<compile_context>
chip_gen: v6e
topology: v6e:2x2x1
jax: 0.10.0
libtpu: 0.0.40
codegen_flags: <defaults>
</compile_context>

<pallas_src>
import functools

import jax
import jax.numpy as jnp
from jax import lax
from jax.experimental import pallas as pl
from jax.experimental.pallas import tpu as pltpu


# --------------------------------------------------------------------------
# Fused Pallas kernel: entire FCN forward for one batch element.
# --------------------------------------------------------------------------
def _fcn_fused_kernel(x_ref, w1_ref, whid_ref, bhid_ref, wl_ref, bl_ref,
                      out_ref, pad0_ref, pad_ref,
                      *, H, W, cin, nf, ncls, n_hidden):
    """Refs (per grid step = one image):

    x_ref:    (1, H, W, cin)           input image, NHWC, f32
    w1_ref:   (9*cin, nf)              conv1 weights flattened (dy,dx,c), bf16
    whid_ref: (n_hidden-1, 9*nf, nf)   conv2..conv5 weights, flattened, bf16
    bhid_ref: (n_hidden, nf)           conv1..conv5 biases, f32
    wl_ref:   (nf, ncls)               1x1 conv weights, bf16
    bl_ref:   (1, ncls)                1x1 conv bias, f32
    out_ref:  (1, ncls, H*W)           channel-major (lane-dense) output, f32
    pad0_ref: (H+2, W+2, cin)          zero-padded input scratch (VMEM), f32
    pad_ref:  (H+2, W+2, nf)           zero-padded activation scratch (VMEM), f32
    """
    # Zero the padded scratch every step (cheap VMEM memset, and keeps the
    # kernel safe under "parallel" grid sharding on v7x megacore).  Only the
    # 1-pixel border actually needs to stay zero; the interior is overwritten.
    pad0_ref[...] = jnp.zeros_like(pad0_ref)
    pad_ref[...] = jnp.zeros_like(pad_ref)

    def conv3x3_relu(src_ref, c, w_flat, bias):
        # im2col: 9 shifted (H, W, c) windows -> one (H*W, 9*c) patch,
        # then a single bf16 MXU matmul with f32 accumulation.
        patch = jnp.concatenate(
            [src_ref[dy:dy + H, dx:dx + W, :]
             for dy in range(3) for dx in range(3)],
            axis=-1)                                        # (H, W, 9*c) f32
        patch = patch.astype(jnp.bfloat16).reshape(H * W, 9 * c)
        acc = jnp.dot(patch, w_flat, preferred_element_type=jnp.float32)
        return jnp.maximum(acc + bias, 0.0)                 # (H*W, nf) f32

    # ---- layer 1: pad the input in-kernel, conv + ReLU -------------------
    pad0_ref[1:H + 1, 1:W + 1, :] = x_ref[0]
    act = conv3x3_relu(pad0_ref, cin, w1_ref[...], bhid_ref[0:1, :])

    # ---- layers 2..5: activation stays resident in the padded VMEM scratch
    for l in range(n_hidden - 1):
        pad_ref[1:H + 1, 1:W + 1, :] = act.reshape(H, W, nf)
        act = conv3x3_relu(pad_ref, nf, whid_ref[l], bhid_ref[l + 1:l + 2, :])

    # ---- final 1x1 conv (pure channel matmul), no activation -------------
    y = jnp.dot(act.astype(jnp.bfloat16), wl_ref[...],
                preferred_element_type=jnp.float32) + bl_ref[...]   # (H*W, ncls)
    # Store channel-major: lane-dense (last dim = H*W) and already NCHW-ordered.
    out_ref[0] = y.T.astype(out_ref.dtype)                          # (ncls, H*W)


# --------------------------------------------------------------------------
# Wrapper
# --------------------------------------------------------------------------
def fcn_forward_pallas(x_nchw, params):
    """Matches FCN.forward: 5 x (conv3x3 + ReLU) then 1x1 conv, NCHW in/out."""
    N, cin, H, W = x_nchw.shape
    nf = params["w1"].shape[-1]
    ncls = params["wl"].shape[-1]
    n_hidden = 5
    cdt = jnp.bfloat16  # MXU compute dtype (accumulation stays f32 in-kernel)

    x = jnp.transpose(x_nchw, (0, 2, 3, 1))                 # NCHW -> NHWC glue

    # Flatten conv weights to (9*Cin, Cout) once, matching the (dy, dx, c)
    # concat order used in-kernel; cast to bf16 once (halves weight DMA too).
    w1 = params["w1"].reshape(9 * cin, nf).astype(cdt)
    whid = jnp.stack(
        [params[f"w{i}"].reshape(9 * nf, nf) for i in range(2, 6)]).astype(cdt)
    bhid = jnp.stack([params[f"b{i}"] for i in range(1, 6)])        # (5, nf) f32
    wl = params["wl"].astype(cdt)
    bl = params["bl"].reshape(1, ncls)

    kernel = functools.partial(_fcn_fused_kernel, H=H, W=W, cin=cin, nf=nf,
                               ncls=ncls, n_hidden=n_hidden)
    out = pl.pallas_call(
        kernel,
        out_shape=jax.ShapeDtypeStruct((N, ncls, H * W), x.dtype),
        grid_spec=pltpu.PrefetchScalarGridSpec(
            num_scalar_prefetch=0,
            grid=(N,),
            in_specs=[
                pl.BlockSpec((1, H, W, cin), lambda n: (n, 0, 0, 0)),
                pl.BlockSpec((9 * cin, nf), lambda n: (0, 0)),
                pl.BlockSpec((n_hidden - 1, 9 * nf, nf), lambda n: (0, 0, 0)),
                pl.BlockSpec((n_hidden, nf), lambda n: (0, 0)),
                pl.BlockSpec((nf, ncls), lambda n: (0, 0)),
                pl.BlockSpec((1, ncls), lambda n: (0, 0)),
            ],
            out_specs=pl.BlockSpec((1, ncls, H * W), lambda n: (n, 0, 0)),
            scratch_shapes=[
                pltpu.VMEM((H + 2, W + 2, cin), jnp.float32),   # padded input
                pltpu.VMEM((H + 2, W + 2, nf), jnp.float32),    # padded acts
            ],
        ),
        compiler_params=pltpu.CompilerParams(
            dimension_semantics=("parallel",)),                 # v7x: 1 img/TC
    )(x, w1, whid, bhid, wl, bl)
    # Channel-major (N, C, H*W) -> NCHW is just a free reshape.
    return out.reshape(N, ncls, H, W)


fcn_forward = jax.jit(fcn_forward_pallas)


# --------------------------------------------------------------------------
# Parameters + pure-JAX reference
# --------------------------------------------------------------------------
def init_fcn_params(key, num_input_channels, num_output_classes, num_filters):
    """Deterministic synthetic init (Kaiming-ish scale), HWIO weight layout."""
    keys = jax.random.split(key, 12)
    params = {}
    cins = [num_input_channels] + [num_filters] * 4
    for i, cin in enumerate(cins, start=1):
        std = (2.0 / (9 * cin)) ** 0.5
        params[f"w{i}"] = std * jax.random.normal(
            keys[2 * (i - 1)], (3, 3, cin, num_filters), jnp.float32)
        params[f"b{i}"] = 0.01 * jax.random.normal(
            keys[2 * (i - 1) + 1], (num_filters,), jnp.float32)
    std = (1.0 / num_filters) ** 0.5
    params["wl"] = std * jax.random.normal(
        keys[10], (num_filters, num_output_classes), jnp.float32)
    params["bl"] = 0.01 * jax.random.normal(
        keys[11], (num_output_classes,), jnp.float32)
    return params


def fcn_reference(x_nchw, params):
    """Pure-JAX f32 reference (lax.conv) for correctness checking."""
    x = jnp.transpose(x_nchw, (0, 2, 3, 1))
    dn = ("NHWC", "HWIO", "NHWC")
    for i in range(1, 6):
        x = lax.conv_general_dilated(
            x, params[f"w{i}"], (1, 1), "SAME", dimension_numbers=dn)
        x = jax.nn.relu(x + params[f"b{i}"])
    x = lax.conv_general_dilated(
        x, params["wl"][None, None], (1, 1), "VALID", dimension_numbers=dn)
    x = x + params["bl"]
    return jnp.transpose(x, (0, 3, 1, 2))


# --------------------------------------------------------------------------
if __name__ == "__main__":
    batch, in_ch, H, W = 2, 4, 16, 16
    num_filters = 32
    num_classes = 8

    key = jax.random.PRNGKey(0)
    k_x, k_p = jax.random.split(key)
    x = jax.random.normal(k_x, (batch, in_ch, H, W), jnp.float32)
    params = init_fcn_params(k_p, in_ch, num_classes, num_filters)

    out = fcn_forward(x, params)
    out = jax.block_until_ready(out)
    assert out.shape == (batch, num_classes, H, W), out.shape

    ref = fcn_reference(x, params)
    # bf16 MXU matmuls (f32 accumulation) across 6 stacked layers -> looser
    # tolerance than the previous pure-f32 version.
    assert jnp.allclose(out, ref, rtol=5e-2, atol=5e-2), (
        float(jnp.max(jnp.abs(out - ref))))

    print("KERNEL_OK")
</pallas_src>

<mosaic_0001>
module attributes {stable_mosaic.version = 11 : i64} {
  func.func @_fcn_fused_kernel(%arg0: i32, %arg1: memref<1x16x16x4xf32, #tpu.memory_space<vmem>>, %arg2: memref<36x32xbf16, #tpu.memory_space<vmem>>, %arg3: memref<4x288x32xbf16, #tpu.memory_space<vmem>>, %arg4: memref<5x32xf32, #tpu.memory_space<vmem>>, %arg5: memref<32x8xbf16, #tpu.memory_space<vmem>>, %arg6: memref<1x8xf32, #tpu.memory_space<vmem>>, %arg7: memref<1x8x256xf32, #tpu.memory_space<vmem>>, %arg8: memref<18x18x4xf32, #tpu.memory_space<vmem>>, %arg9: memref<18x18x32xf32, #tpu.memory_space<vmem>>) attributes {dimension_semantics = [#tpu.dimension_semantics<parallel>], iteration_bounds = array<i64: 2>, scalar_prefetch = 0 : i64, scratch_operands = 2 : i64, tpu.core_type = #tpu.core_type<tc>, window_params = [{transform_indices = @transform_0, window_bounds = array<i64: 1, 16, 16, 4>}, {pipeline_mode = #tpu.pipeline_mode<synchronous>, transform_indices = @transform_1, window_bounds = array<i64: 36, 32>}, {pipeline_mode = #tpu.pipeline_mode<synchronous>, transform_indices = @transform_2, window_bounds = array<i64: 4, 288, 32>}, {pipeline_mode = #tpu.pipeline_mode<synchronous>, transform_indices = @transform_3, window_bounds = array<i64: 5, 32>}, {pipeline_mode = #tpu.pipeline_mode<synchronous>, transform_indices = @transform_4, window_bounds = array<i64: 32, 8>}, {pipeline_mode = #tpu.pipeline_mode<synchronous>, transform_indices = @transform_5, window_bounds = array<i64: 1, 8>}, {transform_indices = @transform_6, window_bounds = array<i64: 1, 8, 256>}]} {
    %cst = arith.constant 0.000000e+00 : f32
    %0 = vector.broadcast %cst : f32 to vector<18x18x4xf32>
    %c0 = arith.constant 0 : index
    %c0_0 = arith.constant 0 : index
    %c0_1 = arith.constant 0 : index
    %1 = vector.load %arg8[%c0, %c0_0, %c0_1] : memref<18x18x4xf32, #tpu.memory_space<vmem>>, vector<18x18x4xf32>
    tpu.vector_store %arg8[%c0, %c0_0, %c0_1], %0 {strides = array<i32>} : memref<18x18x4xf32, #tpu.memory_space<vmem>>, vector<18x18x4xf32>,
    %cst_2 = arith.constant 0.000000e+00 : f32
    %2 = vector.broadcast %cst_2 : f32 to vector<18x18x32xf32>
    %c0_3 = arith.constant 0 : index
    %c0_4 = arith.constant 0 : index
    %c0_5 = arith.constant 0 : index
    %3 = vector.load %arg9[%c0_3, %c0_4, %c0_5] : memref<18x18x32xf32, #tpu.memory_space<vmem>>, vector<18x18x32xf32>
    tpu.vector_store %arg9[%c0_3, %c0_4, %c0_5], %2 {strides = array<i32>} : memref<18x18x32xf32, #tpu.memory_space<vmem>>, vector<18x18x32xf32>,
    %c0_6 = arith.constant 0 : index
    %c0_7 = arith.constant 0 : index
    %c0_8 = arith.constant 0 : index
    %c0_9 = arith.constant 0 : index
    %4 = vector.load %arg1[%c0_6, %c0_7, %c0_8, %c0_9] : memref<1x16x16x4xf32, #tpu.memory_space<vmem>>, vector<1x16x16x4xf32>
    %5 = vector.shape_cast %4 : vector<1x16x16x4xf32> to vector<16x16x4xf32>
    %c1 = arith.constant 1 : index
    %c1_10 = arith.constant 1 : index
    %c0_11 = arith.constant 0 : index
    %6 = vector.load %arg8[%c1, %c1_10, %c0_11] : memref<18x18x4xf32, #tpu.memory_space<vmem>>, vector<16x16x4xf32>
    tpu.vector_store %arg8[%c1, %c1_10, %c0_11], %5 {strides = array<i32>} : memref<18x18x4xf32, #tpu.memory_space<vmem>>, vector<16x16x4xf32>,
    %c0_12 = arith.constant 0 : index
    %c0_13 = arith.constant 0 : index
    %7 = vector.load %arg2[%c0_12, %c0_13] : memref<36x32xbf16, #tpu.memory_space<vmem>>, vector<36x32xbf16>
    %c0_14 = arith.constant 0 : index
    %c0_15 = arith.constant 0 : index
    %8 = vector.load %arg4[%c0_14, %c0_15] : memref<5x32xf32, #tpu.memory_space<vmem>>, vector<1x32xf32>
    %c0_16 = arith.constant 0 : index
    %c0_17 = arith.constant 0 : index
    %c0_18 = arith.constant 0 : index
    %9 = vector.load %arg8[%c0_16, %c0_17, %c0_18] : memref<18x18x4xf32, #tpu.memory_space<vmem>>, vector<16x16x4xf32>
    %c0_19 = arith.constant 0 : index
    %c1_20 = arith.constant 1 : index
    %c0_21 = arith.constant 0 : index
    %10 = vector.load %arg8[%c0_19, %c1_20, %c0_21] : memref<18x18x4xf32, #tpu.memory_space<vmem>>, vector<16x16x4xf32>
    %c0_22 = arith.constant 0 : index
    %c2 = arith.constant 2 : index
    %c0_23 = arith.constant 0 : index
    %11 = vector.load %arg8[%c0_22, %c2, %c0_23] : memref<18x18x4xf32, #tpu.memory_space<vmem>>, vector<16x16x4xf32>
    %c1_24 = arith.constant 1 : index
    %c0_25 = arith.constant 0 : index
    %c0_26 = arith.constant 0 : index
    %12 = vector.load %arg8[%c1_24, %c0_25, %c0_26] : memref<18x18x4xf32, #tpu.memory_space<vmem>>, vector<16x16x4xf32>
    %c1_27 = arith.constant 1 : index
    %c1_28 = arith.constant 1 : index
    %c0_29 = arith.constant 0 : index
    %13 = vector.load %arg8[%c1_27, %c1_28, %c0_29] : memref<18x18x4xf32, #tpu.memory_space<vmem>>, vector<16x16x4xf32>
    %c1_30 = arith.constant 1 : index
    %c2_31 = arith.constant 2 : index
    %c0_32 = arith.constant 0 : index
    %14 = vector.load %arg8[%c1_30, %c2_31, %c0_32] : memref<18x18x4xf32, #tpu.memory_space<vmem>>, vector<16x16x4xf32>
    %c2_33 = arith.constant 2 : index
    %c0_34 = arith.constant 0 : index
    %c0_35 = arith.constant 0 : index
    %15 = vector.load %arg8[%c2_33, %c0_34, %c0_35] : memref<18x18x4xf32, #tpu.memory_space<vmem>>, vector<16x16x4xf32>
    %c2_36 = arith.constant 2 : index
    %c1_37 = arith.constant 1 : index
    %c0_38 = arith.constant 0 : index
    %16 = vector.load %arg8[%c2_36, %c1_37, %c0_38] : memref<18x18x4xf32, #tpu.memory_space<vmem>>, vector<16x16x4xf32>
    %c2_39 = arith.constant 2 : index
    %c2_40 = arith.constant 2 : index
    %c0_41 = arith.constant 0 : index
    %17 = vector.load %arg8[%c2_39, %c2_40, %c0_41] : memref<18x18x4xf32, #tpu.memory_space<vmem>>, vector<16x16x4xf32>
    %18 = tpu.concatenate %9, %10, %11, %12, %13, %14, %15, %16, %17 in 2 : vector<16x16x4xf32>, vector<16x16x4xf32>, vector<16x16x4xf32>, vector<16x16x4xf32>, vector<16x16x4xf32>, vector<16x16x4xf32>, vector<16x16x4xf32>, vector<16x16x4xf32>, vector<16x16x4xf32> -> vector<16x16x36xf32>
    %19 = arith.truncf %18 : vector<16x16x36xf32> to vector<16x16x36xbf16>
    %20 = vector.shape_cast %19 : vector<16x16x36xbf16> to vector<256x36xbf16>
    %cst_42 = arith.constant dense<0.000000e+00> : vector<256x32xf32>
    %21 = tpu.matmul %20, %7, %cst_42 {dimension_numbers = #tpu.dot_dimension_numbers<[1], [0], [0], [1], [0, 0, 1, 1], [], []>} : vector<256x36xbf16>, vector<36x32xbf16>, vector<256x32xf32> -> vector<256x32xf32>
    %22 = vector.broadcast %8 : vector<1x32xf32> to vector<256x32xf32>
    %23 = arith.addf %21, %22 : vector<256x32xf32>
    %cst_43 = arith.constant 0.000000e+00 : f32
    %24 = vector.broadcast %cst_43 : f32 to vector<256x32xf32>
    %25 = arith.maximumf %23, %24 : vector<256x32xf32>
    %26 = vector.shape_cast %25 : vector<256x32xf32> to vector<16x16x32xf32>
    %c1_44 = arith.constant 1 : index
    %c1_45 = arith.constant 1 : index
    %c0_46 = arith.constant 0 : index
    %27 = vector.load %arg9[%c1_44, %c1_45, %c0_46] : memref<18x18x32xf32, #tpu.memory_space<vmem>>, vector<16x16x32xf32>
    tpu.vector_store %arg9[%c1_44, %c1_45, %c0_46], %26 {strides = array<i32>} : memref<18x18x32xf32, #tpu.memory_space<vmem>>, vector<16x16x32xf32>,
    %c0_47 = arith.constant 0 : index
    %c0_48 = arith.constant 0 : index
    %c0_49 = arith.constant 0 : index
    %28 = vector.load %arg3[%c0_47, %c0_48, %c0_49] : memref<4x288x32xbf16, #tpu.memory_space<vmem>>, vector<1x288x32xbf16>
    %29 = vector.shape_cast %28 : vector<1x288x32xbf16> to vector<288x32xbf16>
    %c1_50 = arith.constant 1 : index
    %c0_51 = arith.constant 0 : index
    %30 = vector.load %arg4[%c1_50, %c0_51] : memref<5x32xf32, #tpu.memory_space<vmem>>, vector<1x32xf32>
    %c0_52 = arith.constant 0 : index
    %c0_53 = arith.constant 0 : index
    %c0_54 = arith.constant 0 : index
    %31 = vector.load %arg9[%c0_52, %c0_53, %c0_54] : memref<18x18x32xf32, #tpu.memory_space<vmem>>, vector<16x16x32xf32>
    %c0_55 = arith.constant 0 : index
    %c1_56 = arith.constant 1 : index
    %c0_57 = arith.constant 0 : index
    %32 = vector.load %arg9[%c0_55, %c1_56, %c0_57] : memref<18x18x32xf32, #tpu.memory_space<vmem>>, vector<16x16x32xf32>
    %c0_58 = arith.constant 0 : index
    %c2_59 = arith.constant 2 : index
    %c0_60 = arith.constant 0 : index
    %33 = vector.load %arg9[%c0_58, %c2_59, %c0_60] : memref<18x18x32xf32, #tpu.memory_space<vmem>>, vector<16x16x32xf32>
    %c1_61 = arith.constant 1 : index
    %c0_62 = arith.constant 0 : index
    %c0_63 = arith.constant 0 : index
    %34 = vector.load %arg9[%c1_61, %c0_62, %c0_63] : memref<18x18x32xf32, #tpu.memory_space<vmem>>, vector<16x16x32xf32>
    %c1_64 = arith.constant 1 : index
    %c1_65 = arith.constant 1 : index
    %c0_66 = arith.constant 0 : index
    %35 = vector.load %arg9[%c1_64, %c1_65, %c0_66] : memref<18x18x32xf32, #tpu.memory_space<vmem>>, vector<16x16x32xf32>
    %c1_67 = arith.constant 1 : index
    %c2_68 = arith.constant 2 : index
    %c0_69 = arith.constant 0 : index
    %36 = vector.load %arg9[%c1_67, %c2_68, %c0_69] : memref<18x18x32xf32, #tpu.memory_space<vmem>>, vector<16x16x32xf32>
    %c2_70 = arith.constant 2 : index
    %c0_71 = arith.constant 0 : index
    %c0_72 = arith.constant 0 : index
    %37 = vector.load %arg9[%c2_70, %c0_71, %c0_72] : memref<18x18x32xf32, #tpu.memory_space<vmem>>, vector<16x16x32xf32>
    %c2_73 = arith.constant 2 : index
    %c1_74 = arith.constant 1 : index
    %c0_75 = arith.constant 0 : index
    %38 = vector.load %arg9[%c2_73, %c1_74, %c0_75] : memref<18x18x32xf32, #tpu.memory_space<vmem>>, vector<16x16x32xf32>
    %c2_76 = arith.constant 2 : index
    %c2_77 = arith.constant 2 : index
    %c0_78 = arith.constant 0 : index
    %39 = vector.load %arg9[%c2_76, %c2_77, %c0_78] : memref<18x18x32xf32, #tpu.memory_space<vmem>>, vector<16x16x32xf32>
    %40 = tpu.concatenate %31, %32, %33, %34, %35, %36, %37, %38, %39 in 2 : vector<16x16x32xf32>, vector<16x16x32xf32>, vector<16x16x32xf32>, vector<16x16x32xf32>, vector<16x16x32xf32>, vector<16x16x32xf32>, vector<16x16x32xf32>, vector<16x16x32xf32>, vector<16x16x32xf32> -> vector<16x16x288xf32>
    %41 = arith.truncf %40 : vector<16x16x288xf32> to vector<16x16x288xbf16>
    %42 = vector.shape_cast %41 : vector<16x16x288xbf16> to vector<256x288xbf16>
    %cst_79 = arith.constant dense<0.000000e+00> : vector<256x32xf32>
    %43 = tpu.matmul %42, %29, %cst_79 {dimension_numbers = #tpu.dot_dimension_numbers<[1], [0], [0], [1], [0, 0, 1, 1], [], []>} : vector<256x288xbf16>, vector<288x32xbf16>, vector<256x32xf32> -> vector<256x32xf32>
    %44 = vector.broadcast %30 : vector<1x32xf32> to vector<256x32xf32>
    %45 = arith.addf %43, %44 : vector<256x32xf32>
    %cst_80 = arith.constant 0.000000e+00 : f32
    %46 = vector.broadcast %cst_80 : f32 to vector<256x32xf32>
    %47 = arith.maximumf %45, %46 : vector<256x32xf32>
    %48 = vector.shape_cast %47 : vector<256x32xf32> to vector<16x16x32xf32>
    %c1_81 = arith.constant 1 : index
    %c1_82 = arith.constant 1 : index
    %c0_83 = arith.constant 0 : index
    %49 = vector.load %arg9[%c1_81, %c1_82, %c0_83] : memref<18x18x32xf32, #tpu.memory_space<vmem>>, vector<16x16x32xf32>
    tpu.vector_store %arg9[%c1_81, %c1_82, %c0_83], %48 {strides = array<i32>} : memref<18x18x32xf32, #tpu.memory_space<vmem>>, vector<16x16x32xf32>,
    %c1_84 = arith.constant 1 : index
    %c0_85 = arith.constant 0 : index
    %c0_86 = arith.constant 0 : index
    %50 = vector.load %arg3[%c1_84, %c0_85, %c0_86] : memref<4x288x32xbf16, #tpu.memory_space<vmem>>, vector<1x288x32xbf16>
    %51 = vector.shape_cast %50 : vector<1x288x32xbf16> to vector<288x32xbf16>
    %c2_87 = arith.constant 2 : index
    %c0_88 = arith.constant 0 : index
    %52 = vector.load %arg4[%c2_87, %c0_88] : memref<5x32xf32, #tpu.memory_space<vmem>>, vector<1x32xf32>
    %c0_89 = arith.constant 0 : index
    %c0_90 = arith.constant 0 : index
    %c0_91 = arith.constant 0 : index
    %53 = vector.load %arg9[%c0_89, %c0_90, %c0_91] : memref<18x18x32xf32, #tpu.memory_space<vmem>>, vector<16x16x32xf32>
    %c0_92 = arith.constant 0 : index
    %c1_93 = arith.constant 1 : index
    %c0_94 = arith.constant 0 : index
    %54 = vector.load %arg9[%c0_92, %c1_93, %c0_94] : memref<18x18x32xf32, #tpu.memory_space<vmem>>, vector<16x16x32xf32>
    %c0_95 = arith.constant 0 : index
    %c2_96 = arith.constant 2 : index
    %c0_97 = arith.constant 0 : index
    %55 = vector.load %arg9[%c0_95, %c2_96, %c0_97] : memref<18x18x32xf32, #tpu.memory_space<vmem>>, vector<16x16x32xf32>
    %c1_98 = arith.constant 1 : index
    %c0_99 = arith.constant 0 : index
    %c0_100 = arith.constant 0 : index
    %56 = vector.load %arg9[%c1_98, %c0_99, %c0_100] : memref<18x18x32xf32, #tpu.memory_space<vmem>>, vector<16x16x32xf32>
    %c1_101 = arith.constant 1 : index
    %c1_102 = arith.constant 1 : index
    %c0_103 = arith.constant 0 : index
    %57 = vector.load %arg9[%c1_101, %c1_102, %c0_103] : memref<18x18x32xf32, #tpu.memory_space<vmem>>, vector<16x16x32xf32>
    %c1_104 = arith.constant 1 : index
    %c2_105 = arith.constant 2 : index
    %c0_106 = arith.constant 0 : index
    %58 = vector.load %arg9[%c1_104, %c2_105, %c0_106] : memref<18x18x32xf32, #tpu.memory_space<vmem>>, vector<16x16x32xf32>
    %c2_107 = arith.constant 2 : index
    %c0_108 = arith.constant 0 : index
    %c0_109 = arith.constant 0 : index
    %59 = vector.load %arg9[%c2_107, %c0_108, %c0_109] : memref<18x18x32xf32, #tpu.memory_space<vmem>>, vector<16x16x32xf32>
    %c2_110 = arith.constant 2 : index
    %c1_111 = arith.constant 1 : index
    %c0_112 = arith.constant 0 : index
    %60 = vector.load %arg9[%c2_110, %c1_111, %c0_112] : memref<18x18x32xf32, #tpu.memory_space<vmem>>, vector<16x16x32xf32>
    %c2_113 = arith.constant 2 : index
    %c2_114 = arith.constant 2 : index
    %c0_115 = arith.constant 0 : index
    %61 = vector.load %arg9[%c2_113, %c2_114, %c0_115] : memref<18x18x32xf32, #tpu.memory_space<vmem>>, vector<16x16x32xf32>
    %62 = tpu.concatenate %53, %54, %55, %56, %57, %58, %59, %60, %61 in 2 : vector<16x16x32xf32>, vector<16x16x32xf32>, vector<16x16x32xf32>, vector<16x16x32xf32>, vector<16x16x32xf32>, vector<16x16x32xf32>, vector<16x16x32xf32>, vector<16x16x32xf32>, vector<16x16x32xf32> -> vector<16x16x288xf32>
    %63 = arith.truncf %62 : vector<16x16x288xf32> to vector<16x16x288xbf16>
    %64 = vector.shape_cast %63 : vector<16x16x288xbf16> to vector<256x288xbf16>
    %cst_116 = arith.constant dense<0.000000e+00> : vector<256x32xf32>
    %65 = tpu.matmul %64, %51, %cst_116 {dimension_numbers = #tpu.dot_dimension_numbers<[1], [0], [0], [1], [0, 0, 1, 1], [], []>} : vector<256x288xbf16>, vector<288x32xbf16>, vector<256x32xf32> -> vector<256x32xf32>
    %66 = vector.broadcast %52 : vector<1x32xf32> to vector<256x32xf32>
    %67 = arith.addf %65, %66 : vector<256x32xf32>
    %cst_117 = arith.constant 0.000000e+00 : f32
    %68 = vector.broadcast %cst_117 : f32 to vector<256x32xf32>
    %69 = arith.maximumf %67, %68 : vector<256x32xf32>
    %70 = vector.shape_cast %69 : vector<256x32xf32> to vector<16x16x32xf32>
    %c1_118 = arith.constant 1 : index
    %c1_119 = arith.constant 1 : index
    %c0_120 = arith.constant 0 : index
    %71 = vector.load %arg9[%c1_118, %c1_119, %c0_120] : memref<18x18x32xf32, #tpu.memory_space<vmem>>, vector<16x16x32xf32>
    tpu.vector_store %arg9[%c1_118, %c1_119, %c0_120], %70 {strides = array<i32>} : memref<18x18x32xf32, #tpu.memory_space<vmem>>, vector<16x16x32xf32>,
    %c2_121 = arith.constant 2 : index
    %c0_122 = arith.constant 0 : index
    %c0_123 = arith.constant 0 : index
    %72 = vector.load %arg3[%c2_121, %c0_122, %c0_123] : memref<4x288x32xbf16, #tpu.memory_space<vmem>>, vector<1x288x32xbf16>
    %73 = vector.shape_cast %72 : vector<1x288x32xbf16> to vector<288x32xbf16>
    %c3 = arith.constant 3 : index
    %c0_124 = arith.constant 0 : index
    %74 = vector.load %arg4[%c3, %c0_124] : memref<5x32xf32, #tpu.memory_space<vmem>>, vector<1x32xf32>
    %c0_125 = arith.constant 0 : index
    %c0_126 = arith.constant 0 : index
    %c0_127 = arith.constant 0 : index
    %75 = vector.load %arg9[%c0_125, %c0_126, %c0_127] : memref<18x18x32xf32, #tpu.memory_space<vmem>>, vector<16x16x32xf32>
    %c0_128 = arith.constant 0 : index
    %c1_129 = arith.constant 1 : index
    %c0_130 = arith.constant 0 : index
    %76 = vector.load %arg9[%c0_128, %c1_129, %c0_130] : memref<18x18x32xf32, #tpu.memory_space<vmem>>, vector<16x16x32xf32>
    %c0_131 = arith.constant 0 : index
    %c2_132 = arith.constant 2 : index
    %c0_133 = arith.constant 0 : index
    %77 = vector.load %arg9[%c0_131, %c2_132, %c0_133] : memref<18x18x32xf32, #tpu.memory_space<vmem>>, vector<16x16x32xf32>
    %c1_134 = arith.constant 1 : index
    %c0_135 = arith.constant 0 : index
    %c0_136 = arith.constant 0 : index
    %78 = vector.load %arg9[%c1_134, %c0_135, %c0_136] : memref<18x18x32xf32, #tpu.memory_space<vmem>>, vector<16x16x32xf32>
    %c1_137 = arith.constant 1 : index
    %c1_138 = arith.constant 1 : index
    %c0_139 = arith.constant 0 : index
    %79 = vector.load %arg9[%c1_137, %c1_138, %c0_139] : memref<18x18x32xf32, #tpu.memory_space<vmem>>, vector<16x16x32xf32>
    %c1_140 = arith.constant 1 : index
    %c2_141 = arith.constant 2 : index
    %c0_142 = arith.constant 0 : index
    %80 = vector.load %arg9[%c1_140, %c2_141, %c0_142] : memref<18x18x32xf32, #tpu.memory_space<vmem>>, vector<16x16x32xf32>
    %c2_143 = arith.constant 2 : index
    %c0_144 = arith.constant 0 : index
    %c0_145 = arith.constant 0 : index
    %81 = vector.load %arg9[%c2_143, %c0_144, %c0_145] : memref<18x18x32xf32, #tpu.memory_space<vmem>>, vector<16x16x32xf32>
    %c2_146 = arith.constant 2 : index
    %c1_147 = arith.constant 1 : index
    %c0_148 = arith.constant 0 : index
    %82 = vector.load %arg9[%c2_146, %c1_147, %c0_148] : memref<18x18x32xf32, #tpu.memory_space<vmem>>, vector<16x16x32xf32>
    %c2_149 = arith.constant 2 : index
    %c2_150 = arith.constant 2 : index
    %c0_151 = arith.constant 0 : index
    %83 = vector.load %arg9[%c2_149, %c2_150, %c0_151] : memref<18x18x32xf32, #tpu.memory_space<vmem>>, vector<16x16x32xf32>
    %84 = tpu.concatenate %75, %76, %77, %78, %79, %80, %81, %82, %83 in 2 : vector<16x16x32xf32>, vector<16x16x32xf32>, vector<16x16x32xf32>, vector<16x16x32xf32>, vector<16x16x32xf32>, vector<16x16x32xf32>, vector<16x16x32xf32>, vector<16x16x32xf32>, vector<16x16x32xf32> -> vector<16x16x288xf32>
    %85 = arith.truncf %84 : vector<16x16x288xf32> to vector<16x16x288xbf16>
    %86 = vector.shape_cast %85 : vector<16x16x288xbf16> to vector<256x288xbf16>
    %cst_152 = arith.constant dense<0.000000e+00> : vector<256x32xf32>
    %87 = tpu.matmul %86, %73, %cst_152 {dimension_numbers = #tpu.dot_dimension_numbers<[1], [0], [0], [1], [0, 0, 1, 1], [], []>} : vector<256x288xbf16>, vector<288x32xbf16>, vector<256x32xf32> -> vector<256x32xf32>
    %88 = vector.broadcast %74 : vector<1x32xf32> to vector<256x32xf32>
    %89 = arith.addf %87, %88 : vector<256x32xf32>
    %cst_153 = arith.constant 0.000000e+00 : f32
    %90 = vector.broadcast %cst_153 : f32 to vector<256x32xf32>
    %91 = arith.maximumf %89, %90 : vector<256x32xf32>
    %92 = vector.shape_cast %91 : vector<256x32xf32> to vector<16x16x32xf32>
    %c1_154 = arith.constant 1 : index
    %c1_155 = arith.constant 1 : index
    %c0_156 = arith.constant 0 : index
    %93 = vector.load %arg9[%c1_154, %c1_155, %c0_156] : memref<18x18x32xf32, #tpu.memory_space<vmem>>, vector<16x16x32xf32>
    tpu.vector_store %arg9[%c1_154, %c1_155, %c0_156], %92 {strides = array<i32>} : memref<18x18x32xf32, #tpu.memory_space<vmem>>, vector<16x16x32xf32>,
    %c3_157 = arith.constant 3 : index
    %c0_158 = arith.constant 0 : index
    %c0_159 = arith.constant 0 : index
    %94 = vector.load %arg3[%c3_157, %c0_158, %c0_159] : memref<4x288x32xbf16, #tpu.memory_space<vmem>>, vector<1x288x32xbf16>
    %95 = vector.shape_cast %94 : vector<1x288x32xbf16> to vector<288x32xbf16>
    %c4 = arith.constant 4 : index
    %c0_160 = arith.constant 0 : index
    %96 = vector.load %arg4[%c4, %c0_160] : memref<5x32xf32, #tpu.memory_space<vmem>>, vector<1x32xf32>
    %c0_161 = arith.constant 0 : index
    %c0_162 = arith.constant 0 : index
    %c0_163 = arith.constant 0 : index
    %97 = vector.load %arg9[%c0_161, %c0_162, %c0_163] : memref<18x18x32xf32, #tpu.memory_space<vmem>>, vector<16x16x32xf32>
    %c0_164 = arith.constant 0 : index
    %c1_165 = arith.constant 1 : index
    %c0_166 = arith.constant 0 : index
    %98 = vector.load %arg9[%c0_164, %c1_165, %c0_166] : memref<18x18x32xf32, #tpu.memory_space<vmem>>, vector<16x16x32xf32>
    %c0_167 = arith.constant 0 : index
    %c2_168 = arith.constant 2 : index
    %c0_169 = arith.constant 0 : index
    %99 = vector.load %arg9[%c0_167, %c2_168, %c0_169] : memref<18x18x32xf32, #tpu.memory_space<vmem>>, vector<16x16x32xf32>
    %c1_170 = arith.constant 1 : index
    %c0_171 = arith.constant 0 : index
    %c0_172 = arith.constant 0 : index
    %100 = vector.load %arg9[%c1_170, %c0_171, %c0_172] : memref<18x18x32xf32, #tpu.memory_space<vmem>>, vector<16x16x32xf32>
    %c1_173 = arith.constant 1 : index
    %c1_174 = arith.constant 1 : index
    %c0_175 = arith.constant 0 : index
    %101 = vector.load %arg9[%c1_173, %c1_174, %c0_175] : memref<18x18x32xf32, #tpu.memory_space<vmem>>, vector<16x16x32xf32>
    %c1_176 = arith.constant 1 : index
    %c2_177 = arith.constant 2 : index
    %c0_178 = arith.constant 0 : index
    %102 = vector.load %arg9[%c1_176, %c2_177, %c0_178] : memref<18x18x32xf32, #tpu.memory_space<vmem>>, vector<16x16x32xf32>
    %c2_179 = arith.constant 2 : index
    %c0_180 = arith.constant 0 : index
    %c0_181 = arith.constant 0 : index
    %103 = vector.load %arg9[%c2_179, %c0_180, %c0_181] : memref<18x18x32xf32, #tpu.memory_space<vmem>>, vector<16x16x32xf32>
    %c2_182 = arith.constant 2 : index
    %c1_183 = arith.constant 1 : index
    %c0_184 = arith.constant 0 : index
    %104 = vector.load %arg9[%c2_182, %c1_183, %c0_184] : memref<18x18x32xf32, #tpu.memory_space<vmem>>, vector<16x16x32xf32>
    %c2_185 = arith.constant 2 : index
    %c2_186 = arith.constant 2 : index
    %c0_187 = arith.constant 0 : index
    %105 = vector.load %arg9[%c2_185, %c2_186, %c0_187] : memref<18x18x32xf32, #tpu.memory_space<vmem>>, vector<16x16x32xf32>
    %106 = tpu.concatenate %97, %98, %99, %100, %101, %102, %103, %104, %105 in 2 : vector<16x16x32xf32>, vector<16x16x32xf32>, vector<16x16x32xf32>, vector<16x16x32xf32>, vector<16x16x32xf32>, vector<16x16x32xf32>, vector<16x16x32xf32>, vector<16x16x32xf32>, vector<16x16x32xf32> -> vector<16x16x288xf32>
    %107 = arith.truncf %106 : vector<16x16x288xf32> to vector<16x16x288xbf16>
    %108 = vector.shape_cast %107 : vector<16x16x288xbf16> to vector<256x288xbf16>
    %cst_188 = arith.constant dense<0.000000e+00> : vector<256x32xf32>
    %109 = tpu.matmul %108, %95, %cst_188 {dimension_numbers = #tpu.dot_dimension_numbers<[1], [0], [0], [1], [0, 0, 1, 1], [], []>} : vector<256x288xbf16>, vector<288x32xbf16>, vector<256x32xf32> -> vector<256x32xf32>
    %110 = vector.broadcast %96 : vector<1x32xf32> to vector<256x32xf32>
    %111 = arith.addf %109, %110 : vector<256x32xf32>
    %cst_189 = arith.constant 0.000000e+00 : f32
    %112 = vector.broadcast %cst_189 : f32 to vector<256x32xf32>
    %113 = arith.maximumf %111, %112 : vector<256x32xf32>
    %114 = arith.truncf %113 : vector<256x32xf32> to vector<256x32xbf16>
    %c0_190 = arith.constant 0 : index
    %c0_191 = arith.constant 0 : index
    %115 = vector.load %arg5[%c0_190, %c0_191] : memref<32x8xbf16, #tpu.memory_space<vmem>>, vector<32x8xbf16>
    %cst_192 = arith.constant dense<0.000000e+00> : vector<256x8xf32>
    %116 = tpu.matmul %114, %115, %cst_192 {dimension_numbers = #tpu.dot_dimension_numbers<[1], [0], [0], [1], [0, 0, 1, 1], [], []>} : vector<256x32xbf16>, vector<32x8xbf16>, vector<256x8xf32> -> vector<256x8xf32>
    %c0_193 = arith.constant 0 : index
    %c0_194 = arith.constant 0 : index
    %117 = vector.load %arg6[%c0_193, %c0_194] : memref<1x8xf32, #tpu.memory_space<vmem>>, vector<1x8xf32>
    %118 = vector.broadcast %117 : vector<1x8xf32> to vector<256x8xf32>
    %119 = arith.addf %116, %118 : vector<256x8xf32>
    %120 = tpu.transpose %119, [1, 0] : vector<256x8xf32> -> vector<8x256xf32>
    %c0_195 = arith.constant 0 : index
    %c0_196 = arith.constant 0 : index
    %c0_197 = arith.constant 0 : index
    %121 = vector.load %arg7[%c0_195, %c0_196, %c0_197] : memref<1x8x256xf32, #tpu.memory_space<vmem>>, vector<1x8x256xf32>
    %122 = vector.shape_cast %121 : vector<1x8x256xf32> to vector<8x256xf32>
    %123 = vector.shape_cast %120 : vector<8x256xf32> to vector<1x8x256xf32>
    tpu.vector_store %arg7[%c0_195, %c0_196, %c0_197], %123 {strides = array<i32>} : memref<1x8x256xf32, #tpu.memory_space<vmem>>, vector<1x8x256xf32>,
    return
  }
  func.func @transform_0(%arg0: i32) -> (i32, i32, i32, i32) {
    %c0_i32 = arith.constant 0 : i32
    %c0_i32_0 = arith.constant 0 : i32
    %c0_i32_1 = arith.constant 0 : i32
    %c0_i32_2 = arith.constant 0 : i32
    return %arg0, %c0_i32, %c0_i32_0, %c0_i32_1 : i32, i32, i32, i32
  }
  func.func @transform_1(%arg0: i32) -> (i32, i32) {
    %c0_i32 = arith.constant 0 : i32
    %c0_i32_0 = arith.constant 0 : i32
    %c0_i32_1 = arith.constant 0 : i32
    return %c0_i32, %c0_i32_0 : i32, i32
  }
  func.func @transform_2(%arg0: i32) -> (i32, i32, i32) {
    %c0_i32 = arith.constant 0 : i32
    %c0_i32_0 = arith.constant 0 : i32
    %c0_i32_1 = arith.constant 0 : i32
    %c0_i32_2 = arith.constant 0 : i32
    return %c0_i32, %c0_i32_0, %c0_i32_1 : i32, i32, i32
  }
  func.func @transform_3(%arg0: i32) -> (i32, i32) {
    %c0_i32 = arith.constant 0 : i32
    %c0_i32_0 = arith.constant 0 : i32
    %c0_i32_1 = arith.constant 0 : i32
    return %c0_i32, %c0_i32_0 : i32, i32
  }
  func.func @transform_4(%arg0: i32) -> (i32, i32) {
    %c0_i32 = arith.constant 0 : i32
    %c0_i32_0 = arith.constant 0 : i32
    %c0_i32_1 = arith.constant 0 : i32
    return %c0_i32, %c0_i32_0 : i32, i32
  }
  func.func @transform_5(%arg0: i32) -> (i32, i32) {
    %c0_i32 = arith.constant 0 : i32
    %c0_i32_0 = arith.constant 0 : i32
    %c0_i32_1 = arith.constant 0 : i32
    return %c0_i32, %c0_i32_0 : i32, i32
  }
  func.func @transform_6(%arg0: i32) -> (i32, i32, i32) {
    %c0_i32 = arith.constant 0 : i32
    %c0_i32_0 = arith.constant 0 : i32
    %c0_i32_1 = arith.constant 0 : i32
    return %arg0, %c0_i32, %c0_i32_0 : i32, i32, i32
  }
}

</mosaic_0001>

<llo_original>
// kernel: fcn_forward_pallas.1
$region0: #{fcn_forward_pallas.1}
  #allocation0 [shape = 'u32[]', space=smem, size = 0x4, offset = 0x4, fixed_abs, tag = 'smem constant byte address 0x4 - core index']
  #allocation1 [shape = 'u32[144,128]{1,0:T(1,128)}', space=vmem, size = 0x12000, scoped, tag = 'internal scratch']
  #allocation2 [shape = 'f32[18,18,4]{2,1,0:T(8,128)}', space=vmem, size = 0x36000, scoped, tag = 'scratch operand']
  #allocation3 [shape = 'f32[18,18,32]{2,1,0:T(8,128)}', space=vmem, size = 0x36000, scoped, tag = 'scratch operand']
  %s0 = inlined_call_operand.vmem [shape: f32[2,16,16,4], index: 0, kind: input, shape index: {}]
  %s1 = inlined_call_operand.vmem [shape: bf16[36,32], index: 1, kind: input, shape index: {}]
  %s2 = inlined_call_operand.vmem [shape: bf16[4,288,32], index: 2, kind: input, shape index: {}]
  %s3 = inlined_call_operand.vmem [shape: f32[5,32], index: 3, kind: input, shape index: {}]
  %s4 = inlined_call_operand.vmem [shape: bf16[32,8], index: 4, kind: input, shape index: {}]
  %s5 = inlined_call_operand.vmem [shape: f32[1,8], index: 5, kind: input, shape index: {}]
  %s6 = inlined_call_operand.vmem [shape: f32[2,8,256], index: 6, kind: output, shape index: {}]
  %s7 = sld [smem:[#allocation0]]
  $region57: #{fcn_forward_pallas.1} parent=0
    _
  %s9 = ssub.s32 1, %s7
  %s10 = scalar_select 0, %s9, %s7
  loop: start=0, step=1, limit=4
  $region2: #{fcn_forward_pallas.1} parent=0 // loop_pre_header
    _
  $region3: #{fcn_forward_pallas.1} parent=0 // loop_header
    %s12 = sphi 0, %s16
    %p13 = scmp.ge.s32.totalorder %s12, 4
    %s22 = sphi 0, %s24
    %s25 = sphi 0, %s22
    %s26 = sphi 0, %s25
    %s42 = sphi 0, %s26
    %s46 = sphi 0, %s46
    %s48 = sphi 0, %s46
    %s49 = sphi 0, %s48
    %s63 = sphi 0, %s49
    %s67 = sphi 0, %s67
    %s69 = sphi 0, %s67
    %s70 = sphi 0, %s69
    %s84 = sphi 0, %s70
    %s88 = sphi 0, %s88
    %s90 = sphi 0, %s88
    %s91 = sphi 0, %s90
    %s105 = sphi 0, %s91
    %s109 = sphi 0, %s109
    %s111 = sphi 0, %s109
    %s112 = sphi 0, %s111
    %s126 = sphi 0, %s112
    %s130 = sphi 0, %s130
    %s132 = sphi 0, %s130
    %s133 = sphi 0, %s132
    %s147 = sphi 0, %s133
    %s153 = sphi 0, %s155
    %s156 = sphi 0, %s153
    %s157 = sphi 0, %s156
    %s173 = sphi 0, %s157
  $region4: #{fcn_forward_pallas.1} parent=0 // loop_header_branch
    %15 = sbr.rel (%p13) target = $region8
  $region5: #{fcn_forward_pallas.1} parent=0 // loop_body
    %s17 = ssub.s32 %s12, 1
    %s18 = ssub.s32 %s12, 2
    %s19 = sadd.s32 %s12, 1
    %s20 = ssub.s32 %s12, %s19
    %p21 = scmp.eq.s32.totalorder %s20, 0
    %s23 = sadd.s32 %s22, 1
    %s24 = scalar_select %p21, %s22, %s23
    %p27 = pneg %p21
    %p28 = scmp.eq.s32.totalorder %s12, 1
    %p29 = por %p27, %p28
    %p30 = scmp.ne.s32.totalorder %s22, %s25
    %p31 = scmp.eq.s32.totalorder %s12, 0
    %p32 = por %p30, %p31
    %p33 = scmp.ne.s32.totalorder %s22, %s25
    %p34 = scmp.eq.s32.totalorder %s17, 1
    %p35 = por %p33, %p34
    %p36 = scmp.ne.s32.totalorder %s25, %s26
    %p37 = scmp.eq.s32.totalorder %s17, 0
    %p38 = por %p36, %p37
    %p39 = scmp.ne.s32.totalorder %s25, %s26
    %p40 = scmp.eq.s32.totalorder %s18, 1
    %p41 = por %p39, %p40
    %p43 = scmp.ne.s32.totalorder %s26, %s42
    %p44 = scmp.eq.s32.totalorder %s18, 0
    %p45 = por %p43, %p44
    %s47 = sadd.s32 %s46, 1
    %p50 = scmp.eq.s32.totalorder %s12, 1
    %p51 = scmp.ne.s32.totalorder %s46, %s48
    %p52 = scmp.eq.s32.totalorder %s12, 0
    %p53 = por %p51, %p52
    %p54 = scmp.ne.s32.totalorder %s46, %s48
    %p55 = scmp.eq.s32.totalorder %s17, 1
    %p56 = por %p54, %p55
    %p57 = scmp.ne.s32.totalorder %s48, %s49
    %p58 = scmp.eq.s32.totalorder %s17, 0
    %p59 = por %p57, %p58
    %p60 = scmp.ne.s32.totalorder %s48, %s49
    %p61 = scmp.eq.s32.totalorder %s18, 1
    %p62 = por %p60, %p61
    %p64 = scmp.ne.s32.totalorder %s49, %s63
    %p65 = scmp.eq.s32.totalorder %s18, 0
    %p66 = por %p64, %p65
    %s68 = sadd.s32 %s67, 1
    %p71 = scmp.eq.s32.totalorder %s12, 1
    %p72 = scmp.ne.s32.totalorder %s67, %s69
    %p73 = scmp.eq.s32.totalorder %s12, 0
    %p74 = por %p72, %p73
    %p75 = scmp.ne.s32.totalorder %s67, %s69
    %p76 = scmp.eq.s32.totalorder %s17, 1
    %p77 = por %p75, %p76
    %p78 = scmp.ne.s32.totalorder %s69, %s70
    %p79 = scmp.eq.s32.totalorder %s17, 0
    %p80 = por %p78, %p79
    %p81 = scmp.ne.s32.totalorder %s69, %s70
    %p82 = scmp.eq.s32.totalorder %s18, 1
    %p83 = por %p81, %p82
    %p85 = scmp.ne.s32.totalorder %s70, %s84
    %p86 = scmp.eq.s32.totalorder %s18, 0
    %p87 = por %p85, %p86
    %s89 = sadd.s32 %s88, 1
    %p92 = scmp.eq.s32.totalorder %s12, 1
    %p93 = scmp.ne.s32.totalorder %s88, %s90
    %p94 = scmp.eq.s32.totalorder %s12, 0
    %p95 = por %p93, %p94
    %p96 = scmp.ne.s32.totalorder %s88, %s90
    %p97 = scmp.eq.s32.totalorder %s17, 1
    %p98 = por %p96, %p97
    %p99 = scmp.ne.s32.totalorder %s90, %s91
    %p100 = scmp.eq.s32.totalorder %s17, 0
    %p101 = por %p99, %p100
    %p102 = scmp.ne.s32.totalorder %s90, %s91
    %p103 = scmp.eq.s32.totalorder %s18, 1
    %p104 = por %p102, %p103
    %p106 = scmp.ne.s32.totalorder %s91, %s105
    %p107 = scmp.eq.s32.totalorder %s18, 0
    %p108 = por %p106, %p107
    %s110 = sadd.s32 %s109, 1
    %p113 = scmp.eq.s32.totalorder %s12, 1
    %p114 = scmp.ne.s32.totalorder %s109, %s111
    %p115 = scmp.eq.s32.totalorder %s12, 0
    %p116 = por %p114, %p115
    %p117 = scmp.ne.s32.totalorder %s109, %s111
    %p118 = scmp.eq.s32.totalorder %s17, 1
    %p119 = por %p117, %p118
    %p120 = scmp.ne.s32.totalorder %s111, %s112
    %p121 = scmp.eq.s32.totalorder %s17, 0
    %p122 = por %p120, %p121
    %p123 = scmp.ne.s32.totalorder %s111, %s112
    %p124 = scmp.eq.s32.totalorder %s18, 1
    %p125 = por %p123, %p124
    %p127 = scmp.ne.s32.totalorder %s112, %s126
    %p128 = scmp.eq.s32.totalorder %s18, 0
    %p129 = por %p127, %p128
    %s131 = sadd.s32 %s130, 1
    %p134 = scmp.eq.s32.totalorder %s12, 1
    %p135 = scmp.ne.s32.totalorder %s130, %s132
    %p136 = scmp.eq.s32.totalorder %s12, 0
    %p137 = por %p135, %p136
    %p138 = scmp.ne.s32.totalorder %s130, %s132
    %p139 = scmp.eq.s32.totalorder %s17, 1
    %p140 = por %p138, %p139
    %p141 = scmp.ne.s32.totalorder %s132, %s133
    %p142 = scmp.eq.s32.totalorder %s17, 0
    %p143 = por %p141, %p142
    %p144 = scmp.ne.s32.totalorder %s132, %s133
    %p145 = scmp.eq.s32.totalorder %s18, 1
    %p146 = por %p144, %p145
    %p148 = scmp.ne.s32.totalorder %s133, %s147
    %p149 = scmp.eq.s32.totalorder %s18, 0
    %p150 = por %p148, %p149
    %s151 = ssub.s32 %s12, %s19
    %p152 = scmp.eq.s32.totalorder %s151, 0
    %s154 = sadd.s32 %s153, 1
    %s155 = scalar_select %p152, %s153, %s154
    %p158 = pneg %p152
    %p159 = scmp.eq.s32.totalorder %s12, 1
    %p160 = por %p158, %p159
    %p161 = scmp.ne.s32.totalorder %s153, %s156
    %p162 = scmp.eq.s32.totalorder %s12, 0
    %p163 = por %p161, %p162
    %p164 = scmp.ne.s32.totalorder %s153, %s156
    %p165 = scmp.eq.s32.totalorder %s17, 1
    %p166 = por %p164, %p165
    %p167 = scmp.ne.s32.totalorder %s156, %s157
    %p168 = scmp.eq.s32.totalorder %s17, 0
    %p169 = por %p167, %p168
    %p170 = scmp.ne.s32.totalorder %s156, %s157
    %p171 = scmp.eq.s32.totalorder %s18, 1
    %p172 = por %p170, %p171
    %p174 = scmp.ne.s32.totalorder %s157, %s173
    %p175 = scmp.eq.s32.totalorder %s18, 0
    %p176 = por %p174, %p175
    %p177 = scmp.le.s32.totalorder 1, %s12
    %p178 = scmp.lt.s32.totalorder %s12, 3
    %p179 = pnand %p177, %p178
    %p180 = pneg %p179
    // Predicated region
    $region9: #{fcn_forward_pallas.1} parent=5 // pred_check
      _
    $region10: #{fcn_forward_pallas.1} parent=5 // pred_check_branch
      %182 = sbr.rel (%p179) target = $region12
    $region11: #{fcn_forward_pallas.1} parent=5 // pred_region
      %s183 = ssub.s32 %s12, 1
      // Predicated region
      $region13: #{fcn_forward_pallas.1} parent=11 // pred_check
        %p184 = pneg %p59
      $region14: #{fcn_forward_pallas.1} parent=11 // pred_check_branch
        %186 = sbr.rel (%p184) target = $region16
      $region15: #{fcn_forward_pallas.1} parent=11 // pred_region
        _
      $region16: #{fcn_forward_pallas.1} parent=11 // pred_fallthru
        _
      // Predicated region
      $region17: #{fcn_forward_pallas.1} parent=11 // pred_check
        %p187 = pneg %p80
      $region18: #{fcn_forward_pallas.1} parent=11 // pred_check_branch
        %189 = sbr.rel (%p187) target = $region20
      $region19: #{fcn_forward_pallas.1} parent=11 // pred_region
        _
      $region20: #{fcn_forward_pallas.1} parent=11 // pred_fallthru
        _
      // Predicated region
      $region21: #{fcn_forward_pallas.1} parent=11 // pred_check
        %p190 = pneg %p101
      $region22: #{fcn_forward_pallas.1} parent=11 // pred_check_branch
        %192 = sbr.rel (%p190) target = $region24
      $region23: #{fcn_forward_pallas.1} parent=11 // pred_region
        _
      $region24: #{fcn_forward_pallas.1} parent=11 // pred_fallthru
        _
      // Predicated region
      $region25: #{fcn_forward_pallas.1} parent=11 // pred_check
        %p193 = pneg %p122
      $region26: #{fcn_forward_pallas.1} parent=11 // pred_check_branch
        %195 = sbr.rel (%p193) target = $region28
      $region27: #{fcn_forward_pallas.1} parent=11 // pred_region
        _
      $region28: #{fcn_forward_pallas.1} parent=11 // pred_fallthru
        _
      // Predicated region
      $region29: #{fcn_forward_pallas.1} parent=11 // pred_check
        %p196 = pneg %p143
      $region30: #{fcn_forward_pallas.1} parent=11 // pred_check_branch
        %198 = sbr.rel (%p196) target = $region32
      $region31: #{fcn_forward_pallas.1} parent=11 // pred_region
        _
      $region32: #{fcn_forward_pallas.1} parent=11 // pred_fallthru
        _
    $region12: #{fcn_forward_pallas.1} parent=5 // pred_fallthru
      _
    %p199 = scmp.lt.s32.totalorder %s12, 2
    // Predicated region
    $region33: #{fcn_forward_pallas.1} parent=5 // pred_check
      %p200 = pneg %p199
    $region34: #{fcn_forward_pallas.1} parent=5 // pred_check_branch
      %202 = sbr.rel (%p200) target = $region36
    $region35: #{fcn_forward_pallas.1} parent=5 // pred_region
      // Predicated region
      $region37: #{fcn_forward_pallas.1} parent=35 // pred_check
        %p203 = pneg %p32
      $region38: #{fcn_forward_pallas.1} parent=35 // pred_check_branch
        %205 = sbr.rel (%p203) target = $region40
      $region39: #{fcn_forward_pallas.1} parent=35 // pred_region
        %p206 = scmp.lt.s32.totalorder %s12, 1
        %s207 = scalar_select %p206, %s12, 1
        %s208 = smul.addr %s207, 32
        %s209 = smul.addr %s208, 8
        %s210 = scalar_lea.vmem %s0, %s209
      $region40: #{fcn_forward_pallas.1} parent=35 // pred_fallthru
        _
    $region36: #{fcn_forward_pallas.1} parent=5 // pred_fallthru
      _
    %p211 = scmp.le.s32.totalorder 1, %s12
    %p212 = scmp.lt.s32.totalorder %s12, 3
    %p213 = pnand %p211, %p212
    %p214 = pneg %p213
    // Predicated region
    $region41: #{fcn_forward_pallas.1} parent=5 // pred_check
      _
    $region42: #{fcn_forward_pallas.1} parent=5 // pred_check_branch
      %216 = sbr.rel (%p213) target = $region44
    $region43: #{fcn_forward_pallas.1} parent=5 // pred_region
      %s217 = ssub.s32 %s12, 1
      %p218 = scmp.lt.s32.totalorder %s17, 1
      %s219 = scalar_select %p218, %s17, 1
      %s220 = smul.addr %s219, 32
      %s221 = smul.addr %s220, 8
      %s222 = scalar_lea.vmem %s0, %s221
      %p223 = pneg %p38
      %p224 = pneg %p35
      %p225 = pneg %p59
      %p226 = pneg %p56
      %p227 = pneg %p80
      %p228 = pneg %p77
      %p229 = pneg %p101
      %p230 = pneg %p98
      %p231 = pneg %p122
      %p232 = pneg %p119
      %p233 = pneg %p143
      %p234 = pneg %p140
      %p235 = pneg %p169
      %p236 = pneg %p166
      %p237 = scmp.lt.s32.totalorder %s17, 1
      %s238 = scalar_select %p237, %s17, 1
      %s239 = smul.addr %s238, 2
      %s240 = smul.addr %s239, 8
      %s241 = scalar_lea.vmem %s6, %s240
      %p242 = scmp.lt.s32.totalorder %s17, 1
      %s243 = scalar_select %p242, %s17, 1
      %s244 = smul.addr %s243, 32
      %s245 = smul.addr %s244, 8
      %s246 = scalar_lea.vmem %s0, %s245
      %p247 = scmp.lt.s32.totalorder %s17, 1
      %s248 = scalar_select %p247, %s17, 1
      %s249 = smul.addr %s248, 2
      %s250 = smul.addr %s249, 8
      %s251 = scalar_lea.vmem %s6, %s250
      %vm253 = vcmask 31744
      %254 = vst.msk [vmem:[#allocation2] sm:$0xff] %vm253, 0.0
      %255 = vst.msk [vmem:[#allocation2 + $0x8] sm:$0xff] %vm253, 0.0
      %vm256 = vcmask 25600
      %257 = vst.msk [vmem:[#allocation2 + $0x10] sm:$0x3] %vm256, 0.0
      %258 = vst.msk [vmem:[#allocation2 + $0x18] sm:$0xff] %vm253, 0.0
      %259 = vst.msk [vmem:[#allocation2 + $0x20] sm:$0xff] %vm253, 0.0
      %260 = vst.msk [vmem:[#allocation2 + $0x28] sm:$0x3] %vm256, 0.0
      %261 = vst.msk [vmem:[#allocation2 + $0x30] sm:$0xff] %vm253, 0.0
      %262 = vst.msk [vmem:[#allocation2 + $0x38] sm:$0xff] %vm253, 0.0
      %263 = vst.msk [vmem:[#allocation2 + $0x40] sm:$0x3] %vm256, 0.0
      %264 = vst.msk [vmem:[#allocation2 + $0x48] sm:$0xff] %vm253, 0.0
      %265 = vst.msk [vmem:[#allocation2 + $0x50] sm:$0xff] %vm253, 0.0
      %266 = vst.msk [vmem:[#allocation2 + $0x58] sm:$0x3] %vm256, 0.0
      %267 = vst.msk [vmem:[#allocation2 + $0x60] sm:$0xff] %vm253, 0.0
      %268 = vst.msk [vmem:[#allocation2 + $0x68] sm:$0xff] %vm253, 0.0
      %269 = vst.msk [vmem:[#allocation2 + $0x70] sm:$0x3] %vm256, 0.0
      %270 = vst.msk [vmem:[#allocation2 + $0x78] sm:$0xff] %vm253, 0.0
      %271 = vst.msk [vmem:[#allocation2 + $0x80] sm:$0xff] %vm253, 0.0
      %272 = vst.msk [vmem:[#allocation2 + $0x88] sm:$0x3] %vm256, 0.0
      %273 = vst.msk [vmem:[#allocation2 + $0x90] sm:$0xff] %vm253, 0.0
      %274 = vst.msk [vmem:[#allocation2 + $0x98] sm:$0xff] %vm253, 0.0
      %275 = vst.msk [vmem:[#allocation2 + $0xa0] sm:$0x3] %vm256, 0.0
      %276 = vst.msk [vmem:[#allocation2 + $0xa8] sm:$0xff] %vm253, 0.0
      %277 = vst.msk [vmem:[#allocation2 + $0xb0] sm:$0xff] %vm253, 0.0
      %278 = vst.msk [vmem:[#allocation2 + $0xb8] sm:$0x3] %vm256, 0.0
      %279 = vst.msk [vmem:[#allocation2 + $0xc0] sm:$0xff] %vm253, 0.0
      %280 = vst.msk [vmem:[#allocation2 + $0xc8] sm:$0xff] %vm253, 0.0
      %281 = vst.msk [vmem:[#allocation2 + $0xd0] sm:$0x3] %vm256, 0.0
      %282 = vst.msk [vmem:[#allocation2 + $0xd8] sm:$0xff] %vm253, 0.0
      %283 = vst.msk [vmem:[#allocation2 + $0xe0] sm:$0xff] %vm253, 0.0
      %284 = vst.msk [vmem:[#allocation2 + $0xe8] sm:$0x3] %vm256, 0.0
      %285 = vst.msk [vmem:[#allocation2 + $0xf0] sm:$0xff] %vm253, 0.0
      %286 = vst.msk [vmem:[#allocation2 + $0xf8] sm:$0xff] %vm253, 0.0
      %287 = vst.msk [vmem:[#allocation2 + $0x100] sm:$0x3] %vm256, 0.0
      %288 = vst.msk [vmem:[#allocation2 + $0x108] sm:$0xff] %vm253, 0.0
      %289 = vst.msk [vmem:[#allocation2 + $0x110] sm:$0xff] %vm253, 0.0
      %290 = vst.msk [vmem:[#allocation2 + $0x118] sm:$0x3] %vm256, 0.0
      %291 = vst.msk [vmem:[#allocation2 + $0x120] sm:$0xff] %vm253, 0.0
      %292 = vst.msk [vmem:[#allocation2 + $0x128] sm:$0xff] %vm253, 0.0
      %293 = vst.msk [vmem:[#allocation2 + $0x130] sm:$0x3] %vm256, 0.0
      %294 = vst.msk [vmem:[#allocation2 + $0x138] sm:$0xff] %vm253, 0.0
      %295 = vst.msk [vmem:[#allocation2 + $0x140] sm:$0xff] %vm253, 0.0
      %296 = vst.msk [vmem:[#allocation2 + $0x148] sm:$0x3] %vm256, 0.0
      %297 = vst.msk [vmem:[#allocation2 + $0x150] sm:$0xff] %vm253, 0.0
      %298 = vst.msk [vmem:[#allocation2 + $0x158] sm:$0xff] %vm253, 0.0
      %299 = vst.msk [vmem:[#allocation2 + $0x160] sm:$0x3] %vm256, 0.0
      %300 = vst.msk [vmem:[#allocation2 + $0x168] sm:$0xff] %vm253, 0.0
      %301 = vst.msk [vmem:[#allocation2 + $0x170] sm:$0xff] %vm253, 0.0
      %302 = vst.msk [vmem:[#allocation2 + $0x178] sm:$0x3] %vm256, 0.0
      %303 = vst.msk [vmem:[#allocation2 + $0x180] sm:$0xff] %vm253, 0.0
      %304 = vst.msk [vmem:[#allocation2 + $0x188] sm:$0xff] %vm253, 0.0
      %305 = vst.msk [vmem:[#allocation2 + $0x190] sm:$0x3] %vm256, 0.0
      %306 = vst.msk [vmem:[#allocation2 + $0x198] sm:$0xff] %vm253, 0.0
      %307 = vst.msk [vmem:[#allocation2 + $0x1a0] sm:$0xff] %vm253, 0.0
      %308 = vst.msk [vmem:[#allocation2 + $0x1a8] sm:$0x3] %vm256, 0.0
      %vm309 = vcmask 261120
      %310 = vst.msk [vmem:[#allocation3] sm:$0xff] %vm309, 0.0
      %311 = vst.msk [vmem:[#allocation3 + $0x8] sm:$0xff] %vm309, 0.0
      %vm312 = vcmask 254976
      %313 = vst.msk [vmem:[#allocation3 + $0x10] sm:$0x3] %vm312, 0.0
      %314 = vst.msk [vmem:[#allocation3 + $0x18] sm:$0xff] %vm309, 0.0
      %315 = vst.msk [vmem:[#allocation3 + $0x20] sm:$0xff] %vm309, 0.0
      %316 = vst.msk [vmem:[#allocation3 + $0x28] sm:$0x3] %vm312, 0.0
      %317 = vst.msk [vmem:[#allocation3 + $0x30] sm:$0xff] %vm309, 0.0
      %318 = vst.msk [vmem:[#allocation3 + $0x38] sm:$0xff] %vm309, 0.0
      %319 = vst.msk [vmem:[#allocation3 + $0x40] sm:$0x3] %vm312, 0.0
      %320 = vst.msk [vmem:[#allocation3 + $0x48] sm:$0xff] %vm309, 0.0
      %321 = vst.msk [vmem:[#allocation3 + $0x50] sm:$0xff] %vm309, 0.0
      %322 = vst.msk [vmem:[#allocation3 + $0x58] sm:$0x3] %vm312, 0.0
      %323 = vst.msk [vmem:[#allocation3 + $0x60] sm:$0xff] %vm309, 0.0
      %324 = vst.msk [vmem:[#allocation3 + $0x68] sm:$0xff] %vm309, 0.0
      %325 = vst.msk [vmem:[#allocation3 + $0x70] sm:$0x3] %vm312, 0.0
      %326 = vst.msk [vmem:[#allocation3 + $0x78] sm:$0xff] %vm309, 0.0
      %327 = vst.msk [vmem:[#allocation3 + $0x80] sm:$0xff] %vm309, 0.0
      %328 = vst.msk [vmem:[#allocation3 + $0x88] sm:$0x3] %vm312, 0.0
      %329 = vst.msk [vmem:[#allocation3 + $0x90] sm:$0xff] %vm309, 0.0
      %330 = vst.msk [vmem:[#allocation3 + $0x98] sm:$0xff] %vm309, 0.0
      %331 = vst.msk [vmem:[#allocation3 + $0xa0] sm:$0x3] %vm312, 0.0
      %332 = vst.msk [vmem:[#allocation3 + $0xa8] sm:$0xff] %vm309, 0.0
      %333 = vst.msk [vmem:[#allocation3 + $0xb0] sm:$0xff] %vm309, 0.0
      %334 = vst.msk [vmem:[#allocation3 + $0xb8] sm:$0x3] %vm312, 0.0
      %335 = vst.msk [vmem:[#allocation3 + $0xc0] sm:$0xff] %vm309, 0.0
      %336 = vst.msk [vmem:[#allocation3 + $0xc8] sm:$0xff] %vm309, 0.0
      %337 = vst.msk [vmem:[#allocation3 + $0xd0] sm:$0x3] %vm312, 0.0
      %338 = vst.msk [vmem:[#allocation3 + $0xd8] sm:$0xff] %vm309, 0.0
      %339 = vst.msk [vmem:[#allocation3 + $0xe0] sm:$0xff] %vm309, 0.0
      %340 = vst.msk [vmem:[#allocation3 + $0xe8] sm:$0x3] %vm312, 0.0
      %341 = vst.msk [vmem:[#allocation3 + $0xf0] sm:$0xff] %vm309, 0.0
      %342 = vst.msk [vmem:[#allocation3 + $0xf8] sm:$0xff] %vm309, 0.0
      %343 = vst.msk [vmem:[#allocation3 + $0x100] sm:$0x3] %vm312, 0.0
      %344 = vst.msk [vmem:[#allocation3 + $0x108] sm:$0xff] %vm309, 0.0
      %345 = vst.msk [vmem:[#allocation3 + $0x110] sm:$0xff] %vm309, 0.0
      %346 = vst.msk [vmem:[#allocation3 + $0x118] sm:$0x3] %vm312, 0.0
      %347 = vst.msk [vmem:[#allocation3 + $0x120] sm:$0xff] %vm309, 0.0
      %348 = vst.msk [vmem:[#allocation3 + $0x128] sm:$0xff] %vm309, 0.0
      %349 = vst.msk [vmem:[#allocation3 + $0x130] sm:$0x3] %vm312, 0.0
      %350 = vst.msk [vmem:[#allocation3 + $0x138] sm:$0xff] %vm309, 0.0
      %351 = vst.msk [vmem:[#allocation3 + $0x140] sm:$0xff] %vm309, 0.0
      %352 = vst.msk [vmem:[#allocation3 + $0x148] sm:$0x3] %vm312, 0.0
      %353 = vst.msk [vmem:[#allocation3 + $0x150] sm:$0xff] %vm309, 0.0
      %354 = vst.msk [vmem:[#allocation3 + $0x158] sm:$0xff] %vm309, 0.0
      %355 = vst.msk [vmem:[#allocation3 + $0x160] sm:$0x3] %vm312, 0.0
      %356 = vst.msk [vmem:[#allocation3 + $0x168] sm:$0xff] %vm309, 0.0
      %357 = vst.msk [vmem:[#allocation3 + $0x170] sm:$0xff] %vm309, 0.0
      %358 = vst.msk [vmem:[#allocation3 + $0x178] sm:$0x3] %vm312, 0.0
      %359 = vst.msk [vmem:[#allocation3 + $0x180] sm:$0xff] %vm309, 0.0
      %360 = vst.msk [vmem:[#allocation3 + $0x188] sm:$0xff] %vm309, 0.0
      %361 = vst.msk [vmem:[#allocation3 + $0x190] sm:$0x3] %vm312, 0.0
      %362 = vst.msk [vmem:[#allocation3 + $0x198] sm:$0xff] %vm309, 0.0
      %363 = vst.msk [vmem:[#allocation3 + $0x1a0] sm:$0xff] %vm309, 0.0
      %364 = vst.msk [vmem:[#allocation3 + $0x1a8] sm:$0x3] %vm312, 0.0
      %v365 = vld [vmem:[%s246] sm:$0xff]
      %v366 = vld [vmem:[%s246 + $0x8] sm:$0xff]
      %v367 = vld [vmem:[%s246 + $0x10] sm:$0xff]
      %v368 = vld [vmem:[%s246 + $0x18] sm:$0xff]
      %v369 = vld [vmem:[%s246 + $0x20] sm:$0xff]
      %v370 = vld [vmem:[%s246 + $0x28] sm:$0xff]
      %v371 = vld [vmem:[%s246 + $0x30] sm:$0xff]
      %v372 = vld [vmem:[%s246 + $0x38] sm:$0xff]
      %v373 = vld [vmem:[%s246 + $0x40] sm:$0xff]
      %v374 = vld [vmem:[%s246 + $0x48] sm:$0xff]
      %v375 = vld [vmem:[%s246 + $0x50] sm:$0xff]
      %v376 = vld [vmem:[%s246 + $0x58] sm:$0xff]
      %v377 = vld [vmem:[%s246 + $0x60] sm:$0xff]
      %v378 = vld [vmem:[%s246 + $0x68] sm:$0xff]
      %v379 = vld [vmem:[%s246 + $0x70] sm:$0xff]
      %v380 = vld [vmem:[%s246 + $0x78] sm:$0xff]
      %v381 = vld [vmem:[%s246 + $0x80] sm:$0xff]
      %v382 = vld [vmem:[%s246 + $0x88] sm:$0xff]
      %v383 = vld [vmem:[%s246 + $0x90] sm:$0xff]
      %v384 = vld [vmem:[%s246 + $0x98] sm:$0xff]
      %v385 = vld [vmem:[%s246 + $0xa0] sm:$0xff]
      %v386 = vld [vmem:[%s246 + $0xa8] sm:$0xff]
      %v387 = vld [vmem:[%s246 + $0xb0] sm:$0xff]
      %v388 = vld [vmem:[%s246 + $0xb8] sm:$0xff]
      %v389 = vld [vmem:[%s246 + $0xc0] sm:$0xff]
      %v390 = vld [vmem:[%s246 + $0xc8] sm:$0xff]
      %v391 = vld [vmem:[%s246 + $0xd0] sm:$0xff]
      %v392 = vld [vmem:[%s246 + $0xd8] sm:$0xff]
      %v393 = vld [vmem:[%s246 + $0xe0] sm:$0xff]
      %v394 = vld [vmem:[%s246 + $0xe8] sm:$0xff]
      %v395 = vld [vmem:[%s246 + $0xf0] sm:$0xff]
      %v396 = vld [vmem:[%s246 + $0xf8] sm:$0xff]
      %s397 = scalar_lea.vmem [#allocation2], 24
      %398 = vst.msk [vmem:[%s397 + $0x1] sm:$0xff] %vm253, %v365
      %399 = vst.msk [vmem:[%s397 + $0x9] sm:$0xff] %vm253, %v366
      %400 = vst.msk [vmem:[%s397 + $0x19] sm:$0xff] %vm253, %v367
      %401 = vst.msk [vmem:[%s397 + $0x21] sm:$0xff] %vm253, %v368
      %402 = vst.msk [vmem:[%s397 + $0x31] sm:$0xff] %vm253, %v369
      %403 = vst.msk [vmem:[%s397 + $0x39] sm:$0xff] %vm253, %v370
      %404 = vst.msk [vmem:[%s397 + $0x49] sm:$0xff] %vm253, %v371
      %405 = vst.msk [vmem:[%s397 + $0x51] sm:$0xff] %vm253, %v372
      %406 = vst.msk [vmem:[%s397 + $0x61] sm:$0xff] %vm253, %v373
      %407 = vst.msk [vmem:[%s397 + $0x69] sm:$0xff] %vm253, %v374
      %408 = vst.msk [vmem:[%s397 + $0x79] sm:$0xff] %vm253, %v375
      %409 = vst.msk [vmem:[%s397 + $0x81] sm:$0xff] %vm253, %v376
      %410 = vst.msk [vmem:[%s397 + $0x91] sm:$0xff] %vm253, %v377
      %411 = vst.msk [vmem:[%s397 + $0x99] sm:$0xff] %vm253, %v378
      %412 = vst.msk [vmem:[%s397 + $0xa9] sm:$0xff] %vm253, %v379
      %413 = vst.msk [vmem:[%s397 + $0xb1] sm:$0xff] %vm253, %v380
      %414 = vst.msk [vmem:[%s397 + $0xc1] sm:$0xff] %vm253, %v381
      %415 = vst.msk [vmem:[%s397 + $0xc9] sm:$0xff] %vm253, %v382
      %416 = vst.msk [vmem:[%s397 + $0xd9] sm:$0xff] %vm253, %v383
      %417 = vst.msk [vmem:[%s397 + $0xe1] sm:$0xff] %vm253, %v384
      %418 = vst.msk [vmem:[%s397 + $0xf1] sm:$0xff] %vm253, %v385
      %419 = vst.msk [vmem:[%s397 + $0xf9] sm:$0xff] %vm253, %v386
      %420 = vst.msk [vmem:[%s397 + $0x109] sm:$0xff] %vm253, %v387
      %421 = vst.msk [vmem:[%s397 + $0x111] sm:$0xff] %vm253, %v388
      %422 = vst.msk [vmem:[%s397 + $0x121] sm:$0xff] %vm253, %v389
      %423 = vst.msk [vmem:[%s397 + $0x129] sm:$0xff] %vm253, %v390
      %424 = vst.msk [vmem:[%s397 + $0x139] sm:$0xff] %vm253, %v391
      %425 = vst.msk [vmem:[%s397 + $0x141] sm:$0xff] %vm253, %v392
      %426 = vst.msk [vmem:[%s397 + $0x151] sm:$0xff] %vm253, %v393
      %427 = vst.msk [vmem:[%s397 + $0x159] sm:$0xff] %vm253, %v394
      %428 = vst.msk [vmem:[%s397 + $0x169] sm:$0xff] %vm253, %v395
      %429 = vst.msk [vmem:[%s397 + $0x171] sm:$0xff] %vm253, %v396
      %v430 = vld [vmem:[%s1] sm:$0xf]
      %v431 = vld [vmem:[%s1 + $0x4] sm:$0xf]
      %v432 = vld [vmem:[%s1 + $0x8] sm:$0xf]
      %v433 = vld [vmem:[%s1 + $0xc] sm:$0xf]
      %v434 = vld [vmem:[%s1 + $0x10] sm:$0x3]
      %v435 = vld [vmem:[%s3] sm:$0x1]
      %v436 = vld [vmem:[#allocation2] sm:$0xff]
      %v437 = vld [vmem:[#allocation2 + $0x8] sm:$0xff]
      %v438 = vld [vmem:[#allocation2 + $0x18] sm:$0xff]
      %v439 = vld [vmem:[#allocation2 + $0x20] sm:$0xff]
      %v440 = vld [vmem:[#allocation2 + $0x30] sm:$0xff]
      %v441 = vld [vmem:[#allocation2 + $0x38] sm:$0xff]
      %v442 = vld [vmem:[#allocation2 + $0x48] sm:$0xff]
      %v443 = vld [vmem:[#allocation2 + $0x50] sm:$0xff]
      %v444 = vld [vmem:[#allocation2 + $0x60] sm:$0xff]
      %v445 = vld [vmem:[#allocation2 + $0x68] sm:$0xff]
      %v446 = vld [vmem:[#allocation2 + $0x78] sm:$0xff]
      %v447 = vld [vmem:[#allocation2 + $0x80] sm:$0xff]
      %v448 = vld [vmem:[#allocation2 + $0x90] sm:$0xff]
      %v449 = vld [vmem:[#allocation2 + $0x98] sm:$0xff]
      %v450 = vld [vmem:[#allocation2 + $0xa8] sm:$0xff]
      %v451 = vld [vmem:[#allocation2 + $0xb0] sm:$0xff]
      %v452 = vld [vmem:[#allocation2 + $0xc0] sm:$0xff]
      %v453 = vld [vmem:[#allocation2 + $0xc8] sm:$0xff]
      %v454 = vld [vmem:[#allocation2 + $0xd8] sm:$0xff]
      %v455 = vld [vmem:[#allocation2 + $0xe0] sm:$0xff]
      %v456 = vld [vmem:[#allocation2 + $0xf0] sm:$0xff]
      %v457 = vld [vmem:[#allocation2 + $0xf8] sm:$0xff]
      %v458 = vld [vmem:[#allocation2 + $0x108] sm:$0xff]
      %v459 = vld [vmem:[#allocation2 + $0x110] sm:$0xff]
      %v460 = vld [vmem:[#allocation2 + $0x120] sm:$0xff]
      %v461 = vld [vmem:[#allocation2 + $0x128] sm:$0xff]
      %v462 = vld [vmem:[#allocation2 + $0x138] sm:$0xff]
      %v463 = vld [vmem:[#allocation2 + $0x140] sm:$0xff]
      %v464 = vld [vmem:[#allocation2 + $0x150] sm:$0xff]
      %v465 = vld [vmem:[#allocation2 + $0x158] sm:$0xff]
      %v466 = vld [vmem:[#allocation2 + $0x168] sm:$0xff]
      %v467 = vld [vmem:[#allocation2 + $0x170] sm:$0xff]
      %v468 = vld [vmem:[#allocation2 + $0x1] sm:$0xff]
      %v469 = vld [vmem:[#allocation2 + $0x9] sm:$0xff]
      %v470 = vld [vmem:[#allocation2 + $0x19] sm:$0xff]
      %v471 = vld [vmem:[#allocation2 + $0x21] sm:$0xff]
      %v472 = vld [vmem:[#allocation2 + $0x31] sm:$0xff]
      %v473 = vld [vmem:[#allocation2 + $0x39] sm:$0xff]
      %v474 = vld [vmem:[#allocation2 + $0x49] sm:$0xff]
      %v475 = vld [vmem:[#allocation2 + $0x51] sm:$0xff]
      %v476 = vld [vmem:[#allocation2 + $0x61] sm:$0xff]
      %v477 = vld [vmem:[#allocation2 + $0x69] sm:$0xff]
      %v478 = vld [vmem:[#allocation2 + $0x79] sm:$0xff]
      %v479 = vld [vmem:[#allocation2 + $0x81] sm:$0xff]
      %v480 = vld [vmem:[#allocation2 + $0x91] sm:$0xff]
      %v481 = vld [vmem:[#allocation2 + $0x99] sm:$0xff]
      %v482 = vld [vmem:[#allocation2 + $0xa9] sm:$0xff]
      %v483 = vld [vmem:[#allocation2 + $0xb1] sm:$0xff]
      %v484 = vld [vmem:[#allocation2 + $0xc1] sm:$0xff]
      %v485 = vld [vmem:[#allocation2 + $0xc9] sm:$0xff]
      %v486 = vld [vmem:[#allocation2 + $0xd9] sm:$0xff]
      %v487 = vld [vmem:[#allocation2 + $0xe1] sm:$0xff]
      %v488 = vld [vmem:[#allocation2 + $0xf1] sm:$0xff]
      %v489 = vld [vmem:[#allocation2 + $0xf9] sm:$0xff]
      %v490 = vld [vmem:[#allocation2 + $0x109] sm:$0xff]
      %v491 = vld [vmem:[#allocation2 + $0x111] sm:$0xff]
      %v492 = vld [vmem:[#allocation2 + $0x121] sm:$0xff]
      %v493 = vld [vmem:[#allocation2 + $0x129] sm:$0xff]
      %v494 = vld [vmem:[#allocation2 + $0x139] sm:$0xff]
      %v495 = vld [vmem:[#allocation2 + $0x141] sm:$0xff]
      %v496 = vld [vmem:[#allocation2 + $0x151] sm:$0xff]
      %v497 = vld [vmem:[#allocation2 + $0x159] sm:$0xff]
      %v498 = vld [vmem:[#allocation2 + $0x169] sm:$0xff]
      %v499 = vld [vmem:[#allocation2 + $0x171] sm:$0xff]
      %v500 = vld [vmem:[#allocation2 + $0x2] sm:$0xff]
      %v501 = vld [vmem:[#allocation2 + $0xa] sm:$0xff]
      %v502 = vld [vmem:[#allocation2 + $0x1a] sm:$0xff]
      %v503 = vld [vmem:[#allocation2 + $0x22] sm:$0xff]
      %v504 = vld [vmem:[#allocation2 + $0x32] sm:$0xff]
      %v505 = vld [vmem:[#allocation2 + $0x3a] sm:$0xff]
      %v506 = vld [vmem:[#allocation2 + $0x4a] sm:$0xff]
      %v507 = vld [vmem:[#allocation2 + $0x52] sm:$0xff]
      %v508 = vld [vmem:[#allocation2 + $0x62] sm:$0xff]
      %v509 = vld [vmem:[#allocation2 + $0x6a] sm:$0xff]
      %v510 = vld [vmem:[#allocation2 + $0x7a] sm:$0xff]
      %v511 = vld [vmem:[#allocation2 + $0x82] sm:$0xff]
      %v512 = vld [vmem:[#allocation2 + $0x92] sm:$0xff]
      %v513 = vld [vmem:[#allocation2 + $0x9a] sm:$0xff]
      %v514 = vld [vmem:[#allocation2 + $0xaa] sm:$0xff]
      %v515 = vld [vmem:[#allocation2 + $0xb2] sm:$0xff]
      %v516 = vld [vmem:[#allocation2 + $0xc2] sm:$0xff]
      %v517 = vld [vmem:[#allocation2 + $0xca] sm:$0xff]
      %v518 = vld [vmem:[#allocation2 + $0xda] sm:$0xff]
      %v519 = vld [vmem:[#allocation2 + $0xe2] sm:$0xff]
      %v520 = vld [vmem:[#allocation2 + $0xf2] sm:$0xff]
      %v521 = vld [vmem:[#allocation2 + $0xfa] sm:$0xff]
      %v522 = vld [vmem:[#allocation2 + $0x10a] sm:$0xff]
      %v523 = vld [vmem:[#allocation2 + $0x112] sm:$0xff]
      %v524 = vld [vmem:[#allocation2 + $0x122] sm:$0xff]
      %v525 = vld [vmem:[#allocation2 + $0x12a] sm:$0xff]
      %v526 = vld [vmem:[#allocation2 + $0x13a] sm:$0xff]
      %v527 = vld [vmem:[#allocation2 + $0x142] sm:$0xff]
      %v528 = vld [vmem:[#allocation2 + $0x152] sm:$0xff]
      %v529 = vld [vmem:[#allocation2 + $0x15a] sm:$0xff]
      %v530 = vld [vmem:[#allocation2 + $0x16a] sm:$0xff]
      %v531 = vld [vmem:[#allocation2 + $0x172] sm:$0xff]
      %v532 = vld [vmem:[%s397] sm:$0xff]
      %v533 = vld [vmem:[%s397 + $0x8] sm:$0xff]
      %v534 = vld [vmem:[%s397 + $0x18] sm:$0xff]
      %v535 = vld [vmem:[%s397 + $0x20] sm:$0xff]
      %v536 = vld [vmem:[%s397 + $0x30] sm:$0xff]
      %v537 = vld [vmem:[%s397 + $0x38] sm:$0xff]
      %v538 = vld [vmem:[%s397 + $0x48] sm:$0xff]
      %v539 = vld [vmem:[%s397 + $0x50] sm:$0xff]
      %v540 = vld [vmem:[%s397 + $0x60] sm:$0xff]
      %v541 = vld [vmem:[%s397 + $0x68] sm:$0xff]
      %v542 = vld [vmem:[%s397 + $0x78] sm:$0xff]
      %v543 = vld [vmem:[%s397 + $0x80] sm:$0xff]
      %v544 = vld [vmem:[%s397 + $0x90] sm:$0xff]
      %v545 = vld [vmem:[%s397 + $0x98] sm:$0xff]
      %v546 = vld [vmem:[%s397 + $0xa8] sm:$0xff]
      %v547 = vld [vmem:[%s397 + $0xb0] sm:$0xff]
      %v548 = vld [vmem:[%s397 + $0xc0] sm:$0xff]
      %v549 = vld [vmem:[%s397 + $0xc8] sm:$0xff]
      %v550 = vld [vmem:[%s397 + $0xd8] sm:$0xff]
      %v551 = vld [vmem:[%s397 + $0xe0] sm:$0xff]
      %v552 = vld [vmem:[%s397 + $0xf0] sm:$0xff]
      %v553 = vld [vmem:[%s397 + $0xf8] sm:$0xff]
      %v554 = vld [vmem:[%s397 + $0x108] sm:$0xff]
      %v555 = vld [vmem:[%s397 + $0x110] sm:$0xff]
      %v556 = vld [vmem:[%s397 + $0x120] sm:$0xff]
      %v557 = vld [vmem:[%s397 + $0x128] sm:$0xff]
      %v558 = vld [vmem:[%s397 + $0x138] sm:$0xff]
      %v559 = vld [vmem:[%s397 + $0x140] sm:$0xff]
      %v560 = vld [vmem:[%s397 + $0x150] sm:$0xff]
      %v561 = vld [vmem:[%s397 + $0x158] sm:$0xff]
      %v562 = vld [vmem:[%s397 + $0x168] sm:$0xff]
      %v563 = vld [vmem:[%s397 + $0x170] sm:$0xff]
      %v564 = vld [vmem:[%s397 + $0x1] sm:$0xff]
      %v565 = vld [vmem:[%s397 + $0x9] sm:$0xff]
      %v566 = vld [vmem:[%s397 + $0x19] sm:$0xff]
      %v567 = vld [vmem:[%s397 + $0x21] sm:$0xff]
      %v568 = vld [vmem:[%s397 + $0x31] sm:$0xff]
      %v569 = vld [vmem:[%s397 + $0x39] sm:$0xff]
      %v570 = vld [vmem:[%s397 + $0x49] sm:$0xff]
      %v571 = vld [vmem:[%s397 + $0x51] sm:$0xff]
      %v572 = vld [vmem:[%s397 + $0x61] sm:$0xff]
      %v573 = vld [vmem:[%s397 + $0x69] sm:$0xff]
      %v574 = vld [vmem:[%s397 + $0x79] sm:$0xff]
      %v575 = vld [vmem:[%s397 + $0x81] sm:$0xff]
      %v576 = vld [vmem:[%s397 + $0x91] sm:$0xff]
      %v577 = vld [vmem:[%s397 + $0x99] sm:$0xff]
      %v578 = vld [vmem:[%s397 + $0xa9] sm:$0xff]
      %v579 = vld [vmem:[%s397 + $0xb1] sm:$0xff]
      %v580 = vld [vmem:[%s397 + $0xc1] sm:$0xff]
      %v581 = vld [vmem:[%s397 + $0xc9] sm:$0xff]
      %v582 = vld [vmem:[%s397 + $0xd9] sm:$0xff]
      %v583 = vld [vmem:[%s397 + $0xe1] sm:$0xff]
      %v584 = vld [vmem:[%s397 + $0xf1] sm:$0xff]
      %v585 = vld [vmem:[%s397 + $0xf9] sm:$0xff]
      %v586 = vld [vmem:[%s397 + $0x109] sm:$0xff]
      %v587 = vld [vmem:[%s397 + $0x111] sm:$0xff]
      %v588 = vld [vmem:[%s397 + $0x121] sm:$0xff]
      %v589 = vld [vmem:[%s397 + $0x129] sm:$0xff]
      %v590 = vld [vmem:[%s397 + $0x139] sm:$0xff]
      %v591 = vld [vmem:[%s397 + $0x141] sm:$0xff]
      %v592 = vld [vmem:[%s397 + $0x151] sm:$0xff]
      %v593 = vld [vmem:[%s397 + $0x159] sm:$0xff]
      %v594 = vld [vmem:[%s397 + $0x169] sm:$0xff]
      %v595 = vld [vmem:[%s397 + $0x171] sm:$0xff]
      %v596 = vld [vmem:[%s397 + $0x2] sm:$0xff]
      %v597 = vld [vmem:[%s397 + $0xa] sm:$0xff]
      %v598 = vld [vmem:[%s397 + $0x1a] sm:$0xff]
      %v599 = vld [vmem:[%s397 + $0x22] sm:$0xff]
      %v600 = vld [vmem:[%s397 + $0x32] sm:$0xff]
      %v601 = vld [vmem:[%s397 + $0x3a] sm:$0xff]
      %v602 = vld [vmem:[%s397 + $0x4a] sm:$0xff]
      %v603 = vld [vmem:[%s397 + $0x52] sm:$0xff]
      %v604 = vld [vmem:[%s397 + $0x62] sm:$0xff]
      %v605 = vld [vmem:[%s397 + $0x6a] sm:$0xff]
      %v606 = vld [vmem:[%s397 + $0x7a] sm:$0xff]
      %v607 = vld [vmem:[%s397 + $0x82] sm:$0xff]
      %v608 = vld [vmem:[%s397 + $0x92] sm:$0xff]
      %v609 = vld [vmem:[%s397 + $0x9a] sm:$0xff]
      %v610 = vld [vmem:[%s397 + $0xaa] sm:$0xff]
      %v611 = vld [vmem:[%s397 + $0xb2] sm:$0xff]
      %v612 = vld [vmem:[%s397 + $0xc2] sm:$0xff]
      %v613 = vld [vmem:[%s397 + $0xca] sm:$0xff]
      %v614 = vld [vmem:[%s397 + $0xda] sm:$0xff]
      %v615 = vld [vmem:[%s397 + $0xe2] sm:$0xff]
      %v616 = vld [vmem:[%s397 + $0xf2] sm:$0xff]
      %v617 = vld [vmem:[%s397 + $0xfa] sm:$0xff]
      %v618 = vld [vmem:[%s397 + $0x10a] sm:$0xff]
      %v619 = vld [vmem:[%s397 + $0x112] sm:$0xff]
      %v620 = vld [vmem:[%s397 + $0x122] sm:$0xff]
      %v621 = vld [vmem:[%s397 + $0x12a] sm:$0xff]
      %v622 = vld [vmem:[%s397 + $0x13a] sm:$0xff]
      %v623 = vld [vmem:[%s397 + $0x142] sm:$0xff]
      %v624 = vld [vmem:[%s397 + $0x152] sm:$0xff]
      %v625 = vld [vmem:[%s397 + $0x15a] sm:$0xff]
      %v626 = vld [vmem:[%s397 + $0x16a] sm:$0xff]
      %v627 = vld [vmem:[%s397 + $0x172] sm:$0xff]
      %s628 = scalar_lea.vmem [#allocation2], 48
      %v629 = vld [vmem:[%s628] sm:$0xff]
      %v630 = vld [vmem:[%s628 + $0x8] sm:$0xff]
      %v631 = vld [vmem:[%s628 + $0x18] sm:$0xff]
      %v632 = vld [vmem:[%s628 + $0x20] sm:$0xff]
      %v633 = vld [vmem:[%s628 + $0x30] sm:$0xff]
      %v634 = vld [vmem:[%s628 + $0x38] sm:$0xff]
      %v635 = vld [vmem:[%s628 + $0x48] sm:$0xff]
      %v636 = vld [vmem:[%s628 + $0x50] sm:$0xff]
      %v637 = vld [vmem:[%s628 + $0x60] sm:$0xff]
      %v638 = vld [vmem:[%s628 + $0x68] sm:$0xff]
      %v639 = vld [vmem:[%s628 + $0x78] sm:$0xff]
      %v640 = vld [vmem:[%s628 + $0x80] sm:$0xff]
      %v641 = vld [vmem:[%s628 + $0x90] sm:$0xff]
      %v642 = vld [vmem:[%s628 + $0x98] sm:$0xff]
      %v643 = vld [vmem:[%s628 + $0xa8] sm:$0xff]
      %v644 = vld [vmem:[%s628 + $0xb0] sm:$0xff]
      %v645 = vld [vmem:[%s628 + $0xc0] sm:$0xff]
      %v646 = vld [vmem:[%s628 + $0xc8] sm:$0xff]
      %v647 = vld [vmem:[%s628 + $0xd8] sm:$0xff]
      %v648 = vld [vmem:[%s628 + $0xe0] sm:$0xff]
      %v649 = vld [vmem:[%s628 + $0xf0] sm:$0xff]
      %v650 = vld [vmem:[%s628 + $0xf8] sm:$0xff]
      %v651 = vld [vmem:[%s628 + $0x108] sm:$0xff]
      %v652 = vld [vmem:[%s628 + $0x110] sm:$0xff]
      %v653 = vld [vmem:[%s628 + $0x120] sm:$0xff]
      %v654 = vld [vmem:[%s628 + $0x128] sm:$0xff]
      %v655 = vld [vmem:[%s628 + $0x138] sm:$0xff]
      %v656 = vld [vmem:[%s628 + $0x140] sm:$0xff]
      %v657 = vld [vmem:[%s628 + $0x150] sm:$0xff]
      %v658 = vld [vmem:[%s628 + $0x158] sm:$0xff]
      %v659 = vld [vmem:[%s628 + $0x168] sm:$0xff]
      %v660 = vld [vmem:[%s628 + $0x170] sm:$0xff]
      %v661 = vld [vmem:[%s628 + $0x1] sm:$0xff]
      %v662 = vld [vmem:[%s628 + $0x9] sm:$0xff]
      %v663 = vld [vmem:[%s628 + $0x19] sm:$0xff]
      %v664 = vld [vmem:[%s628 + $0x21] sm:$0xff]
      %v665 = vld [vmem:[%s628 + $0x31] sm:$0xff]
      %v666 = vld [vmem:[%s628 + $0x39] sm:$0xff]
      %v667 = vld [vmem:[%s628 + $0x49] sm:$0xff]
      %v668 = vld [vmem:[%s628 + $0x51] sm:$0xff]
      %v669 = vld [vmem:[%s628 + $0x61] sm:$0xff]
      %v670 = vld [vmem:[%s628 + $0x69] sm:$0xff]
      %v671 = vld [vmem:[%s628 + $0x79] sm:$0xff]
      %v672 = vld [vmem:[%s628 + $0x81] sm:$0xff]
      %v673 = vld [vmem:[%s628 + $0x91] sm:$0xff]
      %v674 = vld [vmem:[%s628 + $0x99] sm:$0xff]
      %v675 = vld [vmem:[%s628 + $0xa9] sm:$0xff]
      %v676 = vld [vmem:[%s628 + $0xb1] sm:$0xff]
      %v677 = vld [vmem:[%s628 + $0xc1] sm:$0xff]
      %v678 = vld [vmem:[%s628 + $0xc9] sm:$0xff]
      %v679 = vld [vmem:[%s628 + $0xd9] sm:$0xff]
      %v680 = vld [vmem:[%s628 + $0xe1] sm:$0xff]
      %v681 = vld [vmem:[%s628 + $0xf1] sm:$0xff]
      %v682 = vld [vmem:[%s628 + $0xf9] sm:$0xff]
      %v683 = vld [vmem:[%s628 + $0x109] sm:$0xff]
      %v684 = vld [vmem:[%s628 + $0x111] sm:$0xff]
      %v685 = vld [vmem:[%s628 + $0x121] sm:$0xff]
      %v686 = vld [vmem:[%s628 + $0x129] sm:$0xff]
      %v687 = vld [vmem:[%s628 + $0x139] sm:$0xff]
      %v688 = vld [vmem:[%s628 + $0x141] sm:$0xff]
      %v689 = vld [vmem:[%s628 + $0x151] sm:$0xff]
      %v690 = vld [vmem:[%s628 + $0x159] sm:$0xff]
      %v691 = vld [vmem:[%s628 + $0x169] sm:$0xff]
      %v692 = vld [vmem:[%s628 + $0x171] sm:$0xff]
      %v693 = vld [vmem:[%s628 + $0x2] sm:$0xff]
      %v694 = vld [vmem:[%s628 + $0xa] sm:$0xff]
      %v695 = vld [vmem:[%s628 + $0x1a] sm:$0xff]
      %v696 = vld [vmem:[%s628 + $0x22] sm:$0xff]
      %v697 = vld [vmem:[%s628 + $0x32] sm:$0xff]
      %v698 = vld [vmem:[%s628 + $0x3a] sm:$0xff]
      %v699 = vld [vmem:[%s628 + $0x4a] sm:$0xff]
      %v700 = vld [vmem:[%s628 + $0x52] sm:$0xff]
      %v701 = vld [vmem:[%s628 + $0x62] sm:$0xff]
      %v702 = vld [vmem:[%s628 + $0x6a] sm:$0xff]
      %v703 = vld [vmem:[%s628 + $0x7a] sm:$0xff]
      %v704 = vld [vmem:[%s628 + $0x82] sm:$0xff]
      %v705 = vld [vmem:[%s628 + $0x92] sm:$0xff]
      %v706 = vld [vmem:[%s628 + $0x9a] sm:$0xff]
      %v707 = vld [vmem:[%s628 + $0xaa] sm:$0xff]
      %v708 = vld [vmem:[%s628 + $0xb2] sm:$0xff]
      %v709 = vld [vmem:[%s628 + $0xc2] sm:$0xff]
      %v710 = vld [vmem:[%s628 + $0xca] sm:$0xff]
      %v711 = vld [vmem:[%s628 + $0xda] sm:$0xff]
      %v712 = vld [vmem:[%s628 + $0xe2] sm:$0xff]
      %v713 = vld [vmem:[%s628 + $0xf2] sm:$0xff]
      %v714 = vld [vmem:[%s628 + $0xfa] sm:$0xff]
      %v715 = vld [vmem:[%s628 + $0x10a] sm:$0xff]
      %v716 = vld [vmem:[%s628 + $0x112] sm:$0xff]
      %v717 = vld [vmem:[%s628 + $0x122] sm:$0xff]
      %v718 = vld [vmem:[%s628 + $0x12a] sm:$0xff]
      %v719 = vld [vmem:[%s628 + $0x13a] sm:$0xff]
      %v720 = vld [vmem:[%s628 + $0x142] sm:$0xff]
      %v721 = vld [vmem:[%s628 + $0x152] sm:$0xff]
      %v722 = vld [vmem:[%s628 + $0x15a] sm:$0xff]
      %v723 = vld [vmem:[%s628 + $0x16a] sm:$0xff]
      %v724 = vld [vmem:[%s628 + $0x172] sm:$0xff]
      %757 = vrot.lane.b32.xlu0 %v468, 4
      %v758 = vpop.permute.xlu0 %757
      %759 = vrot.lane.b32.xlu0 %v469, 4
      %v760 = vpop.permute.xlu0 %759
      %761 = vrot.lane.b32.xlu0 %v470, 4
      %v762 = vpop.permute.xlu0 %761
      %763 = vrot.lane.b32.xlu0 %v471, 4
      %v764 = vpop.permute.xlu0 %763
      %765 = vrot.lane.b32.xlu0 %v472, 4
      %v766 = vpop.permute.xlu0 %765
      %767 = vrot.lane.b32.xlu0 %v473, 4
      %v768 = vpop.permute.xlu0 %767
      %769 = vrot.lane.b32.xlu0 %v474, 4
      %v770 = vpop.permute.xlu0 %769
      %771 = vrot.lane.b32.xlu0 %v475, 4
      %v772 = vpop.permute.xlu0 %771
      %773 = vrot.lane.b32.xlu0 %v476, 4
      %v774 = vpop.permute.xlu0 %773
      %775 = vrot.lane.b32.xlu0 %v477, 4
      %v776 = vpop.permute.xlu0 %775
      %777 = vrot.lane.b32.xlu0 %v478, 4
      %v778 = vpop.permute.xlu0 %777
      %779 = vrot.lane.b32.xlu0 %v479, 4
      %v780 = vpop.permute.xlu0 %779
      %781 = vrot.lane.b32.xlu0 %v480, 4
      %v782 = vpop.permute.xlu0 %781
      %783 = vrot.lane.b32.xlu0 %v481, 4
      %v784 = vpop.permute.xlu0 %783
      %785 = vrot.lane.b32.xlu0 %v482, 4
      %v786 = vpop.permute.xlu0 %785
      %787 = vrot.lane.b32.xlu0 %v483, 4
      %v788 = vpop.permute.xlu0 %787
      %789 = vrot.lane.b32.xlu0 %v484, 4
      %v790 = vpop.permute.xlu0 %789
      %791 = vrot.lane.b32.xlu0 %v485, 4
      %v792 = vpop.permute.xlu0 %791
      %793 = vrot.lane.b32.xlu0 %v486, 4
      %v794 = vpop.permute.xlu0 %793
      %795 = vrot.lane.b32.xlu0 %v487, 4
      %v796 = vpop.permute.xlu0 %795
      %797 = vrot.lane.b32.xlu0 %v488, 4
      %v798 = vpop.permute.xlu0 %797
      %799 = vrot.lane.b32.xlu0 %v489, 4
      %v800 = vpop.permute.xlu0 %799
      %801 = vrot.lane.b32.xlu0 %v490, 4
      %v802 = vpop.permute.xlu0 %801
      %803 = vrot.lane.b32.xlu0 %v491, 4
      %v804 = vpop.permute.xlu0 %803
      %805 = vrot.lane.b32.xlu0 %v492, 4
      %v806 = vpop.permute.xlu0 %805
      %807 = vrot.lane.b32.xlu0 %v493, 4
      %v808 = vpop.permute.xlu0 %807
      %809 = vrot.lane.b32.xlu0 %v494, 4
      %v810 = vpop.permute.xlu0 %809
      %811 = vrot.lane.b32.xlu0 %v495, 4
      %v812 = vpop.permute.xlu0 %811
      %813 = vrot.lane.b32.xlu0 %v496, 4
      %v814 = vpop.permute.xlu0 %813
      %815 = vrot.lane.b32.xlu0 %v497, 4
      %v816 = vpop.permute.xlu0 %815
      %817 = vrot.lane.b32.xlu0 %v498, 4
      %v818 = vpop.permute.xlu0 %817
      %819 = vrot.lane.b32.xlu0 %v499, 4
      %v820 = vpop.permute.xlu0 %819
      %885 = vrot.lane.b32.xlu0 %v500, 8
      %v886 = vpop.permute.xlu0 %885
      %887 = vrot.lane.b32.xlu0 %v501, 8
      %v888 = vpop.permute.xlu0 %887
      %889 = vrot.lane.b32.xlu0 %v502, 8
      %v890 = vpop.permute.xlu0 %889
      %891 = vrot.lane.b32.xlu0 %v503, 8
      %v892 = vpop.permute.xlu0 %891
      %893 = vrot.lane.b32.xlu0 %v504, 8
      %v894 = vpop.permute.xlu0 %893
      %895 = vrot.lane.b32.xlu0 %v505, 8
      %v896 = vpop.permute.xlu0 %895
      %897 = vrot.lane.b32.xlu0 %v506, 8
      %v898 = vpop.permute.xlu0 %897
      %899 = vrot.lane.b32.xlu0 %v507, 8
      %v900 = vpop.permute.xlu0 %899
      %901 = vrot.lane.b32.xlu0 %v508, 8
      %v902 = vpop.permute.xlu0 %901
      %903 = vrot.lane.b32.xlu0 %v509, 8
      %v904 = vpop.permute.xlu0 %903
      %905 = vrot.lane.b32.xlu0 %v510, 8
      %v906 = vpop.permute.xlu0 %905
      %907 = vrot.lane.b32.xlu0 %v511, 8
      %v908 = vpop.permute.xlu0 %907
      %909 = vrot.lane.b32.xlu0 %v512, 8
      %v910 = vpop.permute.xlu0 %909
      %911 = vrot.lane.b32.xlu0 %v513, 8
      %v912 = vpop.permute.xlu0 %911
      %913 = vrot.lane.b32.xlu0 %v514, 8
      %v914 = vpop.permute.xlu0 %913
      %915 = vrot.lane.b32.xlu0 %v515, 8
      %v916 = vpop.permute.xlu0 %915
      %917 = vrot.lane.b32.xlu0 %v516, 8
      %v918 = vpop.permute.xlu0 %917
      %919 = vrot.lane.b32.xlu0 %v517, 8
      %v920 = vpop.permute.xlu0 %919
      %921 = vrot.lane.b32.xlu0 %v518, 8
      %v922 = vpop.permute.xlu0 %921
      %923 = vrot.lane.b32.xlu0 %v519, 8
      %v924 = vpop.permute.xlu0 %923
      %925 = vrot.lane.b32.xlu0 %v520, 8
      %v926 = vpop.permute.xlu0 %925
      %927 = vrot.lane.b32.xlu0 %v521, 8
      %v928 = vpop.permute.xlu0 %927
      %929 = vrot.lane.b32.xlu0 %v522, 8
      %v930 = vpop.permute.xlu0 %929
      %931 = vrot.lane.b32.xlu0 %v523, 8
      %v932 = vpop.permute.xlu0 %931
      %933 = vrot.lane.b32.xlu0 %v524, 8
      %v934 = vpop.permute.xlu0 %933
      %935 = vrot.lane.b32.xlu0 %v525, 8
      %v936 = vpop.permute.xlu0 %935
      %937 = vrot.lane.b32.xlu0 %v526, 8
      %v938 = vpop.permute.xlu0 %937
      %939 = vrot.lane.b32.xlu0 %v527, 8
      %v940 = vpop.permute.xlu0 %939
      %941 = vrot.lane.b32.xlu0 %v528, 8
      %v942 = vpop.permute.xlu0 %941
      %943 = vrot.lane.b32.xlu0 %v529, 8
      %v944 = vpop.permute.xlu0 %943
      %945 = vrot.lane.b32.xlu0 %v530, 8
      %v946 = vpop.permute.xlu0 %945
      %947 = vrot.lane.b32.xlu0 %v531, 8
      %v948 = vpop.permute.xlu0 %947
      %1013 = vrot.lane.b32.xlu0 %v532, 12
      %v1014 = vpop.permute.xlu0 %1013
      %1015 = vrot.lane.b32.xlu0 %v533, 12
      %v1016 = vpop.permute.xlu0 %1015
      %1017 = vrot.lane.b32.xlu0 %v534, 12
      %v1018 = vpop.permute.xlu0 %1017
      %1019 = vrot.lane.b32.xlu0 %v535, 12
      %v1020 = vpop.permute.xlu0 %1019
      %1021 = vrot.lane.b32.xlu0 %v536, 12
      %v1022 = vpop.permute.xlu0 %1021
      %1023 = vrot.lane.b32.xlu0 %v537, 12
      %v1024 = vpop.permute.xlu0 %1023
      %1025 = vrot.lane.b32.xlu0 %v538, 12
      %v1026 = vpop.permute.xlu0 %1025
      %1027 = vrot.lane.b32.xlu0 %v539, 12
      %v1028 = vpop.permute.xlu0 %1027
      %1029 = vrot.lane.b32.xlu0 %v540, 12
      %v1030 = vpop.permute.xlu0 %1029
      %1031 = vrot.lane.b32.xlu0 %v541, 12
      %v1032 = vpop.permute.xlu0 %1031
      %1033 = vrot.lane.b32.xlu0 %v542, 12
      %v1034 = vpop.permute.xlu0 %1033
      %1035 = vrot.lane.b32.xlu0 %v543, 12
      %v1036 = vpop.permute.xlu0 %1035
      %1037 = vrot.lane.b32.xlu0 %v544, 12
      %v1038 = vpop.permute.xlu0 %1037
      %1039 = vrot.lane.b32.xlu0 %v545, 12
      %v1040 = vpop.permute.xlu0 %1039
      %1041 = vrot.lane.b32.xlu0 %v546, 12
      %v1042 = vpop.permute.xlu0 %1041
      %1043 = vrot.lane.b32.xlu0 %v547, 12
      %v1044 = vpop.permute.xlu0 %1043
      %1045 = vrot.lane.b32.xlu0 %v548, 12
      %v1046 = vpop.permute.xlu0 %1045
      %1047 = vrot.lane.b32.xlu0 %v549, 12
      %v1048 = vpop.permute.xlu0 %1047
      %1049 = vrot.lane.b32.xlu0 %v550, 12
      %v1050 = vpop.permute.xlu0 %1049
      %1051 = vrot.lane.b32.xlu0 %v551, 12
      %v1052 = vpop.permute.xlu0 %1051
      %1053 = vrot.lane.b32.xlu0 %v552, 12
      %v1054 = vpop.permute.xlu0 %1053
      %1055 = vrot.lane.b32.xlu0 %v553, 12
      %v1056 = vpop.permute.xlu0 %1055
      %1057 = vrot.lane.b32.xlu0 %v554, 12
      %v1058 = vpop.permute.xlu0 %1057
      %1059 = vrot.lane.b32.xlu0 %v555, 12
      %v1060 = vpop.permute.xlu0 %1059
      %1061 = vrot.lane.b32.xlu0 %v556, 12
      %v1062 = vpop.permute.xlu0 %1061
      %1063 = vrot.lane.b32.xlu0 %v557, 12
      %v1064 = vpop.permute.xlu0 %1063
      %1065 = vrot.lane.b32.xlu0 %v558, 12
      %v1066 = vpop.permute.xlu0 %1065
      %1067 = vrot.lane.b32.xlu0 %v559, 12
      %v1068 = vpop.permute.xlu0 %1067
      %1069 = vrot.lane.b32.xlu0 %v560, 12
      %v1070 = vpop.permute.xlu0 %1069
      %1071 = vrot.lane.b32.xlu0 %v561, 12
      %v1072 = vpop.permute.xlu0 %1071
      %1073 = vrot.lane.b32.xlu0 %v562, 12
      %v1074 = vpop.permute.xlu0 %1073
      %1075 = vrot.lane.b32.xlu0 %v563, 12
      %v1076 = vpop.permute.xlu0 %1075
      %1141 = vrot.lane.b32.xlu0 %v564, 16
      %v1142 = vpop.permute.xlu0 %1141
      %1143 = vrot.lane.b32.xlu0 %v565, 16
      %v1144 = vpop.permute.xlu0 %1143
      %1145 = vrot.lane.b32.xlu0 %v566, 16
      %v1146 = vpop.permute.xlu0 %1145
      %1147 = vrot.lane.b32.xlu0 %v567, 16
      %v1148 = vpop.permute.xlu0 %1147
      %1149 = vrot.lane.b32.xlu0 %v568, 16
      %v1150 = vpop.permute.xlu0 %1149
      %1151 = vrot.lane.b32.xlu0 %v569, 16
      %v1152 = vpop.permute.xlu0 %1151
      %1153 = vrot.lane.b32.xlu0 %v570, 16
      %v1154 = vpop.permute.xlu0 %1153
      %1155 = vrot.lane.b32.xlu0 %v571, 16
      %v1156 = vpop.permute.xlu0 %1155
      %1157 = vrot.lane.b32.xlu0 %v572, 16
      %v1158 = vpop.permute.xlu0 %1157
      %1159 = vrot.lane.b32.xlu0 %v573, 16
      %v1160 = vpop.permute.xlu0 %1159
      %1161 = vrot.lane.b32.xlu0 %v574, 16
      %v1162 = vpop.permute.xlu0 %1161
      %1163 = vrot.lane.b32.xlu0 %v575, 16
      %v1164 = vpop.permute.xlu0 %1163
      %1165 = vrot.lane.b32.xlu0 %v576, 16
      %v1166 = vpop.permute.xlu0 %1165
      %1167 = vrot.lane.b32.xlu0 %v577, 16
      %v1168 = vpop.permute.xlu0 %1167
      %1169 = vrot.lane.b32.xlu0 %v578, 16
      %v1170 = vpop.permute.xlu0 %1169
      %1171 = vrot.lane.b32.xlu0 %v579, 16
      %v1172 = vpop.permute.xlu0 %1171
      %1173 = vrot.lane.b32.xlu0 %v580, 16
      %v1174 = vpop.permute.xlu0 %1173
      %1175 = vrot.lane.b32.xlu0 %v581, 16
      %v1176 = vpop.permute.xlu0 %1175
      %1177 = vrot.lane.b32.xlu0 %v582, 16
      %v1178 = vpop.permute.xlu0 %1177
      %1179 = vrot.lane.b32.xlu0 %v583, 16
      %v1180 = vpop.permute.xlu0 %1179
      %1181 = vrot.lane.b32.xlu0 %v584, 16
      %v1182 = vpop.permute.xlu0 %1181
      %1183 = vrot.lane.b32.xlu0 %v585, 16
      %v1184 = vpop.permute.xlu0 %1183
      %1185 = vrot.lane.b32.xlu0 %v586, 16
      %v1186 = vpop.permute.xlu0 %1185
      %1187 = vrot.lane.b32.xlu0 %v587, 16
      %v1188 = vpop.permute.xlu0 %1187
      %1189 = vrot.lane.b32.xlu0 %v588, 16
      %v1190 = vpop.permute.xlu0 %1189
      %1191 = vrot.lane.b32.xlu0 %v589, 16
      %v1192 = vpop.permute.xlu0 %1191
      %1193 = vrot.lane.b32.xlu0 %v590, 16
      %v1194 = vpop.permute.xlu0 %1193
      %1195 = vrot.lane.b32.xlu0 %v591, 16
      %v1196 = vpop.permute.xlu0 %1195
      %1197 = vrot.lane.b32.xlu0 %v592, 16
      %v1198 = vpop.permute.xlu0 %1197
      %1199 = vrot.lane.b32.xlu0 %v593, 16
      %v1200 = vpop.permute.xlu0 %1199
      %1201 = vrot.lane.b32.xlu0 %v594, 16
      %v1202 = vpop.permute.xlu0 %1201
      %1203 = vrot.lane.b32.xlu0 %v595, 16
      %v1204 = vpop.permute.xlu0 %1203
      %1269 = vrot.lane.b32.xlu0 %v596, 20
      %v1270 = vpop.permute.xlu0 %1269
      %1271 = vrot.lane.b32.xlu0 %v597, 20
      %v1272 = vpop.permute.xlu0 %1271
      %1273 = vrot.lane.b32.xlu0 %v598, 20
      %v1274 = vpop.permute.xlu0 %1273
      %1275 = vrot.lane.b32.xlu0 %v599, 20
      %v1276 = vpop.permute.xlu0 %1275
      %1277 = vrot.lane.b32.xlu0 %v600, 20
      %v1278 = vpop.permute.xlu0 %1277
      %1279 = vrot.lane.b32.xlu0 %v601, 20
      %v1280 = vpop.permute.xlu0 %1279
      %1281 = vrot.lane.b32.xlu0 %v602, 20
      %v1282 = vpop.permute.xlu0 %1281
      %1283 = vrot.lane.b32.xlu0 %v603, 20
      %v1284 = vpop.permute.xlu0 %1283
      %1285 = vrot.lane.b32.xlu0 %v604, 20
      %v1286 = vpop.permute.xlu0 %1285
      %1287 = vrot.lane.b32.xlu0 %v605, 20
      %v1288 = vpop.permute.xlu0 %1287
      %1289 = vrot.lane.b32.xlu0 %v606, 20
      %v1290 = vpop.permute.xlu0 %1289
      %1291 = vrot.lane.b32.xlu0 %v607, 20
      %v1292 = vpop.permute.xlu0 %1291
      %1293 = vrot.lane.b32.xlu0 %v608, 20
      %v1294 = vpop.permute.xlu0 %1293
      %1295 = vrot.lane.b32.xlu0 %v609, 20
      %v1296 = vpop.permute.xlu0 %1295
      %1297 = vrot.lane.b32.xlu0 %v610, 20
      %v1298 = vpop.permute.xlu0 %1297
      %1299 = vrot.lane.b32.xlu0 %v611, 20
      %v1300 = vpop.permute.xlu0 %1299
      %1301 = vrot.lane.b32.xlu0 %v612, 20
      %v1302 = vpop.permute.xlu0 %1301
      %1303 = vrot.lane.b32.xlu0 %v613, 20
      %v1304 = vpop.permute.xlu0 %1303
      %1305 = vrot.lane.b32.xlu0 %v614, 20
      %v1306 = vpop.permute.xlu0 %1305
      %1307 = vrot.lane.b32.xlu0 %v615, 20
      %v1308 = vpop.permute.xlu0 %1307
      %1309 = vrot.lane.b32.xlu0 %v616, 20
      %v1310 = vpop.permute.xlu0 %1309
      %1311 = vrot.lane.b32.xlu0 %v617, 20
      %v1312 = vpop.permute.xlu0 %1311
      %1313 = vrot.lane.b32.xlu0 %v618, 20
      %v1314 = vpop.permute.xlu0 %1313
      %1315 = vrot.lane.b32.xlu0 %v619, 20
      %v1316 = vpop.permute.xlu0 %1315
      %1317 = vrot.lane.b32.xlu0 %v620, 20
      %v1318 = vpop.permute.xlu0 %1317
      %1319 = vrot.lane.b32.xlu0 %v621, 20
      %v1320 = vpop.permute.xlu0 %1319
      %1321 = vrot.lane.b32.xlu0 %v622, 20
      %v1322 = vpop.permute.xlu0 %1321
      %1323 = vrot.lane.b32.xlu0 %v623, 20
      %v1324 = vpop.permute.xlu0 %1323
      %1325 = vrot.lane.b32.xlu0 %v624, 20
      %v1326 = vpop.permute.xlu0 %1325
      %1327 = vrot.lane.b32.xlu0 %v625, 20
      %v1328 = vpop.permute.xlu0 %1327
      %1329 = vrot.lane.b32.xlu0 %v626, 20
      %v1330 = vpop.permute.xlu0 %1329
      %1331 = vrot.lane.b32.xlu0 %v627, 20
      %v1332 = vpop.permute.xlu0 %1331
      %1397 = vrot.lane.b32.xlu0 %v629, 24
      %v1398 = vpop.permute.xlu0 %1397
      %1399 = vrot.lane.b32.xlu0 %v630, 24
      %v1400 = vpop.permute.xlu0 %1399
      %1401 = vrot.lane.b32.xlu0 %v631, 24
      %v1402 = vpop.permute.xlu0 %1401
      %1403 = vrot.lane.b32.xlu0 %v632, 24
      %v1404 = vpop.permute.xlu0 %1403
      %1405 = vrot.lane.b32.xlu0 %v633, 24
      %v1406 = vpop.permute.xlu0 %1405
      %1407 = vrot.lane.b32.xlu0 %v634, 24
      %v1408 = vpop.permute.xlu0 %1407
      %1409 = vrot.lane.b32.xlu0 %v635, 24
      %v1410 = vpop.permute.xlu0 %1409
      %1411 = vrot.lane.b32.xlu0 %v636, 24
      %v1412 = vpop.permute.xlu0 %1411
      %1413 = vrot.lane.b32.xlu0 %v637, 24
      %v1414 = vpop.permute.xlu0 %1413
      %1415 = vrot.lane.b32.xlu0 %v638, 24
      %v1416 = vpop.permute.xlu0 %1415
      %1417 = vrot.lane.b32.xlu0 %v639, 24
      %v1418 = vpop.permute.xlu0 %1417
      %1419 = vrot.lane.b32.xlu0 %v640, 24
      %v1420 = vpop.permute.xlu0 %1419
      %1421 = vrot.lane.b32.xlu0 %v641, 24
      %v1422 = vpop.permute.xlu0 %1421
      %1423 = vrot.lane.b32.xlu0 %v642, 24
      %v1424 = vpop.permute.xlu0 %1423
      %1425 = vrot.lane.b32.xlu0 %v643, 24
      %v1426 = vpop.permute.xlu0 %1425
      %1427 = vrot.lane.b32.xlu0 %v644, 24
      %v1428 = vpop.permute.xlu0 %1427
      %1429 = vrot.lane.b32.xlu0 %v645, 24
      %v1430 = vpop.permute.xlu0 %1429
      %1431 = vrot.lane.b32.xlu0 %v646, 24
      %v1432 = vpop.permute.xlu0 %1431
      %1433 = vrot.lane.b32.xlu0 %v647, 24
      %v1434 = vpop.permute.xlu0 %1433
      %1435 = vrot.lane.b32.xlu0 %v648, 24
      %v1436 = vpop.permute.xlu0 %1435
      %1437 = vrot.lane.b32.xlu0 %v649, 24
      %v1438 = vpop.permute.xlu0 %1437
      %1439 = vrot.lane.b32.xlu0 %v650, 24
      %v1440 = vpop.permute.xlu0 %1439
      %1441 = vrot.lane.b32.xlu0 %v651, 24
      %v1442 = vpop.permute.xlu0 %1441
      %1443 = vrot.lane.b32.xlu0 %v652, 24
      %v1444 = vpop.permute.xlu0 %1443
      %1445 = vrot.lane.b32.xlu0 %v653, 24
      %v1446 = vpop.permute.xlu0 %1445
      %1447 = vrot.lane.b32.xlu0 %v654, 24
      %v1448 = vpop.permute.xlu0 %1447
      %1449 = vrot.lane.b32.xlu0 %v655, 24
      %v1450 = vpop.permute.xlu0 %1449
      %1451 = vrot.lane.b32.xlu0 %v656, 24
      %v1452 = vpop.permute.xlu0 %1451
      %1453 = vrot.lane.b32.xlu0 %v657, 24
      %v1454 = vpop.permute.xlu0 %1453
      %1455 = vrot.lane.b32.xlu0 %v658, 24
      %v1456 = vpop.permute.xlu0 %1455
      %1457 = vrot.lane.b32.xlu0 %v659, 24
      %v1458 = vpop.permute.xlu0 %1457
      %1459 = vrot.lane.b32.xlu0 %v660, 24
      %v1460 = vpop.permute.xlu0 %1459
      %1525 = vrot.lane.b32.xlu0 %v661, 28
      %v1526 = vpop.permute.xlu0 %1525
      %1527 = vrot.lane.b32.xlu0 %v662, 28
      %v1528 = vpop.permute.xlu0 %1527
      %1529 = vrot.lane.b32.xlu0 %v663, 28
      %v1530 = vpop.permute.xlu0 %1529
      %1531 = vrot.lane.b32.xlu0 %v664, 28
      %v1532 = vpop.permute.xlu0 %1531
      %1533 = vrot.lane.b32.xlu0 %v665, 28
      %v1534 = vpop.permute.xlu0 %1533
      %1535 = vrot.lane.b32.xlu0 %v666, 28
      %v1536 = vpop.permute.xlu0 %1535
      %1537 = vrot.lane.b32.xlu0 %v667, 28
      %v1538 = vpop.permute.xlu0 %1537
      %1539 = vrot.lane.b32.xlu0 %v668, 28
      %v1540 = vpop.permute.xlu0 %1539
      %1541 = vrot.lane.b32.xlu0 %v669, 28
      %v1542 = vpop.permute.xlu0 %1541
      %1543 = vrot.lane.b32.xlu0 %v670, 28
      %v1544 = vpop.permute.xlu0 %1543
      %1545 = vrot.lane.b32.xlu0 %v671, 28
      %v1546 = vpop.permute.xlu0 %1545
      %1547 = vrot.lane.b32.xlu0 %v672, 28
      %v1548 = vpop.permute.xlu0 %1547
      %1549 = vrot.lane.b32.xlu0 %v673, 28
      %v1550 = vpop.permute.xlu0 %1549
      %1551 = vrot.lane.b32.xlu0 %v674, 28
      %v1552 = vpop.permute.xlu0 %1551
      %1553 = vrot.lane.b32.xlu0 %v675, 28
      %v1554 = vpop.permute.xlu0 %1553
      %1555 = vrot.lane.b32.xlu0 %v676, 28
      %v1556 = vpop.permute.xlu0 %1555
      %1557 = vrot.lane.b32.xlu0 %v677, 28
      %v1558 = vpop.permute.xlu0 %1557
      %1559 = vrot.lane.b32.xlu0 %v678, 28
      %v1560 = vpop.permute.xlu0 %1559
      %1561 = vrot.lane.b32.xlu0 %v679, 28
      %v1562 = vpop.permute.xlu0 %1561
      %1563 = vrot.lane.b32.xlu0 %v680, 28
      %v1564 = vpop.permute.xlu0 %1563
      %1565 = vrot.lane.b32.xlu0 %v681, 28
      %v1566 = vpop.permute.xlu0 %1565
      %1567 = vrot.lane.b32.xlu0 %v682, 28
      %v1568 = vpop.permute.xlu0 %1567
      %1569 = vrot.lane.b32.xlu0 %v683, 28
      %v1570 = vpop.permute.xlu0 %1569
      %1571 = vrot.lane.b32.xlu0 %v684, 28
      %v1572 = vpop.permute.xlu0 %1571
      %1573 = vrot.lane.b32.xlu0 %v685, 28
      %v1574 = vpop.permute.xlu0 %1573
      %1575 = vrot.lane.b32.xlu0 %v686, 28
      %v1576 = vpop.permute.xlu0 %1575
      %1577 = vrot.lane.b32.xlu0 %v687, 28
      %v1578 = vpop.permute.xlu0 %1577
      %1579 = vrot.lane.b32.xlu0 %v688, 28
      %v1580 = vpop.permute.xlu0 %1579
      %1581 = vrot.lane.b32.xlu0 %v689, 28
      %v1582 = vpop.permute.xlu0 %1581
      %1583 = vrot.lane.b32.xlu0 %v690, 28
      %v1584 = vpop.permute.xlu0 %1583
      %1585 = vrot.lane.b32.xlu0 %v691, 28
      %v1586 = vpop.permute.xlu0 %1585
      %1587 = vrot.lane.b32.xlu0 %v692, 28
      %v1588 = vpop.permute.xlu0 %1587
      %1653 = vrot.lane.b32.xlu0 %v693, 32
      %v1654 = vpop.permute.xlu0 %1653
      %1655 = vrot.lane.b32.xlu0 %v694, 32
      %v1656 = vpop.permute.xlu0 %1655
      %1657 = vrot.lane.b32.xlu0 %v695, 32
      %v1658 = vpop.permute.xlu0 %1657
      %1659 = vrot.lane.b32.xlu0 %v696, 32
      %v1660 = vpop.permute.xlu0 %1659
      %1661 = vrot.lane.b32.xlu0 %v697, 32
      %v1662 = vpop.permute.xlu0 %1661
      %1663 = vrot.lane.b32.xlu0 %v698, 32
      %v1664 = vpop.permute.xlu0 %1663
      %1665 = vrot.lane.b32.xlu0 %v699, 32
      %v1666 = vpop.permute.xlu0 %1665
      %1667 = vrot.lane.b32.xlu0 %v700, 32
      %v1668 = vpop.permute.xlu0 %1667
      %1669 = vrot.lane.b32.xlu0 %v701, 32
      %v1670 = vpop.permute.xlu0 %1669
      %1671 = vrot.lane.b32.xlu0 %v702, 32
      %v1672 = vpop.permute.xlu0 %1671
      %1673 = vrot.lane.b32.xlu0 %v703, 32
      %v1674 = vpop.permute.xlu0 %1673
      %1675 = vrot.lane.b32.xlu0 %v704, 32
      %v1676 = vpop.permute.xlu0 %1675
      %1677 = vrot.lane.b32.xlu0 %v705, 32
      %v1678 = vpop.permute.xlu0 %1677
      %1679 = vrot.lane.b32.xlu0 %v706, 32
      %v1680 = vpop.permute.xlu0 %1679
      %1681 = vrot.lane.b32.xlu0 %v707, 32
      %v1682 = vpop.permute.xlu0 %1681
      %1683 = vrot.lane.b32.xlu0 %v708, 32
      %v1684 = vpop.permute.xlu0 %1683
      %1685 = vrot.lane.b32.xlu0 %v709, 32
      %v1686 = vpop.permute.xlu0 %1685
      %1687 = vrot.lane.b32.xlu0 %v710, 32
      %v1688 = vpop.permute.xlu0 %1687
      %1689 = vrot.lane.b32.xlu0 %v711, 32
      %v1690 = vpop.permute.xlu0 %1689
      %1691 = vrot.lane.b32.xlu0 %v712, 32
      %v1692 = vpop.permute.xlu0 %1691
      %1693 = vrot.lane.b32.xlu0 %v713, 32
      %v1694 = vpop.permute.xlu0 %1693
      %1695 = vrot.lane.b32.xlu0 %v714, 32
      %v1696 = vpop.permute.xlu0 %1695
      %1697 = vrot.lane.b32.xlu0 %v715, 32
      %v1698 = vpop.permute.xlu0 %1697
      %1699 = vrot.lane.b32.xlu0 %v716, 32
      %v1700 = vpop.permute.xlu0 %1699
      %1701 = vrot.lane.b32.xlu0 %v717, 32
      %v1702 = vpop.permute.xlu0 %1701
      %1703 = vrot.lane.b32.xlu0 %v718, 32
      %v1704 = vpop.permute.xlu0 %1703
      %1705 = vrot.lane.b32.xlu0 %v719, 32
      %v1706 = vpop.permute.xlu0 %1705
      %1707 = vrot.lane.b32.xlu0 %v720, 32
      %v1708 = vpop.permute.xlu0 %1707
      %1709 = vrot.lane.b32.xlu0 %v721, 32
      %v1710 = vpop.permute.xlu0 %1709
      %1711 = vrot.lane.b32.xlu0 %v722, 32
      %v1712 = vpop.permute.xlu0 %1711
      %1713 = vrot.lane.b32.xlu0 %v723, 32
      %v1714 = vpop.permute.xlu0 %1713
      %1715 = vrot.lane.b32.xlu0 %v724, 32
      %v1716 = vpop.permute.xlu0 %1715
      %v1749 = vsel %vm253, %v436, %v758
      %v1750 = vsel %vm253, %v437, %v760
      %v1751 = vsel %vm253, %v438, %v762
      %v1752 = vsel %vm253, %v439, %v764
      %v1753 = vsel %vm253, %v440, %v766
      %v1754 = vsel %vm253, %v441, %v768
      %v1755 = vsel %vm253, %v442, %v770
      %v1756 = vsel %vm253, %v443, %v772
      %v1757 = vsel %vm253, %v444, %v774
      %v1758 = vsel %vm253, %v445, %v776
      %v1759 = vsel %vm253, %v446, %v778
      %v1760 = vsel %vm253, %v447, %v780
      %v1761 = vsel %vm253, %v448, %v782
      %v1762 = vsel %vm253, %v449, %v784
      %v1763 = vsel %vm253, %v450, %v786
      %v1764 = vsel %vm253, %v451, %v788
      %v1765 = vsel %vm253, %v452, %v790
      %v1766 = vsel %vm253, %v453, %v792
      %v1767 = vsel %vm253, %v454, %v794
      %v1768 = vsel %vm253, %v455, %v796
      %v1769 = vsel %vm253, %v456, %v798
      %v1770 = vsel %vm253, %v457, %v800
      %v1771 = vsel %vm253, %v458, %v802
      %v1772 = vsel %vm253, %v459, %v804
      %v1773 = vsel %vm253, %v460, %v806
      %v1774 = vsel %vm253, %v461, %v808
      %v1775 = vsel %vm253, %v462, %v810
      %v1776 = vsel %vm253, %v463, %v812
      %v1777 = vsel %vm253, %v464, %v814
      %v1778 = vsel %vm253, %v465, %v816
      %v1779 = vsel %vm253, %v466, %v818
      %v1780 = vsel %vm253, %v467, %v820
      %vm1781 = vcmask 64512
      %v1782 = vsel %vm1781, %v1749, %v886
      %v1783 = vsel %vm1781, %v1750, %v888
      %v1784 = vsel %vm1781, %v1751, %v890
      %v1785 = vsel %vm1781, %v1752, %v892
      %v1786 = vsel %vm1781, %v1753, %v894
      %v1787 = vsel %vm1781, %v1754, %v896
      %v1788 = vsel %vm1781, %v1755, %v898
      %v1789 = vsel %vm1781, %v1756, %v900
      %v1790 = vsel %vm1781, %v1757, %v902
      %v1791 = vsel %vm1781, %v1758, %v904
      %v1792 = vsel %vm1781, %v1759, %v906
      %v1793 = vsel %vm1781, %v1760, %v908
      %v1794 = vsel %vm1781, %v1761, %v910
      %v1795 = vsel %vm1781, %v1762, %v912
      %v1796 = vsel %vm1781, %v1763, %v914
      %v1797 = vsel %vm1781, %v1764, %v916
      %v1798 = vsel %vm1781, %v1765, %v918
      %v1799 = vsel %vm1781, %v1766, %v920
      %v1800 = vsel %vm1781, %v1767, %v922
      %v1801 = vsel %vm1781, %v1768, %v924
      %v1802 = vsel %vm1781, %v1769, %v926
      %v1803 = vsel %vm1781, %v1770, %v928
      %v1804 = vsel %vm1781, %v1771, %v930
      %v1805 = vsel %vm1781, %v1772, %v932
      %v1806 = vsel %vm1781, %v1773, %v934
      %v1807 = vsel %vm1781, %v1774, %v936
      %v1808 = vsel %vm1781, %v1775, %v938
      %v1809 = vsel %vm1781, %v1776, %v940
      %v1810 = vsel %vm1781, %v1777, %v942
      %v1811 = vsel %vm1781, %v1778, %v944
      %v1812 = vsel %vm1781, %v1779, %v946
      %v1813 = vsel %vm1781, %v1780, %v948
      %vm1814 = vcmask 97280
      %v1815 = vsel %vm1814, %v1782, %v1014
      %v1816 = vsel %vm1814, %v1783, %v1016
      %v1817 = vsel %vm1814, %v1784, %v1018
      %v1818 = vsel %vm1814, %v1785, %v1020
      %v1819 = vsel %vm1814, %v1786, %v1022
      %v1820 = vsel %vm1814, %v1787, %v1024
      %v1821 = vsel %vm1814, %v1788, %v1026
      %v1822 = vsel %vm1814, %v1789, %v1028
      %v1823 = vsel %vm1814, %v1790, %v1030
      %v1824 = vsel %vm1814, %v1791, %v1032
      %v1825 = vsel %vm1814, %v1792, %v1034
      %v1826 = vsel %vm1814, %v1793, %v1036
      %v1827 = vsel %vm1814, %v1794, %v1038
      %v1828 = vsel %vm1814, %v1795, %v1040
      %v1829 = vsel %vm1814, %v1796, %v1042
      %v1830 = vsel %vm1814, %v1797, %v1044
      %v1831 = vsel %vm1814, %v1798, %v1046
      %v1832 = vsel %vm1814, %v1799, %v1048
      %v1833 = vsel %vm1814, %v1800, %v1050
      %v1834 = vsel %vm1814, %v1801, %v1052
      %v1835 = vsel %vm1814, %v1802, %v1054
      %v1836 = vsel %vm1814, %v1803, %v1056
      %v1837 = vsel %vm1814, %v1804, %v1058
      %v1838 = vsel %vm1814, %v1805, %v1060
      %v1839 = vsel %vm1814, %v1806, %v1062
      %v1840 = vsel %vm1814, %v1807, %v1064
      %v1841 = vsel %vm1814, %v1808, %v1066
      %v1842 = vsel %vm1814, %v1809, %v1068
      %v1843 = vsel %vm1814, %v1810, %v1070
      %v1844 = vsel %vm1814, %v1811, %v1072
      %v1845 = vsel %vm1814, %v1812, %v1074
      %v1846 = vsel %vm1814, %v1813, %v1076
      %vm1847 = vcmask 130048
      %v1848 = vsel %vm1847, %v1815, %v1142
      %v1849 = vsel %vm1847, %v1816, %v1144
      %v1850 = vsel %vm1847, %v1817, %v1146
      %v1851 = vsel %vm1847, %v1818, %v1148
      %v1852 = vsel %vm1847, %v1819, %v1150
      %v1853 = vsel %vm1847, %v1820, %v1152
      %v1854 = vsel %vm1847, %v1821, %v1154
      %v1855 = vsel %vm1847, %v1822, %v1156
      %v1856 = vsel %vm1847, %v1823, %v1158
      %v1857 = vsel %vm1847, %v1824, %v1160
      %v1858 = vsel %vm1847, %v1825, %v1162
      %v1859 = vsel %vm1847, %v1826, %v1164
      %v1860 = vsel %vm1847, %v1827, %v1166
      %v1861 = vsel %vm1847, %v1828, %v1168
      %v1862 = vsel %vm1847, %v1829, %v1170
      %v1863 = vsel %vm1847, %v1830, %v1172
      %v1864 = vsel %vm1847, %v1831, %v1174
      %v1865 = vsel %vm1847, %v1832, %v1176
      %v1866 = vsel %vm1847, %v1833, %v1178
      %v1867 = vsel %vm1847, %v1834, %v1180
      %v1868 = vsel %vm1847, %v1835, %v1182
      %v1869 = vsel %vm1847, %v1836, %v1184
      %v1870 = vsel %vm1847, %v1837, %v1186
      %v1871 = vsel %vm1847, %v1838, %v1188
      %v1872 = vsel %vm1847, %v1839, %v1190
      %v1873 = vsel %vm1847, %v1840, %v1192
      %v1874 = vsel %vm1847, %v1841, %v1194
      %v1875 = vsel %vm1847, %v1842, %v1196
      %v1876 = vsel %vm1847, %v1843, %v1198
      %v1877 = vsel %vm1847, %v1844, %v1200
      %v1878 = vsel %vm1847, %v1845, %v1202
      %v1879 = vsel %vm1847, %v1846, %v1204
      %vm1880 = vcmask 162816
      %v1881 = vsel %vm1880, %v1848, %v1270
      %v1882 = vsel %vm1880, %v1849, %v1272
      %v1883 = vsel %vm1880, %v1850, %v1274
      %v1884 = vsel %vm1880, %v1851, %v1276
      %v1885 = vsel %vm1880, %v1852, %v1278
      %v1886 = vsel %vm1880, %v1853, %v1280
      %v1887 = vsel %vm1880, %v1854, %v1282
      %v1888 = vsel %vm1880, %v1855, %v1284
      %v1889 = vsel %vm1880, %v1856, %v1286
      %v1890 = vsel %vm1880, %v1857, %v1288
      %v1891 = vsel %vm1880, %v1858, %v1290
      %v1892 = vsel %vm1880, %v1859, %v1292
      %v1893 = vsel %vm1880, %v1860, %v1294
      %v1894 = vsel %vm1880, %v1861, %v1296
      %v1895 = vsel %vm1880, %v1862, %v1298
      %v1896 = vsel %vm1880, %v1863, %v1300
      %v1897 = vsel %vm1880, %v1864, %v1302
      %v1898 = vsel %vm1880, %v1865, %v1304
      %v1899 = vsel %vm1880, %v1866, %v1306
      %v1900 = vsel %vm1880, %v1867, %v1308
      %v1901 = vsel %vm1880, %v1868, %v1310
      %v1902 = vsel %vm1880, %v1869, %v1312
      %v1903 = vsel %vm1880, %v1870, %v1314
      %v1904 = vsel %vm1880, %v1871, %v1316
      %v1905 = vsel %vm1880, %v1872, %v1318
      %v1906 = vsel %vm1880, %v1873, %v1320
      %v1907 = vsel %vm1880, %v1874, %v1322
      %v1908 = vsel %vm1880, %v1875, %v1324
      %v1909 = vsel %vm1880, %v1876, %v1326
      %v1910 = vsel %vm1880, %v1877, %v1328
      %v1911 = vsel %vm1880, %v1878, %v1330
      %v1912 = vsel %vm1880, %v1879, %v1332
      %vm1913 = vcmask 195584
      %v1914 = vsel %vm1913, %v1881, %v1398
      %v1915 = vsel %vm1913, %v1882, %v1400
      %v1916 = vsel %vm1913, %v1883, %v1402
      %v1917 = vsel %vm1913, %v1884, %v1404
      %v1918 = vsel %vm1913, %v1885, %v1406
      %v1919 = vsel %vm1913, %v1886, %v1408
      %v1920 = vsel %vm1913, %v1887, %v1410
      %v1921 = vsel %vm1913, %v1888, %v1412
      %v1922 = vsel %vm1913, %v1889, %v1414
      %v1923 = vsel %vm1913, %v1890, %v1416
      %v1924 = vsel %vm1913, %v1891, %v1418
      %v1925 = vsel %vm1913, %v1892, %v1420
      %v1926 = vsel %vm1913, %v1893, %v1422
      %v1927 = vsel %vm1913, %v1894, %v1424
      %v1928 = vsel %vm1913, %v1895, %v1426
      %v1929 = vsel %vm1913, %v1896, %v1428
      %v1930 = vsel %vm1913, %v1897, %v1430
      %v1931 = vsel %vm1913, %v1898, %v1432
      %v1932 = vsel %vm1913, %v1899, %v1434
      %v1933 = vsel %vm1913, %v1900, %v1436
      %v1934 = vsel %vm1913, %v1901, %v1438
      %v1935 = vsel %vm1913, %v1902, %v1440
      %v1936 = vsel %vm1913, %v1903, %v1442
      %v1937 = vsel %vm1913, %v1904, %v1444
      %v1938 = vsel %vm1913, %v1905, %v1446
      %v1939 = vsel %vm1913, %v1906, %v1448
      %v1940 = vsel %vm1913, %v1907, %v1450
      %v1941 = vsel %vm1913, %v1908, %v1452
      %v1942 = vsel %vm1913, %v1909, %v1454
      %v1943 = vsel %vm1913, %v1910, %v1456
      %v1944 = vsel %vm1913, %v1911, %v1458
      %v1945 = vsel %vm1913, %v1912, %v1460
      %vm1946 = vcmask 228352
      %v1947 = vsel %vm1946, %v1914, %v1526
      %v1948 = vsel %vm1946, %v1915, %v1528
      %v1949 = vsel %vm1946, %v1916, %v1530
      %v1950 = vsel %vm1946, %v1917, %v1532
      %v1951 = vsel %vm1946, %v1918, %v1534
      %v1952 = vsel %vm1946, %v1919, %v1536
      %v1953 = vsel %vm1946, %v1920, %v1538
      %v1954 = vsel %vm1946, %v1921, %v1540
      %v1955 = vsel %vm1946, %v1922, %v1542
      %v1956 = vsel %vm1946, %v1923, %v1544
      %v1957 = vsel %vm1946, %v1924, %v1546
      %v1958 = vsel %vm1946, %v1925, %v1548
      %v1959 = vsel %vm1946, %v1926, %v1550
      %v1960 = vsel %vm1946, %v1927, %v1552
      %v1961 = vsel %vm1946, %v1928, %v1554
      %v1962 = vsel %vm1946, %v1929, %v1556
      %v1963 = vsel %vm1946, %v1930, %v1558
      %v1964 = vsel %vm1946, %v1931, %v1560
      %v1965 = vsel %vm1946, %v1932, %v1562
      %v1966 = vsel %vm1946, %v1933, %v1564
      %v1967 = vsel %vm1946, %v1934, %v1566
      %v1968 = vsel %vm1946, %v1935, %v1568
      %v1969 = vsel %vm1946, %v1936, %v1570
      %v1970 = vsel %vm1946, %v1937, %v1572
      %v1971 = vsel %vm1946, %v1938, %v1574
      %v1972 = vsel %vm1946, %v1939, %v1576
      %v1973 = vsel %vm1946, %v1940, %v1578
      %v1974 = vsel %vm1946, %v1941, %v1580
      %v1975 = vsel %vm1946, %v1942, %v1582
      %v1976 = vsel %vm1946, %v1943, %v1584
      %v1977 = vsel %vm1946, %v1944, %v1586
      %v1978 = vsel %vm1946, %v1945, %v1588
      %v1979 = vsel %vm309, %v1947, %v1654
      %v1980 = vsel %vm309, %v1948, %v1656
      %v1981 = vsel %vm309, %v1949, %v1658
      %v1982 = vsel %vm309, %v1950, %v1660
      %v1983 = vsel %vm309, %v1951, %v1662
      %v1984 = vsel %vm309, %v1952, %v1664
      %v1985 = vsel %vm309, %v1953, %v1666
      %v1986 = vsel %vm309, %v1954, %v1668
      %v1987 = vsel %vm309, %v1955, %v1670
      %v1988 = vsel %vm309, %v1956, %v1672
      %v1989 = vsel %vm309, %v1957, %v1674
      %v1990 = vsel %vm309, %v1958, %v1676
      %v1991 = vsel %vm309, %v1959, %v1678
      %v1992 = vsel %vm309, %v1960, %v1680
      %v1993 = vsel %vm309, %v1961, %v1682
      %v1994 = vsel %vm309, %v1962, %v1684
      %v1995 = vsel %vm309, %v1963, %v1686
      %v1996 = vsel %vm309, %v1964, %v1688
      %v1997 = vsel %vm309, %v1965, %v1690
      %v1998 = vsel %vm309, %v1966, %v1692
      %v1999 = vsel %vm309, %v1967, %v1694
      %v2000 = vsel %vm309, %v1968, %v1696
      %v2001 = vsel %vm309, %v1969, %v1698
      %v2002 = vsel %vm309, %v1970, %v1700
      %v2003 = vsel %vm309, %v1971, %v1702
      %v2004 = vsel %vm309, %v1972, %v1704
      %v2005 = vsel %vm309, %v1973, %v1706
      %v2006 = vsel %vm309, %v1974, %v1708
      %v2007 = vsel %vm309, %v1975, %v1710
      %v2008 = vsel %vm309, %v1976, %v1712
      %v2009 = vsel %vm309, %v1977, %v1714
      %v2010 = vsel %vm309, %v1978, %v1716
      %v2011 = vpack.c.bf16 %v1980, %v1979
      %v2012 = vpack.c.bf16 %v1982, %v1981
      %v2013 = vpack.c.bf16 %v1984, %v1983
      %v2014 = vpack.c.bf16 %v1986, %v1985
      %v2015 = vpack.c.bf16 %v1988, %v1987
      %v2016 = vpack.c.bf16 %v1990, %v1989
      %v2017 = vpack.c.bf16 %v1992, %v1991
      %v2018 = vpack.c.bf16 %v1994, %v1993
      %v2019 = vpack.c.bf16 %v1996, %v1995
      %v2020 = vpack.c.bf16 %v1998, %v1997
      %v2021 = vpack.c.bf16 %v2000, %v1999
      %v2022 = vpack.c.bf16 %v2002, %v2001
      %v2023 = vpack.c.bf16 %v2004, %v2003
      %v2024 = vpack.c.bf16 %v2006, %v2005
      %v2025 = vpack.c.bf16 %v2008, %v2007
      %v2026 = vpack.c.bf16 %v2010, %v2009
      %v2027 = vlaneseq
      %v2028 = vshrl.u32 %v2027, 7
      %v2029 = vsub.s32 0, %v2028
      %v2030 = vrot.slane %v435, %v2029
      %v2036 = vunpack.c.l.b16 %v430
      %v2037 = vunpack.c.l.b16 %v431
      %v2038 = vunpack.c.l.b16 %v432
      %v2039 = vunpack.c.l.b16 %v433
      %v2040 = vunpack.c.l.b16 %v434
      %v2041 = vpack.c.b16 %v2037, %v2036
      %v2042 = vpack.c.b16 %v2039, %v2038
      %v2043 = vpack.c.b16 %v2040, %v2040
      %vm2046 = vcmask 293888
      %v2048 = vsel %vm2046, %v2011, 0
      %v2051 = vsel %vm2046, %v2012, 0
      %v2054 = vsel %vm2046, %v2013, 0
      %v2057 = vsel %vm2046, %v2014, 0
      %v2060 = vsel %vm2046, %v2015, 0
      %v2063 = vsel %vm2046, %v2016, 0
      %v2066 = vsel %vm2046, %v2017, 0
      %v2069 = vsel %vm2046, %v2018, 0
      %v2072 = vsel %vm2046, %v2019, 0
      %v2075 = vsel %vm2046, %v2020, 0
      %v2078 = vsel %vm2046, %v2021, 0
      %v2081 = vsel %vm2046, %v2022, 0
      %v2084 = vsel %vm2046, %v2023, 0
      %v2087 = vsel %vm2046, %v2024, 0
      %v2090 = vsel %vm2046, %v2025, 0
      %v2093 = vsel %vm2046, %v2026, 0
      %vm2095 = vcmask 1041408
      %v2097 = vsel %vm2095, %v2043, 0
      %2099 = vmatprep.subr.bf16.mxu0 0
      %2100 = vmatpush1.bf16.msra.mxu0 0
      %2101 = vmatprep.subr.bf16.mxu0 0
      %2102 = vmatpush1.bf16.msra.mxu0 0
      %2103 = vmatprep.subr.bf16.mxu0 0
      %2104 = vmatpush1.bf16.msra.mxu0 0
      %2105 = vmatprep.subr.bf16.mxu0 0
      %2106 = vmatpush1.bf16.msra.mxu0 0
      %2107 = vmatprep.subr.bf16.mxu0 0
      %2108 = vmatpush1.bf16.msra.mxu0 0
      %2109 = vmatprep.subr.bf16.mxu0 0
      %2110 = vmatpush1.bf16.msra.mxu0 %v2097
      %2111 = vmatprep.subr.bf16.mxu0 0
      %2112 = vmatpush1.bf16.msra.mxu0 %v2042
      %2113 = vmatprep.subr.bf16.mxu0 0
      %2114 = vmatpush1.bf16.msra.mxu0 %v2041
      %2115 = vmatprep.subr.bf16.mxu0 0
      %2116 = vmatpush2.bf16.msra.mxu0 0
      %2117 = vmatprep.subr.bf16.mxu0 0
      %2118 = vmatpush2.bf16.msra.mxu0 0
      %2119 = vmatprep.subr.bf16.mxu0 0
      %2120 = vmatpush2.bf16.msra.mxu0 0
      %2121 = vmatprep.subr.bf16.mxu0 0
      %2122 = vmatpush2.bf16.msra.mxu0 0
      %2123 = vmatprep.subr.bf16.mxu0 0
      %2124 = vmatpush2.bf16.msra.mxu0 0
      %2125 = vmatprep.subr.bf16.mxu0 0
      %2126 = vmatpush2.bf16.msra.mxu0 0
      %2127 = vmatprep.subr.bf16.mxu0 0
      %2128 = vmatpush2.bf16.msra.mxu0 0
      %2129 = vmatprep.subr.bf16.mxu0 0
      %2130 = vmatpush2.bf16.msra.mxu0 0
      %2131 = vmatprep.mubr.bf16.mxu0 0
      %2132 = vmatmul.mubr.bf16.gmra.mxu0 %v2048
      %v2133 = vpop.f32.mrf.mxu0
      %v2134 = vadd.f32 %v2030, %v2133
      %v2135 = vpop.f32.mrf.mxu0
      %v2136 = vpop.f32.mrf.mxu0
      %v2137 = vadd.f32 %v2030, %v2136
      %v2138 = vpop.f32.mrf.mxu0
      %2139 = vmatprep.mubr.bf16.mxu0 0
      %2140 = vmatmul.mubr.bf16.gmra.mxu0 %v2051
      %v2141 = vpop.f32.mrf.mxu0
      %v2142 = vadd.f32 %v2030, %v2141
      %v2143 = vpop.f32.mrf.mxu0
      %v2144 = vpop.f32.mrf.mxu0
      %v2145 = vadd.f32 %v2030, %v2144
      %v2146 = vpop.f32.mrf.mxu0
      %2147 = vmatprep.mubr.bf16.mxu0 0
      %2148 = vmatmul.mubr.bf16.gmra.mxu0 %v2054
      %v2149 = vpop.f32.mrf.mxu0
      %v2150 = vadd.f32 %v2030, %v2149
      %v2151 = vpop.f32.mrf.mxu0
      %v2152 = vpop.f32.mrf.mxu0
      %v2153 = vadd.f32 %v2030, %v2152
      %v2154 = vpop.f32.mrf.mxu0
      %2155 = vmatprep.mubr.bf16.mxu0 0
      %2156 = vmatmul.mubr.bf16.gmra.mxu0 %v2057
      %v2157 = vpop.f32.mrf.mxu0
      %v2158 = vadd.f32 %v2030, %v2157
      %v2159 = vpop.f32.mrf.mxu0
      %v2160 = vpop.f32.mrf.mxu0
      %v2161 = vadd.f32 %v2030, %v2160
      %v2162 = vpop.f32.mrf.mxu0
      %2163 = vmatprep.mubr.bf16.mxu0 0
      %2164 = vmatmul.mubr.bf16.gmra.mxu0 %v2060
      %v2165 = vpop.f32.mrf.mxu0
      %v2166 = vadd.f32 %v2030, %v2165
      %v2167 = vpop.f32.mrf.mxu0
      %v2168 = vpop.f32.mrf.mxu0
      %v2169 = vadd.f32 %v2030, %v2168
      %v2170 = vpop.f32.mrf.mxu0
      %2171 = vmatprep.mubr.bf16.mxu0 0
      %2172 = vmatmul.mubr.bf16.gmra.mxu0 %v2063
      %v2173 = vpop.f32.mrf.mxu0
      %v2174 = vadd.f32 %v2030, %v2173
      %v2175 = vpop.f32.mrf.mxu0
      %v2176 = vpop.f32.mrf.mxu0
      %v2177 = vadd.f32 %v2030, %v2176
      %v2178 = vpop.f32.mrf.mxu0
      %2179 = vmatprep.mubr.bf16.mxu0 0
      %2180 = vmatmul.mubr.bf16.gmra.mxu0 %v2066
      %v2181 = vpop.f32.mrf.mxu0
      %v2182 = vadd.f32 %v2030, %v2181
      %v2183 = vpop.f32.mrf.mxu0
      %v2184 = vpop.f32.mrf.mxu0
      %v2185 = vadd.f32 %v2030, %v2184
      %v2186 = vpop.f32.mrf.mxu0
      %2187 = vmatprep.mubr.bf16.mxu0 0
      %2188 = vmatmul.mubr.bf16.gmra.mxu0 %v2069
      %v2189 = vpop.f32.mrf.mxu0
      %v2190 = vadd.f32 %v2030, %v2189
      %v2191 = vpop.f32.mrf.mxu0
      %v2192 = vpop.f32.mrf.mxu0
      %v2193 = vadd.f32 %v2030, %v2192
      %v2194 = vpop.f32.mrf.mxu0
      %2195 = vmatprep.mubr.bf16.mxu0 0
      %2196 = vmatmul.mubr.bf16.gmra.mxu0 %v2072
      %v2197 = vpop.f32.mrf.mxu0
      %v2198 = vadd.f32 %v2030, %v2197
      %v2199 = vpop.f32.mrf.mxu0
      %v2200 = vpop.f32.mrf.mxu0
      %v2201 = vadd.f32 %v2030, %v2200
      %v2202 = vpop.f32.mrf.mxu0
      %2203 = vmatprep.mubr.bf16.mxu0 0
      %2204 = vmatmul.mubr.bf16.gmra.mxu0 %v2075
      %v2205 = vpop.f32.mrf.mxu0
      %v2206 = vadd.f32 %v2030, %v2205
      %v2207 = vpop.f32.mrf.mxu0
      %v2208 = vpop.f32.mrf.mxu0
      %v2209 = vadd.f32 %v2030, %v2208
      %v2210 = vpop.f32.mrf.mxu0
      %2211 = vmatprep.mubr.bf16.mxu0 0
      %2212 = vmatmul.mubr.bf16.gmra.mxu0 %v2078
      %v2213 = vpop.f32.mrf.mxu0
      %v2214 = vadd.f32 %v2030, %v2213
      %v2215 = vpop.f32.mrf.mxu0
      %v2216 = vpop.f32.mrf.mxu0
      %v2217 = vadd.f32 %v2030, %v2216
      %v2218 = vpop.f32.mrf.mxu0
      %2219 = vmatprep.mubr.bf16.mxu0 0
      %2220 = vmatmul.mubr.bf16.gmra.mxu0 %v2081
      %v2221 = vpop.f32.mrf.mxu0
      %v2222 = vadd.f32 %v2030, %v2221
      %v2223 = vpop.f32.mrf.mxu0
      %v2224 = vpop.f32.mrf.mxu0
      %v2225 = vadd.f32 %v2030, %v2224
      %v2226 = vpop.f32.mrf.mxu0
      %2227 = vmatprep.mubr.bf16.mxu0 0
      %2228 = vmatmul.mubr.bf16.gmra.mxu0 %v2084
      %v2229 = vpop.f32.mrf.mxu0
      %v2230 = vadd.f32 %v2030, %v2229
      %v2231 = vpop.f32.mrf.mxu0
      %v2232 = vpop.f32.mrf.mxu0
      %v2233 = vadd.f32 %v2030, %v2232
      %v2234 = vpop.f32.mrf.mxu0
      %2235 = vmatprep.mubr.bf16.mxu0 0
      %2236 = vmatmul.mubr.bf16.gmra.mxu0 %v2087
      %v2237 = vpop.f32.mrf.mxu0
      %v2238 = vadd.f32 %v2030, %v2237
      %v2239 = vpop.f32.mrf.mxu0
      %v2240 = vpop.f32.mrf.mxu0
      %v2241 = vadd.f32 %v2030, %v2240
      %v2242 = vpop.f32.mrf.mxu0
      %2243 = vmatprep.mubr.bf16.mxu0 0
      %2244 = vmatmul.mubr.bf16.gmra.mxu0 %v2090
      %v2245 = vpop.f32.mrf.mxu0
      %v2246 = vadd.f32 %v2030, %v2245
      %v2247 = vpop.f32.mrf.mxu0
      %v2248 = vpop.f32.mrf.mxu0
      %v2249 = vadd.f32 %v2030, %v2248
      %v2250 = vpop.f32.mrf.mxu0
      %2251 = vmatprep.mubr.bf16.mxu0 0
      %2252 = vmatmul.mubr.bf16.gmra.mxu0 %v2093
      %v2253 = vpop.f32.mrf.mxu0
      %v2254 = vadd.f32 %v2030, %v2253
      %v2255 = vpop.f32.mrf.mxu0
      %v2256 = vpop.f32.mrf.mxu0
      %v2257 = vadd.f32 %v2030, %v2256
      %v2258 = vpop.f32.mrf.mxu0
      %2259 = vdwg.mxu0
      %v2260 = vmax.f32 %v2134, 0.0
      %v2261 = vmax.f32 %v2137, 0.0
      %v2262 = vmax.f32 %v2142, 0.0
      %v2263 = vmax.f32 %v2145, 0.0
      %v2264 = vmax.f32 %v2150, 0.0
      %v2265 = vmax.f32 %v2153, 0.0
      %v2266 = vmax.f32 %v2158, 0.0
      %v2267 = vmax.f32 %v2161, 0.0
      %v2268 = vmax.f32 %v2166, 0.0
      %v2269 = vmax.f32 %v2169, 0.0
      %v2270 = vmax.f32 %v2174, 0.0
      %v2271 = vmax.f32 %v2177, 0.0
      %v2272 = vmax.f32 %v2182, 0.0
      %v2273 = vmax.f32 %v2185, 0.0
      %v2274 = vmax.f32 %v2190, 0.0
      %v2275 = vmax.f32 %v2193, 0.0
      %v2276 = vmax.f32 %v2198, 0.0
      %v2277 = vmax.f32 %v2201, 0.0
      %v2278 = vmax.f32 %v2206, 0.0
      %v2279 = vmax.f32 %v2209, 0.0
      %v2280 = vmax.f32 %v2214, 0.0
      %v2281 = vmax.f32 %v2217, 0.0
      %v2282 = vmax.f32 %v2222, 0.0
      %v2283 = vmax.f32 %v2225, 0.0
      %v2284 = vmax.f32 %v2230, 0.0
      %v2285 = vmax.f32 %v2233, 0.0
      %v2286 = vmax.f32 %v2238, 0.0
      %v2287 = vmax.f32 %v2241, 0.0
      %v2288 = vmax.f32 %v2246, 0.0
      %v2289 = vmax.f32 %v2249, 0.0
      %v2290 = vmax.f32 %v2254, 0.0
      %v2291 = vmax.f32 %v2257, 0.0
      %s2292 = scalar_lea.vmem [#allocation3], 24
      %2293 = vst.msk [vmem:[%s2292 + $0x1] sm:$0xff] %vm309, %v2260
      %2294 = vst.msk [vmem:[%s2292 + $0x9] sm:$0xff] %vm309, %v2261
      %2295 = vst.msk [vmem:[%s2292 + $0x19] sm:$0xff] %vm309, %v2262
      %2296 = vst.msk [vmem:[%s2292 + $0x21] sm:$0xff] %vm309, %v2263
      %2297 = vst.msk [vmem:[%s2292 + $0x31] sm:$0xff] %vm309, %v2264
      %2298 = vst.msk [vmem:[%s2292 + $0x39] sm:$0xff] %vm309, %v2265
      %2299 = vst.msk [vmem:[%s2292 + $0x49] sm:$0xff] %vm309, %v2266
      %2300 = vst.msk [vmem:[%s2292 + $0x51] sm:$0xff] %vm309, %v2267
      %2301 = vst.msk [vmem:[%s2292 + $0x61] sm:$0xff] %vm309, %v2268
      %2302 = vst.msk [vmem:[%s2292 + $0x69] sm:$0xff] %vm309, %v2269
      %2303 = vst.msk [vmem:[%s2292 + $0x79] sm:$0xff] %vm309, %v2270
      %2304 = vst.msk [vmem:[%s2292 + $0x81] sm:$0xff] %vm309, %v2271
      %2305 = vst.msk [vmem:[%s2292 + $0x91] sm:$0xff] %vm309, %v2272
      %2306 = vst.msk [vmem:[%s2292 + $0x99] sm:$0xff] %vm309, %v2273
      %2307 = vst.msk [vmem:[%s2292 + $0xa9] sm:$0xff] %vm309, %v2274
      %2308 = vst.msk [vmem:[%s2292 + $0xb1] sm:$0xff] %vm309, %v2275
      %2309 = vst.msk [vmem:[%s2292 + $0xc1] sm:$0xff] %vm309, %v2276
      %2310 = vst.msk [vmem:[%s2292 + $0xc9] sm:$0xff] %vm309, %v2277
      %2311 = vst.msk [vmem:[%s2292 + $0xd9] sm:$0xff] %vm309, %v2278
      %2312 = vst.msk [vmem:[%s2292 + $0xe1] sm:$0xff] %vm309, %v2279
      %2313 = vst.msk [vmem:[%s2292 + $0xf1] sm:$0xff] %vm309, %v2280
      %2314 = vst.msk [vmem:[%s2292 + $0xf9] sm:$0xff] %vm309, %v2281
      %2315 = vst.msk [vmem:[%s2292 + $0x109] sm:$0xff] %vm309, %v2282
      %2316 = vst.msk [vmem:[%s2292 + $0x111] sm:$0xff] %vm309, %v2283
      %2317 = vst.msk [vmem:[%s2292 + $0x121] sm:$0xff] %vm309, %v2284
      %2318 = vst.msk [vmem:[%s2292 + $0x129] sm:$0xff] %vm309, %v2285
      %2319 = vst.msk [vmem:[%s2292 + $0x139] sm:$0xff] %vm309, %v2286
      %2320 = vst.msk [vmem:[%s2292 + $0x141] sm:$0xff] %vm309, %v2287
      %2321 = vst.msk [vmem:[%s2292 + $0x151] sm:$0xff] %vm309, %v2288
      %2322 = vst.msk [vmem:[%s2292 + $0x159] sm:$0xff] %vm309, %v2289
      %2323 = vst.msk [vmem:[%s2292 + $0x169] sm:$0xff] %vm309, %v2290
      %2324 = vst.msk [vmem:[%s2292 + $0x171] sm:$0xff] %vm309, %v2291
      %v2325 = vld [vmem:[%s2] sm:$0xf]
      %v2326 = vld [vmem:[%s2 + $0x4] sm:$0xf]
      %v2327 = vld [vmem:[%s2 + $0x8] sm:$0xf]
      %v2328 = vld [vmem:[%s2 + $0xc] sm:$0xf]
      %v2329 = vld [vmem:[%s2 + $0x10] sm:$0xf]
      %v2330 = vld [vmem:[%s2 + $0x14] sm:$0xf]
      %v2331 = vld [vmem:[%s2 + $0x18] sm:$0xf]
      %v2332 = vld [vmem:[%s2 + $0x1c] sm:$0xf]
      %v2333 = vld [vmem:[%s2 + $0x20] sm:$0xf]
      %v2334 = vld [vmem:[%s2 + $0x24] sm:$0xf]
      %v2335 = vld [vmem:[%s2 + $0x28] sm:$0xf]
      %v2336 = vld [vmem:[%s2 + $0x2c] sm:$0xf]
      %v2337 = vld [vmem:[%s2 + $0x30] sm:$0xf]
      %v2338 = vld [vmem:[%s2 + $0x34] sm:$0xf]
      %v2339 = vld [vmem:[%s2 + $0x38] sm:$0xf]
      %v2340 = vld [vmem:[%s2 + $0x3c] sm:$0xf]
      %v2341 = vld [vmem:[%s2 + $0x40] sm:$0xf]
      %v2342 = vld [vmem:[%s2 + $0x44] sm:$0xf]
      %v2343 = vld [vmem:[%s2 + $0x48] sm:$0xf]
      %v2344 = vld [vmem:[%s2 + $0x4c] sm:$0xf]
      %v2345 = vld [vmem:[%s2 + $0x50] sm:$0xf]
      %v2346 = vld [vmem:[%s2 + $0x54] sm:$0xf]
      %v2347 = vld [vmem:[%s2 + $0x58] sm:$0xf]
      %v2348 = vld [vmem:[%s2 + $0x5c] sm:$0xf]
      %v2349 = vld [vmem:[%s2 + $0x60] sm:$0xf]
      %v2350 = vld [vmem:[%s2 + $0x64] sm:$0xf]
      %v2351 = vld [vmem:[%s2 + $0x68] sm:$0xf]
      %v2352 = vld [vmem:[%s2 + $0x6c] sm:$0xf]
      %v2353 = vld [vmem:[%s2 + $0x70] sm:$0xf]
      %v2354 = vld [vmem:[%s2 + $0x74] sm:$0xf]
      %v2355 = vld [vmem:[%s2 + $0x78] sm:$0xf]
      %v2356 = vld [vmem:[%s2 + $0x7c] sm:$0xf]
      %v2357 = vld [vmem:[%s2 + $0x80] sm:$0xf]
      %v2358 = vld [vmem:[%s2 + $0x84] sm:$0xf]
      %v2359 = vld [vmem:[%s2 + $0x88] sm:$0xf]
      %v2360 = vld [vmem:[%s2 + $0x8c] sm:$0xf]
      %v2361 = vld [vmem:[%s3 + $0x1] sm:$0x1]
      %v2362 = vld [vmem:[#allocation3] sm:$0xff]
      %v2363 = vld [vmem:[#allocation3 + $0x8] sm:$0xff]
      %v2364 = vld [vmem:[#allocation3 + $0x18] sm:$0xff]
      %v2365 = vld [vmem:[#allocation3 + $0x20] sm:$0xff]
      %v2366 = vld [vmem:[#allocation3 + $0x30] sm:$0xff]
      %v2367 = vld [vmem:[#allocation3 + $0x38] sm:$0xff]
      %v2368 = vld [vmem:[#allocation3 + $0x48] sm:$0xff]
      %v2369 = vld [vmem:[#allocation3 + $0x50] sm:$0xff]
      %v2370 = vld [vmem:[#allocation3 + $0x60] sm:$0xff]
      %v2371 = vld [vmem:[#allocation3 + $0x68] sm:$0xff]
      %v2372 = vld [vmem:[#allocation3 + $0x78] sm:$0xff]
      %v2373 = vld [vmem:[#allocation3 + $0x80] sm:$0xff]
      %v2374 = vld [vmem:[#allocation3 + $0x90] sm:$0xff]
      %v2375 = vld [vmem:[#allocation3 + $0x98] sm:$0xff]
      %v2376 = vld [vmem:[#allocation3 + $0xa8] sm:$0xff]
      %v2377 = vld [vmem:[#allocation3 + $0xb0] sm:$0xff]
      %v2378 = vld [vmem:[#allocation3 + $0xc0] sm:$0xff]
      %v2379 = vld [vmem:[#allocation3 + $0xc8] sm:$0xff]
      %v2380 = vld [vmem:[#allocation3 + $0xd8] sm:$0xff]
      %v2381 = vld [vmem:[#allocation3 + $0xe0] sm:$0xff]
      %v2382 = vld [vmem:[#allocation3 + $0xf0] sm:$0xff]
      %v2383 = vld [vmem:[#allocation3 + $0xf8] sm:$0xff]
      %v2384 = vld [vmem:[#allocation3 + $0x108] sm:$0xff]
      %v2385 = vld [vmem:[#allocation3 + $0x110] sm:$0xff]
      %v2386 = vld [vmem:[#allocation3 + $0x120] sm:$0xff]
      %v2387 = vld [vmem:[#allocation3 + $0x128] sm:$0xff]
      %v2388 = vld [vmem:[#allocation3 + $0x138] sm:$0xff]
      %v2389 = vld [vmem:[#allocation3 + $0x140] sm:$0xff]
      %v2390 = vld [vmem:[#allocation3 + $0x150] sm:$0xff]
      %v2391 = vld [vmem:[#allocation3 + $0x158] sm:$0xff]
      %v2392 = vld [vmem:[#allocation3 + $0x168] sm:$0xff]
      %v2393 = vld [vmem:[#allocation3 + $0x170] sm:$0xff]
      %v2394 = vld [vmem:[#allocation3 + $0x1] sm:$0xff]
      %v2395 = vld [vmem:[#allocation3 + $0x9] sm:$0xff]
      %v2396 = vld [vmem:[#allocation3 + $0x19] sm:$0xff]
      %v2397 = vld [vmem:[#allocation3 + $0x21] sm:$0xff]
      %v2398 = vld [vmem:[#allocation3 + $0x31] sm:$0xff]
      %v2399 = vld [vmem:[#allocation3 + $0x39] sm:$0xff]
      %v2400 = vld [vmem:[#allocation3 + $0x49] sm:$0xff]
      %v2401 = vld [vmem:[#allocation3 + $0x51] sm:$0xff]
      %v2402 = vld [vmem:[#allocation3 + $0x61] sm:$0xff]
      %v2403 = vld [vmem:[#allocation3 + $0x69] sm:$0xff]
      %v2404 = vld [vmem:[#allocation3 + $0x79] sm:$0xff]
      %v2405 = vld [vmem:[#allocation3 + $0x81] sm:$0xff]
      %v2406 = vld [vmem:[#allocation3 + $0x91] sm:$0xff]
      %v2407 = vld [vmem:[#allocation3 + $0x99] sm:$0xff]
      %v2408 = vld [vmem:[#allocation3 + $0xa9] sm:$0xff]
      %v2409 = vld [vmem:[#allocation3 + $0xb1] sm:$0xff]
      %v2410 = vld [vmem:[#allocation3 + $0xc1] sm:$0xff]
      %v2411 = vld [vmem:[#allocation3 + $0xc9] sm:$0xff]
      %v2412 = vld [vmem:[#allocation3 + $0xd9] sm:$0xff]
      %v2413 = vld [vmem:[#allocation3 + $0xe1] sm:$0xff]
      %v2414 = vld [vmem:[#allocation3 + $0xf1] sm:$0xff]
      %v2415 = vld [vmem:[#allocation3 + $0xf9] sm:$0xff]
      %v2416 = vld [vmem:[#allocation3 + $0x109] sm:$0xff]
      %v2417 = vld [vmem:[#allocation3 + $0x111] sm:$0xff]
      %v2418 = vld [vmem:[#allocation3 + $0x121] sm:$0xff]
      %v2419 = vld [vmem:[#allocation3 + $0x129] sm:$0xff]
      %v2420 = vld [vmem:[#allocation3 + $0x139] sm:$0xff]
      %v2421 = vld [vmem:[#allocation3 + $0x141] sm:$0xff]
      %v2422 = vld [vmem:[#allocation3 + $0x151] sm:$0xff]
      %v2423 = vld [vmem:[#allocation3 + $0x159] sm:$0xff]
      %v2424 = vld [vmem:[#allocation3 + $0x169] sm:$0xff]
      %v2425 = vld [vmem:[#allocation3 + $0x171] sm:$0xff]
      %v2426 = vld [vmem:[#allocation3 + $0x2] sm:$0xff]
      %v2427 = vld [vmem:[#allocation3 + $0xa] sm:$0xff]
      %v2428 = vld [vmem:[#allocation3 + $0x1a] sm:$0xff]
      %v2429 = vld [vmem:[#allocation3 + $0x22] sm:$0xff]
      %v2430 = vld [vmem:[#allocation3 + $0x32] sm:$0xff]
      %v2431 = vld [vmem:[#allocation3 + $0x3a] sm:$0xff]
      %v2432 = vld [vmem:[#allocation3 + $0x4a] sm:$0xff]
      %v2433 = vld [vmem:[#allocation3 + $0x52] sm:$0xff]
      %v2434 = vld [vmem:[#allocation3 + $0x62] sm:$0xff]
      %v2435 = vld [vmem:[#allocation3 + $0x6a] sm:$0xff]
      %v2436 = vld [vmem:[#allocation3 + $0x7a] sm:$0xff]
      %v2437 = vld [vmem:[#allocation3 + $0x82] sm:$0xff]
      %v2438 = vld [vmem:[#allocation3 + $0x92] sm:$0xff]
      %v2439 = vld [vmem:[#allocation3 + $0x9a] sm:$0xff]
      %v2440 = vld [vmem:[#allocation3 + $0xaa] sm:$0xff]
      %v2441 = vld [vmem:[#allocation3 + $0xb2] sm:$0xff]
      %v2442 = vld [vmem:[#allocation3 + $0xc2] sm:$0xff]
      %v2443 = vld [vmem:[#allocation3 + $0xca] sm:$0xff]
      %v2444 = vld [vmem:[#allocation3 + $0xda] sm:$0xff]
      %v2445 = vld [vmem:[#allocation3 + $0xe2] sm:$0xff]
      %v2446 = vld [vmem:[#allocation3 + $0xf2] sm:$0xff]
      %v2447 = vld [vmem:[#allocation3 + $0xfa] sm:$0xff]
      %v2448 = vld [vmem:[#allocation3 + $0x10a] sm:$0xff]
      %v2449 = vld [vmem:[#allocation3 + $0x112] sm:$0xff]
      %v2450 = vld [vmem:[#allocation3 + $0x122] sm:$0xff]
      %v2451 = vld [vmem:[#allocation3 + $0x12a] sm:$0xff]
      %v2452 = vld [vmem:[#allocation3 + $0x13a] sm:$0xff]
      %v2453 = vld [vmem:[#allocation3 + $0x142] sm:$0xff]
      %v2454 = vld [vmem:[#allocation3 + $0x152] sm:$0xff]
      %v2455 = vld [vmem:[#allocation3 + $0x15a] sm:$0xff]
      %v2456 = vld [vmem:[#allocation3 + $0x16a] sm:$0xff]
      %v2457 = vld [vmem:[#allocation3 + $0x172] sm:$0xff]
      %v2458 = vld [vmem:[%s2292] sm:$0xff]
      %v2459 = vld [vmem:[%s2292 + $0x8] sm:$0xff]
      %v2460 = vld [vmem:[%s2292 + $0x18] sm:$0xff]
      %v2461 = vld [vmem:[%s2292 + $0x20] sm:$0xff]
      %v2462 = vld [vmem:[%s2292 + $0x30] sm:$0xff]
      %v2463 = vld [vmem:[%s2292 + $0x38] sm:$0xff]
      %v2464 = vld [vmem:[%s2292 + $0x48] sm:$0xff]
      %v2465 = vld [vmem:[%s2292 + $0x50] sm:$0xff]
      %v2466 = vld [vmem:[%s2292 + $0x60] sm:$0xff]
      %v2467 = vld [vmem:[%s2292 + $0x68] sm:$0xff]
      %v2468 = vld [vmem:[%s2292 + $0x78] sm:$0xff]
      %v2469 = vld [vmem:[%s2292 + $0x80] sm:$0xff]
      %v2470 = vld [vmem:[%s2292 + $0x90] sm:$0xff]
      %v2471 = vld [vmem:[%s2292 + $0x98] sm:$0xff]
      %v2472 = vld [vmem:[%s2292 + $0xa8] sm:$0xff]
      %v2473 = vld [vmem:[%s2292 + $0xb0] sm:$0xff]
      %v2474 = vld [vmem:[%s2292 + $0xc0] sm:$0xff]
      %v2475 = vld [vmem:[%s2292 + $0xc8] sm:$0xff]
      %v2476 = vld [vmem:[%s2292 + $0xd8] sm:$0xff]
      %v2477 = vld [vmem:[%s2292 + $0xe0] sm:$0xff]
      %v2478 = vld [vmem:[%s2292 + $0xf0] sm:$0xff]
      %v2479 = vld [vmem:[%s2292 + $0xf8] sm:$0xff]
      %v2480 = vld [vmem:[%s2292 + $0x108] sm:$0xff]
      %v2481 = vld [vmem:[%s2292 + $0x110] sm:$0xff]
      %v2482 = vld [vmem:[%s2292 + $0x120] sm:$0xff]
      %v2483 = vld [vmem:[%s2292 + $0x128] sm:$0xff]
      %v2484 = vld [vmem:[%s2292 + $0x138] sm:$0xff]
      %v2485 = vld [vmem:[%s2292 + $0x140] sm:$0xff]
      %v2486 = vld [vmem:[%s2292 + $0x150] sm:$0xff]
      %v2487 = vld [vmem:[%s2292 + $0x158] sm:$0xff]
      %v2488 = vld [vmem:[%s2292 + $0x168] sm:$0xff]
      %v2489 = vld [vmem:[%s2292 + $0x170] sm:$0xff]
      %v2490 = vld [vmem:[%s2292 + $0x1] sm:$0xff]
      %v2491 = vld [vmem:[%s2292 + $0x9] sm:$0xff]
      %v2492 = vld [vmem:[%s2292 + $0x19] sm:$0xff]
      %v2493 = vld [vmem:[%s2292 + $0x21] sm:$0xff]
      %v2494 = vld [vmem:[%s2292 + $0x31] sm:$0xff]
      %v2495 = vld [vmem:[%s2292 + $0x39] sm:$0xff]
      %v2496 = vld [vmem:[%s2292 + $0x49] sm:$0xff]
      %v2497 = vld [vmem:[%s2292 + $0x51] sm:$0xff]
      %v2498 = vld [vmem:[%s2292 + $0x61] sm:$0xff]
      %v2499 = vld [vmem:[%s2292 + $0x69] sm:$0xff]
      %v2500 = vld [vmem:[%s2292 + $0x79] sm:$0xff]
      %v2501 = vld [vmem:[%s2292 + $0x81] sm:$0xff]
      %v2502 = vld [vmem:[%s2292 + $0x91] sm:$0xff]
      %v2503 = vld [vmem:[%s2292 + $0x99] sm:$0xff]
      %v2504 = vld [vmem:[%s2292 + $0xa9] sm:$0xff]
      %v2505 = vld [vmem:[%s2292 + $0xb1] sm:$0xff]
      %v2506 = vld [vmem:[%s2292 + $0xc1] sm:$0xff]
      %v2507 = vld [vmem:[%s2292 + $0xc9] sm:$0xff]
      %v2508 = vld [vmem:[%s2292 + $0xd9] sm:$0xff]
      %v2509 = vld [vmem:[%s2292 + $0xe1] sm:$0xff]
      %v2510 = vld [vmem:[%s2292 + $0xf1] sm:$0xff]
      %v2511 = vld [vmem:[%s2292 + $0xf9] sm:$0xff]
      %v2512 = vld [vmem:[%s2292 + $0x109] sm:$0xff]
      %v2513 = vld [vmem:[%s2292 + $0x111] sm:$0xff]
      %v2514 = vld [vmem:[%s2292 + $0x121] sm:$0xff]
      %v2515 = vld [vmem:[%s2292 + $0x129] sm:$0xff]
      %v2516 = vld [vmem:[%s2292 + $0x139] sm:$0xff]
      %v2517 = vld [vmem:[%s2292 + $0x141] sm:$0xff]
      %v2518 = vld [vmem:[%s2292 + $0x151] sm:$0xff]
      %v2519 = vld [vmem:[%s2292 + $0x159] sm:$0xff]
      %v2520 = vld [vmem:[%s2292 + $0x169] sm:$0xff]
      %v2521 = vld [vmem:[%s2292 + $0x171] sm:$0xff]
      %v2522 = vld [vmem:[%s2292 + $0x2] sm:$0xff]
      %v2523 = vld [vmem:[%s2292 + $0xa] sm:$0xff]
      %v2524 = vld [vmem:[%s2292 + $0x1a] sm:$0xff]
      %v2525 = vld [vmem:[%s2292 + $0x22] sm:$0xff]
      %v2526 = vld [vmem:[%s2292 + $0x32] sm:$0xff]
      %v2527 = vld [vmem:[%s2292 + $0x3a] sm:$0xff]
      %v2528 = vld [vmem:[%s2292 + $0x4a] sm:$0xff]
      %v2529 = vld [vmem:[%s2292 + $0x52] sm:$0xff]
      %v2530 = vld [vmem:[%s2292 + $0x62] sm:$0xff]
      %v2531 = vld [vmem:[%s2292 + $0x6a] sm:$0xff]
      %v2532 = vld [vmem:[%s2292 + $0x7a] sm:$0xff]
      %v2533 = vld [vmem:[%s2292 + $0x82] sm:$0xff]
      %v2534 = vld [vmem:[%s2292 + $0x92] sm:$0xff]
      %v2535 = vld [vmem:[%s2292 + $0x9a] sm:$0xff]
      %v2536 = vld [vmem:[%s2292 + $0xaa] sm:$0xff]
      %v2537 = vld [vmem:[%s2292 + $0xb2] sm:$0xff]
      %v2538 = vld [vmem:[%s2292 + $0xc2] sm:$0xff]
      %v2539 = vld [vmem:[%s2292 + $0xca] sm:$0xff]
      %v2540 = vld [vmem:[%s2292 + $0xda] sm:$0xff]
      %v2541 = vld [vmem:[%s2292 + $0xe2] sm:$0xff]
      %v2542 = vld [vmem:[%s2292 + $0xf2] sm:$0xff]
      %v2543 = vld [vmem:[%s2292 + $0xfa] sm:$0xff]
      %v2544 = vld [vmem:[%s2292 + $0x10a] sm:$0xff]
      %v2545 = vld [vmem:[%s2292 + $0x112] sm:$0xff]
      %v2546 = vld [vmem:[%s2292 + $0x122] sm:$0xff]
      %v2547 = vld [vmem:[%s2292 + $0x12a] sm:$0xff]
      %v2548 = vld [vmem:[%s2292 + $0x13a] sm:$0xff]
      %v2549 = vld [vmem:[%s2292 + $0x142] sm:$0xff]
      %v2550 = vld [vmem:[%s2292 + $0x152] sm:$0xff]
      %v2551 = vld [vmem:[%s2292 + $0x15a] sm:$0xff]
      %v2552 = vld [vmem:[%s2292 + $0x16a] sm:$0xff]
      %v2553 = vld [vmem:[%s2292 + $0x172] sm:$0xff]
      %s2554 = scalar_lea.vmem [#allocation3], 48
      %v2555 = vld [vmem:[%s2554] sm:$0xff]
      %v2556 = vld [vmem:[%s2554 + $0x8] sm:$0xff]
      %v2557 = vld [vmem:[%s2554 + $0x18] sm:$0xff]
      %v2558 = vld [vmem:[%s2554 + $0x20] sm:$0xff]
      %v2559 = vld [vmem:[%s2554 + $0x30] sm:$0xff]
      %v2560 = vld [vmem:[%s2554 + $0x38] sm:$0xff]
      %v2561 = vld [vmem:[%s2554 + $0x48] sm:$0xff]
      %v2562 = vld [vmem:[%s2554 + $0x50] sm:$0xff]
      %v2563 = vld [vmem:[%s2554 + $0x60] sm:$0xff]
      %v2564 = vld [vmem:[%s2554 + $0x68] sm:$0xff]
      %v2565 = vld [vmem:[%s2554 + $0x78] sm:$0xff]
      %v2566 = vld [vmem:[%s2554 + $0x80] sm:$0xff]
      %v2567 = vld [vmem:[%s2554 + $0x90] sm:$0xff]
      %v2568 = vld [vmem:[%s2554 + $0x98] sm:$0xff]
      %v2569 = vld [vmem:[%s2554 + $0xa8] sm:$0xff]
      %v2570 = vld [vmem:[%s2554 + $0xb0] sm:$0xff]
      %v2571 = vld [vmem:[%s2554 + $0xc0] sm:$0xff]
      %v2572 = vld [vmem:[%s2554 + $0xc8] sm:$0xff]
      %v2573 = vld [vmem:[%s2554 + $0xd8] sm:$0xff]
      %v2574 = vld [vmem:[%s2554 + $0xe0] sm:$0xff]
      %v2575 = vld [vmem:[%s2554 + $0xf0] sm:$0xff]
      %v2576 = vld [vmem:[%s2554 + $0xf8] sm:$0xff]
      %v2577 = vld [vmem:[%s2554 + $0x108] sm:$0xff]
      %v2578 = vld [vmem:[%s2554 + $0x110] sm:$0xff]
      %v2579 = vld [vmem:[%s2554 + $0x120] sm:$0xff]
      %v2580 = vld [vmem:[%s2554 + $0x128] sm:$0xff]
      %v2581 = vld [vmem:[%s2554 + $0x138] sm:$0xff]
      %v2582 = vld [vmem:[%s2554 + $0x140] sm:$0xff]
      %v2583 = vld [vmem:[%s2554 + $0x150] sm:$0xff]
      %v2584 = vld [vmem:[%s2554 + $0x158] sm:$0xff]
      %v2585 = vld [vmem:[%s2554 + $0x168] sm:$0xff]
      %v2586 = vld [vmem:[%s2554 + $0x170] sm:$0xff]
      %v2587 = vld [vmem:[%s2554 + $0x1] sm:$0xff]
      %v2588 = vld [vmem:[%s2554 + $0x9] sm:$0xff]
      %v2589 = vld [vmem:[%s2554 + $0x19] sm:$0xff]
      %v2590 = vld [vmem:[%s2554 + $0x21] sm:$0xff]
      %v2591 = vld [vmem:[%s2554 + $0x31] sm:$0xff]
      %v2592 = vld [vmem:[%s2554 + $0x39] sm:$0xff]
      %v2593 = vld [vmem:[%s2554 + $0x49] sm:$0xff]
      %v2594 = vld [vmem:[%s2554 + $0x51] sm:$0xff]
      %v2595 = vld [vmem:[%s2554 + $0x61] sm:$0xff]
      %v2596 = vld [vmem:[%s2554 + $0x69] sm:$0xff]
      %v2597 = vld [vmem:[%s2554 + $0x79] sm:$0xff]
      %v2598 = vld [vmem:[%s2554 + $0x81] sm:$0xff]
      %v2599 = vld [vmem:[%s2554 + $0x91] sm:$0xff]
      %v2600 = vld [vmem:[%s2554 + $0x99] sm:$0xff]
      %v2601 = vld [vmem:[%s2554 + $0xa9] sm:$0xff]
      %v2602 = vld [vmem:[%s2554 + $0xb1] sm:$0xff]
      %v2603 = vld [vmem:[%s2554 + $0xc1] sm:$0xff]
      %v2604 = vld [vmem:[%s2554 + $0xc9] sm:$0xff]
      %v2605 = vld [vmem:[%s2554 + $0xd9] sm:$0xff]
      %v2606 = vld [vmem:[%s2554 + $0xe1] sm:$0xff]
      %v2607 = vld [vmem:[%s2554 + $0xf1] sm:$0xff]
      %v2608 = vld [vmem:[%s2554 + $0xf9] sm:$0xff]
      %v2609 = vld [vmem:[%s2554 + $0x109] sm:$0xff]
      %v2610 = vld [vmem:[%s2554 + $0x111] sm:$0xff]
      %v2611 = vld [vmem:[%s2554 + $0x121] sm:$0xff]
      %v2612 = vld [vmem:[%s2554 + $0x129] sm:$0xff]
      %v2613 = vld [vmem:[%s2554 + $0x139] sm:$0xff]
      %v2614 = vld [vmem:[%s2554 + $0x141] sm:$0xff]
      %v2615 = vld [vmem:[%s2554 + $0x151] sm:$0xff]
      %v2616 = vld [vmem:[%s2554 + $0x159] sm:$0xff]
      %v2617 = vld [vmem:[%s2554 + $0x169] sm:$0xff]
      %v2618 = vld [vmem:[%s2554 + $0x171] sm:$0xff]
      %v2619 = vld [vmem:[%s2554 + $0x2] sm:$0xff]
      %v2620 = vld [vmem:[%s2554 + $0xa] sm:$0xff]
      %v2621 = vld [vmem:[%s2554 + $0x1a] sm:$0xff]
      %v2622 = vld [vmem:[%s2554 + $0x22] sm:$0xff]
      %v2623 = vld [vmem:[%s2554 + $0x32] sm:$0xff]
      %v2624 = vld [vmem:[%s2554 + $0x3a] sm:$0xff]
      %v2625 = vld [vmem:[%s2554 + $0x4a] sm:$0xff]
      %v2626 = vld [vmem:[%s2554 + $0x52] sm:$0xff]
      %v2627 = vld [vmem:[%s2554 + $0x62] sm:$0xff]
      %v2628 = vld [vmem:[%s2554 + $0x6a] sm:$0xff]
      %v2629 = vld [vmem:[%s2554 + $0x7a] sm:$0xff]
      %v2630 = vld [vmem:[%s2554 + $0x82] sm:$0xff]
      %v2631 = vld [vmem:[%s2554 + $0x92] sm:$0xff]
      %v2632 = vld [vmem:[%s2554 + $0x9a] sm:$0xff]
      %v2633 = vld [vmem:[%s2554 + $0xaa] sm:$0xff]
      %v2634 = vld [vmem:[%s2554 + $0xb2] sm:$0xff]
      %v2635 = vld [vmem:[%s2554 + $0xc2] sm:$0xff]
      %v2636 = vld [vmem:[%s2554 + $0xca] sm:$0xff]
      %v2637 = vld [vmem:[%s2554 + $0xda] sm:$0xff]
      %v2638 = vld [vmem:[%s2554 + $0xe2] sm:$0xff]
      %v2639 = vld [vmem:[%s2554 + $0xf2] sm:$0xff]
      %v2640 = vld [vmem:[%s2554 + $0xfa] sm:$0xff]
      %v2641 = vld [vmem:[%s2554 + $0x10a] sm:$0xff]
      %v2642 = vld [vmem:[%s2554 + $0x112] sm:$0xff]
      %v2643 = vld [vmem:[%s2554 + $0x122] sm:$0xff]
      %v2644 = vld [vmem:[%s2554 + $0x12a] sm:$0xff]
      %v2645 = vld [vmem:[%s2554 + $0x13a] sm:$0xff]
      %v2646 = vld [vmem:[%s2554 + $0x142] sm:$0xff]
      %v2647 = vld [vmem:[%s2554 + $0x152] sm:$0xff]
      %v2648 = vld [vmem:[%s2554 + $0x15a] sm:$0xff]
      %v2649 = vld [vmem:[%s2554 + $0x16a] sm:$0xff]
      %v2650 = vld [vmem:[%s2554 + $0x172] sm:$0xff]
      %2683 = vrot.lane.b32.xlu0 %v2394, 32
      %v2684 = vpop.permute.xlu0 %2683
      %2685 = vrot.lane.b32.xlu0 %v2395, 32
      %v2686 = vpop.permute.xlu0 %2685
      %2687 = vrot.lane.b32.xlu0 %v2396, 32
      %v2688 = vpop.permute.xlu0 %2687
      %2689 = vrot.lane.b32.xlu0 %v2397, 32
      %v2690 = vpop.permute.xlu0 %2689
      %2691 = vrot.lane.b32.xlu0 %v2398, 32
      %v2692 = vpop.permute.xlu0 %2691
      %2693 = vrot.lane.b32.xlu0 %v2399, 32
      %v2694 = vpop.permute.xlu0 %2693
      %2695 = vrot.lane.b32.xlu0 %v2400, 32
      %v2696 = vpop.permute.xlu0 %2695
      %2697 = vrot.lane.b32.xlu0 %v2401, 32
      %v2698 = vpop.permute.xlu0 %2697
      %2699 = vrot.lane.b32.xlu0 %v2402, 32
      %v2700 = vpop.permute.xlu0 %2699
      %2701 = vrot.lane.b32.xlu0 %v2403, 32
      %v2702 = vpop.permute.xlu0 %2701
      %2703 = vrot.lane.b32.xlu0 %v2404, 32
      %v2704 = vpop.permute.xlu0 %2703
      %2705 = vrot.lane.b32.xlu0 %v2405, 32
      %v2706 = vpop.permute.xlu0 %2705
      %2707 = vrot.lane.b32.xlu0 %v2406, 32
      %v2708 = vpop.permute.xlu0 %2707
      %2709 = vrot.lane.b32.xlu0 %v2407, 32
      %v2710 = vpop.permute.xlu0 %2709
      %2711 = vrot.lane.b32.xlu0 %v2408, 32
      %v2712 = vpop.permute.xlu0 %2711
      %2713 = vrot.lane.b32.xlu0 %v2409, 32
      %v2714 = vpop.permute.xlu0 %2713
      %2715 = vrot.lane.b32.xlu0 %v2410, 32
      %v2716 = vpop.permute.xlu0 %2715
      %2717 = vrot.lane.b32.xlu0 %v2411, 32
      %v2718 = vpop.permute.xlu0 %2717
      %2719 = vrot.lane.b32.xlu0 %v2412, 32
      %v2720 = vpop.permute.xlu0 %2719
      %2721 = vrot.lane.b32.xlu0 %v2413, 32
      %v2722 = vpop.permute.xlu0 %2721
      %2723 = vrot.lane.b32.xlu0 %v2414, 32
      %v2724 = vpop.permute.xlu0 %2723
      %2725 = vrot.lane.b32.xlu0 %v2415, 32
      %v2726 = vpop.permute.xlu0 %2725
      %2727 = vrot.lane.b32.xlu0 %v2416, 32
      %v2728 = vpop.permute.xlu0 %2727
      %2729 = vrot.lane.b32.xlu0 %v2417, 32
      %v2730 = vpop.permute.xlu0 %2729
      %2731 = vrot.lane.b32.xlu0 %v2418, 32
      %v2732 = vpop.permute.xlu0 %2731
      %2733 = vrot.lane.b32.xlu0 %v2419, 32
      %v2734 = vpop.permute.xlu0 %2733
      %2735 = vrot.lane.b32.xlu0 %v2420, 32
      %v2736 = vpop.permute.xlu0 %2735
      %2737 = vrot.lane.b32.xlu0 %v2421, 32
      %v2738 = vpop.permute.xlu0 %2737
      %2739 = vrot.lane.b32.xlu0 %v2422, 32
      %v2740 = vpop.permute.xlu0 %2739
      %2741 = vrot.lane.b32.xlu0 %v2423, 32
      %v2742 = vpop.permute.xlu0 %2741
      %2743 = vrot.lane.b32.xlu0 %v2424, 32
      %v2744 = vpop.permute.xlu0 %2743
      %2745 = vrot.lane.b32.xlu0 %v2425, 32
      %v2746 = vpop.permute.xlu0 %2745
      %2811 = vrot.lane.b32.xlu0 %v2426, 64
      %v2812 = vpop.permute.xlu0 %2811
      %2813 = vrot.lane.b32.xlu0 %v2427, 64
      %v2814 = vpop.permute.xlu0 %2813
      %2815 = vrot.lane.b32.xlu0 %v2428, 64
      %v2816 = vpop.permute.xlu0 %2815
      %2817 = vrot.lane.b32.xlu0 %v2429, 64
      %v2818 = vpop.permute.xlu0 %2817
      %2819 = vrot.lane.b32.xlu0 %v2430, 64
      %v2820 = vpop.permute.xlu0 %2819
      %2821 = vrot.lane.b32.xlu0 %v2431, 64
      %v2822 = vpop.permute.xlu0 %2821
      %2823 = vrot.lane.b32.xlu0 %v2432, 64
      %v2824 = vpop.permute.xlu0 %2823
      %2825 = vrot.lane.b32.xlu0 %v2433, 64
      %v2826 = vpop.permute.xlu0 %2825
      %2827 = vrot.lane.b32.xlu0 %v2434, 64
      %v2828 = vpop.permute.xlu0 %2827
      %2829 = vrot.lane.b32.xlu0 %v2435, 64
      %v2830 = vpop.permute.xlu0 %2829
      %2831 = vrot.lane.b32.xlu0 %v2436, 64
      %v2832 = vpop.permute.xlu0 %2831
      %2833 = vrot.lane.b32.xlu0 %v2437, 64
      %v2834 = vpop.permute.xlu0 %2833
      %2835 = vrot.lane.b32.xlu0 %v2438, 64
      %v2836 = vpop.permute.xlu0 %2835
      %2837 = vrot.lane.b32.xlu0 %v2439, 64
      %v2838 = vpop.permute.xlu0 %2837
      %2839 = vrot.lane.b32.xlu0 %v2440, 64
      %v2840 = vpop.permute.xlu0 %2839
      %2841 = vrot.lane.b32.xlu0 %v2441, 64
      %v2842 = vpop.permute.xlu0 %2841
      %2843 = vrot.lane.b32.xlu0 %v2442, 64
      %v2844 = vpop.permute.xlu0 %2843
      %2845 = vrot.lane.b32.xlu0 %v2443, 64
      %v2846 = vpop.permute.xlu0 %2845
      %2847 = vrot.lane.b32.xlu0 %v2444, 64
      %v2848 = vpop.permute.xlu0 %2847
      %2849 = vrot.lane.b32.xlu0 %v2445, 64
      %v2850 = vpop.permute.xlu0 %2849
      %2851 = vrot.lane.b32.xlu0 %v2446, 64
      %v2852 = vpop.permute.xlu0 %2851
      %2853 = vrot.lane.b32.xlu0 %v2447, 64
      %v2854 = vpop.permute.xlu0 %2853
      %2855 = vrot.lane.b32.xlu0 %v2448, 64
      %v2856 = vpop.permute.xlu0 %2855
      %2857 = vrot.lane.b32.xlu0 %v2449, 64
      %v2858 = vpop.permute.xlu0 %2857
      %2859 = vrot.lane.b32.xlu0 %v2450, 64
      %v2860 = vpop.permute.xlu0 %2859
      %2861 = vrot.lane.b32.xlu0 %v2451, 64
      %v2862 = vpop.permute.xlu0 %2861
      %2863 = vrot.lane.b32.xlu0 %v2452, 64
      %v2864 = vpop.permute.xlu0 %2863
      %2865 = vrot.lane.b32.xlu0 %v2453, 64
      %v2866 = vpop.permute.xlu0 %2865
      %2867 = vrot.lane.b32.xlu0 %v2454, 64
      %v2868 = vpop.permute.xlu0 %2867
      %2869 = vrot.lane.b32.xlu0 %v2455, 64
      %v2870 = vpop.permute.xlu0 %2869
      %2871 = vrot.lane.b32.xlu0 %v2456, 64
      %v2872 = vpop.permute.xlu0 %2871
      %2873 = vrot.lane.b32.xlu0 %v2457, 64
      %v2874 = vpop.permute.xlu0 %2873
      %2939 = vrot.lane.b32.xlu0 %v2458, 96
      %v2940 = vpop.permute.xlu0 %2939
      %2941 = vrot.lane.b32.xlu0 %v2459, 96
      %v2942 = vpop.permute.xlu0 %2941
      %2943 = vrot.lane.b32.xlu0 %v2460, 96
      %v2944 = vpop.permute.xlu0 %2943
      %2945 = vrot.lane.b32.xlu0 %v2461, 96
      %v2946 = vpop.permute.xlu0 %2945
      %2947 = vrot.lane.b32.xlu0 %v2462, 96
      %v2948 = vpop.permute.xlu0 %2947
      %2949 = vrot.lane.b32.xlu0 %v2463, 96
      %v2950 = vpop.permute.xlu0 %2949
      %2951 = vrot.lane.b32.xlu0 %v2464, 96
      %v2952 = vpop.permute.xlu0 %2951
      %2953 = vrot.lane.b32.xlu0 %v2465, 96
      %v2954 = vpop.permute.xlu0 %2953
      %2955 = vrot.lane.b32.xlu0 %v2466, 96
      %v2956 = vpop.permute.xlu0 %2955
      %2957 = vrot.lane.b32.xlu0 %v2467, 96
      %v2958 = vpop.permute.xlu0 %2957
      %2959 = vrot.lane.b32.xlu0 %v2468, 96
      %v2960 = vpop.permute.xlu0 %2959
      %2961 = vrot.lane.b32.xlu0 %v2469, 96
      %v2962 = vpop.permute.xlu0 %2961
      %2963 = vrot.lane.b32.xlu0 %v2470, 96
      %v2964 = vpop.permute.xlu0 %2963
      %2965 = vrot.lane.b32.xlu0 %v2471, 96
      %v2966 = vpop.permute.xlu0 %2965
      %2967 = vrot.lane.b32.xlu0 %v2472, 96
      %v2968 = vpop.permute.xlu0 %2967
      %2969 = vrot.lane.b32.xlu0 %v2473, 96
      %v2970 = vpop.permute.xlu0 %2969
      %2971 = vrot.lane.b32.xlu0 %v2474, 96
      %v2972 = vpop.permute.xlu0 %2971
      %2973 = vrot.lane.b32.xlu0 %v2475, 96
      %v2974 = vpop.permute.xlu0 %2973
      %2975 = vrot.lane.b32.xlu0 %v2476, 96
      %v2976 = vpop.permute.xlu0 %2975
      %2977 = vrot.lane.b32.xlu0 %v2477, 96
      %v2978 = vpop.permute.xlu0 %2977
      %2979 = vrot.lane.b32.xlu0 %v2478, 96
      %v2980 = vpop.permute.xlu0 %2979
      %2981 = vrot.lane.b32.xlu0 %v2479, 96
      %v2982 = vpop.permute.xlu0 %2981
      %2983 = vrot.lane.b32.xlu0 %v2480, 96
      %v2984 = vpop.permute.xlu0 %2983
      %2985 = vrot.lane.b32.xlu0 %v2481, 96
      %v2986 = vpop.permute.xlu0 %2985
      %2987 = vrot.lane.b32.xlu0 %v2482, 96
      %v2988 = vpop.permute.xlu0 %2987
      %2989 = vrot.lane.b32.xlu0 %v2483, 96
      %v2990 = vpop.permute.xlu0 %2989
      %2991 = vrot.lane.b32.xlu0 %v2484, 96
      %v2992 = vpop.permute.xlu0 %2991
      %2993 = vrot.lane.b32.xlu0 %v2485, 96
      %v2994 = vpop.permute.xlu0 %2993
      %2995 = vrot.lane.b32.xlu0 %v2486, 96
      %v2996 = vpop.permute.xlu0 %2995
      %2997 = vrot.lane.b32.xlu0 %v2487, 96
      %v2998 = vpop.permute.xlu0 %2997
      %2999 = vrot.lane.b32.xlu0 %v2488, 96
      %v3000 = vpop.permute.xlu0 %2999
      %3001 = vrot.lane.b32.xlu0 %v2489, 96
      %v3002 = vpop.permute.xlu0 %3001
      %3067 = vrot.lane.b32.xlu0 %v2522, 32
      %v3068 = vpop.permute.xlu0 %3067
      %3069 = vrot.lane.b32.xlu0 %v2523, 32
      %v3070 = vpop.permute.xlu0 %3069
      %3071 = vrot.lane.b32.xlu0 %v2524, 32
      %v3072 = vpop.permute.xlu0 %3071
      %3073 = vrot.lane.b32.xlu0 %v2525, 32
      %v3074 = vpop.permute.xlu0 %3073
      %3075 = vrot.lane.b32.xlu0 %v2526, 32
      %v3076 = vpop.permute.xlu0 %3075
      %3077 = vrot.lane.b32.xlu0 %v2527, 32
      %v3078 = vpop.permute.xlu0 %3077
      %3079 = vrot.lane.b32.xlu0 %v2528, 32
      %v3080 = vpop.permute.xlu0 %3079
      %3081 = vrot.lane.b32.xlu0 %v2529, 32
      %v3082 = vpop.permute.xlu0 %3081
      %3083 = vrot.lane.b32.xlu0 %v2530, 32
      %v3084 = vpop.permute.xlu0 %3083
      %3085 = vrot.lane.b32.xlu0 %v2531, 32
      %v3086 = vpop.permute.xlu0 %3085
      %3087 = vrot.lane.b32.xlu0 %v2532, 32
      %v3088 = vpop.permute.xlu0 %3087
      %3089 = vrot.lane.b32.xlu0 %v2533, 32
      %v3090 = vpop.permute.xlu0 %3089
      %3091 = vrot.lane.b32.xlu0 %v2534, 32
      %v3092 = vpop.permute.xlu0 %3091
      %3093 = vrot.lane.b32.xlu0 %v2535, 32
      %v3094 = vpop.permute.xlu0 %3093
      %3095 = vrot.lane.b32.xlu0 %v2536, 32
      %v3096 = vpop.permute.xlu0 %3095
      %3097 = vrot.lane.b32.xlu0 %v2537, 32
      %v3098 = vpop.permute.xlu0 %3097
      %3099 = vrot.lane.b32.xlu0 %v2538, 32
      %v3100 = vpop.permute.xlu0 %3099
      %3101 = vrot.lane.b32.xlu0 %v2539, 32
      %v3102 = vpop.permute.xlu0 %3101
      %3103 = vrot.lane.b32.xlu0 %v2540, 32
      %v3104 = vpop.permute.xlu0 %3103
      %3105 = vrot.lane.b32.xlu0 %v2541, 32
      %v3106 = vpop.permute.xlu0 %3105
      %3107 = vrot.lane.b32.xlu0 %v2542, 32
      %v3108 = vpop.permute.xlu0 %3107
      %3109 = vrot.lane.b32.xlu0 %v2543, 32
      %v3110 = vpop.permute.xlu0 %3109
      %3111 = vrot.lane.b32.xlu0 %v2544, 32
      %v3112 = vpop.permute.xlu0 %3111
      %3113 = vrot.lane.b32.xlu0 %v2545, 32
      %v3114 = vpop.permute.xlu0 %3113
      %3115 = vrot.lane.b32.xlu0 %v2546, 32
      %v3116 = vpop.permute.xlu0 %3115
      %3117 = vrot.lane.b32.xlu0 %v2547, 32
      %v3118 = vpop.permute.xlu0 %3117
      %3119 = vrot.lane.b32.xlu0 %v2548, 32
      %v3120 = vpop.permute.xlu0 %3119
      %3121 = vrot.lane.b32.xlu0 %v2549, 32
      %v3122 = vpop.permute.xlu0 %3121
      %3123 = vrot.lane.b32.xlu0 %v2550, 32
      %v3124 = vpop.permute.xlu0 %3123
      %3125 = vrot.lane.b32.xlu0 %v2551, 32
      %v3126 = vpop.permute.xlu0 %3125
      %3127 = vrot.lane.b32.xlu0 %v2552, 32
      %v3128 = vpop.permute.xlu0 %3127
      %3129 = vrot.lane.b32.xlu0 %v2553, 32
      %v3130 = vpop.permute.xlu0 %3129
      %3195 = vrot.lane.b32.xlu0 %v2555, 64
      %v3196 = vpop.permute.xlu0 %3195
      %3197 = vrot.lane.b32.xlu0 %v2556, 64
      %v3198 = vpop.permute.xlu0 %3197
      %3199 = vrot.lane.b32.xlu0 %v2557, 64
      %v3200 = vpop.permute.xlu0 %3199
      %3201 = vrot.lane.b32.xlu0 %v2558, 64
      %v3202 = vpop.permute.xlu0 %3201
      %3203 = vrot.lane.b32.xlu0 %v2559, 64
      %v3204 = vpop.permute.xlu0 %3203
      %3205 = vrot.lane.b32.xlu0 %v2560, 64
      %v3206 = vpop.permute.xlu0 %3205
      %3207 = vrot.lane.b32.xlu0 %v2561, 64
      %v3208 = vpop.permute.xlu0 %3207
      %3209 = vrot.lane.b32.xlu0 %v2562, 64
      %v3210 = vpop.permute.xlu0 %3209
      %3211 = vrot.lane.b32.xlu0 %v2563, 64
      %v3212 = vpop.permute.xlu0 %3211
      %3213 = vrot.lane.b32.xlu0 %v2564, 64
      %v3214 = vpop.permute.xlu0 %3213
      %3215 = vrot.lane.b32.xlu0 %v2565, 64
      %v3216 = vpop.permute.xlu0 %3215
      %3217 = vrot.lane.b32.xlu0 %v2566, 64
      %v3218 = vpop.permute.xlu0 %3217
      %3219 = vrot.lane.b32.xlu0 %v2567, 64
      %v3220 = vpop.permute.xlu0 %3219
      %3221 = vrot.lane.b32.xlu0 %v2568, 64
      %v3222 = vpop.permute.xlu0 %3221
      %3223 = vrot.lane.b32.xlu0 %v2569, 64
      %v3224 = vpop.permute.xlu0 %3223
      %3225 = vrot.lane.b32.xlu0 %v2570, 64
      %v3226 = vpop.permute.xlu0 %3225
      %3227 = vrot.lane.b32.xlu0 %v2571, 64
      %v3228 = vpop.permute.xlu0 %3227
      %3229 = vrot.lane.b32.xlu0 %v2572, 64
      %v3230 = vpop.permute.xlu0 %3229
      %3231 = vrot.lane.b32.xlu0 %v2573, 64
      %v3232 = vpop.permute.xlu0 %3231
      %3233 = vrot.lane.b32.xlu0 %v2574, 64
      %v3234 = vpop.permute.xlu0 %3233
      %3235 = vrot.lane.b32.xlu0 %v2575, 64
      %v3236 = vpop.permute.xlu0 %3235
      %3237 = vrot.lane.b32.xlu0 %v2576, 64
      %v3238 = vpop.permute.xlu0 %3237
      %3239 = vrot.lane.b32.xlu0 %v2577, 64
      %v3240 = vpop.permute.xlu0 %3239
      %3241 = vrot.lane.b32.xlu0 %v2578, 64
      %v3242 = vpop.permute.xlu0 %3241
      %3243 = vrot.lane.b32.xlu0 %v2579, 64
      %v3244 = vpop.permute.xlu0 %3243
      %3245 = vrot.lane.b32.xlu0 %v2580, 64
      %v3246 = vpop.permute.xlu0 %3245
      %3247 = vrot.lane.b32.xlu0 %v2581, 64
      %v3248 = vpop.permute.xlu0 %3247
      %3249 = vrot.lane.b32.xlu0 %v2582, 64
      %v3250 = vpop.permute.xlu0 %3249
      %3251 = vrot.lane.b32.xlu0 %v2583, 64
      %v3252 = vpop.permute.xlu0 %3251
      %3253 = vrot.lane.b32.xlu0 %v2584, 64
      %v3254 = vpop.permute.xlu0 %3253
      %3255 = vrot.lane.b32.xlu0 %v2585, 64
      %v3256 = vpop.permute.xlu0 %3255
      %3257 = vrot.lane.b32.xlu0 %v2586, 64
      %v3258 = vpop.permute.xlu0 %3257
      %3323 = vrot.lane.b32.xlu0 %v2587, 96
      %v3324 = vpop.permute.xlu0 %3323
      %3325 = vrot.lane.b32.xlu0 %v2588, 96
      %v3326 = vpop.permute.xlu0 %3325
      %3327 = vrot.lane.b32.xlu0 %v2589, 96
      %v3328 = vpop.permute.xlu0 %3327
      %3329 = vrot.lane.b32.xlu0 %v2590, 96
      %v3330 = vpop.permute.xlu0 %3329
      %3331 = vrot.lane.b32.xlu0 %v2591, 96
      %v3332 = vpop.permute.xlu0 %3331
      %3333 = vrot.lane.b32.xlu0 %v2592, 96
      %v3334 = vpop.permute.xlu0 %3333
      %3335 = vrot.lane.b32.xlu0 %v2593, 96
      %v3336 = vpop.permute.xlu0 %3335
      %3337 = vrot.lane.b32.xlu0 %v2594, 96
      %v3338 = vpop.permute.xlu0 %3337
      %3339 = vrot.lane.b32.xlu0 %v2595, 96
      %v3340 = vpop.permute.xlu0 %3339
      %3341 = vrot.lane.b32.xlu0 %v2596, 96
      %v3342 = vpop.permute.xlu0 %3341
      %3343 = vrot.lane.b32.xlu0 %v2597, 96
      %v3344 = vpop.permute.xlu0 %3343
      %3345 = vrot.lane.b32.xlu0 %v2598, 96
      %v3346 = vpop.permute.xlu0 %3345
      %3347 = vrot.lane.b32.xlu0 %v2599, 96
      %v3348 = vpop.permute.xlu0 %3347
      %3349 = vrot.lane.b32.xlu0 %v2600, 96
      %v3350 = vpop.permute.xlu0 %3349
      %3351 = vrot.lane.b32.xlu0 %v2601, 96
      %v3352 = vpop.permute.xlu0 %3351
      %3353 = vrot.lane.b32.xlu0 %v2602, 96
      %v3354 = vpop.permute.xlu0 %3353
      %3355 = vrot.lane.b32.xlu0 %v2603, 96
      %v3356 = vpop.permute.xlu0 %3355
      %3357 = vrot.lane.b32.xlu0 %v2604, 96
      %v3358 = vpop.permute.xlu0 %3357
      %3359 = vrot.lane.b32.xlu0 %v2605, 96
      %v3360 = vpop.permute.xlu0 %3359
      %3361 = vrot.lane.b32.xlu0 %v2606, 96
      %v3362 = vpop.permute.xlu0 %3361
      %3363 = vrot.lane.b32.xlu0 %v2607, 96
      %v3364 = vpop.permute.xlu0 %3363
      %3365 = vrot.lane.b32.xlu0 %v2608, 96
      %v3366 = vpop.permute.xlu0 %3365
      %3367 = vrot.lane.b32.xlu0 %v2609, 96
      %v3368 = vpop.permute.xlu0 %3367
      %3369 = vrot.lane.b32.xlu0 %v2610, 96
      %v3370 = vpop.permute.xlu0 %3369
      %3371 = vrot.lane.b32.xlu0 %v2611, 96
      %v3372 = vpop.permute.xlu0 %3371
      %3373 = vrot.lane.b32.xlu0 %v2612, 96
      %v3374 = vpop.permute.xlu0 %3373
      %3375 = vrot.lane.b32.xlu0 %v2613, 96
      %v3376 = vpop.permute.xlu0 %3375
      %3377 = vrot.lane.b32.xlu0 %v2614, 96
      %v3378 = vpop.permute.xlu0 %3377
      %3379 = vrot.lane.b32.xlu0 %v2615, 96
      %v3380 = vpop.permute.xlu0 %3379
      %3381 = vrot.lane.b32.xlu0 %v2616, 96
      %v3382 = vpop.permute.xlu0 %3381
      %3383 = vrot.lane.b32.xlu0 %v2617, 96
      %v3384 = vpop.permute.xlu0 %3383
      %3385 = vrot.lane.b32.xlu0 %v2618, 96
      %v3386 = vpop.permute.xlu0 %3385
      %v3419 = vsel %vm309, %v2362, %v2684
      %v3420 = vsel %vm309, %v2363, %v2686
      %v3421 = vsel %vm309, %v2364, %v2688
      %v3422 = vsel %vm309, %v2365, %v2690
      %v3423 = vsel %vm309, %v2366, %v2692
      %v3424 = vsel %vm309, %v2367, %v2694
      %v3425 = vsel %vm309, %v2368, %v2696
      %v3426 = vsel %vm309, %v2369, %v2698
      %v3427 = vsel %vm309, %v2370, %v2700
      %v3428 = vsel %vm309, %v2371, %v2702
      %v3429 = vsel %vm309, %v2372, %v2704
      %v3430 = vsel %vm309, %v2373, %v2706
      %v3431 = vsel %vm309, %v2374, %v2708
      %v3432 = vsel %vm309, %v2375, %v2710
      %v3433 = vsel %vm309, %v2376, %v2712
      %v3434 = vsel %vm309, %v2377, %v2714
      %v3435 = vsel %vm309, %v2378, %v2716
      %v3436 = vsel %vm309, %v2379, %v2718
      %v3437 = vsel %vm309, %v2380, %v2720
      %v3438 = vsel %vm309, %v2381, %v2722
      %v3439 = vsel %vm309, %v2382, %v2724
      %v3440 = vsel %vm309, %v2383, %v2726
      %v3441 = vsel %vm309, %v2384, %v2728
      %v3442 = vsel %vm309, %v2385, %v2730
      %v3443 = vsel %vm309, %v2386, %v2732
      %v3444 = vsel %vm309, %v2387, %v2734
      %v3445 = vsel %vm309, %v2388, %v2736
      %v3446 = vsel %vm309, %v2389, %v2738
      %v3447 = vsel %vm309, %v2390, %v2740
      %v3448 = vsel %vm309, %v2391, %v2742
      %v3449 = vsel %vm309, %v2392, %v2744
      %v3450 = vsel %vm309, %v2393, %v2746
      %vm3451 = vcmask 523264
      %v3452 = vsel %vm3451, %v3419, %v2812
      %v3453 = vsel %vm3451, %v3420, %v2814
      %v3454 = vsel %vm3451, %v3421, %v2816
      %v3455 = vsel %vm3451, %v3422, %v2818
      %v3456 = vsel %vm3451, %v3423, %v2820
      %v3457 = vsel %vm3451, %v3424, %v2822
      %v3458 = vsel %vm3451, %v3425, %v2824
      %v3459 = vsel %vm3451, %v3426, %v2826
      %v3460 = vsel %vm3451, %v3427, %v2828
      %v3461 = vsel %vm3451, %v3428, %v2830
      %v3462 = vsel %vm3451, %v3429, %v2832
      %v3463 = vsel %vm3451, %v3430, %v2834
      %v3464 = vsel %vm3451, %v3431, %v2836
      %v3465 = vsel %vm3451, %v3432, %v2838
      %v3466 = vsel %vm3451, %v3433, %v2840
      %v3467 = vsel %vm3451, %v3434, %v2842
      %v3468 = vsel %vm3451, %v3435, %v2844
      %v3469 = vsel %vm3451, %v3436, %v2846
      %v3470 = vsel %vm3451, %v3437, %v2848
      %v3471 = vsel %vm3451, %v3438, %v2850
      %v3472 = vsel %vm3451, %v3439, %v2852
      %v3473 = vsel %vm3451, %v3440, %v2854
      %v3474 = vsel %vm3451, %v3441, %v2856
      %v3475 = vsel %vm3451, %v3442, %v2858
      %v3476 = vsel %vm3451, %v3443, %v2860
      %v3477 = vsel %vm3451, %v3444, %v2862
      %v3478 = vsel %vm3451, %v3445, %v2864
      %v3479 = vsel %vm3451, %v3446, %v2866
      %v3480 = vsel %vm3451, %v3447, %v2868
      %v3481 = vsel %vm3451, %v3448, %v2870
      %v3482 = vsel %vm3451, %v3449, %v2872
      %v3483 = vsel %vm3451, %v3450, %v2874
      %vm3484 = vcmask 785408
      %v3485 = vsel %vm3484, %v3452, %v2940
      %v3486 = vsel %vm3484, %v3453, %v2942
      %v3487 = vsel %vm3484, %v3454, %v2944
      %v3488 = vsel %vm3484, %v3455, %v2946
      %v3489 = vsel %vm3484, %v3456, %v2948
      %v3490 = vsel %vm3484, %v3457, %v2950
      %v3491 = vsel %vm3484, %v3458, %v2952
      %v3492 = vsel %vm3484, %v3459, %v2954
      %v3493 = vsel %vm3484, %v3460, %v2956
      %v3494 = vsel %vm3484, %v3461, %v2958
      %v3495 = vsel %vm3484, %v3462, %v2960
      %v3496 = vsel %vm3484, %v3463, %v2962
      %v3497 = vsel %vm3484, %v3464, %v2964
      %v3498 = vsel %vm3484, %v3465, %v2966
      %v3499 = vsel %vm3484, %v3466, %v2968
      %v3500 = vsel %vm3484, %v3467, %v2970
      %v3501 = vsel %vm3484, %v3468, %v2972
      %v3502 = vsel %vm3484, %v3469, %v2974
      %v3503 = vsel %vm3484, %v3470, %v2976
      %v3504 = vsel %vm3484, %v3471, %v2978
      %v3505 = vsel %vm3484, %v3472, %v2980
      %v3506 = vsel %vm3484, %v3473, %v2982
      %v3507 = vsel %vm3484, %v3474, %v2984
      %v3508 = vsel %vm3484, %v3475, %v2986
      %v3509 = vsel %vm3484, %v3476, %v2988
      %v3510 = vsel %vm3484, %v3477, %v2990
      %v3511 = vsel %vm3484, %v3478, %v2992
      %v3512 = vsel %vm3484, %v3479, %v2994
      %v3513 = vsel %vm3484, %v3480, %v2996
      %v3514 = vsel %vm3484, %v3481, %v2998
      %v3515 = vsel %vm3484, %v3482, %v3000
      %v3516 = vsel %vm3484, %v3483, %v3002
      %v3517 = vsel %vm309, %v2490, %v3068
      %v3518 = vsel %vm309, %v2491, %v3070
      %v3519 = vsel %vm309, %v2492, %v3072
      %v3520 = vsel %vm309, %v2493, %v3074
      %v3521 = vsel %vm309, %v2494, %v3076
      %v3522 = vsel %vm309, %v2495, %v3078
      %v3523 = vsel %vm309, %v2496, %v3080
      %v3524 = vsel %vm309, %v2497, %v3082
      %v3525 = vsel %vm309, %v2498, %v3084
      %v3526 = vsel %vm309, %v2499, %v3086
      %v3527 = vsel %vm309, %v2500, %v3088
      %v3528 = vsel %vm309, %v2501, %v3090
      %v3529 = vsel %vm309, %v2502, %v3092
      %v3530 = vsel %vm309, %v2503, %v3094
      %v3531 = vsel %vm309, %v2504, %v3096
      %v3532 = vsel %vm309, %v2505, %v3098
      %v3533 = vsel %vm309, %v2506, %v3100
      %v3534 = vsel %vm309, %v2507, %v3102
      %v3535 = vsel %vm309, %v2508, %v3104
      %v3536 = vsel %vm309, %v2509, %v3106
      %v3537 = vsel %vm309, %v2510, %v3108
      %v3538 = vsel %vm309, %v2511, %v3110
      %v3539 = vsel %vm309, %v2512, %v3112
      %v3540 = vsel %vm309, %v2513, %v3114
      %v3541 = vsel %vm309, %v2514, %v3116
      %v3542 = vsel %vm309, %v2515, %v3118
      %v3543 = vsel %vm309, %v2516, %v3120
      %v3544 = vsel %vm309, %v2517, %v3122
      %v3545 = vsel %vm309, %v2518, %v3124
      %v3546 = vsel %vm309, %v2519, %v3126
      %v3547 = vsel %vm309, %v2520, %v3128
      %v3548 = vsel %vm309, %v2521, %v3130
      %v3549 = vsel %vm3451, %v3517, %v3196
      %v3550 = vsel %vm3451, %v3518, %v3198
      %v3551 = vsel %vm3451, %v3519, %v3200
      %v3552 = vsel %vm3451, %v3520, %v3202
      %v3553 = vsel %vm3451, %v3521, %v3204
      %v3554 = vsel %vm3451, %v3522, %v3206
      %v3555 = vsel %vm3451, %v3523, %v3208
      %v3556 = vsel %vm3451, %v3524, %v3210
      %v3557 = vsel %vm3451, %v3525, %v3212
      %v3558 = vsel %vm3451, %v3526, %v3214
      %v3559 = vsel %vm3451, %v3527, %v3216
      %v3560 = vsel %vm3451, %v3528, %v3218
      %v3561 = vsel %vm3451, %v3529, %v3220
      %v3562 = vsel %vm3451, %v3530, %v3222
      %v3563 = vsel %vm3451, %v3531, %v3224
      %v3564 = vsel %vm3451, %v3532, %v3226
      %v3565 = vsel %vm3451, %v3533, %v3228
      %v3566 = vsel %vm3451, %v3534, %v3230
      %v3567 = vsel %vm3451, %v3535, %v3232
      %v3568 = vsel %vm3451, %v3536, %v3234
      %v3569 = vsel %vm3451, %v3537, %v3236
      %v3570 = vsel %vm3451, %v3538, %v3238
      %v3571 = vsel %vm3451, %v3539, %v3240
      %v3572 = vsel %vm3451, %v3540, %v3242
      %v3573 = vsel %vm3451, %v3541, %v3244
      %v3574 = vsel %vm3451, %v3542, %v3246
      %v3575 = vsel %vm3451, %v3543, %v3248
      %v3576 = vsel %vm3451, %v3544, %v3250
      %v3577 = vsel %vm3451, %v3545, %v3252
      %v3578 = vsel %vm3451, %v3546, %v3254
      %v3579 = vsel %vm3451, %v3547, %v3256
      %v3580 = vsel %vm3451, %v3548, %v3258
      %v3581 = vsel %vm3484, %v3549, %v3324
      %v3582 = vsel %vm3484, %v3550, %v3326
      %v3583 = vsel %vm3484, %v3551, %v3328
      %v3584 = vsel %vm3484, %v3552, %v3330
      %v3585 = vsel %vm3484, %v3553, %v3332
      %v3586 = vsel %vm3484, %v3554, %v3334
      %v3587 = vsel %vm3484, %v3555, %v3336
      %v3588 = vsel %vm3484, %v3556, %v3338
      %v3589 = vsel %vm3484, %v3557, %v3340
      %v3590 = vsel %vm3484, %v3558, %v3342
      %v3591 = vsel %vm3484, %v3559, %v3344
      %v3592 = vsel %vm3484, %v3560, %v3346
      %v3593 = vsel %vm3484, %v3561, %v3348
      %v3594 = vsel %vm3484, %v3562, %v3350
      %v3595 = vsel %vm3484, %v3563, %v3352
      %v3596 = vsel %vm3484, %v3564, %v3354
      %v3597 = vsel %vm3484, %v3565, %v3356
      %v3598 = vsel %vm3484, %v3566, %v3358
      %v3599 = vsel %vm3484, %v3567, %v3360
      %v3600 = vsel %vm3484, %v3568, %v3362
      %v3601 = vsel %vm3484, %v3569, %v3364
      %v3602 = vsel %vm3484, %v3570, %v3366
      %v3603 = vsel %vm3484, %v3571, %v3368
      %v3604 = vsel %vm3484, %v3572, %v3370
      %v3605 = vsel %vm3484, %v3573, %v3372
      %v3606 = vsel %vm3484, %v3574, %v3374
      %v3607 = vsel %vm3484, %v3575, %v3376
      %v3608 = vsel %vm3484, %v3576, %v3378
      %v3609 = vsel %vm3484, %v3577, %v3380
      %v3610 = vsel %vm3484, %v3578, %v3382
      %v3611 = vsel %vm3484, %v3579, %v3384
      %v3612 = vsel %vm3484, %v3580, %v3386
      %v3613 = vpack.c.bf16 %v3486, %v3485
      %v3614 = vpack.c.bf16 %v3582, %v3581
      %v3615 = vpack.c.bf16 %v2620, %v2619
      %v3616 = vpack.c.bf16 %v3488, %v3487
      %v3617 = vpack.c.bf16 %v3584, %v3583
      %v3618 = vpack.c.bf16 %v2622, %v2621
      %v3619 = vpack.c.bf16 %v3490, %v3489
      %v3620 = vpack.c.bf16 %v3586, %v3585
      %v3621 = vpack.c.bf16 %v2624, %v2623
      %v3622 = vpack.c.bf16 %v3492, %v3491
      %v3623 = vpack.c.bf16 %v3588, %v3587
      %v3624 = vpack.c.bf16 %v2626, %v2625
      %v3625 = vpack.c.bf16 %v3494, %v3493
      %v3626 = vpack.c.bf16 %v3590, %v3589
      %v3627 = vpack.c.bf16 %v2628, %v2627
      %v3628 = vpack.c.bf16 %v3496, %v3495
      %v3629 = vpack.c.bf16 %v3592, %v3591
      %v3630 = vpack.c.bf16 %v2630, %v2629
      %v3631 = vpack.c.bf16 %v3498, %v3497
      %v3632 = vpack.c.bf16 %v3594, %v3593
      %v3633 = vpack.c.bf16 %v2632, %v2631
      %v3634 = vpack.c.bf16 %v3500, %v3499
      %v3635 = vpack.c.bf16 %v3596, %v3595
      %v3636 = vpack.c.bf16 %v2634, %v2633
      %v3637 = vpack.c.bf16 %v3502, %v3501
      %v3638 = vpack.c.bf16 %v3598, %v3597
      %v3639 = vpack.c.bf16 %v2636, %v2635
      %v3640 = vpack.c.bf16 %v3504, %v3503
      %v3641 = vpack.c.bf16 %v3600, %v3599
      %v3642 = vpack.c.bf16 %v2638, %v2637
      %v3643 = vpack.c.bf16 %v3506, %v3505
      %v3644 = vpack.c.bf16 %v3602, %v3601
      %v3645 = vpack.c.bf16 %v2640, %v2639
      %v3646 = vpack.c.bf16 %v3508, %v3507
      %v3647 = vpack.c.bf16 %v3604, %v3603
      %v3648 = vpack.c.bf16 %v2642, %v2641
      %v3649 = vpack.c.bf16 %v3510, %v3509
      %v3650 = vpack.c.bf16 %v3606, %v3605
      %v3651 = vpack.c.bf16 %v2644, %v2643
      %v3652 = vpack.c.bf16 %v3512, %v3511
      %v3653 = vpack.c.bf16 %v3608, %v3607
      %v3654 = vpack.c.bf16 %v2646, %v2645
      %v3655 = vpack.c.bf16 %v3514, %v3513
      %v3656 = vpack.c.bf16 %v3610, %v3609
      %v3657 = vpack.c.bf16 %v2648, %v2647
      %v3658 = vpack.c.bf16 %v3516, %v3515
      %v3659 = vpack.c.bf16 %v3612, %v3611
      %v3660 = vpack.c.bf16 %v2650, %v2649
      %v3661 = vlaneseq
      %v3662 = vshrl.u32 %v3661, 7
      %v3663 = vsub.s32 0, %v3662
      %v3664 = vrot.slane %v2361, %v3663
      %v3701 = vunpack.c.l.b16 %v2325
      %v3702 = vunpack.c.l.b16 %v2326
      %v3703 = vunpack.c.l.b16 %v2327
      %v3704 = vunpack.c.l.b16 %v2328
      %v3705 = vunpack.c.l.b16 %v2329
      %v3706 = vunpack.c.l.b16 %v2330
      %v3707 = vunpack.c.l.b16 %v2331
      %v3708 = vunpack.c.l.b16 %v2332
      %v3709 = vunpack.c.l.b16 %v2333
      %v3710 = vunpack.c.l.b16 %v2334
      %v3711 = vunpack.c.l.b16 %v2335
      %v3712 = vunpack.c.l.b16 %v2336
      %v3713 = vunpack.c.l.b16 %v2337
      %v3714 = vunpack.c.l.b16 %v2338
      %v3715 = vunpack.c.l.b16 %v2339
      %v3716 = vunpack.c.l.b16 %v2340
      %v3717 = vunpack.c.l.b16 %v2341
      %v3718 = vunpack.c.l.b16 %v2342
      %v3719 = vunpack.c.l.b16 %v2343
      %v3720 = vunpack.c.l.b16 %v2344
      %v3721 = vunpack.c.l.b16 %v2345
      %v3722 = vunpack.c.l.b16 %v2346
      %v3723 = vunpack.c.l.b16 %v2347
      %v3724 = vunpack.c.l.b16 %v2348
      %v3725 = vunpack.c.l.b16 %v2349
      %v3726 = vunpack.c.l.b16 %v2350
      %v3727 = vunpack.c.l.b16 %v2351
      %v3728 = vunpack.c.l.b16 %v2352
      %v3729 = vunpack.c.l.b16 %v2353
      %v3730 = vunpack.c.l.b16 %v2354
      %v3731 = vunpack.c.l.b16 %v2355
      %v3732 = vunpack.c.l.b16 %v2356
      %v3733 = vunpack.c.l.b16 %v2357
      %v3734 = vunpack.c.l.b16 %v2358
      %v3735 = vunpack.c.l.b16 %v2359
      %v3736 = vunpack.c.l.b16 %v2360
      %v3737 = vpack.c.b16 %v3702, %v3701
      %v3738 = vpack.c.b16 %v3704, %v3703
      %v3739 = vpack.c.b16 %v3706, %v3705
      %v3740 = vpack.c.b16 %v3708, %v3707
      %v3741 = vpack.c.b16 %v3710, %v3709
      %v3742 = vpack.c.b16 %v3712, %v3711
      %v3743 = vpack.c.b16 %v3714, %v3713
      %v3744 = vpack.c.b16 %v3716, %v3715
      %v3745 = vpack.c.b16 %v3718, %v3717
      %v3746 = vpack.c.b16 %v3720, %v3719
      %v3747 = vpack.c.b16 %v3722, %v3721
      %v3748 = vpack.c.b16 %v3724, %v3723
      %v3749 = vpack.c.b16 %v3726, %v3725
      %v3750 = vpack.c.b16 %v3728, %v3727
      %v3751 = vpack.c.b16 %v3730, %v3729
      %v3752 = vpack.c.b16 %v3732, %v3731
      %v3753 = vpack.c.b16 %v3734, %v3733
      %v3754 = vpack.c.b16 %v3736, %v3735
      %v3774 = vsel %vm309, %v3615, 0
      %v3777 = vsel %vm309, %v3618, 0
      %v3780 = vsel %vm309, %v3621, 0
      %v3783 = vsel %vm309, %v3624, 0
      %v3786 = vsel %vm309, %v3627, 0
      %v3789 = vsel %vm309, %v3630, 0
      %v3792 = vsel %vm309, %v3633, 0
      %v3795 = vsel %vm309, %v3636, 0
      %v3798 = vsel %vm309, %v3639, 0
      %v3801 = vsel %vm309, %v3642, 0
      %v3804 = vsel %vm309, %v3645, 0
      %v3807 = vsel %vm309, %v3648, 0
      %v3810 = vsel %vm309, %v3651, 0
      %v3813 = vsel %vm309, %v3654, 0
      %v3816 = vsel %vm309, %v3657, 0
      %v3819 = vsel %vm309, %v3660, 0
      %3821 = vmatprep.subr.bf16.mxu0 0
      %3822 = vmatpush1.bf16.msra.mxu0 %v3744
      %3823 = vmatprep.subr.bf16.mxu0 0
      %3824 = vmatpush1.bf16.msra.mxu0 %v3743
      %3825 = vmatprep.subr.bf16.mxu0 0
      %3826 = vmatpush1.bf16.msra.mxu0 %v3742
      %3827 = vmatprep.subr.bf16.mxu0 0
      %3828 = vmatpush1.bf16.msra.mxu0 %v3741
      %3829 = vmatprep.subr.bf16.mxu0 0
      %3830 = vmatpush1.bf16.msra.mxu0 %v3740
      %3831 = vmatprep.subr.bf16.mxu0 0
      %3832 = vmatpush1.bf16.msra.mxu0 %v3739
      %3833 = vmatprep.subr.bf16.mxu0 0
      %3834 = vmatpush1.bf16.msra.mxu0 %v3738
      %3835 = vmatprep.subr.bf16.mxu0 0
      %3836 = vmatpush1.bf16.msra.mxu0 %v3737
      %3837 = vmatprep.subr.bf16.mxu0 0
      %3838 = vmatpush2.bf16.msra.mxu0 %v3752
      %3839 = vmatprep.subr.bf16.mxu0 0
      %3840 = vmatpush2.bf16.msra.mxu0 %v3751
      %3841 = vmatprep.subr.bf16.mxu0 0
      %3842 = vmatpush2.bf16.msra.mxu0 %v3750
      %3843 = vmatprep.subr.bf16.mxu0 0
      %3844 = vmatpush2.bf16.msra.mxu0 %v3749
      %3845 = vmatprep.subr.bf16.mxu0 0
      %3846 = vmatpush2.bf16.msra.mxu0 %v3748
      %3847 = vmatprep.subr.bf16.mxu0 0
      %3848 = vmatpush2.bf16.msra.mxu0 %v3747
      %3849 = vmatprep.subr.bf16.mxu0 0
      %3850 = vmatpush2.bf16.msra.mxu0 %v3746
      %3851 = vmatprep.subr.bf16.mxu0 0
      %3852 = vmatpush2.bf16.msra.mxu0 %v3745
      %3853 = vmatprep.mubr.bf16.mxu0 %v3614
      %3854 = vmatmul.mubr.bf16.gmra.mxu0 %v3613
      %v3855 = vpop.f32.mrf.mxu0
      %v3856 = vadd.f32 %v3664, %v3855
      %v3857 = vpop.f32.mrf.mxu0
      %v3858 = vpop.f32.mrf.mxu0
      %v3859 = vadd.f32 %v3664, %v3858
      %v3860 = vpop.f32.mrf.mxu0
      %3861 = vmatprep.mubr.bf16.mxu0 %v3617
      %3862 = vmatmul.mubr.bf16.gmra.mxu0 %v3616
      %v3863 = vpop.f32.mrf.mxu0
      %v3864 = vadd.f32 %v3664, %v3863
      %v3865 = vpop.f32.mrf.mxu0
      %v3866 = vpop.f32.mrf.mxu0
      %v3867 = vadd.f32 %v3664, %v3866
      %v3868 = vpop.f32.mrf.mxu0
      %3869 = vmatprep.mubr.bf16.mxu0 %v3620
      %3870 = vmatmul.mubr.bf16.gmra.mxu0 %v3619
      %v3871 = vpop.f32.mrf.mxu0
      %v3872 = vadd.f32 %v3664, %v3871
      %v3873 = vpop.f32.mrf.mxu0
      %v3874 = vpop.f32.mrf.mxu0
      %v3875 = vadd.f32 %v3664, %v3874
      %v3876 = vpop.f32.mrf.mxu0
      %3877 = vmatprep.mubr.bf16.mxu0 %v3623
      %3878 = vmatmul.mubr.bf16.gmra.mxu0 %v3622
      %v3879 = vpop.f32.mrf.mxu0
      %v3880 = vadd.f32 %v3664, %v3879
      %v3881 = vpop.f32.mrf.mxu0
      %v3882 = vpop.f32.mrf.mxu0
      %v3883 = vadd.f32 %v3664, %v3882
      %v3884 = vpop.f32.mrf.mxu0
      %3885 = vmatprep.mubr.bf16.mxu0 %v3626
      %3886 = vmatmul.mubr.bf16.gmra.mxu0 %v3625
      %v3887 = vpop.f32.mrf.mxu0
      %v3888 = vadd.f32 %v3664, %v3887
      %v3889 = vpop.f32.mrf.mxu0
      %v3890 = vpop.f32.mrf.mxu0
      %v3891 = vadd.f32 %v3664, %v3890
      %v3892 = vpop.f32.mrf.mxu0
      %3893 = vmatprep.mubr.bf16.mxu0 %v3629
      %3894 = vmatmul.mubr.bf16.gmra.mxu0 %v3628
      %v3895 = vpop.f32.mrf.mxu0
      %v3896 = vadd.f32 %v3664, %v3895
      %v3897 = vpop.f32.mrf.mxu0
      %v3898 = vpop.f32.mrf.mxu0
      %v3899 = vadd.f32 %v3664, %v3898
      %v3900 = vpop.f32.mrf.mxu0
      %3901 = vmatprep.mubr.bf16.mxu0 %v3632
      %3902 = vmatmul.mubr.bf16.gmra.mxu0 %v3631
      %v3903 = vpop.f32.mrf.mxu0
      %v3904 = vadd.f32 %v3664, %v3903
      %v3905 = vpop.f32.mrf.mxu0
      %v3906 = vpop.f32.mrf.mxu0
      %v3907 = vadd.f32 %v3664, %v3906
      %v3908 = vpop.f32.mrf.mxu0
      %3909 = vmatprep.mubr.bf16.mxu0 %v3635
      %3910 = vmatmul.mubr.bf16.gmra.mxu0 %v3634
      %v3911 = vpop.f32.mrf.mxu0
      %v3912 = vadd.f32 %v3664, %v3911
      %v3913 = vpop.f32.mrf.mxu0
      %v3914 = vpop.f32.mrf.mxu0
      %v3915 = vadd.f32 %v3664, %v3914
      %v3916 = vpop.f32.mrf.mxu0
      %3917 = vmatprep.mubr.bf16.mxu0 %v3638
      %3918 = vmatmul.mubr.bf16.gmra.mxu0 %v3637
      %v3919 = vpop.f32.mrf.mxu0
      %v3920 = vadd.f32 %v3664, %v3919
      %v3921 = vpop.f32.mrf.mxu0
      %v3922 = vpop.f32.mrf.mxu0
      %v3923 = vadd.f32 %v3664, %v3922
      %v3924 = vpop.f32.mrf.mxu0
      %3925 = vmatprep.mubr.bf16.mxu0 %v3641
      %3926 = vmatmul.mubr.bf16.gmra.mxu0 %v3640
      %v3927 = vpop.f32.mrf.mxu0
      %v3928 = vadd.f32 %v3664, %v3927
      %v3929 = vpop.f32.mrf.mxu0
      %v3930 = vpop.f32.mrf.mxu0
      %v3931 = vadd.f32 %v3664, %v3930
      %v3932 = vpop.f32.mrf.mxu0
      %3933 = vmatprep.mubr.bf16.mxu0 %v3644
      %3934 = vmatmul.mubr.bf16.gmra.mxu0 %v3643
      %v3935 = vpop.f32.mrf.mxu0
      %v3936 = vadd.f32 %v3664, %v3935
      %v3937 = vpop.f32.mrf.mxu0
      %v3938 = vpop.f32.mrf.mxu0
      %v3939 = vadd.f32 %v3664, %v3938
      %v3940 = vpop.f32.mrf.mxu0
      %3941 = vmatprep.mubr.bf16.mxu0 %v3647
      %3942 = vmatmul.mubr.bf16.gmra.mxu0 %v3646
      %v3943 = vpop.f32.mrf.mxu0
      %v3944 = vadd.f32 %v3664, %v3943
      %v3945 = vpop.f32.mrf.mxu0
      %v3946 = vpop.f32.mrf.mxu0
      %v3947 = vadd.f32 %v3664, %v3946
      %v3948 = vpop.f32.mrf.mxu0
      %3949 = vmatprep.mubr.bf16.mxu0 %v3650
      %3950 = vmatmul.mubr.bf16.gmra.mxu0 %v3649
      %v3951 = vpop.f32.mrf.mxu0
      %v3952 = vadd.f32 %v3664, %v3951
      %v3953 = vpop.f32.mrf.mxu0
      %v3954 = vpop.f32.mrf.mxu0
      %v3955 = vadd.f32 %v3664, %v3954
      %v3956 = vpop.f32.mrf.mxu0
      %3957 = vmatprep.mubr.bf16.mxu0 %v3653
      %3958 = vmatmul.mubr.bf16.gmra.mxu0 %v3652
      %v3959 = vpop.f32.mrf.mxu0
      %v3960 = vadd.f32 %v3664, %v3959
      %v3961 = vpop.f32.mrf.mxu0
      %v3962 = vpop.f32.mrf.mxu0
      %v3963 = vadd.f32 %v3664, %v3962
      %v3964 = vpop.f32.mrf.mxu0
      %3965 = vmatprep.mubr.bf16.mxu0 %v3656
      %3966 = vmatmul.mubr.bf16.gmra.mxu0 %v3655
      %v3967 = vpop.f32.mrf.mxu0
      %v3968 = vadd.f32 %v3664, %v3967
      %v3969 = vpop.f32.mrf.mxu0
      %v3970 = vpop.f32.mrf.mxu0
      %v3971 = vadd.f32 %v3664, %v3970
      %v3972 = vpop.f32.mrf.mxu0
      %3973 = vmatprep.mubr.bf16.mxu0 %v3659
      %3974 = vmatmul.mubr.bf16.gmra.mxu0 %v3658
      %v3975 = vpop.f32.mrf.mxu0
      %v3976 = vadd.f32 %v3664, %v3975
      %v3977 = vpop.f32.mrf.mxu0
      %v3978 = vpop.f32.mrf.mxu0
      %v3979 = vadd.f32 %v3664, %v3978
      %v3980 = vpop.f32.mrf.mxu0
      %3981 = vdwg.mxu0
      %3982 = vmatprep.subr.bf16.mxu0 0
      %3983 = vmatpush1.bf16.msra.mxu0 0
      %3984 = vmatprep.subr.bf16.mxu0 0
      %3985 = vmatpush1.bf16.msra.mxu0 0
      %3986 = vmatprep.subr.bf16.mxu0 0
      %3987 = vmatpush1.bf16.msra.mxu0 0
      %3988 = vmatprep.subr.bf16.mxu0 0
      %3989 = vmatpush1.bf16.msra.mxu0 0
      %3990 = vmatprep.subr.bf16.mxu0 0
      %3991 = vmatpush1.bf16.msra.mxu0 0
      %3992 = vmatprep.subr.bf16.mxu0 0
      %3993 = vmatpush1.bf16.msra.mxu0 0
      %3994 = vmatprep.subr.bf16.mxu0 0
      %3995 = vmatpush1.bf16.msra.mxu0 %v3754
      %3996 = vmatprep.subr.bf16.mxu0 0
      %3997 = vmatpush1.bf16.msra.mxu0 %v3753
      %3998 = vmatprep.subr.bf16.mxu0 0
      %3999 = vmatpush2.bf16.msra.mxu0 0
      %4000 = vmatprep.subr.bf16.mxu0 0
      %4001 = vmatpush2.bf16.msra.mxu0 0
      %4002 = vmatprep.subr.bf16.mxu0 0
      %4003 = vmatpush2.bf16.msra.mxu0 0
      %4004 = vmatprep.subr.bf16.mxu0 0
      %4005 = vmatpush2.bf16.msra.mxu0 0
      %4006 = vmatprep.subr.bf16.mxu0 0
      %4007 = vmatpush2.bf16.msra.mxu0 0
      %4008 = vmatprep.subr.bf16.mxu0 0
      %4009 = vmatpush2.bf16.msra.mxu0 0
      %4010 = vmatprep.subr.bf16.mxu0 0
      %4011 = vmatpush2.bf16.msra.mxu0 0
      %4012 = vmatprep.subr.bf16.mxu0 0
      %4013 = vmatpush2.bf16.msra.mxu0 0
      %4014 = vmatprep.mubr.bf16.mxu0 0
      %4015 = vmatmul.mubr.bf16.gmra.mxu0 %v3774
      %v4016 = vpop.f32.mrf.mxu0
      %v4017 = vadd.f32 %v3856, %v4016
      %v4018 = vpop.f32.mrf.mxu0
      %v4019 = vpop.f32.mrf.mxu0
      %v4020 = vadd.f32 %v3859, %v4019
      %v4021 = vpop.f32.mrf.mxu0
      %4022 = vmatprep.mubr.bf16.mxu0 0
      %4023 = vmatmul.mubr.bf16.gmra.mxu0 %v3777
      %v4024 = vpop.f32.mrf.mxu0
      %v4025 = vadd.f32 %v3864, %v4024
      %v4026 = vpop.f32.mrf.mxu0
      %v4027 = vpop.f32.mrf.mxu0
      %v4028 = vadd.f32 %v3867, %v4027
      %v4029 = vpop.f32.mrf.mxu0
      %4030 = vmatprep.mubr.bf16.mxu0 0
      %4031 = vmatmul.mubr.bf16.gmra.mxu0 %v3780
      %v4032 = vpop.f32.mrf.mxu0
      %v4033 = vadd.f32 %v3872, %v4032
      %v4034 = vpop.f32.mrf.mxu0
      %v4035 = vpop.f32.mrf.mxu0
      %v4036 = vadd.f32 %v3875, %v4035
      %v4037 = vpop.f32.mrf.mxu0
      %4038 = vmatprep.mubr.bf16.mxu0 0
      %4039 = vmatmul.mubr.bf16.gmra.mxu0 %v3783
      %v4040 = vpop.f32.mrf.mxu0
      %v4041 = vadd.f32 %v3880, %v4040
      %v4042 = vpop.f32.mrf.mxu0
      %v4043 = vpop.f32.mrf.mxu0
      %v4044 = vadd.f32 %v3883, %v4043
      %v4045 = vpop.f32.mrf.mxu0
      %4046 = vmatprep.mubr.bf16.mxu0 0
      %4047 = vmatmul.mubr.bf16.gmra.mxu0 %v3786
      %v4048 = vpop.f32.mrf.mxu0
      %v4049 = vadd.f32 %v3888, %v4048
      %v4050 = vpop.f32.mrf.mxu0
      %v4051 = vpop.f32.mrf.mxu0
      %v4052 = vadd.f32 %v3891, %v4051
      %v4053 = vpop.f32.mrf.mxu0
      %4054 = vmatprep.mubr.bf16.mxu0 0
      %4055 = vmatmul.mubr.bf16.gmra.mxu0 %v3789
      %v4056 = vpop.f32.mrf.mxu0
      %v4057 = vadd.f32 %v3896, %v4056
      %v4058 = vpop.f32.mrf.mxu0
      %v4059 = vpop.f32.mrf.mxu0
      %v4060 = vadd.f32 %v3899, %v4059
      %v4061 = vpop.f32.mrf.mxu0
      %4062 = vmatprep.mubr.bf16.mxu0 0
      %4063 = vmatmul.mubr.bf16.gmra.mxu0 %v3792
      %v4064 = vpop.f32.mrf.mxu0
      %v4065 = vadd.f32 %v3904, %v4064
      %v4066 = vpop.f32.mrf.mxu0
      %v4067 = vpop.f32.mrf.mxu0
      %v4068 = vadd.f32 %v3907, %v4067
      %v4069 = vpop.f32.mrf.mxu0
      %4070 = vmatprep.mubr.bf16.mxu0 0
      %4071 = vmatmul.mubr.bf16.gmra.mxu0 %v3795
      %v4072 = vpop.f32.mrf.mxu0
      %v4073 = vadd.f32 %v3912, %v4072
      %v4074 = vpop.f32.mrf.mxu0
      %v4075 = vpop.f32.mrf.mxu0
      %v4076 = vadd.f32 %v3915, %v4075
      %v4077 = vpop.f32.mrf.mxu0
      %4078 = vmatprep.mubr.bf16.mxu0 0
      %4079 = vmatmul.mubr.bf16.gmra.mxu0 %v3798
      %v4080 = vpop.f32.mrf.mxu0
      %v4081 = vadd.f32 %v3920, %v4080
      %v4082 = vpop.f32.mrf.mxu0
      %v4083 = vpop.f32.mrf.mxu0
      %v4084 = vadd.f32 %v3923, %v4083
      %v4085 = vpop.f32.mrf.mxu0
      %4086 = vmatprep.mubr.bf16.mxu0 0
      %4087 = vmatmul.mubr.bf16.gmra.mxu0 %v3801
      %v4088 = vpop.f32.mrf.mxu0
      %v4089 = vadd.f32 %v3928, %v4088
      %v4090 = vpop.f32.mrf.mxu0
      %v4091 = vpop.f32.mrf.mxu0
      %v4092 = vadd.f32 %v3931, %v4091
      %v4093 = vpop.f32.mrf.mxu0
      %4094 = vmatprep.mubr.bf16.mxu0 0
      %4095 = vmatmul.mubr.bf16.gmra.mxu0 %v3804
      %v4096 = vpop.f32.mrf.mxu0
      %v4097 = vadd.f32 %v3936, %v4096
      %v4098 = vpop.f32.mrf.mxu0
      %v4099 = vpop.f32.mrf.mxu0
      %v4100 = vadd.f32 %v3939, %v4099
      %v4101 = vpop.f32.mrf.mxu0
      %4102 = vmatprep.mubr.bf16.mxu0 0
      %4103 = vmatmul.mubr.bf16.gmra.mxu0 %v3807
      %v4104 = vpop.f32.mrf.mxu0
      %v4105 = vadd.f32 %v3944, %v4104
      %v4106 = vpop.f32.mrf.mxu0
      %v4107 = vpop.f32.mrf.mxu0
      %v4108 = vadd.f32 %v3947, %v4107
      %v4109 = vpop.f32.mrf.mxu0
      %4110 = vmatprep.mubr.bf16.mxu0 0
      %4111 = vmatmul.mubr.bf16.gmra.mxu0 %v3810
      %v4112 = vpop.f32.mrf.mxu0
      %v4113 = vadd.f32 %v3952, %v4112
      %v4114 = vpop.f32.mrf.mxu0
      %v4115 = vpop.f32.mrf.mxu0
      %v4116 = vadd.f32 %v3955, %v4115
      %v4117 = vpop.f32.mrf.mxu0
      %4118 = vmatprep.mubr.bf16.mxu0 0
      %4119 = vmatmul.mubr.bf16.gmra.mxu0 %v3813
      %v4120 = vpop.f32.mrf.mxu0
      %v4121 = vadd.f32 %v3960, %v4120
      %v4122 = vpop.f32.mrf.mxu0
      %v4123 = vpop.f32.mrf.mxu0
      %v4124 = vadd.f32 %v3963, %v4123
      %v4125 = vpop.f32.mrf.mxu0
      %4126 = vmatprep.mubr.bf16.mxu0 0
      %4127 = vmatmul.mubr.bf16.gmra.mxu0 %v3816
      %v4128 = vpop.f32.mrf.mxu0
      %v4129 = vadd.f32 %v3968, %v4128
      %v4130 = vpop.f32.mrf.mxu0
      %v4131 = vpop.f32.mrf.mxu0
      %v4132 = vadd.f32 %v3971, %v4131
      %v4133 = vpop.f32.mrf.mxu0
      %4134 = vmatprep.mubr.bf16.mxu0 0
      %4135 = vmatmul.mubr.bf16.gmra.mxu0 %v3819
      %v4136 = vpop.f32.mrf.mxu0
      %v4137 = vadd.f32 %v3976, %v4136
      %v4138 = vpop.f32.mrf.mxu0
      %v4139 = vpop.f32.mrf.mxu0
      %v4140 = vadd.f32 %v3979, %v4139
      %v4141 = vpop.f32.mrf.mxu0
      %4142 = vdwg.mxu0
      %v4143 = vmax.f32 %v4017, 0.0
      %v4144 = vmax.f32 %v4020, 0.0
      %v4145 = vmax.f32 %v4025, 0.0
      %v4146 = vmax.f32 %v4028, 0.0
      %v4147 = vmax.f32 %v4033, 0.0
      %v4148 = vmax.f32 %v4036, 0.0
      %v4149 = vmax.f32 %v4041, 0.0
      %v4150 = vmax.f32 %v4044, 0.0
      %v4151 = vmax.f32 %v4049, 0.0
      %v4152 = vmax.f32 %v4052, 0.0
      %v4153 = vmax.f32 %v4057, 0.0
      %v4154 = vmax.f32 %v4060, 0.0
      %v4155 = vmax.f32 %v4065, 0.0
      %v4156 = vmax.f32 %v4068, 0.0
      %v4157 = vmax.f32 %v4073, 0.0
      %v4158 = vmax.f32 %v4076, 0.0
      %v4159 = vmax.f32 %v4081, 0.0
      %v4160 = vmax.f32 %v4084, 0.0
      %v4161 = vmax.f32 %v4089, 0.0
      %v4162 = vmax.f32 %v4092, 0.0
      %v4163 = vmax.f32 %v4097, 0.0
      %v4164 = vmax.f32 %v4100, 0.0
      %v4165 = vmax.f32 %v4105, 0.0
      %v4166 = vmax.f32 %v4108, 0.0
      %v4167 = vmax.f32 %v4113, 0.0
      %v4168 = vmax.f32 %v4116, 0.0
      %v4169 = vmax.f32 %v4121, 0.0
      %v4170 = vmax.f32 %v4124, 0.0
      %v4171 = vmax.f32 %v4129, 0.0
      %v4172 = vmax.f32 %v4132, 0.0
      %v4173 = vmax.f32 %v4137, 0.0
      %v4174 = vmax.f32 %v4140, 0.0
      %4175 = vst.msk [vmem:[%s2292 + $0x1] sm:$0xff] %vm309, %v4143
      %4176 = vst.msk [vmem:[%s2292 + $0x9] sm:$0xff] %vm309, %v4144
      %4177 = vst.msk [vmem:[%s2292 + $0x19] sm:$0xff] %vm309, %v4145
      %4178 = vst.msk [vmem:[%s2292 + $0x21] sm:$0xff] %vm309, %v4146
      %4179 = vst.msk [vmem:[%s2292 + $0x31] sm:$0xff] %vm309, %v4147
      %4180 = vst.msk [vmem:[%s2292 + $0x39] sm:$0xff] %vm309, %v4148
      %4181 = vst.msk [vmem:[%s2292 + $0x49] sm:$0xff] %vm309, %v4149
      %4182 = vst.msk [vmem:[%s2292 + $0x51] sm:$0xff] %vm309, %v4150
      %4183 = vst.msk [vmem:[%s2292 + $0x61] sm:$0xff] %vm309, %v4151
      %4184 = vst.msk [vmem:[%s2292 + $0x69] sm:$0xff] %vm309, %v4152
      %4185 = vst.msk [vmem:[%s2292 + $0x79] sm:$0xff] %vm309, %v4153
      %4186 = vst.msk [vmem:[%s2292 + $0x81] sm:$0xff] %vm309, %v4154
      %4187 = vst.msk [vmem:[%s2292 + $0x91] sm:$0xff] %vm309, %v4155
      %4188 = vst.msk [vmem:[%s2292 + $0x99] sm:$0xff] %vm309, %v4156
      %4189 = vst.msk [vmem:[%s2292 + $0xa9] sm:$0xff] %vm309, %v4157
      %4190 = vst.msk [vmem:[%s2292 + $0xb1] sm:$0xff] %vm309, %v4158
      %4191 = vst.msk [vmem:[%s2292 + $0xc1] sm:$0xff] %vm309, %v4159
      %4192 = vst.msk [vmem:[%s2292 + $0xc9] sm:$0xff] %vm309, %v4160
      %4193 = vst.msk [vmem:[%s2292 + $0xd9] sm:$0xff] %vm309, %v4161
      %4194 = vst.msk [vmem:[%s2292 + $0xe1] sm:$0xff] %vm309, %v4162
      %4195 = vst.msk [vmem:[%s2292 + $0xf1] sm:$0xff] %vm309, %v4163
      %4196 = vst.msk [vmem:[%s2292 + $0xf9] sm:$0xff] %vm309, %v4164
      %4197 = vst.msk [vmem:[%s2292 + $0x109] sm:$0xff] %vm309, %v4165
      %4198 = vst.msk [vmem:[%s2292 + $0x111] sm:$0xff] %vm309, %v4166
      %4199 = vst.msk [vmem:[%s2292 + $0x121] sm:$0xff] %vm309, %v4167
      %4200 = vst.msk [vmem:[%s2292 + $0x129] sm:$0xff] %vm309, %v4168
      %4201 = vst.msk [vmem:[%s2292 + $0x139] sm:$0xff] %vm309, %v4169
      %4202 = vst.msk [vmem:[%s2292 + $0x141] sm:$0xff] %vm309, %v4170
      %4203 = vst.msk [vmem:[%s2292 + $0x151] sm:$0xff] %vm309, %v4171
      %4204 = vst.msk [vmem:[%s2292 + $0x159] sm:$0xff] %vm309, %v4172
      %4205 = vst.msk [vmem:[%s2292 + $0x169] sm:$0xff] %vm309, %v4173
      %4206 = vst.msk [vmem:[%s2292 + $0x171] sm:$0xff] %vm309, %v4174
      %s4207 = scalar_lea.vmem %s2, 144
      %v4208 = vld [vmem:[%s4207] sm:$0xf]
      %v4209 = vld [vmem:[%s4207 + $0x4] sm:$0xf]
      %v4210 = vld [vmem:[%s4207 + $0x8] sm:$0xf]
      %v4211 = vld [vmem:[%s4207 + $0xc] sm:$0xf]
      %v4212 = vld [vmem:[%s4207 + $0x10] sm:$0xf]
      %v4213 = vld [vmem:[%s4207 + $0x14] sm:$0xf]
      %v4214 = vld [vmem:[%s4207 + $0x18] sm:$0xf]
      %v4215 = vld [vmem:[%s4207 + $0x1c] sm:$0xf]
      %v4216 = vld [vmem:[%s4207 + $0x20] sm:$0xf]
      %v4217 = vld [vmem:[%s4207 + $0x24] sm:$0xf]
      %v4218 = vld [vmem:[%s4207 + $0x28] sm:$0xf]
      %v4219 = vld [vmem:[%s4207 + $0x2c] sm:$0xf]
      %v4220 = vld [vmem:[%s4207 + $0x30] sm:$0xf]
      %v4221 = vld [vmem:[%s4207 + $0x34] sm:$0xf]
      %v4222 = vld [vmem:[%s4207 + $0x38] sm:$0xf]
      %v4223 = vld [vmem:[%s4207 + $0x3c] sm:$0xf]
      %v4224 = vld [vmem:[%s4207 + $0x40] sm:$0xf]
      %v4225 = vld [vmem:[%s4207 + $0x44] sm:$0xf]
      %v4226 = vld [vmem:[%s4207 + $0x48] sm:$0xf]
      %v4227 = vld [vmem:[%s4207 + $0x4c] sm:$0xf]
      %v4228 = vld [vmem:[%s4207 + $0x50] sm:$0xf]
      %v4229 = vld [vmem:[%s4207 + $0x54] sm:$0xf]
      %v4230 = vld [vmem:[%s4207 + $0x58] sm:$0xf]
      %v4231 = vld [vmem:[%s4207 + $0x5c] sm:$0xf]
      %v4232 = vld [vmem:[%s4207 + $0x60] sm:$0xf]
      %v4233 = vld [vmem:[%s4207 + $0x64] sm:$0xf]
      %v4234 = vld [vmem:[%s4207 + $0x68] sm:$0xf]
      %v4235 = vld [vmem:[%s4207 + $0x6c] sm:$0xf]
      %v4236 = vld [vmem:[%s4207 + $0x70] sm:$0xf]
      %v4237 = vld [vmem:[%s4207 + $0x74] sm:$0xf]
      %v4238 = vld [vmem:[%s4207 + $0x78] sm:$0xf]
      %v4239 = vld [vmem:[%s4207 + $0x7c] sm:$0xf]
      %v4240 = vld [vmem:[%s4207 + $0x80] sm:$0xf]
      %v4241 = vld [vmem:[%s4207 + $0x84] sm:$0xf]
      %v4242 = vld [vmem:[%s4207 + $0x88] sm:$0xf]
      %v4243 = vld [vmem:[%s4207 + $0x8c] sm:$0xf]
      %v4244 = vld [vmem:[%s3 + $0x2] sm:$0x1]
      %v4245 = vld [vmem:[#allocation3] sm:$0xff]
      %v4246 = vld [vmem:[#allocation3 + $0x8] sm:$0xff]
      %v4247 = vld [vmem:[#allocation3 + $0x18] sm:$0xff]
      %v4248 = vld [vmem:[#allocation3 + $0x20] sm:$0xff]
      %v4249 = vld [vmem:[#allocation3 + $0x30] sm:$0xff]
      %v4250 = vld [vmem:[#allocation3 + $0x38] sm:$0xff]
      %v4251 = vld [vmem:[#allocation3 + $0x48] sm:$0xff]
      %v4252 = vld [vmem:[#allocation3 + $0x50] sm:$0xff]
      %v4253 = vld [vmem:[#allocation3 + $0x60] sm:$0xff]
      %v4254 = vld [vmem:[#allocation3 + $0x68] sm:$0xff]
      %v4255 = vld [vmem:[#allocation3 + $0x78] sm:$0xff]
      %v4256 = vld [vmem:[#allocation3 + $0x80] sm:$0xff]
      %v4257 = vld [vmem:[#allocation3 + $0x90] sm:$0xff]
      %v4258 = vld [vmem:[#allocation3 + $0x98] sm:$0xff]
      %v4259 = vld [vmem:[#allocation3 + $0xa8] sm:$0xff]
      %v4260 = vld [vmem:[#allocation3 + $0xb0] sm:$0xff]
      %v4261 = vld [vmem:[#allocation3 + $0xc0] sm:$0xff]
      %v4262 = vld [vmem:[#allocation3 + $0xc8] sm:$0xff]
      %v4263 = vld [vmem:[#allocation3 + $0xd8] sm:$0xff]
      %v4264 = vld [vmem:[#allocation3 + $0xe0] sm:$0xff]
      %v4265 = vld [vmem:[#allocation3 + $0xf0] sm:$0xff]
      %v4266 = vld [vmem:[#allocation3 + $0xf8] sm:$0xff]
      %v4267 = vld [vmem:[#allocation3 + $0x108] sm:$0xff]
      %v4268 = vld [vmem:[#allocation3 + $0x110] sm:$0xff]
      %v4269 = vld [vmem:[#allocation3 + $0x120] sm:$0xff]
      %v4270 = vld [vmem:[#allocation3 + $0x128] sm:$0xff]
      %v4271 = vld [vmem:[#allocation3 + $0x138] sm:$0xff]
      %v4272 = vld [vmem:[#allocation3 + $0x140] sm:$0xff]
      %v4273 = vld [vmem:[#allocation3 + $0x150] sm:$0xff]
      %v4274 = vld [vmem:[#allocation3 + $0x158] sm:$0xff]
      %v4275 = vld [vmem:[#allocation3 + $0x168] sm:$0xff]
      %v4276 = vld [vmem:[#allocation3 + $0x170] sm:$0xff]
      %v4277 = vld [vmem:[#allocation3 + $0x1] sm:$0xff]
      %v4278 = vld [vmem:[#allocation3 + $0x9] sm:$0xff]
      %v4279 = vld [vmem:[#allocation3 + $0x19] sm:$0xff]
      %v4280 = vld [vmem:[#allocation3 + $0x21] sm:$0xff]
      %v4281 = vld [vmem:[#allocation3 + $0x31] sm:$0xff]
      %v4282 = vld [vmem:[#allocation3 + $0x39] sm:$0xff]
      %v4283 = vld [vmem:[#allocation3 + $0x49] sm:$0xff]
      %v4284 = vld [vmem:[#allocation3 + $0x51] sm:$0xff]
      %v4285 = vld [vmem:[#allocation3 + $0x61] sm:$0xff]
      %v4286 = vld [vmem:[#allocation3 + $0x69] sm:$0xff]
      %v4287 = vld [vmem:[#allocation3 + $0x79] sm:$0xff]
      %v4288 = vld [vmem:[#allocation3 + $0x81] sm:$0xff]
      %v4289 = vld [vmem:[#allocation3 + $0x91] sm:$0xff]
      %v4290 = vld [vmem:[#allocation3 + $0x99] sm:$0xff]
      %v4291 = vld [vmem:[#allocation3 + $0xa9] sm:$0xff]
      %v4292 = vld [vmem:[#allocation3 + $0xb1] sm:$0xff]
      %v4293 = vld [vmem:[#allocation3 + $0xc1] sm:$0xff]
      %v4294 = vld [vmem:[#allocation3 + $0xc9] sm:$0xff]
      %v4295 = vld [vmem:[#allocation3 + $0xd9] sm:$0xff]
      %v4296 = vld [vmem:[#allocation3 + $0xe1] sm:$0xff]
      %v4297 = vld [vmem:[#allocation3 + $0xf1] sm:$0xff]
      %v4298 = vld [vmem:[#allocation3 + $0xf9] sm:$0xff]
      %v4299 = vld [vmem:[#allocation3 + $0x109] sm:$0xff]
      %v4300 = vld [vmem:[#allocation3 + $0x111] sm:$0xff]
      %v4301 = vld [vmem:[#allocation3 + $0x121] sm:$0xff]
      %v4302 = vld [vmem:[#allocation3 + $0x129] sm:$0xff]
      %v4303 = vld [vmem:[#allocation3 + $0x139] sm:$0xff]
      %v4304 = vld [vmem:[#allocation3 + $0x141] sm:$0xff]
      %v4305 = vld [vmem:[#allocation3 + $0x151] sm:$0xff]
      %v4306 = vld [vmem:[#allocation3 + $0x159] sm:$0xff]
      %v4307 = vld [vmem:[#allocation3 + $0x169] sm:$0xff]
      %v4308 = vld [vmem:[#allocation3 + $0x171] sm:$0xff]
      %v4309 = vld [vmem:[#allocation3 + $0x2] sm:$0xff]
      %v4310 = vld [vmem:[#allocation3 + $0xa] sm:$0xff]
      %v4311 = vld [vmem:[#allocation3 + $0x1a] sm:$0xff]
      %v4312 = vld [vmem:[#allocation3 + $0x22] sm:$0xff]
      %v4313 = vld [vmem:[#allocation3 + $0x32] sm:$0xff]
      %v4314 = vld [vmem:[#allocation3 + $0x3a] sm:$0xff]
      %v4315 = vld [vmem:[#allocation3 + $0x4a] sm:$0xff]
      %v4316 = vld [vmem:[#allocation3 + $0x52] sm:$0xff]
      %v4317 = vld [vmem:[#allocation3 + $0x62] sm:$0xff]
      %v4318 = vld [vmem:[#allocation3 + $0x6a] sm:$0xff]
      %v4319 = vld [vmem:[#allocation3 + $0x7a] sm:$0xff]
      %v4320 = vld [vmem:[#allocation3 + $0x82] sm:$0xff]
      %v4321 = vld [vmem:[#allocation3 + $0x92] sm:$0xff]
      %v4322 = vld [vmem:[#allocation3 + $0x9a] sm:$0xff]
      %v4323 = vld [vmem:[#allocation3 + $0xaa] sm:$0xff]
      %v4324 = vld [vmem:[#allocation3 + $0xb2] sm:$0xff]
      %v4325 = vld [vmem:[#allocation3 + $0xc2] sm:$0xff]
      %v4326 = vld [vmem:[#allocation3 + $0xca] sm:$0xff]
      %v4327 = vld [vmem:[#allocation3 + $0xda] sm:$0xff]
      %v4328 = vld [vmem:[#allocation3 + $0xe2] sm:$0xff]
      %v4329 = vld [vmem:[#allocation3 + $0xf2] sm:$0xff]
      %v4330 = vld [vmem:[#allocation3 + $0xfa] sm:$0xff]
      %v4331 = vld [vmem:[#allocation3 + $0x10a] sm:$0xff]
      %v4332 = vld [vmem:[#allocation3 + $0x112] sm:$0xff]
      %v4333 = vld [vmem:[#allocation3 + $0x122] sm:$0xff]
      %v4334 = vld [vmem:[#allocation3 + $0x12a] sm:$0xff]
      %v4335 = vld [vmem:[#allocation3 + $0x13a] sm:$0xff]
      %v4336 = vld [vmem:[#allocation3 + $0x142] sm:$0xff]
      %v4337 = vld [vmem:[#allocation3 + $0x152] sm:$0xff]
      %v4338 = vld [vmem:[#allocation3 + $0x15a] sm:$0xff]
      %v4339 = vld [vmem:[#allocation3 + $0x16a] sm:$0xff]
      %v4340 = vld [vmem:[#allocation3 + $0x172] sm:$0xff]
      %v4341 = vld [vmem:[%s2292] sm:$0xff]
      %v4342 = vld [vmem:[%s2292 + $0x8] sm:$0xff]
      %v4343 = vld [vmem:[%s2292 + $0x18] sm:$0xff]
      %v4344 = vld [vmem:[%s2292 + $0x20] sm:$0xff]
      %v4345 = vld [vmem:[%s2292 + $0x30] sm:$0xff]
      %v4346 = vld [vmem:[%s2292 + $0x38] sm:$0xff]
      %v4347 = vld [vmem:[%s2292 + $0x48] sm:$0xff]
      %v4348 = vld [vmem:[%s2292 + $0x50] sm:$0xff]
      %v4349 = vld [vmem:[%s2292 + $0x60] sm:$0xff]
      %v4350 = vld [vmem:[%s2292 + $0x68] sm:$0xff]
      %v4351 = vld [vmem:[%s2292 + $0x78] sm:$0xff]
      %v4352 = vld [vmem:[%s2292 + $0x80] sm:$0xff]
      %v4353 = vld [vmem:[%s2292 + $0x90] sm:$0xff]
      %v4354 = vld [vmem:[%s2292 + $0x98] sm:$0xff]
      %v4355 = vld [vmem:[%s2292 + $0xa8] sm:$0xff]
      %v4356 = vld [vmem:[%s2292 + $0xb0] sm:$0xff]
      %v4357 = vld [vmem:[%s2292 + $0xc0] sm:$0xff]
      %v4358 = vld [vmem:[%s2292 + $0xc8] sm:$0xff]
      %v4359 = vld [vmem:[%s2292 + $0xd8] sm:$0xff]
      %v4360 = vld [vmem:[%s2292 + $0xe0] sm:$0xff]
      %v4361 = vld [vmem:[%s2292 + $0xf0] sm:$0xff]
      %v4362 = vld [vmem:[%s2292 + $0xf8] sm:$0xff]
      %v4363 = vld [vmem:[%s2292 + $0x108] sm:$0xff]
      %v4364 = vld [vmem:[%s2292 + $0x110] sm:$0xff]
      %v4365 = vld [vmem:[%s2292 + $0x120] sm:$0xff]
      %v4366 = vld [vmem:[%s2292 + $0x128] sm:$0xff]
      %v4367 = vld [vmem:[%s2292 + $0x138] sm:$0xff]
      %v4368 = vld [vmem:[%s2292 + $0x140] sm:$0xff]
      %v4369 = vld [vmem:[%s2292 + $0x150] sm:$0xff]
      %v4370 = vld [vmem:[%s2292 + $0x158] sm:$0xff]
      %v4371 = vld [vmem:[%s2292 + $0x168] sm:$0xff]
      %v4372 = vld [vmem:[%s2292 + $0x170] sm:$0xff]
      %v4373 = vld [vmem:[%s2292 + $0x1] sm:$0xff]
      %v4374 = vld [vmem:[%s2292 + $0x9] sm:$0xff]
      %v4375 = vld [vmem:[%s2292 + $0x19] sm:$0xff]
      %v4376 = vld [vmem:[%s2292 + $0x21] sm:$0xff]
      %v4377 = vld [vmem:[%s2292 + $0x31] sm:$0xff]
      %v4378 = vld [vmem:[%s2292 + $0x39] sm:$0xff]
      %v4379 = vld [vmem:[%s2292 + $0x49] sm:$0xff]
      %v4380 = vld [vmem:[%s2292 + $0x51] sm:$0xff]
      %v4381 = vld [vmem:[%s2292 + $0x61] sm:$0xff]
      %v4382 = vld [vmem:[%s2292 + $0x69] sm:$0xff]
      %v4383 = vld [vmem:[%s2292 + $0x79] sm:$0xff]
      %v4384 = vld [vmem:[%s2292 + $0x81] sm:$0xff]
      %v4385 = vld [vmem:[%s2292 + $0x91] sm:$0xff]
      %v4386 = vld [vmem:[%s2292 + $0x99] sm:$0xff]
      %v4387 = vld [vmem:[%s2292 + $0xa9] sm:$0xff]
      %v4388 = vld [vmem:[%s2292 + $0xb1] sm:$0xff]
      %v4389 = vld [vmem:[%s2292 + $0xc1] sm:$0xff]
      %v4390 = vld [vmem:[%s2292 + $0xc9] sm:$0xff]
      %v4391 = vld [vmem:[%s2292 + $0xd9] sm:$0xff]
      %v4392 = vld [vmem:[%s2292 + $0xe1] sm:$0xff]
      %v4393 = vld [vmem:[%s2292 + $0xf1] sm:$0xff]
      %v4394 = vld [vmem:[%s2292 + $0xf9] sm:$0xff]
      %v4395 = vld [vmem:[%s2292 + $0x109] sm:$0xff]
      %v4396 = vld [vmem:[%s2292 + $0x111] sm:$0xff]
      %v4397 = vld [vmem:[%s2292 + $0x121] sm:$0xff]
      %v4398 = vld [vmem:[%s2292 + $0x129] sm:$0xff]
      %v4399 = vld [vmem:[%s2292 + $0x139] sm:$0xff]
      %v4400 = vld [vmem:[%s2292 + $0x141] sm:$0xff]
      %v4401 = vld [vmem:[%s2292 + $0x151] sm:$0xff]
      %v4402 = vld [vmem:[%s2292 + $0x159] sm:$0xff]
      %v4403 = vld [vmem:[%s2292 + $0x169] sm:$0xff]
      %v4404 = vld [vmem:[%s2292 + $0x171] sm:$0xff]
      %v4405 = vld [vmem:[%s2292 + $0x2] sm:$0xff]
      %v4406 = vld [vmem:[%s2292 + $0xa] sm:$0xff]
      %v4407 = vld [vmem:[%s2292 + $0x1a] sm:$0xff]
      %v4408 = vld [vmem:[%s2292 + $0x22] sm:$0xff]
      %v4409 = vld [vmem:[%s2292 + $0x32] sm:$0xff]
      %v4410 = vld [vmem:[%s2292 + $0x3a] sm:$0xff]
      %v4411 = vld [vmem:[%s2292 + $0x4a] sm:$0xff]
      %v4412 = vld [vmem:[%s2292 + $0x52] sm:$0xff]
      %v4413 = vld [vmem:[%s2292 + $0x62] sm:$0xff]
      %v4414 = vld [vmem:[%s2292 + $0x6a] sm:$0xff]
      %v4415 = vld [vmem:[%s2292 + $0x7a] sm:$0xff]
      %v4416 = vld [vmem:[%s2292 + $0x82] sm:$0xff]
      %v4417 = vld [vmem:[%s2292 + $0x92] sm:$0xff]
      %v4418 = vld [vmem:[%s2292 + $0x9a] sm:$0xff]
      %v4419 = vld [vmem:[%s2292 + $0xaa] sm:$0xff]
      %v4420 = vld [vmem:[%s2292 + $0xb2] sm:$0xff]
      %v4421 = vld [vmem:[%s2292 + $0xc2] sm:$0xff]
      %v4422 = vld [vmem:[%s2292 + $0xca] sm:$0xff]
      %v4423 = vld [vmem:[%s2292 + $0xda] sm:$0xff]
      %v4424 = vld [vmem:[%s2292 + $0xe2] sm:$0xff]
      %v4425 = vld [vmem:[%s2292 + $0xf2] sm:$0xff]
      %v4426 = vld [vmem:[%s2292 + $0xfa] sm:$0xff]
      %v4427 = vld [vmem:[%s2292 + $0x10a] sm:$0xff]
      %v4428 = vld [vmem:[%s2292 + $0x112] sm:$0xff]
      %v4429 = vld [vmem:[%s2292 + $0x122] sm:$0xff]
      %v4430 = vld [vmem:[%s2292 + $0x12a] sm:$0xff]
      %v4431 = vld [vmem:[%s2292 + $0x13a] sm:$0xff]
      %v4432 = vld [vmem:[%s2292 + $0x142] sm:$0xff]
      %v4433 = vld [vmem:[%s2292 + $0x152] sm:$0xff]
      %v4434 = vld [vmem:[%s2292 + $0x15a] sm:$0xff]
      %v4435 = vld [vmem:[%s2292 + $0x16a] sm:$0xff]
      %v4436 = vld [vmem:[%s2292 + $0x172] sm:$0xff]
      %v4437 = vld [vmem:[%s2554] sm:$0xff]
      %v4438 = vld [vmem:[%s2554 + $0x8] sm:$0xff]
      %v4439 = vld [vmem:[%s2554 + $0x18] sm:$0xff]
      %v4440 = vld [vmem:[%s2554 + $0x20] sm:$0xff]
      %v4441 = vld [vmem:[%s2554 + $0x30] sm:$0xff]
      %v4442 = vld [vmem:[%s2554 + $0x38] sm:$0xff]
      %v4443 = vld [vmem:[%s2554 + $0x48] sm:$0xff]
      %v4444 = vld [vmem:[%s2554 + $0x50] sm:$0xff]
      %v4445 = vld [vmem:[%s2554 + $0x60] sm:$0xff]
      %v4446 = vld [vmem:[%s2554 + $0x68] sm:$0xff]
      %v4447 = vld [vmem:[%s2554 + $0x78] sm:$0xff]
      %v4448 = vld [vmem:[%s2554 + $0x80] sm:$0xff]
      %v4449 = vld [vmem:[%s2554 + $0x90] sm:$0xff]
      %v4450 = vld [vmem:[%s2554 + $0x98] sm:$0xff]
      %v4451 = vld [vmem:[%s2554 + $0xa8] sm:$0xff]
      %v4452 = vld [vmem:[%s2554 + $0xb0] sm:$0xff]
      %v4453 = vld [vmem:[%s2554 + $0xc0] sm:$0xff]
      %v4454 = vld [vmem:[%s2554 + $0xc8] sm:$0xff]
      %v4455 = vld [vmem:[%s2554 + $0xd8] sm:$0xff]
      %v4456 = vld [vmem:[%s2554 + $0xe0] sm:$0xff]
      %v4457 = vld [vmem:[%s2554 + $0xf0] sm:$0xff]
      %v4458 = vld [vmem:[%s2554 + $0xf8] sm:$0xff]
      %v4459 = vld [vmem:[%s2554 + $0x108] sm:$0xff]
      %v4460 = vld [vmem:[%s2554 + $0x110] sm:$0xff]
      %v4461 = vld [vmem:[%s2554 + $0x120] sm:$0xff]
      %v4462 = vld [vmem:[%s2554 + $0x128] sm:$0xff]
      %v4463 = vld [vmem:[%s2554 + $0x138] sm:$0xff]
      %v4464 = vld [vmem:[%s2554 + $0x140] sm:$0xff]
      %v4465 = vld [vmem:[%s2554 + $0x150] sm:$0xff]
      %v4466 = vld [vmem:[%s2554 + $0x158] sm:$0xff]
      %v4467 = vld [vmem:[%s2554 + $0x168] sm:$0xff]
      %v4468 = vld [vmem:[%s2554 + $0x170] sm:$0xff]
      %v4469 = vld [vmem:[%s2554 + $0x1] sm:$0xff]
      %v4470 = vld [vmem:[%s2554 + $0x9] sm:$0xff]
      %v4471 = vld [vmem:[%s2554 + $0x19] sm:$0xff]
      %v4472 = vld [vmem:[%s2554 + $0x21] sm:$0xff]
      %v4473 = vld [vmem:[%s2554 + $0x31] sm:$0xff]
      %v4474 = vld [vmem:[%s2554 + $0x39] sm:$0xff]
      %v4475 = vld [vmem:[%s2554 + $0x49] sm:$0xff]
      %v4476 = vld [vmem:[%s2554 + $0x51] sm:$0xff]
      %v4477 = vld [vmem:[%s2554 + $0x61] sm:$0xff]
      %v4478 = vld [vmem:[%s2554 + $0x69] sm:$0xff]
      %v4479 = vld [vmem:[%s2554 + $0x79] sm:$0xff]
      %v4480 = vld [vmem:[%s2554 + $0x81] sm:$0xff]
      %v4481 = vld [vmem:[%s2554 + $0x91] sm:$0xff]
      %v4482 = vld [vmem:[%s2554 + $0x99] sm:$0xff]
      %v4483 = vld [vmem:[%s2554 + $0xa9] sm:$0xff]
      %v4484 = vld [vmem:[%s2554 + $0xb1] sm:$0xff]
      %v4485 = vld [vmem:[%s2554 + $0xc1] sm:$0xff]
      %v4486 = vld [vmem:[%s2554 + $0xc9] sm:$0xff]
      %v4487 = vld [vmem:[%s2554 + $0xd9] sm:$0xff]
      %v4488 = vld [vmem:[%s2554 + $0xe1] sm:$0xff]
      %v4489 = vld [vmem:[%s2554 + $0xf1] sm:$0xff]
      %v4490 = vld [vmem:[%s2554 + $0xf9] sm:$0xff]
      %v4491 = vld [vmem:[%s2554 + $0x109] sm:$0xff]
      %v4492 = vld [vmem:[%s2554 + $0x111] sm:$0xff]
      %v4493 = vld [vmem:[%s2554 + $0x121] sm:$0xff]
      %v4494 = vld [vmem:[%s2554 + $0x129] sm:$0xff]
      %v4495 = vld [vmem:[%s2554 + $0x139] sm:$0xff]
      %v4496 = vld [vmem:[%s2554 + $0x141] sm:$0xff]
      %v4497 = vld [vmem:[%s2554 + $0x151] sm:$0xff]
      %v4498 = vld [vmem:[%s2554 + $0x159] sm:$0xff]
      %v4499 = vld [vmem:[%s2554 + $0x169] sm:$0xff]
      %v4500 = vld [vmem:[%s2554 + $0x171] sm:$0xff]
      %v4501 = vld [vmem:[%s2554 + $0x2] sm:$0xff]
      %v4502 = vld [vmem:[%s2554 + $0xa] sm:$0xff]
      %v4503 = vld [vmem:[%s2554 + $0x1a] sm:$0xff]
      %v4504 = vld [vmem:[%s2554 + $0x22] sm:$0xff]
      %v4505 = vld [vmem:[%s2554 + $0x32] sm:$0xff]
      %v4506 = vld [vmem:[%s2554 + $0x3a] sm:$0xff]
      %v4507 = vld [vmem:[%s2554 + $0x4a] sm:$0xff]
      %v4508 = vld [vmem:[%s2554 + $0x52] sm:$0xff]
      %v4509 = vld [vmem:[%s2554 + $0x62] sm:$0xff]
      %v4510 = vld [vmem:[%s2554 + $0x6a] sm:$0xff]
      %v4511 = vld [vmem:[%s2554 + $0x7a] sm:$0xff]
      %v4512 = vld [vmem:[%s2554 + $0x82] sm:$0xff]
      %v4513 = vld [vmem:[%s2554 + $0x92] sm:$0xff]
      %v4514 = vld [vmem:[%s2554 + $0x9a] sm:$0xff]
      %v4515 = vld [vmem:[%s2554 + $0xaa] sm:$0xff]
      %v4516 = vld [vmem:[%s2554 + $0xb2] sm:$0xff]
      %v4517 = vld [vmem:[%s2554 + $0xc2] sm:$0xff]
      %v4518 = vld [vmem:[%s2554 + $0xca] sm:$0xff]
      %v4519 = vld [vmem:[%s2554 + $0xda] sm:$0xff]
      %v4520 = vld [vmem:[%s2554 + $0xe2] sm:$0xff]
      %v4521 = vld [vmem:[%s2554 + $0xf2] sm:$0xff]
      %v4522 = vld [vmem:[%s2554 + $0xfa] sm:$0xff]
      %v4523 = vld [vmem:[%s2554 + $0x10a] sm:$0xff]
      %v4524 = vld [vmem:[%s2554 + $0x112] sm:$0xff]
      %v4525 = vld [vmem:[%s2554 + $0x122] sm:$0xff]
      %v4526 = vld [vmem:[%s2554 + $0x12a] sm:$0xff]
      %v4527 = vld [vmem:[%s2554 + $0x13a] sm:$0xff]
      %v4528 = vld [vmem:[%s2554 + $0x142] sm:$0xff]
      %v4529 = vld [vmem:[%s2554 + $0x152] sm:$0xff]
      %v4530 = vld [vmem:[%s2554 + $0x15a] sm:$0xff]
      %v4531 = vld [vmem:[%s2554 + $0x16a] sm:$0xff]
      %v4532 = vld [vmem:[%s2554 + $0x172] sm:$0xff]
      %4565 = vrot.lane.b32.xlu0 %v4277, 32
      %v4566 = vpop.permute.xlu0 %4565
      %4567 = vrot.lane.b32.xlu0 %v4278, 32
      %v4568 = vpop.permute.xlu0 %4567
      %4569 = vrot.lane.b32.xlu0 %v4279, 32
      %v4570 = vpop.permute.xlu0 %4569
      %4571 = vrot.lane.b32.xlu0 %v4280, 32
      %v4572 = vpop.permute.xlu0 %4571
      %4573 = vrot.lane.b32.xlu0 %v4281, 32
      %v4574 = vpop.permute.xlu0 %4573
      %4575 = vrot.lane.b32.xlu0 %v4282, 32
      %v4576 = vpop.permute.xlu0 %4575
      %4577 = vrot.lane.b32.xlu0 %v4283, 32
      %v4578 = vpop.permute.xlu0 %4577
      %4579 = vrot.lane.b32.xlu0 %v4284, 32
      %v4580 = vpop.permute.xlu0 %4579
      %4581 = vrot.lane.b32.xlu0 %v4285, 32
      %v4582 = vpop.permute.xlu0 %4581
      %4583 = vrot.lane.b32.xlu0 %v4286, 32
      %v4584 = vpop.permute.xlu0 %4583
      %4585 = vrot.lane.b32.xlu0 %v4287, 32
      %v4586 = vpop.permute.xlu0 %4585
      %4587 = vrot.lane.b32.xlu0 %v4288, 32
      %v4588 = vpop.permute.xlu0 %4587
      %4589 = vrot.lane.b32.xlu0 %v4289, 32
      %v4590 = vpop.permute.xlu0 %4589
      %4591 = vrot.lane.b32.xlu0 %v4290, 32
      %v4592 = vpop.permute.xlu0 %4591
      %4593 = vrot.lane.b32.xlu0 %v4291, 32
      %v4594 = vpop.permute.xlu0 %4593
      %4595 = vrot.lane.b32.xlu0 %v4292, 32
      %v4596 = vpop.permute.xlu0 %4595
      %4597 = vrot.lane.b32.xlu0 %v4293, 32
      %v4598 = vpop.permute.xlu0 %4597
      %4599 = vrot.lane.b32.xlu0 %v4294, 32
      %v4600 = vpop.permute.xlu0 %4599
      %4601 = vrot.lane.b32.xlu0 %v4295, 32
      %v4602 = vpop.permute.xlu0 %4601
      %4603 = vrot.lane.b32.xlu0 %v4296, 32
      %v4604 = vpop.permute.xlu0 %4603
      %4605 = vrot.lane.b32.xlu0 %v4297, 32
      %v4606 = vpop.permute.xlu0 %4605
      %4607 = vrot.lane.b32.xlu0 %v4298, 32
      %v4608 = vpop.permute.xlu0 %4607
      %4609 = vrot.lane.b32.xlu0 %v4299, 32
      %v4610 = vpop.permute.xlu0 %4609
      %4611 = vrot.lane.b32.xlu0 %v4300, 32
      %v4612 = vpop.permute.xlu0 %4611
      %4613 = vrot.lane.b32.xlu0 %v4301, 32
      %v4614 = vpop.permute.xlu0 %4613
      %4615 = vrot.lane.b32.xlu0 %v4302, 32
      %v4616 = vpop.permute.xlu0 %4615
      %4617 = vrot.lane.b32.xlu0 %v4303, 32
      %v4618 = vpop.permute.xlu0 %4617
      %4619 = vrot.lane.b32.xlu0 %v4304, 32
      %v4620 = vpop.permute.xlu0 %4619
      %4621 = vrot.lane.b32.xlu0 %v4305, 32
      %v4622 = vpop.permute.xlu0 %4621
      %4623 = vrot.lane.b32.xlu0 %v4306, 32
      %v4624 = vpop.permute.xlu0 %4623
      %4625 = vrot.lane.b32.xlu0 %v4307, 32
      %v4626 = vpop.permute.xlu0 %4625
      %4627 = vrot.lane.b32.xlu0 %v4308, 32
      %v4628 = vpop.permute.xlu0 %4627
      %4693 = vrot.lane.b32.xlu0 %v4309, 64
      %v4694 = vpop.permute.xlu0 %4693
      %4695 = vrot.lane.b32.xlu0 %v4310, 64
      %v4696 = vpop.permute.xlu0 %4695
      %4697 = vrot.lane.b32.xlu0 %v4311, 64
      %v4698 = vpop.permute.xlu0 %4697
      %4699 = vrot.lane.b32.xlu0 %v4312, 64
      %v4700 = vpop.permute.xlu0 %4699
      %4701 = vrot.lane.b32.xlu0 %v4313, 64
      %v4702 = vpop.permute.xlu0 %4701
      %4703 = vrot.lane.b32.xlu0 %v4314, 64
      %v4704 = vpop.permute.xlu0 %4703
      %4705 = vrot.lane.b32.xlu0 %v4315, 64
      %v4706 = vpop.permute.xlu0 %4705
      %4707 = vrot.lane.b32.xlu0 %v4316, 64
      %v4708 = vpop.permute.xlu0 %4707
      %4709 = vrot.lane.b32.xlu0 %v4317, 64
      %v4710 = vpop.permute.xlu0 %4709
      %4711 = vrot.lane.b32.xlu0 %v4318, 64
      %v4712 = vpop.permute.xlu0 %4711
      %4713 = vrot.lane.b32.xlu0 %v4319, 64
      %v4714 = vpop.permute.xlu0 %4713
      %4715 = vrot.lane.b32.xlu0 %v4320, 64
      %v4716 = vpop.permute.xlu0 %4715
      %4717 = vrot.lane.b32.xlu0 %v4321, 64
      %v4718 = vpop.permute.xlu0 %4717
      %4719 = vrot.lane.b32.xlu0 %v4322, 64
      %v4720 = vpop.permute.xlu0 %4719
      %4721 = vrot.lane.b32.xlu0 %v4323, 64
      %v4722 = vpop.permute.xlu0 %4721
      %4723 = vrot.lane.b32.xlu0 %v4324, 64
      %v4724 = vpop.permute.xlu0 %4723
      %4725 = vrot.lane.b32.xlu0 %v4325, 64
      %v4726 = vpop.permute.xlu0 %4725
      %4727 = vrot.lane.b32.xlu0 %v4326, 64
      %v4728 = vpop.permute.xlu0 %4727
      %4729 = vrot.lane.b32.xlu0 %v4327, 64
      %v4730 = vpop.permute.xlu0 %4729
      %4731 = vrot.lane.b32.xlu0 %v4328, 64
      %v4732 = vpop.permute.xlu0 %4731
      %4733 = vrot.lane.b32.xlu0 %v4329, 64
      %v4734 = vpop.permute.xlu0 %4733
      %4735 = vrot.lane.b32.xlu0 %v4330, 64
      %v4736 = vpop.permute.xlu0 %4735
      %4737 = vrot.lane.b32.xlu0 %v4331, 64
      %v4738 = vpop.permute.xlu0 %4737
      %4739 = vrot.lane.b32.xlu0 %v4332, 64
      %v4740 = vpop.permute.xlu0 %4739
      %4741 = vrot.lane.b32.xlu0 %v4333, 64
      %v4742 = vpop.permute.xlu0 %4741
      %4743 = vrot.lane.b32.xlu0 %v4334, 64
      %v4744 = vpop.permute.xlu0 %4743
      %4745 = vrot.lane.b32.xlu0 %v4335, 64
      %v4746 = vpop.permute.xlu0 %4745
      %4747 = vrot.lane.b32.xlu0 %v4336, 64
      %v4748 = vpop.permute.xlu0 %4747
      %4749 = vrot.lane.b32.xlu0 %v4337, 64
      %v4750 = vpop.permute.xlu0 %4749
      %4751 = vrot.lane.b32.xlu0 %v4338, 64
      %v4752 = vpop.permute.xlu0 %4751
      %4753 = vrot.lane.b32.xlu0 %v4339, 64
      %v4754 = vpop.permute.xlu0 %4753
      %4755 = vrot.lane.b32.xlu0 %v4340, 64
      %v4756 = vpop.permute.xlu0 %4755
      %4821 = vrot.lane.b32.xlu0 %v4341, 96
      %v4822 = vpop.permute.xlu0 %4821
      %4823 = vrot.lane.b32.xlu0 %v4342, 96
      %v4824 = vpop.permute.xlu0 %4823
      %4825 = vrot.lane.b32.xlu0 %v4343, 96
      %v4826 = vpop.permute.xlu0 %4825
      %4827 = vrot.lane.b32.xlu0 %v4344, 96
      %v4828 = vpop.permute.xlu0 %4827
      %4829 = vrot.lane.b32.xlu0 %v4345, 96
      %v4830 = vpop.permute.xlu0 %4829
      %4831 = vrot.lane.b32.xlu0 %v4346, 96
      %v4832 = vpop.permute.xlu0 %4831
      %4833 = vrot.lane.b32.xlu0 %v4347, 96
      %v4834 = vpop.permute.xlu0 %4833
      %4835 = vrot.lane.b32.xlu0 %v4348, 96
      %v4836 = vpop.permute.xlu0 %4835
      %4837 = vrot.lane.b32.xlu0 %v4349, 96
      %v4838 = vpop.permute.xlu0 %4837
      %4839 = vrot.lane.b32.xlu0 %v4350, 96
      %v4840 = vpop.permute.xlu0 %4839
      %4841 = vrot.lane.b32.xlu0 %v4351, 96
      %v4842 = vpop.permute.xlu0 %4841
      %4843 = vrot.lane.b32.xlu0 %v4352, 96
      %v4844 = vpop.permute.xlu0 %4843
      %4845 = vrot.lane.b32.xlu0 %v4353, 96
      %v4846 = vpop.permute.xlu0 %4845
      %4847 = vrot.lane.b32.xlu0 %v4354, 96
      %v4848 = vpop.permute.xlu0 %4847
      %4849 = vrot.lane.b32.xlu0 %v4355, 96
      %v4850 = vpop.permute.xlu0 %4849
      %4851 = vrot.lane.b32.xlu0 %v4356, 96
      %v4852 = vpop.permute.xlu0 %4851
      %4853 = vrot.lane.b32.xlu0 %v4357, 96
      %v4854 = vpop.permute.xlu0 %4853
      %4855 = vrot.lane.b32.xlu0 %v4358, 96
      %v4856 = vpop.permute.xlu0 %4855
      %4857 = vrot.lane.b32.xlu0 %v4359, 96
      %v4858 = vpop.permute.xlu0 %4857
      %4859 = vrot.lane.b32.xlu0 %v4360, 96
      %v4860 = vpop.permute.xlu0 %4859
      %4861 = vrot.lane.b32.xlu0 %v4361, 96
      %v4862 = vpop.permute.xlu0 %4861
      %4863 = vrot.lane.b32.xlu0 %v4362, 96
      %v4864 = vpop.permute.xlu0 %4863
      %4865 = vrot.lane.b32.xlu0 %v4363, 96
      %v4866 = vpop.permute.xlu0 %4865
      %4867 = vrot.lane.b32.xlu0 %v4364, 96
      %v4868 = vpop.permute.xlu0 %4867
      %4869 = vrot.lane.b32.xlu0 %v4365, 96
      %v4870 = vpop.permute.xlu0 %4869
      %4871 = vrot.lane.b32.xlu0 %v4366, 96
      %v4872 = vpop.permute.xlu0 %4871
      %4873 = vrot.lane.b32.xlu0 %v4367, 96
      %v4874 = vpop.permute.xlu0 %4873
      %4875 = vrot.lane.b32.xlu0 %v4368, 96
      %v4876 = vpop.permute.xlu0 %4875
      %4877 = vrot.lane.b32.xlu0 %v4369, 96
      %v4878 = vpop.permute.xlu0 %4877
      %4879 = vrot.lane.b32.xlu0 %v4370, 96
      %v4880 = vpop.permute.xlu0 %4879
      %4881 = vrot.lane.b32.xlu0 %v4371, 96
      %v4882 = vpop.permute.xlu0 %4881
      %4883 = vrot.lane.b32.xlu0 %v4372, 96
      %v4884 = vpop.permute.xlu0 %4883
      %4949 = vrot.lane.b32.xlu0 %v4405, 32
      %v4950 = vpop.permute.xlu0 %4949
      %4951 = vrot.lane.b32.xlu0 %v4406, 32
      %v4952 = vpop.permute.xlu0 %4951
      %4953 = vrot.lane.b32.xlu0 %v4407, 32
      %v4954 = vpop.permute.xlu0 %4953
      %4955 = vrot.lane.b32.xlu0 %v4408, 32
      %v4956 = vpop.permute.xlu0 %4955
      %4957 = vrot.lane.b32.xlu0 %v4409, 32
      %v4958 = vpop.permute.xlu0 %4957
      %4959 = vrot.lane.b32.xlu0 %v4410, 32
      %v4960 = vpop.permute.xlu0 %4959
      %4961 = vrot.lane.b32.xlu0 %v4411, 32
      %v4962 = vpop.permute.xlu0 %4961
      %4963 = vrot.lane.b32.xlu0 %v4412, 32
      %v4964 = vpop.permute.xlu0 %4963
      %4965 = vrot.lane.b32.xlu0 %v4413, 32
      %v4966 = vpop.permute.xlu0 %4965
      %4967 = vrot.lane.b32.xlu0 %v4414, 32
      %v4968 = vpop.permute.xlu0 %4967
      %4969 = vrot.lane.b32.xlu0 %v4415, 32
      %v4970 = vpop.permute.xlu0 %4969
      %4971 = vrot.lane.b32.xlu0 %v4416, 32
      %v4972 = vpop.permute.xlu0 %4971
      %4973 = vrot.lane.b32.xlu0 %v4417, 32
      %v4974 = vpop.permute.xlu0 %4973
      %4975 = vrot.lane.b32.xlu0 %v4418, 32
      %v4976 = vpop.permute.xlu0 %4975
      %4977 = vrot.lane.b32.xlu0 %v4419, 32
      %v4978 = vpop.permute.xlu0 %4977
      %4979 = vrot.lane.b32.xlu0 %v4420, 32
      %v4980 = vpop.permute.xlu0 %4979
      %4981 = vrot.lane.b32.xlu0 %v4421, 32
      %v4982 = vpop.permute.xlu0 %4981
      %4983 = vrot.lane.b32.xlu0 %v4422, 32
      %v4984 = vpop.permute.xlu0 %4983
      %4985 = vrot.lane.b32.xlu0 %v4423, 32
      %v4986 = vpop.permute.xlu0 %4985
      %4987 = vrot.lane.b32.xlu0 %v4424, 32
      %v4988 = vpop.permute.xlu0 %4987
      %4989 = vrot.lane.b32.xlu0 %v4425, 32
      %v4990 = vpop.permute.xlu0 %4989
      %4991 = vrot.lane.b32.xlu0 %v4426, 32
      %v4992 = vpop.permute.xlu0 %4991
      %4993 = vrot.lane.b32.xlu0 %v4427, 32
      %v4994 = vpop.permute.xlu0 %4993
      %4995 = vrot.lane.b32.xlu0 %v4428, 32
      %v4996 = vpop.permute.xlu0 %4995
      %4997 = vrot.lane.b32.xlu0 %v4429, 32
      %v4998 = vpop.permute.xlu0 %4997
      %4999 = vrot.lane.b32.xlu0 %v4430, 32
      %v5000 = vpop.permute.xlu0 %4999
      %5001 = vrot.lane.b32.xlu0 %v4431, 32
      %v5002 = vpop.permute.xlu0 %5001
      %5003 = vrot.lane.b32.xlu0 %v4432, 32
      %v5004 = vpop.permute.xlu0 %5003
      %5005 = vrot.lane.b32.xlu0 %v4433, 32
      %v5006 = vpop.permute.xlu0 %5005
      %5007 = vrot.lane.b32.xlu0 %v4434, 32
      %v5008 = vpop.permute.xlu0 %5007
      %5009 = vrot.lane.b32.xlu0 %v4435, 32
      %v5010 = vpop.permute.xlu0 %5009
      %5011 = vrot.lane.b32.xlu0 %v4436, 32
      %v5012 = vpop.permute.xlu0 %5011
      %5077 = vrot.lane.b32.xlu0 %v4437, 64
      %v5078 = vpop.permute.xlu0 %5077
      %5079 = vrot.lane.b32.xlu0 %v4438, 64
      %v5080 = vpop.permute.xlu0 %5079
      %5081 = vrot.lane.b32.xlu0 %v4439, 64
      %v5082 = vpop.permute.xlu0 %5081
      %5083 = vrot.lane.b32.xlu0 %v4440, 64
      %v5084 = vpop.permute.xlu0 %5083
      %5085 = vrot.lane.b32.xlu0 %v4441, 64
      %v5086 = vpop.permute.xlu0 %5085
      %5087 = vrot.lane.b32.xlu0 %v4442, 64
      %v5088 = vpop.permute.xlu0 %5087
      %5089 = vrot.lane.b32.xlu0 %v4443, 64
      %v5090 = vpop.permute.xlu0 %5089
      %5091 = vrot.lane.b32.xlu0 %v4444, 64
      %v5092 = vpop.permute.xlu0 %5091
      %5093 = vrot.lane.b32.xlu0 %v4445, 64
      %v5094 = vpop.permute.xlu0 %5093
      %5095 = vrot.lane.b32.xlu0 %v4446, 64
      %v5096 = vpop.permute.xlu0 %5095
      %5097 = vrot.lane.b32.xlu0 %v4447, 64
      %v5098 = vpop.permute.xlu0 %5097
      %5099 = vrot.lane.b32.xlu0 %v4448, 64
      %v5100 = vpop.permute.xlu0 %5099
      %5101 = vrot.lane.b32.xlu0 %v4449, 64
      %v5102 = vpop.permute.xlu0 %5101
      %5103 = vrot.lane.b32.xlu0 %v4450, 64
      %v5104 = vpop.permute.xlu0 %5103
      %5105 = vrot.lane.b32.xlu0 %v4451, 64
      %v5106 = vpop.permute.xlu0 %5105
      %5107 = vrot.lane.b32.xlu0 %v4452, 64
      %v5108 = vpop.permute.xlu0 %5107
      %5109 = vrot.lane.b32.xlu0 %v4453, 64
      %v5110 = vpop.permute.xlu0 %5109
      %5111 = vrot.lane.b32.xlu0 %v4454, 64
      %v5112 = vpop.permute.xlu0 %5111
      %5113 = vrot.lane.b32.xlu0 %v4455, 64
      %v5114 = vpop.permute.xlu0 %5113
      %5115 = vrot.lane.b32.xlu0 %v4456, 64
      %v5116 = vpop.permute.xlu0 %5115
      %5117 = vrot.lane.b32.xlu0 %v4457, 64
      %v5118 = vpop.permute.xlu0 %5117
      %5119 = vrot.lane.b32.xlu0 %v4458, 64
      %v5120 = vpop.permute.xlu0 %5119
      %5121 = vrot.lane.b32.xlu0 %v4459, 64
      %v5122 = vpop.permute.xlu0 %5121
      %5123 = vrot.lane.b32.xlu0 %v4460, 64
      %v5124 = vpop.permute.xlu0 %5123
      %5125 = vrot.lane.b32.xlu0 %v4461, 64
      %v5126 = vpop.permute.xlu0 %5125
      %5127 = vrot.lane.b32.xlu0 %v4462, 64
      %v5128 = vpop.permute.xlu0 %5127
      %5129 = vrot.lane.b32.xlu0 %v4463, 64
      %v5130 = vpop.permute.xlu0 %5129
      %5131 = vrot.lane.b32.xlu0 %v4464, 64
      %v5132 = vpop.permute.xlu0 %5131
      %5133 = vrot.lane.b32.xlu0 %v4465, 64
      %v5134 = vpop.permute.xlu0 %5133
      %5135 = vrot.lane.b32.xlu0 %v4466, 64
      %v5136 = vpop.permute.xlu0 %5135
      %5137 = vrot.lane.b32.xlu0 %v4467, 64
      %v5138 = vpop.permute.xlu0 %5137
      %5139 = vrot.lane.b32.xlu0 %v4468, 64
      %v5140 = vpop.permute.xlu0 %5139
      %5205 = vrot.lane.b32.xlu0 %v4469, 96
      %v5206 = vpop.permute.xlu0 %5205
      %5207 = vrot.lane.b32.xlu0 %v4470, 96
      %v5208 = vpop.permute.xlu0 %5207
      %5209 = vrot.lane.b32.xlu0 %v4471, 96
      %v5210 = vpop.permute.xlu0 %5209
      %5211 = vrot.lane.b32.xlu0 %v4472, 96
      %v5212 = vpop.permute.xlu0 %5211
      %5213 = vrot.lane.b32.xlu0 %v4473, 96
      %v5214 = vpop.permute.xlu0 %5213
      %5215 = vrot.lane.b32.xlu0 %v4474, 96
      %v5216 = vpop.permute.xlu0 %5215
      %5217 = vrot.lane.b32.xlu0 %v4475, 96
      %v5218 = vpop.permute.xlu0 %5217
      %5219 = vrot.lane.b32.xlu0 %v4476, 96
      %v5220 = vpop.permute.xlu0 %5219
      %5221 = vrot.lane.b32.xlu0 %v4477, 96
      %v5222 = vpop.permute.xlu0 %5221
      %5223 = vrot.lane.b32.xlu0 %v4478, 96
      %v5224 = vpop.permute.xlu0 %5223
      %5225 = vrot.lane.b32.xlu0 %v4479, 96
      %v5226 = vpop.permute.xlu0 %5225
      %5227 = vrot.lane.b32.xlu0 %v4480, 96
      %v5228 = vpop.permute.xlu0 %5227
      %5229 = vrot.lane.b32.xlu0 %v4481, 96
      %v5230 = vpop.permute.xlu0 %5229
      %5231 = vrot.lane.b32.xlu0 %v4482, 96
      %v5232 = vpop.permute.xlu0 %5231
      %5233 = vrot.lane.b32.xlu0 %v4483, 96
      %v5234 = vpop.permute.xlu0 %5233
      %5235 = vrot.lane.b32.xlu0 %v4484, 96
      %v5236 = vpop.permute.xlu0 %5235
      %5237 = vrot.lane.b32.xlu0 %v4485, 96
      %v5238 = vpop.permute.xlu0 %5237
      %5239 = vrot.lane.b32.xlu0 %v4486, 96
      %v5240 = vpop.permute.xlu0 %5239
      %5241 = vrot.lane.b32.xlu0 %v4487, 96
      %v5242 = vpop.permute.xlu0 %5241
      %5243 = vrot.lane.b32.xlu0 %v4488, 96
      %v5244 = vpop.permute.xlu0 %5243
      %5245 = vrot.lane.b32.xlu0 %v4489, 96
      %v5246 = vpop.permute.xlu0 %5245
      %5247 = vrot.lane.b32.xlu0 %v4490, 96
      %v5248 = vpop.permute.xlu0 %5247
      %5249 = vrot.lane.b32.xlu0 %v4491, 96
      %v5250 = vpop.permute.xlu0 %5249
      %5251 = vrot.lane.b32.xlu0 %v4492, 96
      %v5252 = vpop.permute.xlu0 %5251
      %5253 = vrot.lane.b32.xlu0 %v4493, 96
      %v5254 = vpop.permute.xlu0 %5253
      %5255 = vrot.lane.b32.xlu0 %v4494, 96
      %v5256 = vpop.permute.xlu0 %5255
      %5257 = vrot.lane.b32.xlu0 %v4495, 96
      %v5258 = vpop.permute.xlu0 %5257
      %5259 = vrot.lane.b32.xlu0 %v4496, 96
      %v5260 = vpop.permute.xlu0 %5259
      %5261 = vrot.lane.b32.xlu0 %v4497, 96
      %v5262 = vpop.permute.xlu0 %5261
      %5263 = vrot.lane.b32.xlu0 %v4498, 96
      %v5264 = vpop.permute.xlu0 %5263
      %5265 = vrot.lane.b32.xlu0 %v4499, 96
      %v5266 = vpop.permute.xlu0 %5265
      %5267 = vrot.lane.b32.xlu0 %v4500, 96
      %v5268 = vpop.permute.xlu0 %5267
      %v5301 = vsel %vm309, %v4245, %v4566
      %v5302 = vsel %vm309, %v4246, %v4568
      %v5303 = vsel %vm309, %v4247, %v4570
      %v5304 = vsel %vm309, %v4248, %v4572
      %v5305 = vsel %vm309, %v4249, %v4574
      %v5306 = vsel %vm309, %v4250, %v4576
      %v5307 = vsel %vm309, %v4251, %v4578
      %v5308 = vsel %vm309, %v4252, %v4580
      %v5309 = vsel %vm309, %v4253, %v4582
      %v5310 = vsel %vm309, %v4254, %v4584
      %v5311 = vsel %vm309, %v4255, %v4586
      %v5312 = vsel %vm309, %v4256, %v4588
      %v5313 = vsel %vm309, %v4257, %v4590
      %v5314 = vsel %vm309, %v4258, %v4592
      %v5315 = vsel %vm309, %v4259, %v4594
      %v5316 = vsel %vm309, %v4260, %v4596
      %v5317 = vsel %vm309, %v4261, %v4598
      %v5318 = vsel %vm309, %v4262, %v4600
      %v5319 = vsel %vm309, %v4263, %v4602
      %v5320 = vsel %vm309, %v4264, %v4604
      %v5321 = vsel %vm309, %v4265, %v4606
      %v5322 = vsel %vm309, %v4266, %v4608
      %v5323 = vsel %vm309, %v4267, %v4610
      %v5324 = vsel %vm309, %v4268, %v4612
      %v5325 = vsel %vm309, %v4269, %v4614
      %v5326 = vsel %vm309, %v4270, %v4616
      %v5327 = vsel %vm309, %v4271, %v4618
      %v5328 = vsel %vm309, %v4272, %v4620
      %v5329 = vsel %vm309, %v4273, %v4622
      %v5330 = vsel %vm309, %v4274, %v4624
      %v5331 = vsel %vm309, %v4275, %v4626
      %v5332 = vsel %vm309, %v4276, %v4628
      %v5333 = vsel %vm3451, %v5301, %v4694
      %v5334 = vsel %vm3451, %v5302, %v4696
      %v5335 = vsel %vm3451, %v5303, %v4698
      %v5336 = vsel %vm3451, %v5304, %v4700
      %v5337 = vsel %vm3451, %v5305, %v4702
      %v5338 = vsel %vm3451, %v5306, %v4704
      %v5339 = vsel %vm3451, %v5307, %v4706
      %v5340 = vsel %vm3451, %v5308, %v4708
      %v5341 = vsel %vm3451, %v5309, %v4710
      %v5342 = vsel %vm3451, %v5310, %v4712
      %v5343 = vsel %vm3451, %v5311, %v4714
      %v5344 = vsel %vm3451, %v5312, %v4716
      %v5345 = vsel %vm3451, %v5313, %v4718
      %v5346 = vsel %vm3451, %v5314, %v4720
      %v5347 = vsel %vm3451, %v5315, %v4722
      %v5348 = vsel %vm3451, %v5316, %v4724
      %v5349 = vsel %vm3451, %v5317, %v4726
      %v5350 = vsel %vm3451, %v5318, %v4728
      %v5351 = vsel %vm3451, %v5319, %v4730
      %v5352 = vsel %vm3451, %v5320, %v4732
      %v5353 = vsel %vm3451, %v5321, %v4734
      %v5354 = vsel %vm3451, %v5322, %v4736
      %v5355 = vsel %vm3451, %v5323, %v4738
      %v5356 = vsel %vm3451, %v5324, %v4740
      %v5357 = vsel %vm3451, %v5325, %v4742
      %v5358 = vsel %vm3451, %v5326, %v4744
      %v5359 = vsel %vm3451, %v5327, %v4746
      %v5360 = vsel %vm3451, %v5328, %v4748
      %v5361 = vsel %vm3451, %v5329, %v4750
      %v5362 = vsel %vm3451, %v5330, %v4752
      %v5363 = vsel %vm3451, %v5331, %v4754
      %v5364 = vsel %vm3451, %v5332, %v4756
      %v5365 = vsel %vm3484, %v5333, %v4822
      %v5366 = vsel %vm3484, %v5334, %v4824
      %v5367 = vsel %vm3484, %v5335, %v4826
      %v5368 = vsel %vm3484, %v5336, %v4828
      %v5369 = vsel %vm3484, %v5337, %v4830
      %v5370 = vsel %vm3484, %v5338, %v4832
      %v5371 = vsel %vm3484, %v5339, %v4834
      %v5372 = vsel %vm3484, %v5340, %v4836
      %v5373 = vsel %vm3484, %v5341, %v4838
      %v5374 = vsel %vm3484, %v5342, %v4840
      %v5375 = vsel %vm3484, %v5343, %v4842
      %v5376 = vsel %vm3484, %v5344, %v4844
      %v5377 = vsel %vm3484, %v5345, %v4846
      %v5378 = vsel %vm3484, %v5346, %v4848
      %v5379 = vsel %vm3484, %v5347, %v4850
      %v5380 = vsel %vm3484, %v5348, %v4852
      %v5381 = vsel %vm3484, %v5349, %v4854
      %v5382 = vsel %vm3484, %v5350, %v4856
      %v5383 = vsel %vm3484, %v5351, %v4858
      %v5384 = vsel %vm3484, %v5352, %v4860
      %v5385 = vsel %vm3484, %v5353, %v4862
      %v5386 = vsel %vm3484, %v5354, %v4864
      %v5387 = vsel %vm3484, %v5355, %v4866
      %v5388 = vsel %vm3484, %v5356, %v4868
      %v5389 = vsel %vm3484, %v5357, %v4870
      %v5390 = vsel %vm3484, %v5358, %v4872
      %v5391 = vsel %vm3484, %v5359, %v4874
      %v5392 = vsel %vm3484, %v5360, %v4876
      %v5393 = vsel %vm3484, %v5361, %v4878
      %v5394 = vsel %vm3484, %v5362, %v4880
      %v5395 = vsel %vm3484, %v5363, %v4882
      %v5396 = vsel %vm3484, %v5364, %v4884
      %v5397 = vsel %vm309, %v4373, %v4950
      %v5398 = vsel %vm309, %v4374, %v4952
      %v5399 = vsel %vm309, %v4375, %v4954
      %v5400 = vsel %vm309, %v4376, %v4956
      %v5401 = vsel %vm309, %v4377, %v4958
      %v5402 = vsel %vm309, %v4378, %v4960
      %v5403 = vsel %vm309, %v4379, %v4962
      %v5404 = vsel %vm309, %v4380, %v4964
      %v5405 = vsel %vm309, %v4381, %v4966
      %v5406 = vsel %vm309, %v4382, %v4968
      %v5407 = vsel %vm309, %v4383, %v4970
      %v5408 = vsel %vm309, %v4384, %v4972
      %v5409 = vsel %vm309, %v4385, %v4974
      %v5410 = vsel %vm309, %v4386, %v4976
      %v5411 = vsel %vm309, %v4387, %v4978
      %v5412 = vsel %vm309, %v4388, %v4980
      %v5413 = vsel %vm309, %v4389, %v4982
      %v5414 = vsel %vm309, %v4390, %v4984
      %v5415 = vsel %vm309, %v4391, %v4986
      %v5416 = vsel %vm309, %v4392, %v4988
      %v5417 = vsel %vm309, %v4393, %v4990
      %v5418 = vsel %vm309, %v4394, %v4992
      %v5419 = vsel %vm309, %v4395, %v4994
      %v5420 = vsel %vm309, %v4396, %v4996
      %v5421 = vsel %vm309, %v4397, %v4998
      %v5422 = vsel %vm309, %v4398, %v5000
      %v5423 = vsel %vm309, %v4399, %v5002
      %v5424 = vsel %vm309, %v4400, %v5004
      %v5425 = vsel %vm309, %v4401, %v5006
      %v5426 = vsel %vm309, %v4402, %v5008
      %v5427 = vsel %vm309, %v4403, %v5010
      %v5428 = vsel %vm309, %v4404, %v5012
      %v5429 = vsel %vm3451, %v5397, %v5078
      %v5430 = vsel %vm3451, %v5398, %v5080
      %v5431 = vsel %vm3451, %v5399, %v5082
      %v5432 = vsel %vm3451, %v5400, %v5084
      %v5433 = vsel %vm3451, %v5401, %v5086
      %v5434 = vsel %vm3451, %v5402, %v5088
      %v5435 = vsel %vm3451, %v5403, %v5090
      %v5436 = vsel %vm3451, %v5404, %v5092
      %v5437 = vsel %vm3451, %v5405, %v5094
      %v5438 = vsel %vm3451, %v5406, %v5096
      %v5439 = vsel %vm3451, %v5407, %v5098
      %v5440 = vsel %vm3451, %v5408, %v5100
      %v5441 = vsel %vm3451, %v5409, %v5102
      %v5442 = vsel %vm3451, %v5410, %v5104
      %v5443 = vsel %vm3451, %v5411, %v5106
      %v5444 = vsel %vm3451, %v5412, %v5108
      %v5445 = vsel %vm3451, %v5413, %v5110
      %v5446 = vsel %vm3451, %v5414, %v5112
      %v5447 = vsel %vm3451, %v5415, %v5114
      %v5448 = vsel %vm3451, %v5416, %v5116
      %v5449 = vsel %vm3451, %v5417, %v5118
      %v5450 = vsel %vm3451, %v5418, %v5120
      %v5451 = vsel %vm3451, %v5419, %v5122
      %v5452 = vsel %vm3451, %v5420, %v5124
      %v5453 = vsel %vm3451, %v5421, %v5126
      %v5454 = vsel %vm3451, %v5422, %v5128
      %v5455 = vsel %vm3451, %v5423, %v5130
      %v5456 = vsel %vm3451, %v5424, %v5132
      %v5457 = vsel %vm3451, %v5425, %v5134
      %v5458 = vsel %vm3451, %v5426, %v5136
      %v5459 = vsel %vm3451, %v5427, %v5138
      %v5460 = vsel %vm3451, %v5428, %v5140
      %v5461 = vsel %vm3484, %v5429, %v5206
      %v5462 = vsel %vm3484, %v5430, %v5208
      %v5463 = vsel %vm3484, %v5431, %v5210
      %v5464 = vsel %vm3484, %v5432, %v5212
      %v5465 = vsel %vm3484, %v5433, %v5214
      %v5466 = vsel %vm3484, %v5434, %v5216
      %v5467 = vsel %vm3484, %v5435, %v5218
      %v5468 = vsel %vm3484, %v5436, %v5220
      %v5469 = vsel %vm3484, %v5437, %v5222
      %v5470 = vsel %vm3484, %v5438, %v5224
      %v5471 = vsel %vm3484, %v5439, %v5226
      %v5472 = vsel %vm3484, %v5440, %v5228
      %v5473 = vsel %vm3484, %v5441, %v5230
      %v5474 = vsel %vm3484, %v5442, %v5232
      %v5475 = vsel %vm3484, %v5443, %v5234
      %v5476 = vsel %vm3484, %v5444, %v5236
      %v5477 = vsel %vm3484, %v5445, %v5238
      %v5478 = vsel %vm3484, %v5446, %v5240
      %v5479 = vsel %vm3484, %v5447, %v5242
      %v5480 = vsel %vm3484, %v5448, %v5244
      %v5481 = vsel %vm3484, %v5449, %v5246
      %v5482 = vsel %vm3484, %v5450, %v5248
      %v5483 = vsel %vm3484, %v5451, %v5250
      %v5484 = vsel %vm3484, %v5452, %v5252
      %v5485 = vsel %vm3484, %v5453, %v5254
      %v5486 = vsel %vm3484, %v5454, %v5256
      %v5487 = vsel %vm3484, %v5455, %v5258
      %v5488 = vsel %vm3484, %v5456, %v5260
      %v5489 = vsel %vm3484, %v5457, %v5262
      %v5490 = vsel %vm3484, %v5458, %v5264
      %v5491 = vsel %vm3484, %v5459, %v5266
      %v5492 = vsel %vm3484, %v5460, %v5268
      %v5493 = vpack.c.bf16 %v5366, %v5365
      %v5494 = vpack.c.bf16 %v5462, %v5461
      %v5495 = vpack.c.bf16 %v4502, %v4501
      %v5496 = vpack.c.bf16 %v5368, %v5367
      %v5497 = vpack.c.bf16 %v5464, %v5463
      %v5498 = vpack.c.bf16 %v4504, %v4503
      %v5499 = vpack.c.bf16 %v5370, %v5369
      %v5500 = vpack.c.bf16 %v5466, %v5465
      %v5501 = vpack.c.bf16 %v4506, %v4505
      %v5502 = vpack.c.bf16 %v5372, %v5371
      %v5503 = vpack.c.bf16 %v5468, %v5467
      %v5504 = vpack.c.bf16 %v4508, %v4507
      %v5505 = vpack.c.bf16 %v5374, %v5373
      %v5506 = vpack.c.bf16 %v5470, %v5469
      %v5507 = vpack.c.bf16 %v4510, %v4509
      %v5508 = vpack.c.bf16 %v5376, %v5375
      %v5509 = vpack.c.bf16 %v5472, %v5471
      %v5510 = vpack.c.bf16 %v4512, %v4511
      %v5511 = vpack.c.bf16 %v5378, %v5377
      %v5512 = vpack.c.bf16 %v5474, %v5473
      %v5513 = vpack.c.bf16 %v4514, %v4513
      %v5514 = vpack.c.bf16 %v5380, %v5379
      %v5515 = vpack.c.bf16 %v5476, %v5475
      %v5516 = vpack.c.bf16 %v4516, %v4515
      %v5517 = vpack.c.bf16 %v5382, %v5381
      %v5518 = vpack.c.bf16 %v5478, %v5477
      %v5519 = vpack.c.bf16 %v4518, %v4517
      %v5520 = vpack.c.bf16 %v5384, %v5383
      %v5521 = vpack.c.bf16 %v5480, %v5479
      %v5522 = vpack.c.bf16 %v4520, %v4519
      %v5523 = vpack.c.bf16 %v5386, %v5385
      %v5524 = vpack.c.bf16 %v5482, %v5481
      %v5525 = vpack.c.bf16 %v4522, %v4521
      %v5526 = vpack.c.bf16 %v5388, %v5387
      %v5527 = vpack.c.bf16 %v5484, %v5483
      %v5528 = vpack.c.bf16 %v4524, %v4523
      %v5529 = vpack.c.bf16 %v5390, %v5389
      %v5530 = vpack.c.bf16 %v5486, %v5485
      %v5531 = vpack.c.bf16 %v4526, %v4525
      %v5532 = vpack.c.bf16 %v5392, %v5391
      %v5533 = vpack.c.bf16 %v5488, %v5487
      %v5534 = vpack.c.bf16 %v4528, %v4527
      %v5535 = vpack.c.bf16 %v5394, %v5393
      %v5536 = vpack.c.bf16 %v5490, %v5489
      %v5537 = vpack.c.bf16 %v4530, %v4529
      %v5538 = vpack.c.bf16 %v5396, %v5395
      %v5539 = vpack.c.bf16 %v5492, %v5491
      %v5540 = vpack.c.bf16 %v4532, %v4531
      %v5541 = vlaneseq
      %v5542 = vshrl.u32 %v5541, 7
      %v5543 = vsub.s32 0, %v5542
      %v5544 = vrot.slane %v4244, %v5543
      %v5581 = vunpack.c.l.b16 %v4208
      %v5582 = vunpack.c.l.b16 %v4209
      %v5583 = vunpack.c.l.b16 %v4210
      %v5584 = vunpack.c.l.b16 %v4211
      %v5585 = vunpack.c.l.b16 %v4212
      %v5586 = vunpack.c.l.b16 %v4213
      %v5587 = vunpack.c.l.b16 %v4214
      %v5588 = vunpack.c.l.b16 %v4215
      %v5589 = vunpack.c.l.b16 %v4216
      %v5590 = vunpack.c.l.b16 %v4217
      %v5591 = vunpack.c.l.b16 %v4218
      %v5592 = vunpack.c.l.b16 %v4219
      %v5593 = vunpack.c.l.b16 %v4220
      %v5594 = vunpack.c.l.b16 %v4221
      %v5595 = vunpack.c.l.b16 %v4222
      %v5596 = vunpack.c.l.b16 %v4223
      %v5597 = vunpack.c.l.b16 %v4224
      %v5598 = vunpack.c.l.b16 %v4225
      %v5599 = vunpack.c.l.b16 %v4226
      %v5600 = vunpack.c.l.b16 %v4227
      %v5601 = vunpack.c.l.b16 %v4228
      %v5602 = vunpack.c.l.b16 %v4229
      %v5603 = vunpack.c.l.b16 %v4230
      %v5604 = vunpack.c.l.b16 %v4231
      %v5605 = vunpack.c.l.b16 %v4232
      %v5606 = vunpack.c.l.b16 %v4233
      %v5607 = vunpack.c.l.b16 %v4234
      %v5608 = vunpack.c.l.b16 %v4235
      %v5609 = vunpack.c.l.b16 %v4236
      %v5610 = vunpack.c.l.b16 %v4237
      %v5611 = vunpack.c.l.b16 %v4238
      %v5612 = vunpack.c.l.b16 %v4239
      %v5613 = vunpack.c.l.b16 %v4240
      %v5614 = vunpack.c.l.b16 %v4241
      %v5615 = vunpack.c.l.b16 %v4242
      %v5616 = vunpack.c.l.b16 %v4243
      %v5617 = vpack.c.b16 %v5582, %v5581
      %v5618 = vpack.c.b16 %v5584, %v5583
      %v5619 = vpack.c.b16 %v5586, %v5585
      %v5620 = vpack.c.b16 %v5588, %v5587
      %v5621 = vpack.c.b16 %v5590, %v5589
      %v5622 = vpack.c.b16 %v5592, %v5591
      %v5623 = vpack.c.b16 %v5594, %v5593
      %v5624 = vpack.c.b16 %v5596, %v5595
      %v5625 = vpack.c.b16 %v5598, %v5597
      %v5626 = vpack.c.b16 %v5600, %v5599
      %v5627 = vpack.c.b16 %v5602, %v5601
      %v5628 = vpack.c.b16 %v5604, %v5603
      %v5629 = vpack.c.b16 %v5606, %v5605
      %v5630 = vpack.c.b16 %v5608, %v5607
      %v5631 = vpack.c.b16 %v5610, %v5609
      %v5632 = vpack.c.b16 %v5612, %v5611
      %v5633 = vpack.c.b16 %v5614, %v5613
      %v5634 = vpack.c.b16 %v5616, %v5615
      %v5654 = vsel %vm309, %v5495, 0
      %v5657 = vsel %vm309, %v5498, 0
      %v5660 = vsel %vm309, %v5501, 0
      %v5663 = vsel %vm309, %v5504, 0
      %v5666 = vsel %vm309, %v5507, 0
      %v5669 = vsel %vm309, %v5510, 0
      %v5672 = vsel %vm309, %v5513, 0
      %v5675 = vsel %vm309, %v5516, 0
      %v5678 = vsel %vm309, %v5519, 0
      %v5681 = vsel %vm309, %v5522, 0
      %v5684 = vsel %vm309, %v5525, 0
      %v5687 = vsel %vm309, %v5528, 0
      %v5690 = vsel %vm309, %v5531, 0
      %v5693 = vsel %vm309, %v5534, 0
      %v5696 = vsel %vm309, %v5537, 0
      %v5699 = vsel %vm309, %v5540, 0
      %5701 = vmatprep.subr.bf16.mxu0 0
      %5702 = vmatpush1.bf16.msra.mxu0 %v5624
      %5703 = vmatprep.subr.bf16.mxu0 0
      %5704 = vmatpush1.bf16.msra.mxu0 %v5623
      %5705 = vmatprep.subr.bf16.mxu0 0
      %5706 = vmatpush1.bf16.msra.mxu0 %v5622
      %5707 = vmatprep.subr.bf16.mxu0 0
      %5708 = vmatpush1.bf16.msra.mxu0 %v5621
      %5709 = vmatprep.subr.bf16.mxu0 0
      %5710 = vmatpush1.bf16.msra.mxu0 %v5620
      %5711 = vmatprep.subr.bf16.mxu0 0
      %5712 = vmatpush1.bf16.msra.mxu0 %v5619
      %5713 = vmatprep.subr.bf16.mxu0 0
      %5714 = vmatpush1.bf16.msra.mxu0 %v5618
      %5715 = vmatprep.subr.bf16.mxu0 0
      %5716 = vmatpush1.bf16.msra.mxu0 %v5617
      %5717 = vmatprep.subr.bf16.mxu0 0
      %5718 = vmatpush2.bf16.msra.mxu0 %v5632
      %5719 = vmatprep.subr.bf16.mxu0 0
      %5720 = vmatpush2.bf16.msra.mxu0 %v5631
      %5721 = vmatprep.subr.bf16.mxu0 0
      %5722 = vmatpush2.bf16.msra.mxu0 %v5630
      %5723 = vmatprep.subr.bf16.mxu0 0
      %5724 = vmatpush2.bf16.msra.mxu0 %v5629
      %5725 = vmatprep.subr.bf16.mxu0 0
      %5726 = vmatpush2.bf16.msra.mxu0 %v5628
      %5727 = vmatprep.subr.bf16.mxu0 0
      %5728 = vmatpush2.bf16.msra.mxu0 %v5627
      %5729 = vmatprep.subr.bf16.mxu0 0
      %5730 = vmatpush2.bf16.msra.mxu0 %v5626
      %5731 = vmatprep.subr.bf16.mxu0 0
      %5732 = vmatpush2.bf16.msra.mxu0 %v5625
      %5733 = vmatprep.mubr.bf16.mxu0 %v5494
      %5734 = vmatmul.mubr.bf16.gmra.mxu0 %v5493
      %v5735 = vpop.f32.mrf.mxu0
      %v5736 = vadd.f32 %v5544, %v5735
      %v5737 = vpop.f32.mrf.mxu0
      %v5738 = vpop.f32.mrf.mxu0
      %v5739 = vadd.f32 %v5544, %v5738
      %v5740 = vpop.f32.mrf.mxu0
      %5741 = vmatprep.mubr.bf16.mxu0 %v5497
      %5742 = vmatmul.mubr.bf16.gmra.mxu0 %v5496
      %v5743 = vpop.f32.mrf.mxu0
      %v5744 = vadd.f32 %v5544, %v5743
      %v5745 = vpop.f32.mrf.mxu0
      %v5746 = vpop.f32.mrf.mxu0
      %v5747 = vadd.f32 %v5544, %v5746
      %v5748 = vpop.f32.mrf.mxu0
      %5749 = vmatprep.mubr.bf16.mxu0 %v5500
      %5750 = vmatmul.mubr.bf16.gmra.mxu0 %v5499
      %v5751 = vpop.f32.mrf.mxu0
      %v5752 = vadd.f32 %v5544, %v5751
      %v5753 = vpop.f32.mrf.mxu0
      %v5754 = vpop.f32.mrf.mxu0
      %v5755 = vadd.f32 %v5544, %v5754
      %v5756 = vpop.f32.mrf.mxu0
      %5757 = vmatprep.mubr.bf16.mxu0 %v5503
      %5758 = vmatmul.mubr.bf16.gmra.mxu0 %v5502
      %v5759 = vpop.f32.mrf.mxu0
      %v5760 = vadd.f32 %v5544, %v5759
      %v5761 = vpop.f32.mrf.mxu0
      %v5762 = vpop.f32.mrf.mxu0
      %v5763 = vadd.f32 %v5544, %v5762
      %v5764 = vpop.f32.mrf.mxu0
      %5765 = vmatprep.mubr.bf16.mxu0 %v5506
      %5766 = vmatmul.mubr.bf16.gmra.mxu0 %v5505
      %v5767 = vpop.f32.mrf.mxu0
      %v5768 = vadd.f32 %v5544, %v5767
      %v5769 = vpop.f32.mrf.mxu0
      %v5770 = vpop.f32.mrf.mxu0
      %v5771 = vadd.f32 %v5544, %v5770
      %v5772 = vpop.f32.mrf.mxu0
      %5773 = vmatprep.mubr.bf16.mxu0 %v5509
      %5774 = vmatmul.mubr.bf16.gmra.mxu0 %v5508
      %v5775 = vpop.f32.mrf.mxu0
      %v5776 = vadd.f32 %v5544, %v5775
      %v5777 = vpop.f32.mrf.mxu0
      %v5778 = vpop.f32.mrf.mxu0
      %v5779 = vadd.f32 %v5544, %v5778
      %v5780 = vpop.f32.mrf.mxu0
      %5781 = vmatprep.mubr.bf16.mxu0 %v5512
      %5782 = vmatmul.mubr.bf16.gmra.mxu0 %v5511
      %v5783 = vpop.f32.mrf.mxu0
      %v5784 = vadd.f32 %v5544, %v5783
      %v5785 = vpop.f32.mrf.mxu0
      %v5786 = vpop.f32.mrf.mxu0
      %v5787 = vadd.f32 %v5544, %v5786
      %v5788 = vpop.f32.mrf.mxu0
      %5789 = vmatprep.mubr.bf16.mxu0 %v5515
      %5790 = vmatmul.mubr.bf16.gmra.mxu0 %v5514
      %v5791 = vpop.f32.mrf.mxu0
      %v5792 = vadd.f32 %v5544, %v5791
      %v5793 = vpop.f32.mrf.mxu0
      %v5794 = vpop.f32.mrf.mxu0
      %v5795 = vadd.f32 %v5544, %v5794
      %v5796 = vpop.f32.mrf.mxu0
      %5797 = vmatprep.mubr.bf16.mxu0 %v5518
      %5798 = vmatmul.mubr.bf16.gmra.mxu0 %v5517
      %v5799 = vpop.f32.mrf.mxu0
      %v5800 = vadd.f32 %v5544, %v5799
      %v5801 = vpop.f32.mrf.mxu0
      %v5802 = vpop.f32.mrf.mxu0
      %v5803 = vadd.f32 %v5544, %v5802
      %v5804 = vpop.f32.mrf.mxu0
      %5805 = vmatprep.mubr.bf16.mxu0 %v5521
      %5806 = vmatmul.mubr.bf16.gmra.mxu0 %v5520
      %v5807 = vpop.f32.mrf.mxu0
      %v5808 = vadd.f32 %v5544, %v5807
      %v5809 = vpop.f32.mrf.mxu0
      %v5810 = vpop.f32.mrf.mxu0
      %v5811 = vadd.f32 %v5544, %v5810
      %v5812 = vpop.f32.mrf.mxu0
      %5813 = vmatprep.mubr.bf16.mxu0 %v5524
      %5814 = vmatmul.mubr.bf16.gmra.mxu0 %v5523
      %v5815 = vpop.f32.mrf.mxu0
      %v5816 = vadd.f32 %v5544, %v5815
      %v5817 = vpop.f32.mrf.mxu0
      %v5818 = vpop.f32.mrf.mxu0
      %v5819 = vadd.f32 %v5544, %v5818
      %v5820 = vpop.f32.mrf.mxu0
      %5821 = vmatprep.mubr.bf16.mxu0 %v5527
      %5822 = vmatmul.mubr.bf16.gmra.mxu0 %v5526
      %v5823 = vpop.f32.mrf.mxu0
      %v5824 = vadd.f32 %v5544, %v5823
      %v5825 = vpop.f32.mrf.mxu0
      %v5826 = vpop.f32.mrf.mxu0
      %v5827 = vadd.f32 %v5544, %v5826
      %v5828 = vpop.f32.mrf.mxu0
      %5829 = vmatprep.mubr.bf16.mxu0 %v5530
      %5830 = vmatmul.mubr.bf16.gmra.mxu0 %v5529
      %v5831 = vpop.f32.mrf.mxu0
      %v5832 = vadd.f32 %v5544, %v5831
      %v5833 = vpop.f32.mrf.mxu0
      %v5834 = vpop.f32.mrf.mxu0
      %v5835 = vadd.f32 %v5544, %v5834
      %v5836 = vpop.f32.mrf.mxu0
      %5837 = vmatprep.mubr.bf16.mxu0 %v5533
      %5838 = vmatmul.mubr.bf16.gmra.mxu0 %v5532
      %v5839 = vpop.f32.mrf.mxu0
      %v5840 = vadd.f32 %v5544, %v5839
      %v5841 = vpop.f32.mrf.mxu0
      %v5842 = vpop.f32.mrf.mxu0
      %v5843 = vadd.f32 %v5544, %v5842
      %v5844 = vpop.f32.mrf.mxu0
      %5845 = vmatprep.mubr.bf16.mxu0 %v5536
      %5846 = vmatmul.mubr.bf16.gmra.mxu0 %v5535
      %v5847 = vpop.f32.mrf.mxu0
      %v5848 = vadd.f32 %v5544, %v5847
      %v5849 = vpop.f32.mrf.mxu0
      %v5850 = vpop.f32.mrf.mxu0
      %v5851 = vadd.f32 %v5544, %v5850
      %v5852 = vpop.f32.mrf.mxu0
      %5853 = vmatprep.mubr.bf16.mxu0 %v5539
      %5854 = vmatmul.mubr.bf16.gmra.mxu0 %v5538
      %v5855 = vpop.f32.mrf.mxu0
      %v5856 = vadd.f32 %v5544, %v5855
      %v5857 = vpop.f32.mrf.mxu0
      %v5858 = vpop.f32.mrf.mxu0
      %v5859 = vadd.f32 %v5544, %v5858
      %v5860 = vpop.f32.mrf.mxu0
      %5861 = vdwg.mxu0
      %5862 = vmatprep.subr.bf16.mxu0 0
      %5863 = vmatpush1.bf16.msra.mxu0 0
      %5864 = vmatprep.subr.bf16.mxu0 0
      %5865 = vmatpush1.bf16.msra.mxu0 0
      %5866 = vmatprep.subr.bf16.mxu0 0
      %5867 = vmatpush1.bf16.msra.mxu0 0
      %5868 = vmatprep.subr.bf16.mxu0 0
      %5869 = vmatpush1.bf16.msra.mxu0 0
      %5870 = vmatprep.subr.bf16.mxu0 0
      %5871 = vmatpush1.bf16.msra.mxu0 0
      %5872 = vmatprep.subr.bf16.mxu0 0
      %5873 = vmatpush1.bf16.msra.mxu0 0
      %5874 = vmatprep.subr.bf16.mxu0 0
      %5875 = vmatpush1.bf16.msra.mxu0 %v5634
      %5876 = vmatprep.subr.bf16.mxu0 0
      %5877 = vmatpush1.bf16.msra.mxu0 %v5633
      %5878 = vmatprep.subr.bf16.mxu0 0
      %5879 = vmatpush2.bf16.msra.mxu0 0
      %5880 = vmatprep.subr.bf16.mxu0 0
      %5881 = vmatpush2.bf16.msra.mxu0 0
      %5882 = vmatprep.subr.bf16.mxu0 0
      %5883 = vmatpush2.bf16.msra.mxu0 0
      %5884 = vmatprep.subr.bf16.mxu0 0
      %5885 = vmatpush2.bf16.msra.mxu0 0
      %5886 = vmatprep.subr.bf16.mxu0 0
      %5887 = vmatpush2.bf16.msra.mxu0 0
      %5888 = vmatprep.subr.bf16.mxu0 0
      %5889 = vmatpush2.bf16.msra.mxu0 0
      %5890 = vmatprep.subr.bf16.mxu0 0
      %5891 = vmatpush2.bf16.msra.mxu0 0
      %5892 = vmatprep.subr.bf16.mxu0 0
      %5893 = vmatpush2.bf16.msra.mxu0 0
      %5894 = vmatprep.mubr.bf16.mxu0 0
      %5895 = vmatmul.mubr.bf16.gmra.mxu0 %v5654
      %v5896 = vpop.f32.mrf.mxu0
      %v5897 = vadd.f32 %v5736, %v5896
      %v5898 = vpop.f32.mrf.mxu0
      %v5899 = vpop.f32.mrf.mxu0
      %v5900 = vadd.f32 %v5739, %v5899
      %v5901 = vpop.f32.mrf.mxu0
      %5902 = vmatprep.mubr.bf16.mxu0 0
      %5903 = vmatmul.mubr.bf16.gmra.mxu0 %v5657
      %v5904 = vpop.f32.mrf.mxu0
      %v5905 = vadd.f32 %v5744, %v5904
      %v5906 = vpop.f32.mrf.mxu0
      %v5907 = vpop.f32.mrf.mxu0
      %v5908 = vadd.f32 %v5747, %v5907
      %v5909 = vpop.f32.mrf.mxu0
      %5910 = vmatprep.mubr.bf16.mxu0 0
      %5911 = vmatmul.mubr.bf16.gmra.mxu0 %v5660
      %v5912 = vpop.f32.mrf.mxu0
      %v5913 = vadd.f32 %v5752, %v5912
      %v5914 = vpop.f32.mrf.mxu0
      %v5915 = vpop.f32.mrf.mxu0
      %v5916 = vadd.f32 %v5755, %v5915
      %v5917 = vpop.f32.mrf.mxu0
      %5918 = vmatprep.mubr.bf16.mxu0 0
      %5919 = vmatmul.mubr.bf16.gmra.mxu0 %v5663
      %v5920 = vpop.f32.mrf.mxu0
      %v5921 = vadd.f32 %v5760, %v5920
      %v5922 = vpop.f32.mrf.mxu0
      %v5923 = vpop.f32.mrf.mxu0
      %v5924 = vadd.f32 %v5763, %v5923
      %v5925 = vpop.f32.mrf.mxu0
      %5926 = vmatprep.mubr.bf16.mxu0 0
      %5927 = vmatmul.mubr.bf16.gmra.mxu0 %v5666
      %v5928 = vpop.f32.mrf.mxu0
      %v5929 = vadd.f32 %v5768, %v5928
      %v5930 = vpop.f32.mrf.mxu0
      %v5931 = vpop.f32.mrf.mxu0
      %v5932 = vadd.f32 %v5771, %v5931
      %v5933 = vpop.f32.mrf.mxu0
      %5934 = vmatprep.mubr.bf16.mxu0 0
      %5935 = vmatmul.mubr.bf16.gmra.mxu0 %v5669
      %v5936 = vpop.f32.mrf.mxu0
      %v5937 = vadd.f32 %v5776, %v5936
      %v5938 = vpop.f32.mrf.mxu0
      %v5939 = vpop.f32.mrf.mxu0
      %v5940 = vadd.f32 %v5779, %v5939
      %v5941 = vpop.f32.mrf.mxu0
      %5942 = vmatprep.mubr.bf16.mxu0 0
      %5943 = vmatmul.mubr.bf16.gmra.mxu0 %v5672
      %v5944 = vpop.f32.mrf.mxu0
      %v5945 = vadd.f32 %v5784, %v5944
      %v5946 = vpop.f32.mrf.mxu0
      %v5947 = vpop.f32.mrf.mxu0
      %v5948 = vadd.f32 %v5787, %v5947
      %v5949 = vpop.f32.mrf.mxu0
      %5950 = vmatprep.mubr.bf16.mxu0 0
      %5951 = vmatmul.mubr.bf16.gmra.mxu0 %v5675
      %v5952 = vpop.f32.mrf.mxu0
      %v5953 = vadd.f32 %v5792, %v5952
      %v5954 = vpop.f32.mrf.mxu0
      %v5955 = vpop.f32.mrf.mxu0
      %v5956 = vadd.f32 %v5795, %v5955
      %v5957 = vpop.f32.mrf.mxu0
      %5958 = vmatprep.mubr.bf16.mxu0 0
      %5959 = vmatmul.mubr.bf16.gmra.mxu0 %v5678
      %v5960 = vpop.f32.mrf.mxu0
      %v5961 = vadd.f32 %v5800, %v5960
      %v5962 = vpop.f32.mrf.mxu0
      %v5963 = vpop.f32.mrf.mxu0
      %v5964 = vadd.f32 %v5803, %v5963
      %v5965 = vpop.f32.mrf.mxu0
      %5966 = vmatprep.mubr.bf16.mxu0 0
      %5967 = vmatmul.mubr.bf16.gmra.mxu0 %v5681
      %v5968 = vpop.f32.mrf.mxu0
      %v5969 = vadd.f32 %v5808, %v5968
      %v5970 = vpop.f32.mrf.mxu0
      %v5971 = vpop.f32.mrf.mxu0
      %v5972 = vadd.f32 %v5811, %v5971
      %v5973 = vpop.f32.mrf.mxu0
      %5974 = vmatprep.mubr.bf16.mxu0 0
      %5975 = vmatmul.mubr.bf16.gmra.mxu0 %v5684
      %v5976 = vpop.f32.mrf.mxu0
      %v5977 = vadd.f32 %v5816, %v5976
      %v5978 = vpop.f32.mrf.mxu0
      %v5979 = vpop.f32.mrf.mxu0
      %v5980 = vadd.f32 %v5819, %v5979
      %v5981 = vpop.f32.mrf.mxu0
      %5982 = vmatprep.mubr.bf16.mxu0 0
      %5983 = vmatmul.mubr.bf16.gmra.mxu0 %v5687
      %v5984 = vpop.f32.mrf.mxu0
      %v5985 = vadd.f32 %v5824, %v5984
      %v5986 = vpop.f32.mrf.mxu0
      %v5987 = vpop.f32.mrf.mxu0
      %v5988 = vadd.f32 %v5827, %v5987
      %v5989 = vpop.f32.mrf.mxu0
      %5990 = vmatprep.mubr.bf16.mxu0 0
      %5991 = vmatmul.mubr.bf16.gmra.mxu0 %v5690
      %v5992 = vpop.f32.mrf.mxu0
      %v5993 = vadd.f32 %v5832, %v5992
      %v5994 = vpop.f32.mrf.mxu0
      %v5995 = vpop.f32.mrf.mxu0
      %v5996 = vadd.f32 %v5835, %v5995
      %v5997 = vpop.f32.mrf.mxu0
      %5998 = vmatprep.mubr.bf16.mxu0 0
      %5999 = vmatmul.mubr.bf16.gmra.mxu0 %v5693
      %v6000 = vpop.f32.mrf.mxu0
      %v6001 = vadd.f32 %v5840, %v6000
      %v6002 = vpop.f32.mrf.mxu0
      %v6003 = vpop.f32.mrf.mxu0
      %v6004 = vadd.f32 %v5843, %v6003
      %v6005 = vpop.f32.mrf.mxu0
      %6006 = vmatprep.mubr.bf16.mxu0 0
      %6007 = vmatmul.mubr.bf16.gmra.mxu0 %v5696
      %v6008 = vpop.f32.mrf.mxu0
      %v6009 = vadd.f32 %v5848, %v6008
      %v6010 = vpop.f32.mrf.mxu0
      %v6011 = vpop.f32.mrf.mxu0
      %v6012 = vadd.f32 %v5851, %v6011
      %v6013 = vpop.f32.mrf.mxu0
      %6014 = vmatprep.mubr.bf16.mxu0 0
      %6015 = vmatmul.mubr.bf16.gmra.mxu0 %v5699
      %v6016 = vpop.f32.mrf.mxu0
      %v6017 = vadd.f32 %v5856, %v6016
      %v6018 = vpop.f32.mrf.mxu0
      %v6019 = vpop.f32.mrf.mxu0
      %v6020 = vadd.f32 %v5859, %v6019
      %v6021 = vpop.f32.mrf.mxu0
      %6022 = vdwg.mxu0
      %v6023 = vmax.f32 %v5897, 0.0
      %v6024 = vmax.f32 %v5900, 0.0
      %v6025 = vmax.f32 %v5905, 0.0
      %v6026 = vmax.f32 %v5908, 0.0
      %v6027 = vmax.f32 %v5913, 0.0
      %v6028 = vmax.f32 %v5916, 0.0
      %v6029 = vmax.f32 %v5921, 0.0
      %v6030 = vmax.f32 %v5924, 0.0
      %v6031 = vmax.f32 %v5929, 0.0
      %v6032 = vmax.f32 %v5932, 0.0
      %v6033 = vmax.f32 %v5937, 0.0
      %v6034 = vmax.f32 %v5940, 0.0
      %v6035 = vmax.f32 %v5945, 0.0
      %v6036 = vmax.f32 %v5948, 0.0
      %v6037 = vmax.f32 %v5953, 0.0
      %v6038 = vmax.f32 %v5956, 0.0
      %v6039 = vmax.f32 %v5961, 0.0
      %v6040 = vmax.f32 %v5964, 0.0
      %v6041 = vmax.f32 %v5969, 0.0
      %v6042 = vmax.f32 %v5972, 0.0
      %v6043 = vmax.f32 %v5977, 0.0
      %v6044 = vmax.f32 %v5980, 0.0
      %v6045 = vmax.f32 %v5985, 0.0
      %v6046 = vmax.f32 %v5988, 0.0
      %v6047 = vmax.f32 %v5993, 0.0
      %v6048 = vmax.f32 %v5996, 0.0
      %v6049 = vmax.f32 %v6001, 0.0
      %v6050 = vmax.f32 %v6004, 0.0
      %v6051 = vmax.f32 %v6009, 0.0
      %v6052 = vmax.f32 %v6012, 0.0
      %v6053 = vmax.f32 %v6017, 0.0
      %v6054 = vmax.f32 %v6020, 0.0
      %6055 = vst.msk [vmem:[%s2292 + $0x1] sm:$0xff] %vm309, %v6023
      %6056 = vst.msk [vmem:[%s2292 + $0x9] sm:$0xff] %vm309, %v6024
      %6057 = vst.msk [vmem:[%s2292 + $0x19] sm:$0xff] %vm309, %v6025
      %6058 = vst.msk [vmem:[%s2292 + $0x21] sm:$0xff] %vm309, %v6026
      %6059 = vst.msk [vmem:[%s2292 + $0x31] sm:$0xff] %vm309, %v6027
      %6060 = vst.msk [vmem:[%s2292 + $0x39] sm:$0xff] %vm309, %v6028
      %6061 = vst.msk [vmem:[%s2292 + $0x49] sm:$0xff] %vm309, %v6029
      %6062 = vst.msk [vmem:[%s2292 + $0x51] sm:$0xff] %vm309, %v6030
      %6063 = vst.msk [vmem:[%s2292 + $0x61] sm:$0xff] %vm309, %v6031
      %6064 = vst.msk [vmem:[%s2292 + $0x69] sm:$0xff] %vm309, %v6032
      %6065 = vst.msk [vmem:[%s2292 + $0x79] sm:$0xff] %vm309, %v6033
      %6066 = vst.msk [vmem:[%s2292 + $0x81] sm:$0xff] %vm309, %v6034
      %6067 = vst.msk [vmem:[%s2292 + $0x91] sm:$0xff] %vm309, %v6035
      %6068 = vst.msk [vmem:[%s2292 + $0x99] sm:$0xff] %vm309, %v6036
      %6069 = vst.msk [vmem:[%s2292 + $0xa9] sm:$0xff] %vm309, %v6037
      %6070 = vst.msk [vmem:[%s2292 + $0xb1] sm:$0xff] %vm309, %v6038
      %6071 = vst.msk [vmem:[%s2292 + $0xc1] sm:$0xff] %vm309, %v6039
      %6072 = vst.msk [vmem:[%s2292 + $0xc9] sm:$0xff] %vm309, %v6040
      %6073 = vst.msk [vmem:[%s2292 + $0xd9] sm:$0xff] %vm309, %v6041
      %6074 = vst.msk [vmem:[%s2292 + $0xe1] sm:$0xff] %vm309, %v6042
      %6075 = vst.msk [vmem:[%s2292 + $0xf1] sm:$0xff] %vm309, %v6043
      %6076 = vst.msk [vmem:[%s2292 + $0xf9] sm:$0xff] %vm309, %v6044
      %6077 = vst.msk [vmem:[%s2292 + $0x109] sm:$0xff] %vm309, %v6045
      %6078 = vst.msk [vmem:[%s2292 + $0x111] sm:$0xff] %vm309, %v6046
      %6079 = vst.msk [vmem:[%s2292 + $0x121] sm:$0xff] %vm309, %v6047
      %6080 = vst.msk [vmem:[%s2292 + $0x129] sm:$0xff] %vm309, %v6048
      %6081 = vst.msk [vmem:[%s2292 + $0x139] sm:$0xff] %vm309, %v6049
      %6082 = vst.msk [vmem:[%s2292 + $0x141] sm:$0xff] %vm309, %v6050
      %6083 = vst.msk [vmem:[%s2292 + $0x151] sm:$0xff] %vm309, %v6051
      %6084 = vst.msk [vmem:[%s2292 + $0x159] sm:$0xff] %vm309, %v6052
      %6085 = vst.msk [vmem:[%s2292 + $0x169] sm:$0xff] %vm309, %v6053
      %6086 = vst.msk [vmem:[%s2292 + $0x171] sm:$0xff] %vm309, %v6054
      %s6087 = scalar_lea.vmem %s2, 288
      %v6088 = vld [vmem:[%s6087] sm:$0xf]
      %v6089 = vld [vmem:[%s6087 + $0x4] sm:$0xf]
      %v6090 = vld [vmem:[%s6087 + $0x8] sm:$0xf]
      %v6091 = vld [vmem:[%s6087 + $0xc] sm:$0xf]
      %v6092 = vld [vmem:[%s6087 + $0x10] sm:$0xf]
      %v6093 = vld [vmem:[%s6087 + $0x14] sm:$0xf]
      %v6094 = vld [vmem:[%s6087 + $0x18] sm:$0xf]
      %v6095 = vld [vmem:[%s6087 + $0x1c] sm:$0xf]
      %v6096 = vld [vmem:[%s6087 + $0x20] sm:$0xf]
      %v6097 = vld [vmem:[%s6087 + $0x24] sm:$0xf]
      %v6098 = vld [vmem:[%s6087 + $0x28] sm:$0xf]
      %v6099 = vld [vmem:[%s6087 + $0x2c] sm:$0xf]
      %v6100 = vld [vmem:[%s6087 + $0x30] sm:$0xf]
      %v6101 = vld [vmem:[%s6087 + $0x34] sm:$0xf]
      %v6102 = vld [vmem:[%s6087 + $0x38] sm:$0xf]
      %v6103 = vld [vmem:[%s6087 + $0x3c] sm:$0xf]
      %v6104 = vld [vmem:[%s6087 + $0x40] sm:$0xf]
      %v6105 = vld [vmem:[%s6087 + $0x44] sm:$0xf]
      %v6106 = vld [vmem:[%s6087 + $0x48] sm:$0xf]
      %v6107 = vld [vmem:[%s6087 + $0x4c] sm:$0xf]
      %v6108 = vld [vmem:[%s6087 + $0x50] sm:$0xf]
      %v6109 = vld [vmem:[%s6087 + $0x54] sm:$0xf]
      %v6110 = vld [vmem:[%s6087 + $0x58] sm:$0xf]
      %v6111 = vld [vmem:[%s6087 + $0x5c] sm:$0xf]
      %v6112 = vld [vmem:[%s6087 + $0x60] sm:$0xf]
      %v6113 = vld [vmem:[%s6087 + $0x64] sm:$0xf]
      %v6114 = vld [vmem:[%s6087 + $0x68] sm:$0xf]
      %v6115 = vld [vmem:[%s6087 + $0x6c] sm:$0xf]
      %v6116 = vld [vmem:[%s6087 + $0x70] sm:$0xf]
      %v6117 = vld [vmem:[%s6087 + $0x74] sm:$0xf]
      %v6118 = vld [vmem:[%s6087 + $0x78] sm:$0xf]
      %v6119 = vld [vmem:[%s6087 + $0x7c] sm:$0xf]
      %v6120 = vld [vmem:[%s6087 + $0x80] sm:$0xf]
      %v6121 = vld [vmem:[%s6087 + $0x84] sm:$0xf]
      %v6122 = vld [vmem:[%s6087 + $0x88] sm:$0xf]
      %v6123 = vld [vmem:[%s6087 + $0x8c] sm:$0xf]
      %v6124 = vld [vmem:[%s3 + $0x3] sm:$0x1]
      %v6125 = vld [vmem:[#allocation3] sm:$0xff]
      %v6126 = vld [vmem:[#allocation3 + $0x8] sm:$0xff]
      %v6127 = vld [vmem:[#allocation3 + $0x18] sm:$0xff]
      %v6128 = vld [vmem:[#allocation3 + $0x20] sm:$0xff]
      %v6129 = vld [vmem:[#allocation3 + $0x30] sm:$0xff]
      %v6130 = vld [vmem:[#allocation3 + $0x38] sm:$0xff]
      %v6131 = vld [vmem:[#allocation3 + $0x48] sm:$0xff]
      %v6132 = vld [vmem:[#allocation3 + $0x50] sm:$0xff]
      %v6133 = vld [vmem:[#allocation3 + $0x60] sm:$0xff]
      %v6134 = vld [vmem:[#allocation3 + $0x68] sm:$0xff]
      %v6135 = vld [vmem:[#allocation3 + $0x78] sm:$0xff]
      %v6136 = vld [vmem:[#allocation3 + $0x80] sm:$0xff]
      %v6137 = vld [vmem:[#allocation3 + $0x90] sm:$0xff]
      %v6138 = vld [vmem:[#allocation3 + $0x98] sm:$0xff]
      %v6139 = vld [vmem:[#allocation3 + $0xa8] sm:$0xff]
      %v6140 = vld [vmem:[#allocation3 + $0xb0] sm:$0xff]
      %v6141 = vld [vmem:[#allocation3 + $0xc0] sm:$0xff]
      %v6142 = vld [vmem:[#allocation3 + $0xc8] sm:$0xff]
      %v6143 = vld [vmem:[#allocation3 + $0xd8] sm:$0xff]
      %v6144 = vld [vmem:[#allocation3 + $0xe0] sm:$0xff]
      %v6145 = vld [vmem:[#allocation3 + $0xf0] sm:$0xff]
      %v6146 = vld [vmem:[#allocation3 + $0xf8] sm:$0xff]
      %v6147 = vld [vmem:[#allocation3 + $0x108] sm:$0xff]
      %v6148 = vld [vmem:[#allocation3 + $0x110] sm:$0xff]
      %v6149 = vld [vmem:[#allocation3 + $0x120] sm:$0xff]
      %v6150 = vld [vmem:[#allocation3 + $0x128] sm:$0xff]
      %v6151 = vld [vmem:[#allocation3 + $0x138] sm:$0xff]
      %v6152 = vld [vmem:[#allocation3 + $0x140] sm:$0xff]
      %v6153 = vld [vmem:[#allocation3 + $0x150] sm:$0xff]
      %v6154 = vld [vmem:[#allocation3 + $0x158] sm:$0xff]
      %v6155 = vld [vmem:[#allocation3 + $0x168] sm:$0xff]
      %v6156 = vld [vmem:[#allocation3 + $0x170] sm:$0xff]
      %v6157 = vld [vmem:[#allocation3 + $0x1] sm:$0xff]
      %v6158 = vld [vmem:[#allocation3 + $0x9] sm:$0xff]
      %v6159 = vld [vmem:[#allocation3 + $0x19] sm:$0xff]
      %v6160 = vld [vmem:[#allocation3 + $0x21] sm:$0xff]
      %v6161 = vld [vmem:[#allocation3 + $0x31] sm:$0xff]
      %v6162 = vld [vmem:[#allocation3 + $0x39] sm:$0xff]
      %v6163 = vld [vmem:[#allocation3 + $0x49] sm:$0xff]
      %v6164 = vld [vmem:[#allocation3 + $0x51] sm:$0xff]
      %v6165 = vld [vmem:[#allocation3 + $0x61] sm:$0xff]
      %v6166 = vld [vmem:[#allocation3 + $0x69] sm:$0xff]
      %v6167 = vld [vmem:[#allocation3 + $0x79] sm:$0xff]
      %v6168 = vld [vmem:[#allocation3 + $0x81] sm:$0xff]
      %v6169 = vld [vmem:[#allocation3 + $0x91] sm:$0xff]
      %v6170 = vld [vmem:[#allocation3 + $0x99] sm:$0xff]
      %v6171 = vld [vmem:[#allocation3 + $0xa9] sm:$0xff]
      %v6172 = vld [vmem:[#allocation3 + $0xb1] sm:$0xff]
      %v6173 = vld [vmem:[#allocation3 + $0xc1] sm:$0xff]
      %v6174 = vld [vmem:[#allocation3 + $0xc9] sm:$0xff]
      %v6175 = vld [vmem:[#allocation3 + $0xd9] sm:$0xff]
      %v6176 = vld [vmem:[#allocation3 + $0xe1] sm:$0xff]
      %v6177 = vld [vmem:[#allocation3 + $0xf1] sm:$0xff]
      %v6178 = vld [vmem:[#allocation3 + $0xf9] sm:$0xff]
      %v6179 = vld [vmem:[#allocation3 + $0x109] sm:$0xff]
      %v6180 = vld [vmem:[#allocation3 + $0x111] sm:$0xff]
      %v6181 = vld [vmem:[#allocation3 + $0x121] sm:$0xff]
      %v6182 = vld [vmem:[#allocation3 + $0x129] sm:$0xff]
      %v6183 = vld [vmem:[#allocation3 + $0x139] sm:$0xff]
      %v6184 = vld [vmem:[#allocation3 + $0x141] sm:$0xff]
      %v6185 = vld [vmem:[#allocation3 + $0x151] sm:$0xff]
      %v6186 = vld [vmem:[#allocation3 + $0x159] sm:$0xff]
      %v6187 = vld [vmem:[#allocation3 + $0x169] sm:$0xff]
      %v6188 = vld [vmem:[#allocation3 + $0x171] sm:$0xff]
      %v6189 = vld [vmem:[#allocation3 + $0x2] sm:$0xff]
      %v6190 = vld [vmem:[#allocation3 + $0xa] sm:$0xff]
      %v6191 = vld [vmem:[#allocation3 + $0x1a] sm:$0xff]
      %v6192 = vld [vmem:[#allocation3 + $0x22] sm:$0xff]
      %v6193 = vld [vmem:[#allocation3 + $0x32] sm:$0xff]
      %v6194 = vld [vmem:[#allocation3 + $0x3a] sm:$0xff]
      %v6195 = vld [vmem:[#allocation3 + $0x4a] sm:$0xff]
      %v6196 = vld [vmem:[#allocation3 + $0x52] sm:$0xff]
      %v6197 = vld [vmem:[#allocation3 + $0x62] sm:$0xff]
      %v6198 = vld [vmem:[#allocation3 + $0x6a] sm:$0xff]
      %v6199 = vld [vmem:[#allocation3 + $0x7a] sm:$0xff]
      %v6200 = vld [vmem:[#allocation3 + $0x82] sm:$0xff]
      %v6201 = vld [vmem:[#allocation3 + $0x92] sm:$0xff]
      %v6202 = vld [vmem:[#allocation3 + $0x9a] sm:$0xff]
      %v6203 = vld [vmem:[#allocation3 + $0xaa] sm:$0xff]
      %v6204 = vld [vmem:[#allocation3 + $0xb2] sm:$0xff]
      %v6205 = vld [vmem:[#allocation3 + $0xc2] sm:$0xff]
      %v6206 = vld [vmem:[#allocation3 + $0xca] sm:$0xff]
      %v6207 = vld [vmem:[#allocation3 + $0xda] sm:$0xff]
      %v6208 = vld [vmem:[#allocation3 + $0xe2] sm:$0xff]
      %v6209 = vld [vmem:[#allocation3 + $0xf2] sm:$0xff]
      %v6210 = vld [vmem:[#allocation3 + $0xfa] sm:$0xff]
      %v6211 = vld [vmem:[#allocation3 + $0x10a] sm:$0xff]
      %v6212 = vld [vmem:[#allocation3 + $0x112] sm:$0xff]
      %v6213 = vld [vmem:[#allocation3 + $0x122] sm:$0xff]
      %v6214 = vld [vmem:[#allocation3 + $0x12a] sm:$0xff]
      %v6215 = vld [vmem:[#allocation3 + $0x13a] sm:$0xff]
      %v6216 = vld [vmem:[#allocation3 + $0x142] sm:$0xff]
      %v6217 = vld [vmem:[#allocation3 + $0x152] sm:$0xff]
      %v6218 = vld [vmem:[#allocation3 + $0x15a] sm:$0xff]
      %v6219 = vld [vmem:[#allocation3 + $0x16a] sm:$0xff]
      %v6220 = vld [vmem:[#allocation3 + $0x172] sm:$0xff]
      %v6221 = vld [vmem:[%s2292] sm:$0xff]
      %v6222 = vld [vmem:[%s2292 + $0x8] sm:$0xff]
      %v6223 = vld [vmem:[%s2292 + $0x18] sm:$0xff]
      %v6224 = vld [vmem:[%s2292 + $0x20] sm:$0xff]
      %v6225 = vld [vmem:[%s2292 + $0x30] sm:$0xff]
      %v6226 = vld [vmem:[%s2292 + $0x38] sm:$0xff]
      %v6227 = vld [vmem:[%s2292 + $0x48] sm:$0xff]
      %v6228 = vld [vmem:[%s2292 + $0x50] sm:$0xff]
      %v6229 = vld [vmem:[%s2292 + $0x60] sm:$0xff]
      %v6230 = vld [vmem:[%s2292 + $0x68] sm:$0xff]
      %v6231 = vld [vmem:[%s2292 + $0x78] sm:$0xff]
      %v6232 = vld [vmem:[%s2292 + $0x80] sm:$0xff]
      %v6233 = vld [vmem:[%s2292 + $0x90] sm:$0xff]
      %v6234 = vld [vmem:[%s2292 + $0x98] sm:$0xff]
      %v6235 = vld [vmem:[%s2292 + $0xa8] sm:$0xff]
      %v6236 = vld [vmem:[%s2292 + $0xb0] sm:$0xff]
      %v6237 = vld [vmem:[%s2292 + $0xc0] sm:$0xff]
      %v6238 = vld [vmem:[%s2292 + $0xc8] sm:$0xff]
      %v6239 = vld [vmem:[%s2292 + $0xd8] sm:$0xff]
      %v6240 = vld [vmem:[%s2292 + $0xe0] sm:$0xff]
      %v6241 = vld [vmem:[%s2292 + $0xf0] sm:$0xff]
      %v6242 = vld [vmem:[%s2292 + $0xf8] sm:$0xff]
      %v6243 = vld [vmem:[%s2292 + $0x108] sm:$0xff]
      %v6244 = vld [vmem:[%s2292 + $0x110] sm:$0xff]
      %v6245 = vld [vmem:[%s2292 + $0x120] sm:$0xff]
      %v6246 = vld [vmem:[%s2292 + $0x128] sm:$0xff]
      %v6247 = vld [vmem:[%s2292 + $0x138] sm:$0xff]
      %v6248 = vld [vmem:[%s2292 + $0x140] sm:$0xff]
      %v6249 = vld [vmem:[%s2292 + $0x150] sm:$0xff]
      %v6250 = vld [vmem:[%s2292 + $0x158] sm:$0xff]
      %v6251 = vld [vmem:[%s2292 + $0x168] sm:$0xff]
      %v6252 = vld [vmem:[%s2292 + $0x170] sm:$0xff]
      %v6253 = vld [vmem:[%s2292 + $0x1] sm:$0xff]
      %v6254 = vld [vmem:[%s2292 + $0x9] sm:$0xff]
      %v6255 = vld [vmem:[%s2292 + $0x19] sm:$0xff]
      %v6256 = vld [vmem:[%s2292 + $0x21] sm:$0xff]
      %v6257 = vld [vmem:[%s2292 + $0x31] sm:$0xff]
      %v6258 = vld [vmem:[%s2292 + $0x39] sm:$0xff]
      %v6259 = vld [vmem:[%s2292 + $0x49] sm:$0xff]
      %v6260 = vld [vmem:[%s2292 + $0x51] sm:$0xff]
      %v6261 = vld [vmem:[%s2292 + $0x61] sm:$0xff]
      %v6262 = vld [vmem:[%s2292 + $0x69] sm:$0xff]
      %v6263 = vld [vmem:[%s2292 + $0x79] sm:$0xff]
      %v6264 = vld [vmem:[%s2292 + $0x81] sm:$0xff]
      %v6265 = vld [vmem:[%s2292 + $0x91] sm:$0xff]
      %v6266 = vld [vmem:[%s2292 + $0x99] sm:$0xff]
      %v6267 = vld [vmem:[%s2292 + $0xa9] sm:$0xff]
      %v6268 = vld [vmem:[%s2292 + $0xb1] sm:$0xff]
      %v6269 = vld [vmem:[%s2292 + $0xc1] sm:$0xff]
      %v6270 = vld [vmem:[%s2292 + $0xc9] sm:$0xff]
      %v6271 = vld [vmem:[%s2292 + $0xd9] sm:$0xff]
      %v6272 = vld [vmem:[%s2292 + $0xe1] sm:$0xff]
      %v6273 = vld [vmem:[%s2292 + $0xf1] sm:$0xff]
      %v6274 = vld [vmem:[%s2292 + $0xf9] sm:$0xff]
      %v6275 = vld [vmem:[%s2292 + $0x109] sm:$0xff]
      %v6276 = vld [vmem:[%s2292 + $0x111] sm:$0xff]
      %v6277 = vld [vmem:[%s2292 + $0x121] sm:$0xff]
      %v6278 = vld [vmem:[%s2292 + $0x129] sm:$0xff]
      %v6279 = vld [vmem:[%s2292 + $0x139] sm:$0xff]
      %v6280 = vld [vmem:[%s2292 + $0x141] sm:$0xff]
      %v6281 = vld [vmem:[%s2292 + $0x151] sm:$0xff]
      %v6282 = vld [vmem:[%s2292 + $0x159] sm:$0xff]
      %v6283 = vld [vmem:[%s2292 + $0x169] sm:$0xff]
      %v6284 = vld [vmem:[%s2292 + $0x171] sm:$0xff]
      %v6285 = vld [vmem:[%s2292 + $0x2] sm:$0xff]
      %v6286 = vld [vmem:[%s2292 + $0xa] sm:$0xff]
      %v6287 = vld [vmem:[%s2292 + $0x1a] sm:$0xff]
      %v6288 = vld [vmem:[%s2292 + $0x22] sm:$0xff]
      %v6289 = vld [vmem:[%s2292 + $0x32] sm:$0xff]
      %v6290 = vld [vmem:[%s2292 + $0x3a] sm:$0xff]
      %v6291 = vld [vmem:[%s2292 + $0x4a] sm:$0xff]
      %v6292 = vld [vmem:[%s2292 + $0x52] sm:$0xff]
      %v6293 = vld [vmem:[%s2292 + $0x62] sm:$0xff]
      %v6294 = vld [vmem:[%s2292 + $0x6a] sm:$0xff]
      %v6295 = vld [vmem:[%s2292 + $0x7a] sm:$0xff]
      %v6296 = vld [vmem:[%s2292 + $0x82] sm:$0xff]
      %v6297 = vld [vmem:[%s2292 + $0x92] sm:$0xff]
      %v6298 = vld [vmem:[%s2292 + $0x9a] sm:$0xff]
      %v6299 = vld [vmem:[%s2292 + $0xaa] sm:$0xff]
      %v6300 = vld [vmem:[%s2292 + $0xb2] sm:$0xff]
      %v6301 = vld [vmem:[%s2292 + $0xc2] sm:$0xff]
      %v6302 = vld [vmem:[%s2292 + $0xca] sm:$0xff]
      %v6303 = vld [vmem:[%s2292 + $0xda] sm:$0xff]
      %v6304 = vld [vmem:[%s2292 + $0xe2] sm:$0xff]
      %v6305 = vld [vmem:[%s2292 + $0xf2] sm:$0xff]
      %v6306 = vld [vmem:[%s2292 + $0xfa] sm:$0xff]
      %v6307 = vld [vmem:[%s2292 + $0x10a] sm:$0xff]
      %v6308 = vld [vmem:[%s2292 + $0x112] sm:$0xff]
      %v6309 = vld [vmem:[%s2292 + $0x122] sm:$0xff]
      %v6310 = vld [vmem:[%s2292 + $0x12a] sm:$0xff]
      %v6311 = vld [vmem:[%s2292 + $0x13a] sm:$0xff]
      %v6312 = vld [vmem:[%s2292 + $0x142] sm:$0xff]
      %v6313 = vld [vmem:[%s2292 + $0x152] sm:$0xff]
      %v6314 = vld [vmem:[%s2292 + $0x15a] sm:$0xff]
      %v6315 = vld [vmem:[%s2292 + $0x16a] sm:$0xff]
      %v6316 = vld [vmem:[%s2292 + $0x172] sm:$0xff]
      %v6317 = vld [vmem:[%s2554] sm:$0xff]
      %v6318 = vld [vmem:[%s2554 + $0x8] sm:$0xff]
      %v6319 = vld [vmem:[%s2554 + $0x18] sm:$0xff]
      %v6320 = vld [vmem:[%s2554 + $0x20] sm:$0xff]
      %v6321 = vld [vmem:[%s2554 + $0x30] sm:$0xff]
      %v6322 = vld [vmem:[%s2554 + $0x38] sm:$0xff]
      %v6323 = vld [vmem:[%s2554 + $0x48] sm:$0xff]
      %v6324 = vld [vmem:[%s2554 + $0x50] sm:$0xff]
      %v6325 = vld [vmem:[%s2554 + $0x60] sm:$0xff]
      %v6326 = vld [vmem:[%s2554 + $0x68] sm:$0xff]
      %v6327 = vld [vmem:[%s2554 + $0x78] sm:$0xff]
      %v6328 = vld [vmem:[%s2554 + $0x80] sm:$0xff]
      %v6329 = vld [vmem:[%s2554 + $0x90] sm:$0xff]
      %v6330 = vld [vmem:[%s2554 + $0x98] sm:$0xff]
      %v6331 = vld [vmem:[%s2554 + $0xa8] sm:$0xff]
      %v6332 = vld [vmem:[%s2554 + $0xb0] sm:$0xff]
      %v6333 = vld [vmem:[%s2554 + $0xc0] sm:$0xff]
      %v6334 = vld [vmem:[%s2554 + $0xc8] sm:$0xff]
      %v6335 = vld [vmem:[%s2554 + $0xd8] sm:$0xff]
      %v6336 = vld [vmem:[%s2554 + $0xe0] sm:$0xff]
      %v6337 = vld [vmem:[%s2554 + $0xf0] sm:$0xff]
      %v6338 = vld [vmem:[%s2554 + $0xf8] sm:$0xff]
      %v6339 = vld [vmem:[%s2554 + $0x108] sm:$0xff]
      %v6340 = vld [vmem:[%s2554 + $0x110] sm:$0xff]
      %v6341 = vld [vmem:[%s2554 + $0x120] sm:$0xff]
      %v6342 = vld [vmem:[%s2554 + $0x128] sm:$0xff]
      %v6343 = vld [vmem:[%s2554 + $0x138] sm:$0xff]
      %v6344 = vld [vmem:[%s2554 + $0x140] sm:$0xff]
      %v6345 = vld [vmem:[%s2554 + $0x150] sm:$0xff]
      %v6346 = vld [vmem:[%s2554 + $0x158] sm:$0xff]
      %v6347 = vld [vmem:[%s2554 + $0x168] sm:$0xff]
      %v6348 = vld [vmem:[%s2554 + $0x170] sm:$0xff]
      %v6349 = vld [vmem:[%s2554 + $0x1] sm:$0xff]
      %v6350 = vld [vmem:[%s2554 + $0x9] sm:$0xff]
      %v6351 = vld [vmem:[%s2554 + $0x19] sm:$0xff]
      %v6352 = vld [vmem:[%s2554 + $0x21] sm:$0xff]
      %v6353 = vld [vmem:[%s2554 + $0x31] sm:$0xff]
      %v6354 = vld [vmem:[%s2554 + $0x39] sm:$0xff]
      %v6355 = vld [vmem:[%s2554 + $0x49] sm:$0xff]
      %v6356 = vld [vmem:[%s2554 + $0x51] sm:$0xff]
      %v6357 = vld [vmem:[%s2554 + $0x61] sm:$0xff]
      %v6358 = vld [vmem:[%s2554 + $0x69] sm:$0xff]
      %v6359 = vld [vmem:[%s2554 + $0x79] sm:$0xff]
      %v6360 = vld [vmem:[%s2554 + $0x81] sm:$0xff]
      %v6361 = vld [vmem:[%s2554 + $0x91] sm:$0xff]
      %v6362 = vld [vmem:[%s2554 + $0x99] sm:$0xff]
      %v6363 = vld [vmem:[%s2554 + $0xa9] sm:$0xff]
      %v6364 = vld [vmem:[%s2554 + $0xb1] sm:$0xff]
      %v6365 = vld [vmem:[%s2554 + $0xc1] sm:$0xff]
      %v6366 = vld [vmem:[%s2554 + $0xc9] sm:$0xff]
      %v6367 = vld [vmem:[%s2554 + $0xd9] sm:$0xff]
      %v6368 = vld [vmem:[%s2554 + $0xe1] sm:$0xff]
      %v6369 = vld [vmem:[%s2554 + $0xf1] sm:$0xff]
      %v6370 = vld [vmem:[%s2554 + $0xf9] sm:$0xff]
      %v6371 = vld [vmem:[%s2554 + $0x109] sm:$0xff]
      %v6372 = vld [vmem:[%s2554 + $0x111] sm:$0xff]
      %v6373 = vld [vmem:[%s2554 + $0x121] sm:$0xff]
      %v6374 = vld [vmem:[%s2554 + $0x129] sm:$0xff]
      %v6375 = vld [vmem:[%s2554 + $0x139] sm:$0xff]
      %v6376 = vld [vmem:[%s2554 + $0x141] sm:$0xff]
      %v6377 = vld [vmem:[%s2554 + $0x151] sm:$0xff]
      %v6378 = vld [vmem:[%s2554 + $0x159] sm:$0xff]
      %v6379 = vld [vmem:[%s2554 + $0x169] sm:$0xff]
      %v6380 = vld [vmem:[%s2554 + $0x171] sm:$0xff]
      %v6381 = vld [vmem:[%s2554 + $0x2] sm:$0xff]
      %v6382 = vld [vmem:[%s2554 + $0xa] sm:$0xff]
      %v6383 = vld [vmem:[%s2554 + $0x1a] sm:$0xff]
      %v6384 = vld [vmem:[%s2554 + $0x22] sm:$0xff]
      %v6385 = vld [vmem:[%s2554 + $0x32] sm:$0xff]
      %v6386 = vld [vmem:[%s2554 + $0x3a] sm:$0xff]
      %v6387 = vld [vmem:[%s2554 + $0x4a] sm:$0xff]
      %v6388 = vld [vmem:[%s2554 + $0x52] sm:$0xff]
      %v6389 = vld [vmem:[%s2554 + $0x62] sm:$0xff]
      %v6390 = vld [vmem:[%s2554 + $0x6a] sm:$0xff]
      %v6391 = vld [vmem:[%s2554 + $0x7a] sm:$0xff]
      %v6392 = vld [vmem:[%s2554 + $0x82] sm:$0xff]
      %v6393 = vld [vmem:[%s2554 + $0x92] sm:$0xff]
      %v6394 = vld [vmem:[%s2554 + $0x9a] sm:$0xff]
      %v6395 = vld [vmem:[%s2554 + $0xaa] sm:$0xff]
      %v6396 = vld [vmem:[%s2554 + $0xb2] sm:$0xff]
      %v6397 = vld [vmem:[%s2554 + $0xc2] sm:$0xff]
      %v6398 = vld [vmem:[%s2554 + $0xca] sm:$0xff]
      %v6399 = vld [vmem:[%s2554 + $0xda] sm:$0xff]
      %v6400 = vld [vmem:[%s2554 + $0xe2] sm:$0xff]
      %v6401 = vld [vmem:[%s2554 + $0xf2] sm:$0xff]
      %v6402 = vld [vmem:[%s2554 + $0xfa] sm:$0xff]
      %v6403 = vld [vmem:[%s2554 + $0x10a] sm:$0xff]
      %v6404 = vld [vmem:[%s2554 + $0x112] sm:$0xff]
      %v6405 = vld [vmem:[%s2554 + $0x122] sm:$0xff]
      %v6406 = vld [vmem:[%s2554 + $0x12a] sm:$0xff]
      %v6407 = vld [vmem:[%s2554 + $0x13a] sm:$0xff]
      %v6408 = vld [vmem:[%s2554 + $0x142] sm:$0xff]
      %v6409 = vld [vmem:[%s2554 + $0x152] sm:$0xff]
      %v6410 = vld [vmem:[%s2554 + $0x15a] sm:$0xff]
      %v6411 = vld [vmem:[%s2554 + $0x16a] sm:$0xff]
      %v6412 = vld [vmem:[%s2554 + $0x172] sm:$0xff]
      %6445 = vrot.lane.b32.xlu0 %v6157, 32
      %v6446 = vpop.permute.xlu0 %6445
      %6447 = vrot.lane.b32.xlu0 %v6158, 32
      %v6448 = vpop.permute.xlu0 %6447
      %6449 = vrot.lane.b32.xlu0 %v6159, 32
      %v6450 = vpop.permute.xlu0 %6449
      %6451 = vrot.lane.b32.xlu0 %v6160, 32
      %v6452 = vpop.permute.xlu0 %6451
      %6453 = vrot.lane.b32.xlu0 %v6161, 32
      %v6454 = vpop.permute.xlu0 %6453
      %6455 = vrot.lane.b32.xlu0 %v6162, 32
      %v6456 = vpop.permute.xlu0 %6455
      %6457 = vrot.lane.b32.xlu0 %v6163, 32
      %v6458 = vpop.permute.xlu0 %6457
      %6459 = vrot.lane.b32.xlu0 %v6164, 32
      %v6460 = vpop.permute.xlu0 %6459
      %6461 = vrot.lane.b32.xlu0 %v6165, 32
      %v6462 = vpop.permute.xlu0 %6461
      %6463 = vrot.lane.b32.xlu0 %v6166, 32
      %v6464 = vpop.permute.xlu0 %6463
      %6465 = vrot.lane.b32.xlu0 %v6167, 32
      %v6466 = vpop.permute.xlu0 %6465
      %6467 = vrot.lane.b32.xlu0 %v6168, 32
      %v6468 = vpop.permute.xlu0 %6467
      %6469 = vrot.lane.b32.xlu0 %v6169, 32
      %v6470 = vpop.permute.xlu0 %6469
      %6471 = vrot.lane.b32.xlu0 %v6170, 32
      %v6472 = vpop.permute.xlu0 %6471
      %6473 = vrot.lane.b32.xlu0 %v6171, 32
      %v6474 = vpop.permute.xlu0 %6473
      %6475 = vrot.lane.b32.xlu0 %v6172, 32
      %v6476 = vpop.permute.xlu0 %6475
      %6477 = vrot.lane.b32.xlu0 %v6173, 32
      %v6478 = vpop.permute.xlu0 %6477
      %6479 = vrot.lane.b32.xlu0 %v6174, 32
      %v6480 = vpop.permute.xlu0 %6479
      %6481 = vrot.lane.b32.xlu0 %v6175, 32
      %v6482 = vpop.permute.xlu0 %6481
      %6483 = vrot.lane.b32.xlu0 %v6176, 32
      %v6484 = vpop.permute.xlu0 %6483
      %6485 = vrot.lane.b32.xlu0 %v6177, 32
      %v6486 = vpop.permute.xlu0 %6485
      %6487 = vrot.lane.b32.xlu0 %v6178, 32
      %v6488 = vpop.permute.xlu0 %6487
      %6489 = vrot.lane.b32.xlu0 %v6179, 32
      %v6490 = vpop.permute.xlu0 %6489
      %6491 = vrot.lane.b32.xlu0 %v6180, 32
      %v6492 = vpop.permute.xlu0 %6491
      %6493 = vrot.lane.b32.xlu0 %v6181, 32
      %v6494 = vpop.permute.xlu0 %6493
      %6495 = vrot.lane.b32.xlu0 %v6182, 32
      %v6496 = vpop.permute.xlu0 %6495
      %6497 = vrot.lane.b32.xlu0 %v6183, 32
      %v6498 = vpop.permute.xlu0 %6497
      %6499 = vrot.lane.b32.xlu0 %v6184, 32
      %v6500 = vpop.permute.xlu0 %6499
      %6501 = vrot.lane.b32.xlu0 %v6185, 32
      %v6502 = vpop.permute.xlu0 %6501
      %6503 = vrot.lane.b32.xlu0 %v6186, 32
      %v6504 = vpop.permute.xlu0 %6503
      %6505 = vrot.lane.b32.xlu0 %v6187, 32
      %v6506 = vpop.permute.xlu0 %6505
      %6507 = vrot.lane.b32.xlu0 %v6188, 32
      %v6508 = vpop.permute.xlu0 %6507
      %6573 = vrot.lane.b32.xlu0 %v6189, 64
      %v6574 = vpop.permute.xlu0 %6573
      %6575 = vrot.lane.b32.xlu0 %v6190, 64
      %v6576 = vpop.permute.xlu0 %6575
      %6577 = vrot.lane.b32.xlu0 %v6191, 64
      %v6578 = vpop.permute.xlu0 %6577
      %6579 = vrot.lane.b32.xlu0 %v6192, 64
      %v6580 = vpop.permute.xlu0 %6579
      %6581 = vrot.lane.b32.xlu0 %v6193, 64
      %v6582 = vpop.permute.xlu0 %6581
      %6583 = vrot.lane.b32.xlu0 %v6194, 64
      %v6584 = vpop.permute.xlu0 %6583
      %6585 = vrot.lane.b32.xlu0 %v6195, 64
      %v6586 = vpop.permute.xlu0 %6585
      %6587 = vrot.lane.b32.xlu0 %v6196, 64
      %v6588 = vpop.permute.xlu0 %6587
      %6589 = vrot.lane.b32.xlu0 %v6197, 64
      %v6590 = vpop.permute.xlu0 %6589
      %6591 = vrot.lane.b32.xlu0 %v6198, 64
      %v6592 = vpop.permute.xlu0 %6591
      %6593 = vrot.lane.b32.xlu0 %v6199, 64
      %v6594 = vpop.permute.xlu0 %6593
      %6595 = vrot.lane.b32.xlu0 %v6200, 64
      %v6596 = vpop.permute.xlu0 %6595
      %6597 = vrot.lane.b32.xlu0 %v6201, 64
      %v6598 = vpop.permute.xlu0 %6597
      %6599 = vrot.lane.b32.xlu0 %v6202, 64
      %v6600 = vpop.permute.xlu0 %6599
      %6601 = vrot.lane.b32.xlu0 %v6203, 64
      %v6602 = vpop.permute.xlu0 %6601
      %6603 = vrot.lane.b32.xlu0 %v6204, 64
      %v6604 = vpop.permute.xlu0 %6603
      %6605 = vrot.lane.b32.xlu0 %v6205, 64
      %v6606 = vpop.permute.xlu0 %6605
      %6607 = vrot.lane.b32.xlu0 %v6206, 64
      %v6608 = vpop.permute.xlu0 %6607
      %6609 = vrot.lane.b32.xlu0 %v6207, 64
      %v6610 = vpop.permute.xlu0 %6609
      %6611 = vrot.lane.b32.xlu0 %v6208, 64
      %v6612 = vpop.permute.xlu0 %6611
      %6613 = vrot.lane.b32.xlu0 %v6209, 64
      %v6614 = vpop.permute.xlu0 %6613
      %6615 = vrot.lane.b32.xlu0 %v6210, 64
      %v6616 = vpop.permute.xlu0 %6615
      %6617 = vrot.lane.b32.xlu0 %v6211, 64
      %v6618 = vpop.permute.xlu0 %6617
      %6619 = vrot.lane.b32.xlu0 %v6212, 64
      %v6620 = vpop.permute.xlu0 %6619
      %6621 = vrot.lane.b32.xlu0 %v6213, 64
      %v6622 = vpop.permute.xlu0 %6621
      %6623 = vrot.lane.b32.xlu0 %v6214, 64
      %v6624 = vpop.permute.xlu0 %6623
      %6625 = vrot.lane.b32.xlu0 %v6215, 64
      %v6626 = vpop.permute.xlu0 %6625
      %6627 = vrot.lane.b32.xlu0 %v6216, 64
      %v6628 = vpop.permute.xlu0 %6627
      %6629 = vrot.lane.b32.xlu0 %v6217, 64
      %v6630 = vpop.permute.xlu0 %6629
      %6631 = vrot.lane.b32.xlu0 %v6218, 64
      %v6632 = vpop.permute.xlu0 %6631
      %6633 = vrot.lane.b32.xlu0 %v6219, 64
      %v6634 = vpop.permute.xlu0 %6633
      %6635 = vrot.lane.b32.xlu0 %v6220, 64
      %v6636 = vpop.permute.xlu0 %6635
      %6701 = vrot.lane.b32.xlu0 %v6221, 96
      %v6702 = vpop.permute.xlu0 %6701
      %6703 = vrot.lane.b32.xlu0 %v6222, 96
      %v6704 = vpop.permute.xlu0 %6703
      %6705 = vrot.lane.b32.xlu0 %v6223, 96
      %v6706 = vpop.permute.xlu0 %6705
      %6707 = vrot.lane.b32.xlu0 %v6224, 96
      %v6708 = vpop.permute.xlu0 %6707
      %6709 = vrot.lane.b32.xlu0 %v6225, 96
      %v6710 = vpop.permute.xlu0 %6709
      %6711 = vrot.lane.b32.xlu0 %v6226, 96
      %v6712 = vpop.permute.xlu0 %6711
      %6713 = vrot.lane.b32.xlu0 %v6227, 96
      %v6714 = vpop.permute.xlu0 %6713
      %6715 = vrot.lane.b32.xlu0 %v6228, 96
      %v6716 = vpop.permute.xlu0 %6715
      %6717 = vrot.lane.b32.xlu0 %v6229, 96
      %v6718 = vpop.permute.xlu0 %6717
      %6719 = vrot.lane.b32.xlu0 %v6230, 96
      %v6720 = vpop.permute.xlu0 %6719
      %6721 = vrot.lane.b32.xlu0 %v6231, 96
      %v6722 = vpop.permute.xlu0 %6721
      %6723 = vrot.lane.b32.xlu0 %v6232, 96
      %v6724 = vpop.permute.xlu0 %6723
      %6725 = vrot.lane.b32.xlu0 %v6233, 96
      %v6726 = vpop.permute.xlu0 %6725
      %6727 = vrot.lane.b32.xlu0 %v6234, 96
      %v6728 = vpop.permute.xlu0 %6727
      %6729 = vrot.lane.b32.xlu0 %v6235, 96
      %v6730 = vpop.permute.xlu0 %6729
      %6731 = vrot.lane.b32.xlu0 %v6236, 96
      %v6732 = vpop.permute.xlu0 %6731
      %6733 = vrot.lane.b32.xlu0 %v6237, 96
      %v6734 = vpop.permute.xlu0 %6733
      %6735 = vrot.lane.b32.xlu0 %v6238, 96
      %v6736 = vpop.permute.xlu0 %6735
      %6737 = vrot.lane.b32.xlu0 %v6239, 96
      %v6738 = vpop.permute.xlu0 %6737
      %6739 = vrot.lane.b32.xlu0 %v6240, 96
      %v6740 = vpop.permute.xlu0 %6739
      %6741 = vrot.lane.b32.xlu0 %v6241, 96
      %v6742 = vpop.permute.xlu0 %6741
      %6743 = vrot.lane.b32.xlu0 %v6242, 96
      %v6744 = vpop.permute.xlu0 %6743
      %6745 = vrot.lane.b32.xlu0 %v6243, 96
      %v6746 = vpop.permute.xlu0 %6745
      %6747 = vrot.lane.b32.xlu0 %v6244, 96
      %v6748 = vpop.permute.xlu0 %6747
      %6749 = vrot.lane.b32.xlu0 %v6245, 96
      %v6750 = vpop.permute.xlu0 %6749
      %6751 = vrot.lane.b32.xlu0 %v6246, 96
      %v6752 = vpop.permute.xlu0 %6751
      %6753 = vrot.lane.b32.xlu0 %v6247, 96
      %v6754 = vpop.permute.xlu0 %6753
      %6755 = vrot.lane.b32.xlu0 %v6248, 96
      %v6756 = vpop.permute.xlu0 %6755
      %6757 = vrot.lane.b32.xlu0 %v6249, 96
      %v6758 = vpop.permute.xlu0 %6757
      %6759 = vrot.lane.b32.xlu0 %v6250, 96
      %v6760 = vpop.permute.xlu0 %6759
      %6761 = vrot.lane.b32.xlu0 %v6251, 96
      %v6762 = vpop.permute.xlu0 %6761
      %6763 = vrot.lane.b32.xlu0 %v6252, 96
      %v6764 = vpop.permute.xlu0 %6763
      %6829 = vrot.lane.b32.xlu0 %v6285, 32
      %v6830 = vpop.permute.xlu0 %6829
      %6831 = vrot.lane.b32.xlu0 %v6286, 32
      %v6832 = vpop.permute.xlu0 %6831
      %6833 = vrot.lane.b32.xlu0 %v6287, 32
      %v6834 = vpop.permute.xlu0 %6833
      %6835 = vrot.lane.b32.xlu0 %v6288, 32
      %v6836 = vpop.permute.xlu0 %6835
      %6837 = vrot.lane.b32.xlu0 %v6289, 32
      %v6838 = vpop.permute.xlu0 %6837
      %6839 = vrot.lane.b32.xlu0 %v6290, 32
      %v6840 = vpop.permute.xlu0 %6839
      %6841 = vrot.lane.b32.xlu0 %v6291, 32
      %v6842 = vpop.permute.xlu0 %6841
      %6843 = vrot.lane.b32.xlu0 %v6292, 32
      %v6844 = vpop.permute.xlu0 %6843
      %6845 = vrot.lane.b32.xlu0 %v6293, 32
      %v6846 = vpop.permute.xlu0 %6845
      %6847 = vrot.lane.b32.xlu0 %v6294, 32
      %v6848 = vpop.permute.xlu0 %6847
      %6849 = vrot.lane.b32.xlu0 %v6295, 32
      %v6850 = vpop.permute.xlu0 %6849
      %6851 = vrot.lane.b32.xlu0 %v6296, 32
      %v6852 = vpop.permute.xlu0 %6851
      %6853 = vrot.lane.b32.xlu0 %v6297, 32
      %v6854 = vpop.permute.xlu0 %6853
      %6855 = vrot.lane.b32.xlu0 %v6298, 32
      %v6856 = vpop.permute.xlu0 %6855
      %6857 = vrot.lane.b32.xlu0 %v6299, 32
      %v6858 = vpop.permute.xlu0 %6857
      %6859 = vrot.lane.b32.xlu0 %v6300, 32
      %v6860 = vpop.permute.xlu0 %6859
      %6861 = vrot.lane.b32.xlu0 %v6301, 32
      %v6862 = vpop.permute.xlu0 %6861
      %6863 = vrot.lane.b32.xlu0 %v6302, 32
      %v6864 = vpop.permute.xlu0 %6863
      %6865 = vrot.lane.b32.xlu0 %v6303, 32
      %v6866 = vpop.permute.xlu0 %6865
      %6867 = vrot.lane.b32.xlu0 %v6304, 32
      %v6868 = vpop.permute.xlu0 %6867
      %6869 = vrot.lane.b32.xlu0 %v6305, 32
      %v6870 = vpop.permute.xlu0 %6869
      %6871 = vrot.lane.b32.xlu0 %v6306, 32
      %v6872 = vpop.permute.xlu0 %6871
      %6873 = vrot.lane.b32.xlu0 %v6307, 32
      %v6874 = vpop.permute.xlu0 %6873
      %6875 = vrot.lane.b32.xlu0 %v6308, 32
      %v6876 = vpop.permute.xlu0 %6875
      %6877 = vrot.lane.b32.xlu0 %v6309, 32
      %v6878 = vpop.permute.xlu0 %6877
      %6879 = vrot.lane.b32.xlu0 %v6310, 32
      %v6880 = vpop.permute.xlu0 %6879
      %6881 = vrot.lane.b32.xlu0 %v6311, 32
      %v6882 = vpop.permute.xlu0 %6881
      %6883 = vrot.lane.b32.xlu0 %v6312, 32
      %v6884 = vpop.permute.xlu0 %6883
      %6885 = vrot.lane.b32.xlu0 %v6313, 32
      %v6886 = vpop.permute.xlu0 %6885
      %6887 = vrot.lane.b32.xlu0 %v6314, 32
      %v6888 = vpop.permute.xlu0 %6887
      %6889 = vrot.lane.b32.xlu0 %v6315, 32
      %v6890 = vpop.permute.xlu0 %6889
      %6891 = vrot.lane.b32.xlu0 %v6316, 32
      %v6892 = vpop.permute.xlu0 %6891
      %6957 = vrot.lane.b32.xlu0 %v6317, 64
      %v6958 = vpop.permute.xlu0 %6957
      %6959 = vrot.lane.b32.xlu0 %v6318, 64
      %v6960 = vpop.permute.xlu0 %6959
      %6961 = vrot.lane.b32.xlu0 %v6319, 64
      %v6962 = vpop.permute.xlu0 %6961
      %6963 = vrot.lane.b32.xlu0 %v6320, 64
      %v6964 = vpop.permute.xlu0 %6963
      %6965 = vrot.lane.b32.xlu0 %v6321, 64
      %v6966 = vpop.permute.xlu0 %6965
      %6967 = vrot.lane.b32.xlu0 %v6322, 64
      %v6968 = vpop.permute.xlu0 %6967
      %6969 = vrot.lane.b32.xlu0 %v6323, 64
      %v6970 = vpop.permute.xlu0 %6969
      %6971 = vrot.lane.b32.xlu0 %v6324, 64
      %v6972 = vpop.permute.xlu0 %6971
      %6973 = vrot.lane.b32.xlu0 %v6325, 64
      %v6974 = vpop.permute.xlu0 %6973
      %6975 = vrot.lane.b32.xlu0 %v6326, 64
      %v6976 = vpop.permute.xlu0 %6975
      %6977 = vrot.lane.b32.xlu0 %v6327, 64
      %v6978 = vpop.permute.xlu0 %6977
      %6979 = vrot.lane.b32.xlu0 %v6328, 64
      %v6980 = vpop.permute.xlu0 %6979
      %6981 = vrot.lane.b32.xlu0 %v6329, 64
      %v6982 = vpop.permute.xlu0 %6981
      %6983 = vrot.lane.b32.xlu0 %v6330, 64
      %v6984 = vpop.permute.xlu0 %6983
      %6985 = vrot.lane.b32.xlu0 %v6331, 64
      %v6986 = vpop.permute.xlu0 %6985
      %6987 = vrot.lane.b32.xlu0 %v6332, 64
      %v6988 = vpop.permute.xlu0 %6987
      %6989 = vrot.lane.b32.xlu0 %v6333, 64
      %v6990 = vpop.permute.xlu0 %6989
      %6991 = vrot.lane.b32.xlu0 %v6334, 64
      %v6992 = vpop.permute.xlu0 %6991
      %6993 = vrot.lane.b32.xlu0 %v6335, 64
      %v6994 = vpop.permute.xlu0 %6993
      %6995 = vrot.lane.b32.xlu0 %v6336, 64
      %v6996 = vpop.permute.xlu0 %6995
      %6997 = vrot.lane.b32.xlu0 %v6337, 64
      %v6998 = vpop.permute.xlu0 %6997
      %6999 = vrot.lane.b32.xlu0 %v6338, 64
      %v7000 = vpop.permute.xlu0 %6999
      %7001 = vrot.lane.b32.xlu0 %v6339, 64
      %v7002 = vpop.permute.xlu0 %7001
      %7003 = vrot.lane.b32.xlu0 %v6340, 64
      %v7004 = vpop.permute.xlu0 %7003
      %7005 = vrot.lane.b32.xlu0 %v6341, 64
      %v7006 = vpop.permute.xlu0 %7005
      %7007 = vrot.lane.b32.xlu0 %v6342, 64
      %v7008 = vpop.permute.xlu0 %7007
      %7009 = vrot.lane.b32.xlu0 %v6343, 64
      %v7010 = vpop.permute.xlu0 %7009
      %7011 = vrot.lane.b32.xlu0 %v6344, 64
      %v7012 = vpop.permute.xlu0 %7011
      %7013 = vrot.lane.b32.xlu0 %v6345, 64
      %v7014 = vpop.permute.xlu0 %7013
      %7015 = vrot.lane.b32.xlu0 %v6346, 64
      %v7016 = vpop.permute.xlu0 %7015
      %7017 = vrot.lane.b32.xlu0 %v6347, 64
      %v7018 = vpop.permute.xlu0 %7017
      %7019 = vrot.lane.b32.xlu0 %v6348, 64
      %v7020 = vpop.permute.xlu0 %7019
      %7085 = vrot.lane.b32.xlu0 %v6349, 96
      %v7086 = vpop.permute.xlu0 %7085
      %7087 = vrot.lane.b32.xlu0 %v6350, 96
      %v7088 = vpop.permute.xlu0 %7087
      %7089 = vrot.lane.b32.xlu0 %v6351, 96
      %v7090 = vpop.permute.xlu0 %7089
      %7091 = vrot.lane.b32.xlu0 %v6352, 96
      %v7092 = vpop.permute.xlu0 %7091
      %7093 = vrot.lane.b32.xlu0 %v6353, 96
      %v7094 = vpop.permute.xlu0 %7093
      %7095 = vrot.lane.b32.xlu0 %v6354, 96
      %v7096 = vpop.permute.xlu0 %7095
      %7097 = vrot.lane.b32.xlu0 %v6355, 96
      %v7098 = vpop.permute.xlu0 %7097
      %7099 = vrot.lane.b32.xlu0 %v6356, 96
      %v7100 = vpop.permute.xlu0 %7099
      %7101 = vrot.lane.b32.xlu0 %v6357, 96
      %v7102 = vpop.permute.xlu0 %7101
      %7103 = vrot.lane.b32.xlu0 %v6358, 96
      %v7104 = vpop.permute.xlu0 %7103
      %7105 = vrot.lane.b32.xlu0 %v6359, 96
      %v7106 = vpop.permute.xlu0 %7105
      %7107 = vrot.lane.b32.xlu0 %v6360, 96
      %v7108 = vpop.permute.xlu0 %7107
      %7109 = vrot.lane.b32.xlu0 %v6361, 96
      %v7110 = vpop.permute.xlu0 %7109
      %7111 = vrot.lane.b32.xlu0 %v6362, 96
      %v7112 = vpop.permute.xlu0 %7111
      %7113 = vrot.lane.b32.xlu0 %v6363, 96
      %v7114 = vpop.permute.xlu0 %7113
      %7115 = vrot.lane.b32.xlu0 %v6364, 96
      %v7116 = vpop.permute.xlu0 %7115
      %7117 = vrot.lane.b32.xlu0 %v6365, 96
      %v7118 = vpop.permute.xlu0 %7117
      %7119 = vrot.lane.b32.xlu0 %v6366, 96
      %v7120 = vpop.permute.xlu0 %7119
      %7121 = vrot.lane.b32.xlu0 %v6367, 96
      %v7122 = vpop.permute.xlu0 %7121
      %7123 = vrot.lane.b32.xlu0 %v6368, 96
      %v7124 = vpop.permute.xlu0 %7123
      %7125 = vrot.lane.b32.xlu0 %v6369, 96
      %v7126 = vpop.permute.xlu0 %7125
      %7127 = vrot.lane.b32.xlu0 %v6370, 96
      %v7128 = vpop.permute.xlu0 %7127
      %7129 = vrot.lane.b32.xlu0 %v6371, 96
      %v7130 = vpop.permute.xlu0 %7129
      %7131 = vrot.lane.b32.xlu0 %v6372, 96
      %v7132 = vpop.permute.xlu0 %7131
      %7133 = vrot.lane.b32.xlu0 %v6373, 96
      %v7134 = vpop.permute.xlu0 %7133
      %7135 = vrot.lane.b32.xlu0 %v6374, 96
      %v7136 = vpop.permute.xlu0 %7135
      %7137 = vrot.lane.b32.xlu0 %v6375, 96
      %v7138 = vpop.permute.xlu0 %7137
      %7139 = vrot.lane.b32.xlu0 %v6376, 96
      %v7140 = vpop.permute.xlu0 %7139
      %7141 = vrot.lane.b32.xlu0 %v6377, 96
      %v7142 = vpop.permute.xlu0 %7141
      %7143 = vrot.lane.b32.xlu0 %v6378, 96
      %v7144 = vpop.permute.xlu0 %7143
      %7145 = vrot.lane.b32.xlu0 %v6379, 96
      %v7146 = vpop.permute.xlu0 %7145
      %7147 = vrot.lane.b32.xlu0 %v6380, 96
      %v7148 = vpop.permute.xlu0 %7147
      %v7181 = vsel %vm309, %v6125, %v6446
      %v7182 = vsel %vm309, %v6126, %v6448
      %v7183 = vsel %vm309, %v6127, %v6450
      %v7184 = vsel %vm309, %v6128, %v6452
      %v7185 = vsel %vm309, %v6129, %v6454
      %v7186 = vsel %vm309, %v6130, %v6456
      %v7187 = vsel %vm309, %v6131, %v6458
      %v7188 = vsel %vm309, %v6132, %v6460
      %v7189 = vsel %vm309, %v6133, %v6462
      %v7190 = vsel %vm309, %v6134, %v6464
      %v7191 = vsel %vm309, %v6135, %v6466
      %v7192 = vsel %vm309, %v6136, %v6468
      %v7193 = vsel %vm309, %v6137, %v6470
      %v7194 = vsel %vm309, %v6138, %v6472
      %v7195 = vsel %vm309, %v6139, %v6474
      %v7196 = vsel %vm309, %v6140, %v6476
      %v7197 = vsel %vm309, %v6141, %v6478
      %v7198 = vsel %vm309, %v6142, %v6480
      %v7199 = vsel %vm309, %v6143, %v6482
      %v7200 = vsel %vm309, %v6144, %v6484
      %v7201 = vsel %vm309, %v6145, %v6486
      %v7202 = vsel %vm309, %v6146, %v6488
      %v7203 = vsel %vm309, %v6147, %v6490
      %v7204 = vsel %vm309, %v6148, %v6492
      %v7205 = vsel %vm309, %v6149, %v6494
      %v7206 = vsel %vm309, %v6150, %v6496
      %v7207 = vsel %vm309, %v6151, %v6498
      %v7208 = vsel %vm309, %v6152, %v6500
      %v7209 = vsel %vm309, %v6153, %v6502
      %v7210 = vsel %vm309, %v6154, %v6504
      %v7211 = vsel %vm309, %v6155, %v6506
      %v7212 = vsel %vm309, %v6156, %v6508
      %v7213 = vsel %vm3451, %v7181, %v6574
      %v7214 = vsel %vm3451, %v7182, %v6576
      %v7215 = vsel %vm3451, %v7183, %v6578
      %v7216 = vsel %vm3451, %v7184, %v6580
      %v7217 = vsel %vm3451, %v7185, %v6582
      %v7218 = vsel %vm3451, %v7186, %v6584
      %v7219 = vsel %vm3451, %v7187, %v6586
      %v7220 = vsel %vm3451, %v7188, %v6588
      %v7221 = vsel %vm3451, %v7189, %v6590
      %v7222 = vsel %vm3451, %v7190, %v6592
      %v7223 = vsel %vm3451, %v7191, %v6594
      %v7224 = vsel %vm3451, %v7192, %v6596
      %v7225 = vsel %vm3451, %v7193, %v6598
      %v7226 = vsel %vm3451, %v7194, %v6600
      %v7227 = vsel %vm3451, %v7195, %v6602
      %v7228 = vsel %vm3451, %v7196, %v6604
      %v7229 = vsel %vm3451, %v7197, %v6606
      %v7230 = vsel %vm3451, %v7198, %v6608
      %v7231 = vsel %vm3451, %v7199, %v6610
      %v7232 = vsel %vm3451, %v7200, %v6612
      %v7233 = vsel %vm3451, %v7201, %v6614
      %v7234 = vsel %vm3451, %v7202, %v6616
      %v7235 = vsel %vm3451, %v7203, %v6618
      %v7236 = vsel %vm3451, %v7204, %v6620
      %v7237 = vsel %vm3451, %v7205, %v6622
      %v7238 = vsel %vm3451, %v7206, %v6624
      %v7239 = vsel %vm3451, %v7207, %v6626
      %v7240 = vsel %vm3451, %v7208, %v6628
      %v7241 = vsel %vm3451, %v7209, %v6630
      %v7242 = vsel %vm3451, %v7210, %v6632
      %v7243 = vsel %vm3451, %v7211, %v6634
      %v7244 = vsel %vm3451, %v7212, %v6636
      %v7245 = vsel %vm3484, %v7213, %v6702
      %v7246 = vsel %vm3484, %v7214, %v6704
      %v7247 = vsel %vm3484, %v7215, %v6706
      %v7248 = vsel %vm3484, %v7216, %v6708
      %v7249 = vsel %vm3484, %v7217, %v6710
      %v7250 = vsel %vm3484, %v7218, %v6712
      %v7251 = vsel %vm3484, %v7219, %v6714
      %v7252 = vsel %vm3484, %v7220, %v6716
      %v7253 = vsel %vm3484, %v7221, %v6718
      %v7254 = vsel %vm3484, %v7222, %v6720
      %v7255 = vsel %vm3484, %v7223, %v6722
      %v7256 = vsel %vm3484, %v7224, %v6724
      %v7257 = vsel %vm3484, %v7225, %v6726
      %v7258 = vsel %vm3484, %v7226, %v6728
      %v7259 = vsel %vm3484, %v7227, %v6730
      %v7260 = vsel %vm3484, %v7228, %v6732
      %v7261 = vsel %vm3484, %v7229, %v6734
      %v7262 = vsel %vm3484, %v7230, %v6736
      %v7263 = vsel %vm3484, %v7231, %v6738
      %v7264 = vsel %vm3484, %v7232, %v6740
      %v7265 = vsel %vm3484, %v7233, %v6742
      %v7266 = vsel %vm3484, %v7234, %v6744
      %v7267 = vsel %vm3484, %v7235, %v6746
      %v7268 = vsel %vm3484, %v7236, %v6748
      %v7269 = vsel %vm3484, %v7237, %v6750
      %v7270 = vsel %vm3484, %v7238, %v6752
      %v7271 = vsel %vm3484, %v7239, %v6754
      %v7272 = vsel %vm3484, %v7240, %v6756
      %v7273 = vsel %vm3484, %v7241, %v6758
      %v7274 = vsel %vm3484, %v7242, %v6760
      %v7275 = vsel %vm3484, %v7243, %v6762
      %v7276 = vsel %vm3484, %v7244, %v6764
      %v7277 = vsel %vm309, %v6253, %v6830
      %v7278 = vsel %vm309, %v6254, %v6832
      %v7279 = vsel %vm309, %v6255, %v6834
      %v7280 = vsel %vm309, %v6256, %v6836
      %v7281 = vsel %vm309, %v6257, %v6838
      %v7282 = vsel %vm309, %v6258, %v6840
      %v7283 = vsel %vm309, %v6259, %v6842
      %v7284 = vsel %vm309, %v6260, %v6844
      %v7285 = vsel %vm309, %v6261, %v6846
      %v7286 = vsel %vm309, %v6262, %v6848
      %v7287 = vsel %vm309, %v6263, %v6850
      %v7288 = vsel %vm309, %v6264, %v6852
      %v7289 = vsel %vm309, %v6265, %v6854
      %v7290 = vsel %vm309, %v6266, %v6856
      %v7291 = vsel %vm309, %v6267, %v6858
      %v7292 = vsel %vm309, %v6268, %v6860
      %v7293 = vsel %vm309, %v6269, %v6862
      %v7294 = vsel %vm309, %v6270, %v6864
      %v7295 = vsel %vm309, %v6271, %v6866
      %v7296 = vsel %vm309, %v6272, %v6868
      %v7297 = vsel %vm309, %v6273, %v6870
      %v7298 = vsel %vm309, %v6274, %v6872
      %v7299 = vsel %vm309, %v6275, %v6874
      %v7300 = vsel %vm309, %v6276, %v6876
      %v7301 = vsel %vm309, %v6277, %v6878
      %v7302 = vsel %vm309, %v6278, %v6880
      %v7303 = vsel %vm309, %v6279, %v6882
      %v7304 = vsel %vm309, %v6280, %v6884
      %v7305 = vsel %vm309, %v6281, %v6886
      %v7306 = vsel %vm309, %v6282, %v6888
      %v7307 = vsel %vm309, %v6283, %v6890
      %v7308 = vsel %vm309, %v6284, %v6892
      %v7309 = vsel %vm3451, %v7277, %v6958
      %v7310 = vsel %vm3451, %v7278, %v6960
      %v7311 = vsel %vm3451, %v7279, %v6962
      %v7312 = vsel %vm3451, %v7280, %v6964
      %v7313 = vsel %vm3451, %v7281, %v6966
      %v7314 = vsel %vm3451, %v7282, %v6968
      %v7315 = vsel %vm3451, %v7283, %v6970
      %v7316 = vsel %vm3451, %v7284, %v6972
      %v7317 = vsel %vm3451, %v7285, %v6974
      %v7318 = vsel %vm3451, %v7286, %v6976
      %v7319 = vsel %vm3451, %v7287, %v6978
      %v7320 = vsel %vm3451, %v7288, %v6980
      %v7321 = vsel %vm3451, %v7289, %v6982
      %v7322 = vsel %vm3451, %v7290, %v6984
      %v7323 = vsel %vm3451, %v7291, %v6986
      %v7324 = vsel %vm3451, %v7292, %v6988
      %v7325 = vsel %vm3451, %v7293, %v6990
      %v7326 = vsel %vm3451, %v7294, %v6992
      %v7327 = vsel %vm3451, %v7295, %v6994
      %v7328 = vsel %vm3451, %v7296, %v6996
      %v7329 = vsel %vm3451, %v7297, %v6998
      %v7330 = vsel %vm3451, %v7298, %v7000
      %v7331 = vsel %vm3451, %v7299, %v7002
      %v7332 = vsel %vm3451, %v7300, %v7004
      %v7333 = vsel %vm3451, %v7301, %v7006
      %v7334 = vsel %vm3451, %v7302, %v7008
      %v7335 = vsel %vm3451, %v7303, %v7010
      %v7336 = vsel %vm3451, %v7304, %v7012
      %v7337 = vsel %vm3451, %v7305, %v7014
      %v7338 = vsel %vm3451, %v7306, %v7016
      %v7339 = vsel %vm3451, %v7307, %v7018
      %v7340 = vsel %vm3451, %v7308, %v7020
      %v7341 = vsel %vm3484, %v7309, %v7086
      %v7342 = vsel %vm3484, %v7310, %v7088
      %v7343 = vsel %vm3484, %v7311, %v7090
      %v7344 = vsel %vm3484, %v7312, %v7092
      %v7345 = vsel %vm3484, %v7313, %v7094
      %v7346 = vsel %vm3484, %v7314, %v7096
      %v7347 = vsel %vm3484, %v7315, %v7098
      %v7348 = vsel %vm3484, %v7316, %v7100
      %v7349 = vsel %vm3484, %v7317, %v7102
      %v7350 = vsel %vm3484, %v7318, %v7104
      %v7351 = vsel %vm3484, %v7319, %v7106
      %v7352 = vsel %vm3484, %v7320, %v7108
      %v7353 = vsel %vm3484, %v7321, %v7110
      %v7354 = vsel %vm3484, %v7322, %v7112
      %v7355 = vsel %vm3484, %v7323, %v7114
      %v7356 = vsel %vm3484, %v7324, %v7116
      %v7357 = vsel %vm3484, %v7325, %v7118
      %v7358 = vsel %vm3484, %v7326, %v7120
      %v7359 = vsel %vm3484, %v7327, %v7122
      %v7360 = vsel %vm3484, %v7328, %v7124
      %v7361 = vsel %vm3484, %v7329, %v7126
      %v7362 = vsel %vm3484, %v7330, %v7128
      %v7363 = vsel %vm3484, %v7331, %v7130
      %v7364 = vsel %vm3484, %v7332, %v7132
      %v7365 = vsel %vm3484, %v7333, %v7134
      %v7366 = vsel %vm3484, %v7334, %v7136
      %v7367 = vsel %vm3484, %v7335, %v7138
      %v7368 = vsel %vm3484, %v7336, %v7140
      %v7369 = vsel %vm3484, %v7337, %v7142
      %v7370 = vsel %vm3484, %v7338, %v7144
      %v7371 = vsel %vm3484, %v7339, %v7146
      %v7372 = vsel %vm3484, %v7340, %v7148
      %v7373 = vpack.c.bf16 %v7246, %v7245
      %v7374 = vpack.c.bf16 %v7342, %v7341
      %v7375 = vpack.c.bf16 %v6382, %v6381
      %v7376 = vpack.c.bf16 %v7248, %v7247
      %v7377 = vpack.c.bf16 %v7344, %v7343
      %v7378 = vpack.c.bf16 %v6384, %v6383
      %v7379 = vpack.c.bf16 %v7250, %v7249
      %v7380 = vpack.c.bf16 %v7346, %v7345
      %v7381 = vpack.c.bf16 %v6386, %v6385
      %v7382 = vpack.c.bf16 %v7252, %v7251
      %v7383 = vpack.c.bf16 %v7348, %v7347
      %v7384 = vpack.c.bf16 %v6388, %v6387
      %v7385 = vpack.c.bf16 %v7254, %v7253
      %v7386 = vpack.c.bf16 %v7350, %v7349
      %v7387 = vpack.c.bf16 %v6390, %v6389
      %v7388 = vpack.c.bf16 %v7256, %v7255
      %v7389 = vpack.c.bf16 %v7352, %v7351
      %v7390 = vpack.c.bf16 %v6392, %v6391
      %v7391 = vpack.c.bf16 %v7258, %v7257
      %v7392 = vpack.c.bf16 %v7354, %v7353
      %v7393 = vpack.c.bf16 %v6394, %v6393
      %v7394 = vpack.c.bf16 %v7260, %v7259
      %v7395 = vpack.c.bf16 %v7356, %v7355
      %v7396 = vpack.c.bf16 %v6396, %v6395
      %v7397 = vpack.c.bf16 %v7262, %v7261
      %v7398 = vpack.c.bf16 %v7358, %v7357
      %v7399 = vpack.c.bf16 %v6398, %v6397
      %v7400 = vpack.c.bf16 %v7264, %v7263
      %v7401 = vpack.c.bf16 %v7360, %v7359
      %v7402 = vpack.c.bf16 %v6400, %v6399
      %v7403 = vpack.c.bf16 %v7266, %v7265
      %v7404 = vpack.c.bf16 %v7362, %v7361
      %v7405 = vpack.c.bf16 %v6402, %v6401
      %v7406 = vpack.c.bf16 %v7268, %v7267
      %v7407 = vpack.c.bf16 %v7364, %v7363
      %v7408 = vpack.c.bf16 %v6404, %v6403
      %v7409 = vpack.c.bf16 %v7270, %v7269
      %v7410 = vpack.c.bf16 %v7366, %v7365
      %v7411 = vpack.c.bf16 %v6406, %v6405
      %v7412 = vpack.c.bf16 %v7272, %v7271
      %v7413 = vpack.c.bf16 %v7368, %v7367
      %v7414 = vpack.c.bf16 %v6408, %v6407
      %v7415 = vpack.c.bf16 %v7274, %v7273
      %v7416 = vpack.c.bf16 %v7370, %v7369
      %v7417 = vpack.c.bf16 %v6410, %v6409
      %v7418 = vpack.c.bf16 %v7276, %v7275
      %v7419 = vpack.c.bf16 %v7372, %v7371
      %v7420 = vpack.c.bf16 %v6412, %v6411
      %v7421 = vlaneseq
      %v7422 = vshrl.u32 %v7421, 7
      %v7423 = vsub.s32 0, %v7422
      %v7424 = vrot.slane %v6124, %v7423
      %v7461 = vunpack.c.l.b16 %v6088
      %v7462 = vunpack.c.l.b16 %v6089
      %v7463 = vunpack.c.l.b16 %v6090
      %v7464 = vunpack.c.l.b16 %v6091
      %v7465 = vunpack.c.l.b16 %v6092
      %v7466 = vunpack.c.l.b16 %v6093
      %v7467 = vunpack.c.l.b16 %v6094
      %v7468 = vunpack.c.l.b16 %v6095
      %v7469 = vunpack.c.l.b16 %v6096
      %v7470 = vunpack.c.l.b16 %v6097
      %v7471 = vunpack.c.l.b16 %v6098
      %v7472 = vunpack.c.l.b16 %v6099
      %v7473 = vunpack.c.l.b16 %v6100
      %v7474 = vunpack.c.l.b16 %v6101
      %v7475 = vunpack.c.l.b16 %v6102
      %v7476 = vunpack.c.l.b16 %v6103
      %v7477 = vunpack.c.l.b16 %v6104
      %v7478 = vunpack.c.l.b16 %v6105
      %v7479 = vunpack.c.l.b16 %v6106
      %v7480 = vunpack.c.l.b16 %v6107
      %v7481 = vunpack.c.l.b16 %v6108
      %v7482 = vunpack.c.l.b16 %v6109
      %v7483 = vunpack.c.l.b16 %v6110
      %v7484 = vunpack.c.l.b16 %v6111
      %v7485 = vunpack.c.l.b16 %v6112
      %v7486 = vunpack.c.l.b16 %v6113
      %v7487 = vunpack.c.l.b16 %v6114
      %v7488 = vunpack.c.l.b16 %v6115
      %v7489 = vunpack.c.l.b16 %v6116
      %v7490 = vunpack.c.l.b16 %v6117
      %v7491 = vunpack.c.l.b16 %v6118
      %v7492 = vunpack.c.l.b16 %v6119
      %v7493 = vunpack.c.l.b16 %v6120
      %v7494 = vunpack.c.l.b16 %v6121
      %v7495 = vunpack.c.l.b16 %v6122
      %v7496 = vunpack.c.l.b16 %v6123
      %v7497 = vpack.c.b16 %v7462, %v7461
      %v7498 = vpack.c.b16 %v7464, %v7463
      %v7499 = vpack.c.b16 %v7466, %v7465
      %v7500 = vpack.c.b16 %v7468, %v7467
      %v7501 = vpack.c.b16 %v7470, %v7469
      %v7502 = vpack.c.b16 %v7472, %v7471
      %v7503 = vpack.c.b16 %v7474, %v7473
      %v7504 = vpack.c.b16 %v7476, %v7475
      %v7505 = vpack.c.b16 %v7478, %v7477
      %v7506 = vpack.c.b16 %v7480, %v7479
      %v7507 = vpack.c.b16 %v7482, %v7481
      %v7508 = vpack.c.b16 %v7484, %v7483
      %v7509 = vpack.c.b16 %v7486, %v7485
      %v7510 = vpack.c.b16 %v7488, %v7487
      %v7511 = vpack.c.b16 %v7490, %v7489
      %v7512 = vpack.c.b16 %v7492, %v7491
      %v7513 = vpack.c.b16 %v7494, %v7493
      %v7514 = vpack.c.b16 %v7496, %v7495
      %v7534 = vsel %vm309, %v7375, 0
      %v7537 = vsel %vm309, %v7378, 0
      %v7540 = vsel %vm309, %v7381, 0
      %v7543 = vsel %vm309, %v7384, 0
      %v7546 = vsel %vm309, %v7387, 0
      %v7549 = vsel %vm309, %v7390, 0
      %v7552 = vsel %vm309, %v7393, 0
      %v7555 = vsel %vm309, %v7396, 0
      %v7558 = vsel %vm309, %v7399, 0
      %v7561 = vsel %vm309, %v7402, 0
      %v7564 = vsel %vm309, %v7405, 0
      %v7567 = vsel %vm309, %v7408, 0
      %v7570 = vsel %vm309, %v7411, 0
      %v7573 = vsel %vm309, %v7414, 0
      %v7576 = vsel %vm309, %v7417, 0
      %v7579 = vsel %vm309, %v7420, 0
      %7581 = vmatprep.subr.bf16.mxu0 0
      %7582 = vmatpush1.bf16.msra.mxu0 %v7504
      %7583 = vmatprep.subr.bf16.mxu0 0
      %7584 = vmatpush1.bf16.msra.mxu0 %v7503
      %7585 = vmatprep.subr.bf16.mxu0 0
      %7586 = vmatpush1.bf16.msra.mxu0 %v7502
      %7587 = vmatprep.subr.bf16.mxu0 0
      %7588 = vmatpush1.bf16.msra.mxu0 %v7501
      %7589 = vmatprep.subr.bf16.mxu0 0
      %7590 = vmatpush1.bf16.msra.mxu0 %v7500
      %7591 = vmatprep.subr.bf16.mxu0 0
      %7592 = vmatpush1.bf16.msra.mxu0 %v7499
      %7593 = vmatprep.subr.bf16.mxu0 0
      %7594 = vmatpush1.bf16.msra.mxu0 %v7498
      %7595 = vmatprep.subr.bf16.mxu0 0
      %7596 = vmatpush1.bf16.msra.mxu0 %v7497
      %7597 = vmatprep.subr.bf16.mxu0 0
      %7598 = vmatpush2.bf16.msra.mxu0 %v7512
      %7599 = vmatprep.subr.bf16.mxu0 0
      %7600 = vmatpush2.bf16.msra.mxu0 %v7511
      %7601 = vmatprep.subr.bf16.mxu0 0
      %7602 = vmatpush2.bf16.msra.mxu0 %v7510
      %7603 = vmatprep.subr.bf16.mxu0 0
      %7604 = vmatpush2.bf16.msra.mxu0 %v7509
      %7605 = vmatprep.subr.bf16.mxu0 0
      %7606 = vmatpush2.bf16.msra.mxu0 %v7508
      %7607 = vmatprep.subr.bf16.mxu0 0
      %7608 = vmatpush2.bf16.msra.mxu0 %v7507
      %7609 = vmatprep.subr.bf16.mxu0 0
      %7610 = vmatpush2.bf16.msra.mxu0 %v7506
      %7611 = vmatprep.subr.bf16.mxu0 0
      %7612 = vmatpush2.bf16.msra.mxu0 %v7505
      %7613 = vmatprep.mubr.bf16.mxu0 %v7374
      %7614 = vmatmul.mubr.bf16.gmra.mxu0 %v7373
      %v7615 = vpop.f32.mrf.mxu0
      %v7616 = vadd.f32 %v7424, %v7615
      %v7617 = vpop.f32.mrf.mxu0
      %v7618 = vpop.f32.mrf.mxu0
      %v7619 = vadd.f32 %v7424, %v7618
      %v7620 = vpop.f32.mrf.mxu0
      %7621 = vmatprep.mubr.bf16.mxu0 %v7377
      %7622 = vmatmul.mubr.bf16.gmra.mxu0 %v7376
      %v7623 = vpop.f32.mrf.mxu0
      %v7624 = vadd.f32 %v7424, %v7623
      %v7625 = vpop.f32.mrf.mxu0
      %v7626 = vpop.f32.mrf.mxu0
      %v7627 = vadd.f32 %v7424, %v7626
      %v7628 = vpop.f32.mrf.mxu0
      %7629 = vmatprep.mubr.bf16.mxu0 %v7380
      %7630 = vmatmul.mubr.bf16.gmra.mxu0 %v7379
      %v7631 = vpop.f32.mrf.mxu0
      %v7632 = vadd.f32 %v7424, %v7631
      %v7633 = vpop.f32.mrf.mxu0
      %v7634 = vpop.f32.mrf.mxu0
      %v7635 = vadd.f32 %v7424, %v7634
      %v7636 = vpop.f32.mrf.mxu0
      %7637 = vmatprep.mubr.bf16.mxu0 %v7383
      %7638 = vmatmul.mubr.bf16.gmra.mxu0 %v7382
      %v7639 = vpop.f32.mrf.mxu0
      %v7640 = vadd.f32 %v7424, %v7639
      %v7641 = vpop.f32.mrf.mxu0
      %v7642 = vpop.f32.mrf.mxu0
      %v7643 = vadd.f32 %v7424, %v7642
      %v7644 = vpop.f32.mrf.mxu0
      %7645 = vmatprep.mubr.bf16.mxu0 %v7386
      %7646 = vmatmul.mubr.bf16.gmra.mxu0 %v7385
      %v7647 = vpop.f32.mrf.mxu0
      %v7648 = vadd.f32 %v7424, %v7647
      %v7649 = vpop.f32.mrf.mxu0
      %v7650 = vpop.f32.mrf.mxu0
      %v7651 = vadd.f32 %v7424, %v7650
      %v7652 = vpop.f32.mrf.mxu0
      %7653 = vmatprep.mubr.bf16.mxu0 %v7389
      %7654 = vmatmul.mubr.bf16.gmra.mxu0 %v7388
      %v7655 = vpop.f32.mrf.mxu0
      %v7656 = vadd.f32 %v7424, %v7655
      %v7657 = vpop.f32.mrf.mxu0
      %v7658 = vpop.f32.mrf.mxu0
      %v7659 = vadd.f32 %v7424, %v7658
      %v7660 = vpop.f32.mrf.mxu0
      %7661 = vmatprep.mubr.bf16.mxu0 %v7392
      %7662 = vmatmul.mubr.bf16.gmra.mxu0 %v7391
      %v7663 = vpop.f32.mrf.mxu0
      %v7664 = vadd.f32 %v7424, %v7663
      %v7665 = vpop.f32.mrf.mxu0
      %v7666 = vpop.f32.mrf.mxu0
      %v7667 = vadd.f32 %v7424, %v7666
      %v7668 = vpop.f32.mrf.mxu0
      %7669 = vmatprep.mubr.bf16.mxu0 %v7395
      %7670 = vmatmul.mubr.bf16.gmra.mxu0 %v7394
      %v7671 = vpop.f32.mrf.mxu0
      %v7672 = vadd.f32 %v7424, %v7671
      %v7673 = vpop.f32.mrf.mxu0
      %v7674 = vpop.f32.mrf.mxu0
      %v7675 = vadd.f32 %v7424, %v7674
      %v7676 = vpop.f32.mrf.mxu0
      %7677 = vmatprep.mubr.bf16.mxu0 %v7398
      %7678 = vmatmul.mubr.bf16.gmra.mxu0 %v7397
      %v7679 = vpop.f32.mrf.mxu0
      %v7680 = vadd.f32 %v7424, %v7679
      %v7681 = vpop.f32.mrf.mxu0
      %v7682 = vpop.f32.mrf.mxu0
      %v7683 = vadd.f32 %v7424, %v7682
      %v7684 = vpop.f32.mrf.mxu0
      %7685 = vmatprep.mubr.bf16.mxu0 %v7401
      %7686 = vmatmul.mubr.bf16.gmra.mxu0 %v7400
      %v7687 = vpop.f32.mrf.mxu0
      %v7688 = vadd.f32 %v7424, %v7687
      %v7689 = vpop.f32.mrf.mxu0
      %v7690 = vpop.f32.mrf.mxu0
      %v7691 = vadd.f32 %v7424, %v7690
      %v7692 = vpop.f32.mrf.mxu0
      %7693 = vmatprep.mubr.bf16.mxu0 %v7404
      %7694 = vmatmul.mubr.bf16.gmra.mxu0 %v7403
      %v7695 = vpop.f32.mrf.mxu0
      %v7696 = vadd.f32 %v7424, %v7695
      %v7697 = vpop.f32.mrf.mxu0
      %v7698 = vpop.f32.mrf.mxu0
      %v7699 = vadd.f32 %v7424, %v7698
      %v7700 = vpop.f32.mrf.mxu0
      %7701 = vmatprep.mubr.bf16.mxu0 %v7407
      %7702 = vmatmul.mubr.bf16.gmra.mxu0 %v7406
      %v7703 = vpop.f32.mrf.mxu0
      %v7704 = vadd.f32 %v7424, %v7703
      %v7705 = vpop.f32.mrf.mxu0
      %v7706 = vpop.f32.mrf.mxu0
      %v7707 = vadd.f32 %v7424, %v7706
      %v7708 = vpop.f32.mrf.mxu0
      %7709 = vmatprep.mubr.bf16.mxu0 %v7410
      %7710 = vmatmul.mubr.bf16.gmra.mxu0 %v7409
      %v7711 = vpop.f32.mrf.mxu0
      %v7712 = vadd.f32 %v7424, %v7711
      %v7713 = vpop.f32.mrf.mxu0
      %v7714 = vpop.f32.mrf.mxu0
      %v7715 = vadd.f32 %v7424, %v7714
      %v7716 = vpop.f32.mrf.mxu0
      %7717 = vmatprep.mubr.bf16.mxu0 %v7413
      %7718 = vmatmul.mubr.bf16.gmra.mxu0 %v7412
      %v7719 = vpop.f32.mrf.mxu0
      %v7720 = vadd.f32 %v7424, %v7719
      %v7721 = vpop.f32.mrf.mxu0
      %v7722 = vpop.f32.mrf.mxu0
      %v7723 = vadd.f32 %v7424, %v7722
      %v7724 = vpop.f32.mrf.mxu0
      %7725 = vmatprep.mubr.bf16.mxu0 %v7416
      %7726 = vmatmul.mubr.bf16.gmra.mxu0 %v7415
      %v7727 = vpop.f32.mrf.mxu0
      %v7728 = vadd.f32 %v7424, %v7727
      %v7729 = vpop.f32.mrf.mxu0
      %v7730 = vpop.f32.mrf.mxu0
      %v7731 = vadd.f32 %v7424, %v7730
      %v7732 = vpop.f32.mrf.mxu0
      %7733 = vmatprep.mubr.bf16.mxu0 %v7419
      %7734 = vmatmul.mubr.bf16.gmra.mxu0 %v7418
      %v7735 = vpop.f32.mrf.mxu0
      %v7736 = vadd.f32 %v7424, %v7735
      %v7737 = vpop.f32.mrf.mxu0
      %v7738 = vpop.f32.mrf.mxu0
      %v7739 = vadd.f32 %v7424, %v7738
      %v7740 = vpop.f32.mrf.mxu0
      %7741 = vdwg.mxu0
      %7742 = vmatprep.subr.bf16.mxu0 0
      %7743 = vmatpush1.bf16.msra.mxu0 0
      %7744 = vmatprep.subr.bf16.mxu0 0
      %7745 = vmatpush1.bf16.msra.mxu0 0
      %7746 = vmatprep.subr.bf16.mxu0 0
      %7747 = vmatpush1.bf16.msra.mxu0 0
      %7748 = vmatprep.subr.bf16.mxu0 0
      %7749 = vmatpush1.bf16.msra.mxu0 0
      %7750 = vmatprep.subr.bf16.mxu0 0
      %7751 = vmatpush1.bf16.msra.mxu0 0
      %7752 = vmatprep.subr.bf16.mxu0 0
      %7753 = vmatpush1.bf16.msra.mxu0 0
      %7754 = vmatprep.subr.bf16.mxu0 0
      %7755 = vmatpush1.bf16.msra.mxu0 %v7514
      %7756 = vmatprep.subr.bf16.mxu0 0
      %7757 = vmatpush1.bf16.msra.mxu0 %v7513
      %7758 = vmatprep.subr.bf16.mxu0 0
      %7759 = vmatpush2.bf16.msra.mxu0 0
      %7760 = vmatprep.subr.bf16.mxu0 0
      %7761 = vmatpush2.bf16.msra.mxu0 0
      %7762 = vmatprep.subr.bf16.mxu0 0
      %7763 = vmatpush2.bf16.msra.mxu0 0
      %7764 = vmatprep.subr.bf16.mxu0 0
      %7765 = vmatpush2.bf16.msra.mxu0 0
      %7766 = vmatprep.subr.bf16.mxu0 0
      %7767 = vmatpush2.bf16.msra.mxu0 0
      %7768 = vmatprep.subr.bf16.mxu0 0
      %7769 = vmatpush2.bf16.msra.mxu0 0
      %7770 = vmatprep.subr.bf16.mxu0 0
      %7771 = vmatpush2.bf16.msra.mxu0 0
      %7772 = vmatprep.subr.bf16.mxu0 0
      %7773 = vmatpush2.bf16.msra.mxu0 0
      %7774 = vmatprep.mubr.bf16.mxu0 0
      %7775 = vmatmul.mubr.bf16.gmra.mxu0 %v7534
      %v7776 = vpop.f32.mrf.mxu0
      %v7777 = vadd.f32 %v7616, %v7776
      %v7778 = vpop.f32.mrf.mxu0
      %v7779 = vpop.f32.mrf.mxu0
      %v7780 = vadd.f32 %v7619, %v7779
      %v7781 = vpop.f32.mrf.mxu0
      %7782 = vmatprep.mubr.bf16.mxu0 0
      %7783 = vmatmul.mubr.bf16.gmra.mxu0 %v7537
      %v7784 = vpop.f32.mrf.mxu0
      %v7785 = vadd.f32 %v7624, %v7784
      %v7786 = vpop.f32.mrf.mxu0
      %v7787 = vpop.f32.mrf.mxu0
      %v7788 = vadd.f32 %v7627, %v7787
      %v7789 = vpop.f32.mrf.mxu0
      %7790 = vmatprep.mubr.bf16.mxu0 0
      %7791 = vmatmul.mubr.bf16.gmra.mxu0 %v7540
      %v7792 = vpop.f32.mrf.mxu0
      %v7793 = vadd.f32 %v7632, %v7792
      %v7794 = vpop.f32.mrf.mxu0
      %v7795 = vpop.f32.mrf.mxu0
      %v7796 = vadd.f32 %v7635, %v7795
      %v7797 = vpop.f32.mrf.mxu0
      %7798 = vmatprep.mubr.bf16.mxu0 0
      %7799 = vmatmul.mubr.bf16.gmra.mxu0 %v7543
      %v7800 = vpop.f32.mrf.mxu0
      %v7801 = vadd.f32 %v7640, %v7800
      %v7802 = vpop.f32.mrf.mxu0
      %v7803 = vpop.f32.mrf.mxu0
      %v7804 = vadd.f32 %v7643, %v7803
      %v7805 = vpop.f32.mrf.mxu0
      %7806 = vmatprep.mubr.bf16.mxu0 0
      %7807 = vmatmul.mubr.bf16.gmra.mxu0 %v7546
      %v7808 = vpop.f32.mrf.mxu0
      %v7809 = vadd.f32 %v7648, %v7808
      %v7810 = vpop.f32.mrf.mxu0
      %v7811 = vpop.f32.mrf.mxu0
      %v7812 = vadd.f32 %v7651, %v7811
      %v7813 = vpop.f32.mrf.mxu0
      %7814 = vmatprep.mubr.bf16.mxu0 0
      %7815 = vmatmul.mubr.bf16.gmra.mxu0 %v7549
      %v7816 = vpop.f32.mrf.mxu0
      %v7817 = vadd.f32 %v7656, %v7816
      %v7818 = vpop.f32.mrf.mxu0
      %v7819 = vpop.f32.mrf.mxu0
      %v7820 = vadd.f32 %v7659, %v7819
      %v7821 = vpop.f32.mrf.mxu0
      %7822 = vmatprep.mubr.bf16.mxu0 0
      %7823 = vmatmul.mubr.bf16.gmra.mxu0 %v7552
      %v7824 = vpop.f32.mrf.mxu0
      %v7825 = vadd.f32 %v7664, %v7824
      %v7826 = vpop.f32.mrf.mxu0
      %v7827 = vpop.f32.mrf.mxu0
      %v7828 = vadd.f32 %v7667, %v7827
      %v7829 = vpop.f32.mrf.mxu0
      %7830 = vmatprep.mubr.bf16.mxu0 0
      %7831 = vmatmul.mubr.bf16.gmra.mxu0 %v7555
      %v7832 = vpop.f32.mrf.mxu0
      %v7833 = vadd.f32 %v7672, %v7832
      %v7834 = vpop.f32.mrf.mxu0
      %v7835 = vpop.f32.mrf.mxu0
      %v7836 = vadd.f32 %v7675, %v7835
      %v7837 = vpop.f32.mrf.mxu0
      %7838 = vmatprep.mubr.bf16.mxu0 0
      %7839 = vmatmul.mubr.bf16.gmra.mxu0 %v7558
      %v7840 = vpop.f32.mrf.mxu0
      %v7841 = vadd.f32 %v7680, %v7840
      %v7842 = vpop.f32.mrf.mxu0
      %v7843 = vpop.f32.mrf.mxu0
      %v7844 = vadd.f32 %v7683, %v7843
      %v7845 = vpop.f32.mrf.mxu0
      %7846 = vmatprep.mubr.bf16.mxu0 0
      %7847 = vmatmul.mubr.bf16.gmra.mxu0 %v7561
      %v7848 = vpop.f32.mrf.mxu0
      %v7849 = vadd.f32 %v7688, %v7848
      %v7850 = vpop.f32.mrf.mxu0
      %v7851 = vpop.f32.mrf.mxu0
      %v7852 = vadd.f32 %v7691, %v7851
      %v7853 = vpop.f32.mrf.mxu0
      %7854 = vmatprep.mubr.bf16.mxu0 0
      %7855 = vmatmul.mubr.bf16.gmra.mxu0 %v7564
      %v7856 = vpop.f32.mrf.mxu0
      %v7857 = vadd.f32 %v7696, %v7856
      %v7858 = vpop.f32.mrf.mxu0
      %v7859 = vpop.f32.mrf.mxu0
      %v7860 = vadd.f32 %v7699, %v7859
      %v7861 = vpop.f32.mrf.mxu0
      %7862 = vmatprep.mubr.bf16.mxu0 0
      %7863 = vmatmul.mubr.bf16.gmra.mxu0 %v7567
      %v7864 = vpop.f32.mrf.mxu0
      %v7865 = vadd.f32 %v7704, %v7864
      %v7866 = vpop.f32.mrf.mxu0
      %v7867 = vpop.f32.mrf.mxu0
      %v7868 = vadd.f32 %v7707, %v7867
      %v7869 = vpop.f32.mrf.mxu0
      %7870 = vmatprep.mubr.bf16.mxu0 0
      %7871 = vmatmul.mubr.bf16.gmra.mxu0 %v7570
      %v7872 = vpop.f32.mrf.mxu0
      %v7873 = vadd.f32 %v7712, %v7872
      %v7874 = vpop.f32.mrf.mxu0
      %v7875 = vpop.f32.mrf.mxu0
      %v7876 = vadd.f32 %v7715, %v7875
      %v7877 = vpop.f32.mrf.mxu0
      %7878 = vmatprep.mubr.bf16.mxu0 0
      %7879 = vmatmul.mubr.bf16.gmra.mxu0 %v7573
      %v7880 = vpop.f32.mrf.mxu0
      %v7881 = vadd.f32 %v7720, %v7880
      %v7882 = vpop.f32.mrf.mxu0
      %v7883 = vpop.f32.mrf.mxu0
      %v7884 = vadd.f32 %v7723, %v7883
      %v7885 = vpop.f32.mrf.mxu0
      %7886 = vmatprep.mubr.bf16.mxu0 0
      %7887 = vmatmul.mubr.bf16.gmra.mxu0 %v7576
      %v7888 = vpop.f32.mrf.mxu0
      %v7889 = vadd.f32 %v7728, %v7888
      %v7890 = vpop.f32.mrf.mxu0
      %v7891 = vpop.f32.mrf.mxu0
      %v7892 = vadd.f32 %v7731, %v7891
      %v7893 = vpop.f32.mrf.mxu0
      %7894 = vmatprep.mubr.bf16.mxu0 0
      %7895 = vmatmul.mubr.bf16.gmra.mxu0 %v7579
      %v7896 = vpop.f32.mrf.mxu0
      %v7897 = vadd.f32 %v7736, %v7896
      %v7898 = vpop.f32.mrf.mxu0
      %v7899 = vpop.f32.mrf.mxu0
      %v7900 = vadd.f32 %v7739, %v7899
      %v7901 = vpop.f32.mrf.mxu0
      %7902 = vdwg.mxu0
      %v7903 = vmax.f32 %v7777, 0.0
      %v7904 = vmax.f32 %v7780, 0.0
      %v7905 = vmax.f32 %v7785, 0.0
      %v7906 = vmax.f32 %v7788, 0.0
      %v7907 = vmax.f32 %v7793, 0.0
      %v7908 = vmax.f32 %v7796, 0.0
      %v7909 = vmax.f32 %v7801, 0.0
      %v7910 = vmax.f32 %v7804, 0.0
      %v7911 = vmax.f32 %v7809, 0.0
      %v7912 = vmax.f32 %v7812, 0.0
      %v7913 = vmax.f32 %v7817, 0.0
      %v7914 = vmax.f32 %v7820, 0.0
      %v7915 = vmax.f32 %v7825, 0.0
      %v7916 = vmax.f32 %v7828, 0.0
      %v7917 = vmax.f32 %v7833, 0.0
      %v7918 = vmax.f32 %v7836, 0.0
      %v7919 = vmax.f32 %v7841, 0.0
      %v7920 = vmax.f32 %v7844, 0.0
      %v7921 = vmax.f32 %v7849, 0.0
      %v7922 = vmax.f32 %v7852, 0.0
      %v7923 = vmax.f32 %v7857, 0.0
      %v7924 = vmax.f32 %v7860, 0.0
      %v7925 = vmax.f32 %v7865, 0.0
      %v7926 = vmax.f32 %v7868, 0.0
      %v7927 = vmax.f32 %v7873, 0.0
      %v7928 = vmax.f32 %v7876, 0.0
      %v7929 = vmax.f32 %v7881, 0.0
      %v7930 = vmax.f32 %v7884, 0.0
      %v7931 = vmax.f32 %v7889, 0.0
      %v7932 = vmax.f32 %v7892, 0.0
      %v7933 = vmax.f32 %v7897, 0.0
      %v7934 = vmax.f32 %v7900, 0.0
      %7935 = vst.msk [vmem:[%s2292 + $0x1] sm:$0xff] %vm309, %v7903
      %7936 = vst.msk [vmem:[%s2292 + $0x9] sm:$0xff] %vm309, %v7904
      %7937 = vst.msk [vmem:[%s2292 + $0x19] sm:$0xff] %vm309, %v7905
      %7938 = vst.msk [vmem:[%s2292 + $0x21] sm:$0xff] %vm309, %v7906
      %7939 = vst.msk [vmem:[%s2292 + $0x31] sm:$0xff] %vm309, %v7907
      %7940 = vst.msk [vmem:[%s2292 + $0x39] sm:$0xff] %vm309, %v7908
      %7941 = vst.msk [vmem:[%s2292 + $0x49] sm:$0xff] %vm309, %v7909
      %7942 = vst.msk [vmem:[%s2292 + $0x51] sm:$0xff] %vm309, %v7910
      %7943 = vst.msk [vmem:[%s2292 + $0x61] sm:$0xff] %vm309, %v7911
      %7944 = vst.msk [vmem:[%s2292 + $0x69] sm:$0xff] %vm309, %v7912
      %7945 = vst.msk [vmem:[%s2292 + $0x79] sm:$0xff] %vm309, %v7913
      %7946 = vst.msk [vmem:[%s2292 + $0x81] sm:$0xff] %vm309, %v7914
      %7947 = vst.msk [vmem:[%s2292 + $0x91] sm:$0xff] %vm309, %v7915
      %7948 = vst.msk [vmem:[%s2292 + $0x99] sm:$0xff] %vm309, %v7916
      %7949 = vst.msk [vmem:[%s2292 + $0xa9] sm:$0xff] %vm309, %v7917
      %7950 = vst.msk [vmem:[%s2292 + $0xb1] sm:$0xff] %vm309, %v7918
      %7951 = vst.msk [vmem:[%s2292 + $0xc1] sm:$0xff] %vm309, %v7919
      %7952 = vst.msk [vmem:[%s2292 + $0xc9] sm:$0xff] %vm309, %v7920
      %7953 = vst.msk [vmem:[%s2292 + $0xd9] sm:$0xff] %vm309, %v7921
      %7954 = vst.msk [vmem:[%s2292 + $0xe1] sm:$0xff] %vm309, %v7922
      %7955 = vst.msk [vmem:[%s2292 + $0xf1] sm:$0xff] %vm309, %v7923
      %7956 = vst.msk [vmem:[%s2292 + $0xf9] sm:$0xff] %vm309, %v7924
      %7957 = vst.msk [vmem:[%s2292 + $0x109] sm:$0xff] %vm309, %v7925
      %7958 = vst.msk [vmem:[%s2292 + $0x111] sm:$0xff] %vm309, %v7926
      %7959 = vst.msk [vmem:[%s2292 + $0x121] sm:$0xff] %vm309, %v7927
      %7960 = vst.msk [vmem:[%s2292 + $0x129] sm:$0xff] %vm309, %v7928
      %7961 = vst.msk [vmem:[%s2292 + $0x139] sm:$0xff] %vm309, %v7929
      %7962 = vst.msk [vmem:[%s2292 + $0x141] sm:$0xff] %vm309, %v7930
      %7963 = vst.msk [vmem:[%s2292 + $0x151] sm:$0xff] %vm309, %v7931
      %7964 = vst.msk [vmem:[%s2292 + $0x159] sm:$0xff] %vm309, %v7932
      %7965 = vst.msk [vmem:[%s2292 + $0x169] sm:$0xff] %vm309, %v7933
      %7966 = vst.msk [vmem:[%s2292 + $0x171] sm:$0xff] %vm309, %v7934
      %s7967 = scalar_lea.vmem %s2, 432
      %v7968 = vld [vmem:[%s7967] sm:$0xf]
      %v7969 = vld [vmem:[%s7967 + $0x4] sm:$0xf]
      %v7970 = vld [vmem:[%s7967 + $0x8] sm:$0xf]
      %v7971 = vld [vmem:[%s7967 + $0xc] sm:$0xf]
      %v7972 = vld [vmem:[%s7967 + $0x10] sm:$0xf]
      %v7973 = vld [vmem:[%s7967 + $0x14] sm:$0xf]
      %v7974 = vld [vmem:[%s7967 + $0x18] sm:$0xf]
      %v7975 = vld [vmem:[%s7967 + $0x1c] sm:$0xf]
      %v7976 = vld [vmem:[%s7967 + $0x20] sm:$0xf]
      %v7977 = vld [vmem:[%s7967 + $0x24] sm:$0xf]
      %v7978 = vld [vmem:[%s7967 + $0x28] sm:$0xf]
      %v7979 = vld [vmem:[%s7967 + $0x2c] sm:$0xf]
      %v7980 = vld [vmem:[%s7967 + $0x30] sm:$0xf]
      %v7981 = vld [vmem:[%s7967 + $0x34] sm:$0xf]
      %v7982 = vld [vmem:[%s7967 + $0x38] sm:$0xf]
      %v7983 = vld [vmem:[%s7967 + $0x3c] sm:$0xf]
      %v7984 = vld [vmem:[%s7967 + $0x40] sm:$0xf]
      %v7985 = vld [vmem:[%s7967 + $0x44] sm:$0xf]
      %v7986 = vld [vmem:[%s7967 + $0x48] sm:$0xf]
      %v7987 = vld [vmem:[%s7967 + $0x4c] sm:$0xf]
      %v7988 = vld [vmem:[%s7967 + $0x50] sm:$0xf]
      %v7989 = vld [vmem:[%s7967 + $0x54] sm:$0xf]
      %v7990 = vld [vmem:[%s7967 + $0x58] sm:$0xf]
      %v7991 = vld [vmem:[%s7967 + $0x5c] sm:$0xf]
      %v7992 = vld [vmem:[%s7967 + $0x60] sm:$0xf]
      %v7993 = vld [vmem:[%s7967 + $0x64] sm:$0xf]
      %v7994 = vld [vmem:[%s7967 + $0x68] sm:$0xf]
      %v7995 = vld [vmem:[%s7967 + $0x6c] sm:$0xf]
      %v7996 = vld [vmem:[%s7967 + $0x70] sm:$0xf]
      %v7997 = vld [vmem:[%s7967 + $0x74] sm:$0xf]
      %v7998 = vld [vmem:[%s7967 + $0x78] sm:$0xf]
      %v7999 = vld [vmem:[%s7967 + $0x7c] sm:$0xf]
      %v8000 = vld [vmem:[%s7967 + $0x80] sm:$0xf]
      %v8001 = vld [vmem:[%s7967 + $0x84] sm:$0xf]
      %v8002 = vld [vmem:[%s7967 + $0x88] sm:$0xf]
      %v8003 = vld [vmem:[%s7967 + $0x8c] sm:$0xf]
      %v8004 = vld [vmem:[%s3 + $0x4] sm:$0x1]
      %v8005 = vld [vmem:[#allocation3] sm:$0xff]
      %v8006 = vld [vmem:[#allocation3 + $0x8] sm:$0xff]
      %v8007 = vld [vmem:[#allocation3 + $0x18] sm:$0xff]
      %v8008 = vld [vmem:[#allocation3 + $0x20] sm:$0xff]
      %v8009 = vld [vmem:[#allocation3 + $0x30] sm:$0xff]
      %v8010 = vld [vmem:[#allocation3 + $0x38] sm:$0xff]
      %v8011 = vld [vmem:[#allocation3 + $0x48] sm:$0xff]
      %v8012 = vld [vmem:[#allocation3 + $0x50] sm:$0xff]
      %v8013 = vld [vmem:[#allocation3 + $0x60] sm:$0xff]
      %v8014 = vld [vmem:[#allocation3 + $0x68] sm:$0xff]
      %v8015 = vld [vmem:[#allocation3 + $0x78] sm:$0xff]
      %v8016 = vld [vmem:[#allocation3 + $0x80] sm:$0xff]
      %v8017 = vld [vmem:[#allocation3 + $0x90] sm:$0xff]
      %v8018 = vld [vmem:[#allocation3 + $0x98] sm:$0xff]
      %v8019 = vld [vmem:[#allocation3 + $0xa8] sm:$0xff]
      %v8020 = vld [vmem:[#allocation3 + $0xb0] sm:$0xff]
      %v8021 = vld [vmem:[#allocation3 + $0xc0] sm:$0xff]
      %v8022 = vld [vmem:[#allocation3 + $0xc8] sm:$0xff]
      %v8023 = vld [vmem:[#allocation3 + $0xd8] sm:$0xff]
      %v8024 = vld [vmem:[#allocation3 + $0xe0] sm:$0xff]
      %v8025 = vld [vmem:[#allocation3 + $0xf0] sm:$0xff]
      %v8026 = vld [vmem:[#allocation3 + $0xf8] sm:$0xff]
      %v8027 = vld [vmem:[#allocation3 + $0x108] sm:$0xff]
      %v8028 = vld [vmem:[#allocation3 + $0x110] sm:$0xff]
      %v8029 = vld [vmem:[#allocation3 + $0x120] sm:$0xff]
      %v8030 = vld [vmem:[#allocation3 + $0x128] sm:$0xff]
      %v8031 = vld [vmem:[#allocation3 + $0x138] sm:$0xff]
      %v8032 = vld [vmem:[#allocation3 + $0x140] sm:$0xff]
      %v8033 = vld [vmem:[#allocation3 + $0x150] sm:$0xff]
      %v8034 = vld [vmem:[#allocation3 + $0x158] sm:$0xff]
      %v8035 = vld [vmem:[#allocation3 + $0x168] sm:$0xff]
      %v8036 = vld [vmem:[#allocation3 + $0x170] sm:$0xff]
      %v8037 = vld [vmem:[#allocation3 + $0x1] sm:$0xff]
      %v8038 = vld [vmem:[#allocation3 + $0x9] sm:$0xff]
      %v8039 = vld [vmem:[#allocation3 + $0x19] sm:$0xff]
      %v8040 = vld [vmem:[#allocation3 + $0x21] sm:$0xff]
      %v8041 = vld [vmem:[#allocation3 + $0x31] sm:$0xff]
      %v8042 = vld [vmem:[#allocation3 + $0x39] sm:$0xff]
      %v8043 = vld [vmem:[#allocation3 + $0x49] sm:$0xff]
      %v8044 = vld [vmem:[#allocation3 + $0x51] sm:$0xff]
      %v8045 = vld [vmem:[#allocation3 + $0x61] sm:$0xff]
      %v8046 = vld [vmem:[#allocation3 + $0x69] sm:$0xff]
      %v8047 = vld [vmem:[#allocation3 + $0x79] sm:$0xff]
      %v8048 = vld [vmem:[#allocation3 + $0x81] sm:$0xff]
      %v8049 = vld [vmem:[#allocation3 + $0x91] sm:$0xff]
      %v8050 = vld [vmem:[#allocation3 + $0x99] sm:$0xff]
      %v8051 = vld [vmem:[#allocation3 + $0xa9] sm:$0xff]
      %v8052 = vld [vmem:[#allocation3 + $0xb1] sm:$0xff]
      %v8053 = vld [vmem:[#allocation3 + $0xc1] sm:$0xff]
      %v8054 = vld [vmem:[#allocation3 + $0xc9] sm:$0xff]
      %v8055 = vld [vmem:[#allocation3 + $0xd9] sm:$0xff]
      %v8056 = vld [vmem:[#allocation3 + $0xe1] sm:$0xff]
      %v8057 = vld [vmem:[#allocation3 + $0xf1] sm:$0xff]
      %v8058 = vld [vmem:[#allocation3 + $0xf9] sm:$0xff]
      %v8059 = vld [vmem:[#allocation3 + $0x109] sm:$0xff]
      %v8060 = vld [vmem:[#allocation3 + $0x111] sm:$0xff]
      %v8061 = vld [vmem:[#allocation3 + $0x121] sm:$0xff]
      %v8062 = vld [vmem:[#allocation3 + $0x129] sm:$0xff]
      %v8063 = vld [vmem:[#allocation3 + $0x139] sm:$0xff]
      %v8064 = vld [vmem:[#allocation3 + $0x141] sm:$0xff]
      %v8065 = vld [vmem:[#allocation3 + $0x151] sm:$0xff]
      %v8066 = vld [vmem:[#allocation3 + $0x159] sm:$0xff]
      %v8067 = vld [vmem:[#allocation3 + $0x169] sm:$0xff]
      %v8068 = vld [vmem:[#allocation3 + $0x171] sm:$0xff]
      %v8069 = vld [vmem:[#allocation3 + $0x2] sm:$0xff]
      %v8070 = vld [vmem:[#allocation3 + $0xa] sm:$0xff]
      %v8071 = vld [vmem:[#allocation3 + $0x1a] sm:$0xff]
      %v8072 = vld [vmem:[#allocation3 + $0x22] sm:$0xff]
      %v8073 = vld [vmem:[#allocation3 + $0x32] sm:$0xff]
      %v8074 = vld [vmem:[#allocation3 + $0x3a] sm:$0xff]
      %v8075 = vld [vmem:[#allocation3 + $0x4a] sm:$0xff]
      %v8076 = vld [vmem:[#allocation3 + $0x52] sm:$0xff]
      %v8077 = vld [vmem:[#allocation3 + $0x62] sm:$0xff]
      %v8078 = vld [vmem:[#allocation3 + $0x6a] sm:$0xff]
      %v8079 = vld [vmem:[#allocation3 + $0x7a] sm:$0xff]
      %v8080 = vld [vmem:[#allocation3 + $0x82] sm:$0xff]
      %v8081 = vld [vmem:[#allocation3 + $0x92] sm:$0xff]
      %v8082 = vld [vmem:[#allocation3 + $0x9a] sm:$0xff]
      %v8083 = vld [vmem:[#allocation3 + $0xaa] sm:$0xff]
      %v8084 = vld [vmem:[#allocation3 + $0xb2] sm:$0xff]
      %v8085 = vld [vmem:[#allocation3 + $0xc2] sm:$0xff]
      %v8086 = vld [vmem:[#allocation3 + $0xca] sm:$0xff]
      %v8087 = vld [vmem:[#allocation3 + $0xda] sm:$0xff]
      %v8088 = vld [vmem:[#allocation3 + $0xe2] sm:$0xff]
      %v8089 = vld [vmem:[#allocation3 + $0xf2] sm:$0xff]
      %v8090 = vld [vmem:[#allocation3 + $0xfa] sm:$0xff]
      %v8091 = vld [vmem:[#allocation3 + $0x10a] sm:$0xff]
      %v8092 = vld [vmem:[#allocation3 + $0x112] sm:$0xff]
      %v8093 = vld [vmem:[#allocation3 + $0x122] sm:$0xff]
      %v8094 = vld [vmem:[#allocation3 + $0x12a] sm:$0xff]
      %v8095 = vld [vmem:[#allocation3 + $0x13a] sm:$0xff]
      %v8096 = vld [vmem:[#allocation3 + $0x142] sm:$0xff]
      %v8097 = vld [vmem:[#allocation3 + $0x152] sm:$0xff]
      %v8098 = vld [vmem:[#allocation3 + $0x15a] sm:$0xff]
      %v8099 = vld [vmem:[#allocation3 + $0x16a] sm:$0xff]
      %v8100 = vld [vmem:[#allocation3 + $0x172] sm:$0xff]
      %v8101 = vld [vmem:[%s2292] sm:$0xff]
      %v8102 = vld [vmem:[%s2292 + $0x8] sm:$0xff]
      %v8103 = vld [vmem:[%s2292 + $0x18] sm:$0xff]
      %v8104 = vld [vmem:[%s2292 + $0x20] sm:$0xff]
      %v8105 = vld [vmem:[%s2292 + $0x30] sm:$0xff]
      %v8106 = vld [vmem:[%s2292 + $0x38] sm:$0xff]
      %v8107 = vld [vmem:[%s2292 + $0x48] sm:$0xff]
      %v8108 = vld [vmem:[%s2292 + $0x50] sm:$0xff]
      %v8109 = vld [vmem:[%s2292 + $0x60] sm:$0xff]
      %v8110 = vld [vmem:[%s2292 + $0x68] sm:$0xff]
      %v8111 = vld [vmem:[%s2292 + $0x78] sm:$0xff]
      %v8112 = vld [vmem:[%s2292 + $0x80] sm:$0xff]
      %v8113 = vld [vmem:[%s2292 + $0x90] sm:$0xff]
      %v8114 = vld [vmem:[%s2292 + $0x98] sm:$0xff]
      %v8115 = vld [vmem:[%s2292 + $0xa8] sm:$0xff]
      %v8116 = vld [vmem:[%s2292 + $0xb0] sm:$0xff]
      %v8117 = vld [vmem:[%s2292 + $0xc0] sm:$0xff]
      %v8118 = vld [vmem:[%s2292 + $0xc8] sm:$0xff]
      %v8119 = vld [vmem:[%s2292 + $0xd8] sm:$0xff]
      %v8120 = vld [vmem:[%s2292 + $0xe0] sm:$0xff]
      %v8121 = vld [vmem:[%s2292 + $0xf0] sm:$0xff]
      %v8122 = vld [vmem:[%s2292 + $0xf8] sm:$0xff]
      %v8123 = vld [vmem:[%s2292 + $0x108] sm:$0xff]
      %v8124 = vld [vmem:[%s2292 + $0x110] sm:$0xff]
      %v8125 = vld [vmem:[%s2292 + $0x120] sm:$0xff]
      %v8126 = vld [vmem:[%s2292 + $0x128] sm:$0xff]
      %v8127 = vld [vmem:[%s2292 + $0x138] sm:$0xff]
      %v8128 = vld [vmem:[%s2292 + $0x140] sm:$0xff]
      %v8129 = vld [vmem:[%s2292 + $0x150] sm:$0xff]
      %v8130 = vld [vmem:[%s2292 + $0x158] sm:$0xff]
      %v8131 = vld [vmem:[%s2292 + $0x168] sm:$0xff]
      %v8132 = vld [vmem:[%s2292 + $0x170] sm:$0xff]
      %v8133 = vld [vmem:[%s2292 + $0x1] sm:$0xff]
      %v8134 = vld [vmem:[%s2292 + $0x9] sm:$0xff]
      %v8135 = vld [vmem:[%s2292 + $0x19] sm:$0xff]
      %v8136 = vld [vmem:[%s2292 + $0x21] sm:$0xff]
      %v8137 = vld [vmem:[%s2292 + $0x31] sm:$0xff]
      %v8138 = vld [vmem:[%s2292 + $0x39] sm:$0xff]
      %v8139 = vld [vmem:[%s2292 + $0x49] sm:$0xff]
      %v8140 = vld [vmem:[%s2292 + $0x51] sm:$0xff]
      %v8141 = vld [vmem:[%s2292 + $0x61] sm:$0xff]
      %v8142 = vld [vmem:[%s2292 + $0x69] sm:$0xff]
      %v8143 = vld [vmem:[%s2292 + $0x79] sm:$0xff]
      %v8144 = vld [vmem:[%s2292 + $0x81] sm:$0xff]
      %v8145 = vld [vmem:[%s2292 + $0x91] sm:$0xff]
      %v8146 = vld [vmem:[%s2292 + $0x99] sm:$0xff]
      %v8147 = vld [vmem:[%s2292 + $0xa9] sm:$0xff]
      %v8148 = vld [vmem:[%s2292 + $0xb1] sm:$0xff]
      %v8149 = vld [vmem:[%s2292 + $0xc1] sm:$0xff]
      %v8150 = vld [vmem:[%s2292 + $0xc9] sm:$0xff]
      %v8151 = vld [vmem:[%s2292 + $0xd9] sm:$0xff]
      %v8152 = vld [vmem:[%s2292 + $0xe1] sm:$0xff]
      %v8153 = vld [vmem:[%s2292 + $0xf1] sm:$0xff]
      %v8154 = vld [vmem:[%s2292 + $0xf9] sm:$0xff]
      %v8155 = vld [vmem:[%s2292 + $0x109] sm:$0xff]
      %v8156 = vld [vmem:[%s2292 + $0x111] sm:$0xff]
      %v8157 = vld [vmem:[%s2292 + $0x121] sm:$0xff]
      %v8158 = vld [vmem:[%s2292 + $0x129] sm:$0xff]
      %v8159 = vld [vmem:[%s2292 + $0x139] sm:$0xff]
      %v8160 = vld [vmem:[%s2292 + $0x141] sm:$0xff]
      %v8161 = vld [vmem:[%s2292 + $0x151] sm:$0xff]
      %v8162 = vld [vmem:[%s2292 + $0x159] sm:$0xff]
      %v8163 = vld [vmem:[%s2292 + $0x169] sm:$0xff]
      %v8164 = vld [vmem:[%s2292 + $0x171] sm:$0xff]
      %v8165 = vld [vmem:[%s2292 + $0x2] sm:$0xff]
      %v8166 = vld [vmem:[%s2292 + $0xa] sm:$0xff]
      %v8167 = vld [vmem:[%s2292 + $0x1a] sm:$0xff]
      %v8168 = vld [vmem:[%s2292 + $0x22] sm:$0xff]
      %v8169 = vld [vmem:[%s2292 + $0x32] sm:$0xff]
      %v8170 = vld [vmem:[%s2292 + $0x3a] sm:$0xff]
      %v8171 = vld [vmem:[%s2292 + $0x4a] sm:$0xff]
      %v8172 = vld [vmem:[%s2292 + $0x52] sm:$0xff]
      %v8173 = vld [vmem:[%s2292 + $0x62] sm:$0xff]
      %v8174 = vld [vmem:[%s2292 + $0x6a] sm:$0xff]
      %v8175 = vld [vmem:[%s2292 + $0x7a] sm:$0xff]
      %v8176 = vld [vmem:[%s2292 + $0x82] sm:$0xff]
      %v8177 = vld [vmem:[%s2292 + $0x92] sm:$0xff]
      %v8178 = vld [vmem:[%s2292 + $0x9a] sm:$0xff]
      %v8179 = vld [vmem:[%s2292 + $0xaa] sm:$0xff]
      %v8180 = vld [vmem:[%s2292 + $0xb2] sm:$0xff]
      %v8181 = vld [vmem:[%s2292 + $0xc2] sm:$0xff]
      %v8182 = vld [vmem:[%s2292 + $0xca] sm:$0xff]
      %v8183 = vld [vmem:[%s2292 + $0xda] sm:$0xff]
      %v8184 = vld [vmem:[%s2292 + $0xe2] sm:$0xff]
      %v8185 = vld [vmem:[%s2292 + $0xf2] sm:$0xff]
      %v8186 = vld [vmem:[%s2292 + $0xfa] sm:$0xff]
      %v8187 = vld [vmem:[%s2292 + $0x10a] sm:$0xff]
      %v8188 = vld [vmem:[%s2292 + $0x112] sm:$0xff]
      %v8189 = vld [vmem:[%s2292 + $0x122] sm:$0xff]
      %v8190 = vld [vmem:[%s2292 + $0x12a] sm:$0xff]
      %v8191 = vld [vmem:[%s2292 + $0x13a] sm:$0xff]
      %v8192 = vld [vmem:[%s2292 + $0x142] sm:$0xff]
      %v8193 = vld [vmem:[%s2292 + $0x152] sm:$0xff]
      %v8194 = vld [vmem:[%s2292 + $0x15a] sm:$0xff]
      %v8195 = vld [vmem:[%s2292 + $0x16a] sm:$0xff]
      %v8196 = vld [vmem:[%s2292 + $0x172] sm:$0xff]
      %v8197 = vld [vmem:[%s2554] sm:$0xff]
      %v8198 = vld [vmem:[%s2554 + $0x8] sm:$0xff]
      %v8199 = vld [vmem:[%s2554 + $0x18] sm:$0xff]
      %v8200 = vld [vmem:[%s2554 + $0x20] sm:$0xff]
      %v8201 = vld [vmem:[%s2554 + $0x30] sm:$0xff]
      %v8202 = vld [vmem:[%s2554 + $0x38] sm:$0xff]
      %v8203 = vld [vmem:[%s2554 + $0x48] sm:$0xff]
      %v8204 = vld [vmem:[%s2554 + $0x50] sm:$0xff]
      %v8205 = vld [vmem:[%s2554 + $0x60] sm:$0xff]
      %v8206 = vld [vmem:[%s2554 + $0x68] sm:$0xff]
      %v8207 = vld [vmem:[%s2554 + $0x78] sm:$0xff]
      %v8208 = vld [vmem:[%s2554 + $0x80] sm:$0xff]
      %v8209 = vld [vmem:[%s2554 + $0x90] sm:$0xff]
      %v8210 = vld [vmem:[%s2554 + $0x98] sm:$0xff]
      %v8211 = vld [vmem:[%s2554 + $0xa8] sm:$0xff]
      %v8212 = vld [vmem:[%s2554 + $0xb0] sm:$0xff]
      %v8213 = vld [vmem:[%s2554 + $0xc0] sm:$0xff]
      %v8214 = vld [vmem:[%s2554 + $0xc8] sm:$0xff]
      %v8215 = vld [vmem:[%s2554 + $0xd8] sm:$0xff]
      %v8216 = vld [vmem:[%s2554 + $0xe0] sm:$0xff]
      %v8217 = vld [vmem:[%s2554 + $0xf0] sm:$0xff]
      %v8218 = vld [vmem:[%s2554 + $0xf8] sm:$0xff]
      %v8219 = vld [vmem:[%s2554 + $0x108] sm:$0xff]
      %v8220 = vld [vmem:[%s2554 + $0x110] sm:$0xff]
      %v8221 = vld [vmem:[%s2554 + $0x120] sm:$0xff]
      %v8222 = vld [vmem:[%s2554 + $0x128] sm:$0xff]
      %v8223 = vld [vmem:[%s2554 + $0x138] sm:$0xff]
      %v8224 = vld [vmem:[%s2554 + $0x140] sm:$0xff]
      %v8225 = vld [vmem:[%s2554 + $0x150] sm:$0xff]
      %v8226 = vld [vmem:[%s2554 + $0x158] sm:$0xff]
      %v8227 = vld [vmem:[%s2554 + $0x168] sm:$0xff]
      %v8228 = vld [vmem:[%s2554 + $0x170] sm:$0xff]
      %v8229 = vld [vmem:[%s2554 + $0x1] sm:$0xff]
      %v8230 = vld [vmem:[%s2554 + $0x9] sm:$0xff]
      %v8231 = vld [vmem:[%s2554 + $0x19] sm:$0xff]
      %v8232 = vld [vmem:[%s2554 + $0x21] sm:$0xff]
      %v8233 = vld [vmem:[%s2554 + $0x31] sm:$0xff]
      %v8234 = vld [vmem:[%s2554 + $0x39] sm:$0xff]
      %v8235 = vld [vmem:[%s2554 + $0x49] sm:$0xff]
      %v8236 = vld [vmem:[%s2554 + $0x51] sm:$0xff]
      %v8237 = vld [vmem:[%s2554 + $0x61] sm:$0xff]
      %v8238 = vld [vmem:[%s2554 + $0x69] sm:$0xff]
      %v8239 = vld [vmem:[%s2554 + $0x79] sm:$0xff]
      %v8240 = vld [vmem:[%s2554 + $0x81] sm:$0xff]
      %v8241 = vld [vmem:[%s2554 + $0x91] sm:$0xff]
      %v8242 = vld [vmem:[%s2554 + $0x99] sm:$0xff]
      %v8243 = vld [vmem:[%s2554 + $0xa9] sm:$0xff]
      %v8244 = vld [vmem:[%s2554 + $0xb1] sm:$0xff]
      %v8245 = vld [vmem:[%s2554 + $0xc1] sm:$0xff]
      %v8246 = vld [vmem:[%s2554 + $0xc9] sm:$0xff]
      %v8247 = vld [vmem:[%s2554 + $0xd9] sm:$0xff]
      %v8248 = vld [vmem:[%s2554 + $0xe1] sm:$0xff]
      %v8249 = vld [vmem:[%s2554 + $0xf1] sm:$0xff]
      %v8250 = vld [vmem:[%s2554 + $0xf9] sm:$0xff]
      %v8251 = vld [vmem:[%s2554 + $0x109] sm:$0xff]
      %v8252 = vld [vmem:[%s2554 + $0x111] sm:$0xff]
      %v8253 = vld [vmem:[%s2554 + $0x121] sm:$0xff]
      %v8254 = vld [vmem:[%s2554 + $0x129] sm:$0xff]
      %v8255 = vld [vmem:[%s2554 + $0x139] sm:$0xff]
      %v8256 = vld [vmem:[%s2554 + $0x141] sm:$0xff]
      %v8257 = vld [vmem:[%s2554 + $0x151] sm:$0xff]
      %v8258 = vld [vmem:[%s2554 + $0x159] sm:$0xff]
      %v8259 = vld [vmem:[%s2554 + $0x169] sm:$0xff]
      %v8260 = vld [vmem:[%s2554 + $0x171] sm:$0xff]
      %v8261 = vld [vmem:[%s2554 + $0x2] sm:$0xff]
      %v8262 = vld [vmem:[%s2554 + $0xa] sm:$0xff]
      %v8263 = vld [vmem:[%s2554 + $0x1a] sm:$0xff]
      %v8264 = vld [vmem:[%s2554 + $0x22] sm:$0xff]
      %v8265 = vld [vmem:[%s2554 + $0x32] sm:$0xff]
      %v8266 = vld [vmem:[%s2554 + $0x3a] sm:$0xff]
      %v8267 = vld [vmem:[%s2554 + $0x4a] sm:$0xff]
      %v8268 = vld [vmem:[%s2554 + $0x52] sm:$0xff]
      %v8269 = vld [vmem:[%s2554 + $0x62] sm:$0xff]
      %v8270 = vld [vmem:[%s2554 + $0x6a] sm:$0xff]
      %v8271 = vld [vmem:[%s2554 + $0x7a] sm:$0xff]
      %v8272 = vld [vmem:[%s2554 + $0x82] sm:$0xff]
      %v8273 = vld [vmem:[%s2554 + $0x92] sm:$0xff]
      %v8274 = vld [vmem:[%s2554 + $0x9a] sm:$0xff]
      %v8275 = vld [vmem:[%s2554 + $0xaa] sm:$0xff]
      %v8276 = vld [vmem:[%s2554 + $0xb2] sm:$0xff]
      %v8277 = vld [vmem:[%s2554 + $0xc2] sm:$0xff]
      %v8278 = vld [vmem:[%s2554 + $0xca] sm:$0xff]
      %v8279 = vld [vmem:[%s2554 + $0xda] sm:$0xff]
      %v8280 = vld [vmem:[%s2554 + $0xe2] sm:$0xff]
      %v8281 = vld [vmem:[%s2554 + $0xf2] sm:$0xff]
      %v8282 = vld [vmem:[%s2554 + $0xfa] sm:$0xff]
      %v8283 = vld [vmem:[%s2554 + $0x10a] sm:$0xff]
      %v8284 = vld [vmem:[%s2554 + $0x112] sm:$0xff]
      %v8285 = vld [vmem:[%s2554 + $0x122] sm:$0xff]
      %v8286 = vld [vmem:[%s2554 + $0x12a] sm:$0xff]
      %v8287 = vld [vmem:[%s2554 + $0x13a] sm:$0xff]
      %v8288 = vld [vmem:[%s2554 + $0x142] sm:$0xff]
      %v8289 = vld [vmem:[%s2554 + $0x152] sm:$0xff]
      %v8290 = vld [vmem:[%s2554 + $0x15a] sm:$0xff]
      %v8291 = vld [vmem:[%s2554 + $0x16a] sm:$0xff]
      %v8292 = vld [vmem:[%s2554 + $0x172] sm:$0xff]
      %8325 = vrot.lane.b32.xlu0 %v8037, 32
      %v8326 = vpop.permute.xlu0 %8325
      %8327 = vrot.lane.b32.xlu0 %v8038, 32
      %v8328 = vpop.permute.xlu0 %8327
      %8329 = vrot.lane.b32.xlu0 %v8039, 32
      %v8330 = vpop.permute.xlu0 %8329
      %8331 = vrot.lane.b32.xlu0 %v8040, 32
      %v8332 = vpop.permute.xlu0 %8331
      %8333 = vrot.lane.b32.xlu0 %v8041, 32
      %v8334 = vpop.permute.xlu0 %8333
      %8335 = vrot.lane.b32.xlu0 %v8042, 32
      %v8336 = vpop.permute.xlu0 %8335
      %8337 = vrot.lane.b32.xlu0 %v8043, 32
      %v8338 = vpop.permute.xlu0 %8337
      %8339 = vrot.lane.b32.xlu0 %v8044, 32
      %v8340 = vpop.permute.xlu0 %8339
      %8341 = vrot.lane.b32.xlu0 %v8045, 32
      %v8342 = vpop.permute.xlu0 %8341
      %8343 = vrot.lane.b32.xlu0 %v8046, 32
      %v8344 = vpop.permute.xlu0 %8343
      %8345 = vrot.lane.b32.xlu0 %v8047, 32
      %v8346 = vpop.permute.xlu0 %8345
      %8347 = vrot.lane.b32.xlu0 %v8048, 32
      %v8348 = vpop.permute.xlu0 %8347
      %8349 = vrot.lane.b32.xlu0 %v8049, 32
      %v8350 = vpop.permute.xlu0 %8349
      %8351 = vrot.lane.b32.xlu0 %v8050, 32
      %v8352 = vpop.permute.xlu0 %8351
      %8353 = vrot.lane.b32.xlu0 %v8051, 32
      %v8354 = vpop.permute.xlu0 %8353
      %8355 = vrot.lane.b32.xlu0 %v8052, 32
      %v8356 = vpop.permute.xlu0 %8355
      %8357 = vrot.lane.b32.xlu0 %v8053, 32
      %v8358 = vpop.permute.xlu0 %8357
      %8359 = vrot.lane.b32.xlu0 %v8054, 32
      %v8360 = vpop.permute.xlu0 %8359
      %8361 = vrot.lane.b32.xlu0 %v8055, 32
      %v8362 = vpop.permute.xlu0 %8361
      %8363 = vrot.lane.b32.xlu0 %v8056, 32
      %v8364 = vpop.permute.xlu0 %8363
      %8365 = vrot.lane.b32.xlu0 %v8057, 32
      %v8366 = vpop.permute.xlu0 %8365
      %8367 = vrot.lane.b32.xlu0 %v8058, 32
      %v8368 = vpop.permute.xlu0 %8367
      %8369 = vrot.lane.b32.xlu0 %v8059, 32
      %v8370 = vpop.permute.xlu0 %8369
      %8371 = vrot.lane.b32.xlu0 %v8060, 32
      %v8372 = vpop.permute.xlu0 %8371
      %8373 = vrot.lane.b32.xlu0 %v8061, 32
      %v8374 = vpop.permute.xlu0 %8373
      %8375 = vrot.lane.b32.xlu0 %v8062, 32
      %v8376 = vpop.permute.xlu0 %8375
      %8377 = vrot.lane.b32.xlu0 %v8063, 32
      %v8378 = vpop.permute.xlu0 %8377
      %8379 = vrot.lane.b32.xlu0 %v8064, 32
      %v8380 = vpop.permute.xlu0 %8379
      %8381 = vrot.lane.b32.xlu0 %v8065, 32
      %v8382 = vpop.permute.xlu0 %8381
      %8383 = vrot.lane.b32.xlu0 %v8066, 32
      %v8384 = vpop.permute.xlu0 %8383
      %8385 = vrot.lane.b32.xlu0 %v8067, 32
      %v8386 = vpop.permute.xlu0 %8385
      %8387 = vrot.lane.b32.xlu0 %v8068, 32
      %v8388 = vpop.permute.xlu0 %8387
      %8453 = vrot.lane.b32.xlu0 %v8069, 64
      %v8454 = vpop.permute.xlu0 %8453
      %8455 = vrot.lane.b32.xlu0 %v8070, 64
      %v8456 = vpop.permute.xlu0 %8455
      %8457 = vrot.lane.b32.xlu0 %v8071, 64
      %v8458 = vpop.permute.xlu0 %8457
      %8459 = vrot.lane.b32.xlu0 %v8072, 64
      %v8460 = vpop.permute.xlu0 %8459
      %8461 = vrot.lane.b32.xlu0 %v8073, 64
      %v8462 = vpop.permute.xlu0 %8461
      %8463 = vrot.lane.b32.xlu0 %v8074, 64
      %v8464 = vpop.permute.xlu0 %8463
      %8465 = vrot.lane.b32.xlu0 %v8075, 64
      %v8466 = vpop.permute.xlu0 %8465
      %8467 = vrot.lane.b32.xlu0 %v8076, 64
      %v8468 = vpop.permute.xlu0 %8467
      %8469 = vrot.lane.b32.xlu0 %v8077, 64
      %v8470 = vpop.permute.xlu0 %8469
      %8471 = vrot.lane.b32.xlu0 %v8078, 64
      %v8472 = vpop.permute.xlu0 %8471
      %8473 = vrot.lane.b32.xlu0 %v8079, 64
      %v8474 = vpop.permute.xlu0 %8473
      %8475 = vrot.lane.b32.xlu0 %v8080, 64
      %v8476 = vpop.permute.xlu0 %8475
      %8477 = vrot.lane.b32.xlu0 %v8081, 64
      %v8478 = vpop.permute.xlu0 %8477
      %8479 = vrot.lane.b32.xlu0 %v8082, 64
      %v8480 = vpop.permute.xlu0 %8479
      %8481 = vrot.lane.b32.xlu0 %v8083, 64
      %v8482 = vpop.permute.xlu0 %8481
      %8483 = vrot.lane.b32.xlu0 %v8084, 64
      %v8484 = vpop.permute.xlu0 %8483
      %8485 = vrot.lane.b32.xlu0 %v8085, 64
      %v8486 = vpop.permute.xlu0 %8485
      %8487 = vrot.lane.b32.xlu0 %v8086, 64
      %v8488 = vpop.permute.xlu0 %8487
      %8489 = vrot.lane.b32.xlu0 %v8087, 64
      %v8490 = vpop.permute.xlu0 %8489
      %8491 = vrot.lane.b32.xlu0 %v8088, 64
      %v8492 = vpop.permute.xlu0 %8491
      %8493 = vrot.lane.b32.xlu0 %v8089, 64
      %v8494 = vpop.permute.xlu0 %8493
      %8495 = vrot.lane.b32.xlu0 %v8090, 64
      %v8496 = vpop.permute.xlu0 %8495
      %8497 = vrot.lane.b32.xlu0 %v8091, 64
      %v8498 = vpop.permute.xlu0 %8497
      %8499 = vrot.lane.b32.xlu0 %v8092, 64
      %v8500 = vpop.permute.xlu0 %8499
      %8501 = vrot.lane.b32.xlu0 %v8093, 64
      %v8502 = vpop.permute.xlu0 %8501
      %8503 = vrot.lane.b32.xlu0 %v8094, 64
      %v8504 = vpop.permute.xlu0 %8503
      %8505 = vrot.lane.b32.xlu0 %v8095, 64
      %v8506 = vpop.permute.xlu0 %8505
      %8507 = vrot.lane.b32.xlu0 %v8096, 64
      %v8508 = vpop.permute.xlu0 %8507
      %8509 = vrot.lane.b32.xlu0 %v8097, 64
      %v8510 = vpop.permute.xlu0 %8509
      %8511 = vrot.lane.b32.xlu0 %v8098, 64
      %v8512 = vpop.permute.xlu0 %8511
      %8513 = vrot.lane.b32.xlu0 %v8099, 64
      %v8514 = vpop.permute.xlu0 %8513
      %8515 = vrot.lane.b32.xlu0 %v8100, 64
      %v8516 = vpop.permute.xlu0 %8515
      %8581 = vrot.lane.b32.xlu0 %v8101, 96
      %v8582 = vpop.permute.xlu0 %8581
      %8583 = vrot.lane.b32.xlu0 %v8102, 96
      %v8584 = vpop.permute.xlu0 %8583
      %8585 = vrot.lane.b32.xlu0 %v8103, 96
      %v8586 = vpop.permute.xlu0 %8585
      %8587 = vrot.lane.b32.xlu0 %v8104, 96
      %v8588 = vpop.permute.xlu0 %8587
      %8589 = vrot.lane.b32.xlu0 %v8105, 96
      %v8590 = vpop.permute.xlu0 %8589
      %8591 = vrot.lane.b32.xlu0 %v8106, 96
      %v8592 = vpop.permute.xlu0 %8591
      %8593 = vrot.lane.b32.xlu0 %v8107, 96
      %v8594 = vpop.permute.xlu0 %8593
      %8595 = vrot.lane.b32.xlu0 %v8108, 96
      %v8596 = vpop.permute.xlu0 %8595
      %8597 = vrot.lane.b32.xlu0 %v8109, 96
      %v8598 = vpop.permute.xlu0 %8597
      %8599 = vrot.lane.b32.xlu0 %v8110, 96
      %v8600 = vpop.permute.xlu0 %8599
      %8601 = vrot.lane.b32.xlu0 %v8111, 96
      %v8602 = vpop.permute.xlu0 %8601
      %8603 = vrot.lane.b32.xlu0 %v8112, 96
      %v8604 = vpop.permute.xlu0 %8603
      %8605 = vrot.lane.b32.xlu0 %v8113, 96
      %v8606 = vpop.permute.xlu0 %8605
      %8607 = vrot.lane.b32.xlu0 %v8114, 96
      %v8608 = vpop.permute.xlu0 %8607
      %8609 = vrot.lane.b32.xlu0 %v8115, 96
      %v8610 = vpop.permute.xlu0 %8609
      %8611 = vrot.lane.b32.xlu0 %v8116, 96
      %v8612 = vpop.permute.xlu0 %8611
      %8613 = vrot.lane.b32.xlu0 %v8117, 96
      %v8614 = vpop.permute.xlu0 %8613
      %8615 = vrot.lane.b32.xlu0 %v8118, 96
      %v8616 = vpop.permute.xlu0 %8615
      %8617 = vrot.lane.b32.xlu0 %v8119, 96
      %v8618 = vpop.permute.xlu0 %8617
      %8619 = vrot.lane.b32.xlu0 %v8120, 96
      %v8620 = vpop.permute.xlu0 %8619
      %8621 = vrot.lane.b32.xlu0 %v8121, 96
      %v8622 = vpop.permute.xlu0 %8621
      %8623 = vrot.lane.b32.xlu0 %v8122, 96
      %v8624 = vpop.permute.xlu0 %8623
      %8625 = vrot.lane.b32.xlu0 %v8123, 96
      %v8626 = vpop.permute.xlu0 %8625
      %8627 = vrot.lane.b32.xlu0 %v8124, 96
      %v8628 = vpop.permute.xlu0 %8627
      %8629 = vrot.lane.b32.xlu0 %v8125, 96
      %v8630 = vpop.permute.xlu0 %8629
      %8631 = vrot.lane.b32.xlu0 %v8126, 96
      %v8632 = vpop.permute.xlu0 %8631
      %8633 = vrot.lane.b32.xlu0 %v8127, 96
      %v8634 = vpop.permute.xlu0 %8633
      %8635 = vrot.lane.b32.xlu0 %v8128, 96
      %v8636 = vpop.permute.xlu0 %8635
      %8637 = vrot.lane.b32.xlu0 %v8129, 96
      %v8638 = vpop.permute.xlu0 %8637
      %8639 = vrot.lane.b32.xlu0 %v8130, 96
      %v8640 = vpop.permute.xlu0 %8639
      %8641 = vrot.lane.b32.xlu0 %v8131, 96
      %v8642 = vpop.permute.xlu0 %8641
      %8643 = vrot.lane.b32.xlu0 %v8132, 96
      %v8644 = vpop.permute.xlu0 %8643
      %8709 = vrot.lane.b32.xlu0 %v8165, 32
      %v8710 = vpop.permute.xlu0 %8709
      %8711 = vrot.lane.b32.xlu0 %v8166, 32
      %v8712 = vpop.permute.xlu0 %8711
      %8713 = vrot.lane.b32.xlu0 %v8167, 32
      %v8714 = vpop.permute.xlu0 %8713
      %8715 = vrot.lane.b32.xlu0 %v8168, 32
      %v8716 = vpop.permute.xlu0 %8715
      %8717 = vrot.lane.b32.xlu0 %v8169, 32
      %v8718 = vpop.permute.xlu0 %8717
      %8719 = vrot.lane.b32.xlu0 %v8170, 32
      %v8720 = vpop.permute.xlu0 %8719
      %8721 = vrot.lane.b32.xlu0 %v8171, 32
      %v8722 = vpop.permute.xlu0 %8721
      %8723 = vrot.lane.b32.xlu0 %v8172, 32
      %v8724 = vpop.permute.xlu0 %8723
      %8725 = vrot.lane.b32.xlu0 %v8173, 32
      %v8726 = vpop.permute.xlu0 %8725
      %8727 = vrot.lane.b32.xlu0 %v8174, 32
      %v8728 = vpop.permute.xlu0 %8727
      %8729 = vrot.lane.b32.xlu0 %v8175, 32
      %v8730 = vpop.permute.xlu0 %8729
      %8731 = vrot.lane.b32.xlu0 %v8176, 32
      %v8732 = vpop.permute.xlu0 %8731
      %8733 = vrot.lane.b32.xlu0 %v8177, 32
      %v8734 = vpop.permute.xlu0 %8733
      %8735 = vrot.lane.b32.xlu0 %v8178, 32
      %v8736 = vpop.permute.xlu0 %8735
      %8737 = vrot.lane.b32.xlu0 %v8179, 32
      %v8738 = vpop.permute.xlu0 %8737
      %8739 = vrot.lane.b32.xlu0 %v8180, 32
      %v8740 = vpop.permute.xlu0 %8739
      %8741 = vrot.lane.b32.xlu0 %v8181, 32
      %v8742 = vpop.permute.xlu0 %8741
      %8743 = vrot.lane.b32.xlu0 %v8182, 32
      %v8744 = vpop.permute.xlu0 %8743
      %8745 = vrot.lane.b32.xlu0 %v8183, 32
      %v8746 = vpop.permute.xlu0 %8745
      %8747 = vrot.lane.b32.xlu0 %v8184, 32
      %v8748 = vpop.permute.xlu0 %8747
      %8749 = vrot.lane.b32.xlu0 %v8185, 32
      %v8750 = vpop.permute.xlu0 %8749
      %8751 = vrot.lane.b32.xlu0 %v8186, 32
      %v8752 = vpop.permute.xlu0 %8751
      %8753 = vrot.lane.b32.xlu0 %v8187, 32
      %v8754 = vpop.permute.xlu0 %8753
      %8755 = vrot.lane.b32.xlu0 %v8188, 32
      %v8756 = vpop.permute.xlu0 %8755
      %8757 = vrot.lane.b32.xlu0 %v8189, 32
      %v8758 = vpop.permute.xlu0 %8757
      %8759 = vrot.lane.b32.xlu0 %v8190, 32
      %v8760 = vpop.permute.xlu0 %8759
      %8761 = vrot.lane.b32.xlu0 %v8191, 32
      %v8762 = vpop.permute.xlu0 %8761
      %8763 = vrot.lane.b32.xlu0 %v8192, 32
      %v8764 = vpop.permute.xlu0 %8763
      %8765 = vrot.lane.b32.xlu0 %v8193, 32
      %v8766 = vpop.permute.xlu0 %8765
      %8767 = vrot.lane.b32.xlu0 %v8194, 32
      %v8768 = vpop.permute.xlu0 %8767
      %8769 = vrot.lane.b32.xlu0 %v8195, 32
      %v8770 = vpop.permute.xlu0 %8769
      %8771 = vrot.lane.b32.xlu0 %v8196, 32
      %v8772 = vpop.permute.xlu0 %8771
      %8837 = vrot.lane.b32.xlu0 %v8197, 64
      %v8838 = vpop.permute.xlu0 %8837
      %8839 = vrot.lane.b32.xlu0 %v8198, 64
      %v8840 = vpop.permute.xlu0 %8839
      %8841 = vrot.lane.b32.xlu0 %v8199, 64
      %v8842 = vpop.permute.xlu0 %8841
      %8843 = vrot.lane.b32.xlu0 %v8200, 64
      %v8844 = vpop.permute.xlu0 %8843
      %8845 = vrot.lane.b32.xlu0 %v8201, 64
      %v8846 = vpop.permute.xlu0 %8845
      %8847 = vrot.lane.b32.xlu0 %v8202, 64
      %v8848 = vpop.permute.xlu0 %8847
      %8849 = vrot.lane.b32.xlu0 %v8203, 64
      %v8850 = vpop.permute.xlu0 %8849
      %8851 = vrot.lane.b32.xlu0 %v8204, 64
      %v8852 = vpop.permute.xlu0 %8851
      %8853 = vrot.lane.b32.xlu0 %v8205, 64
      %v8854 = vpop.permute.xlu0 %8853
      %8855 = vrot.lane.b32.xlu0 %v8206, 64
      %v8856 = vpop.permute.xlu0 %8855
      %8857 = vrot.lane.b32.xlu0 %v8207, 64
      %v8858 = vpop.permute.xlu0 %8857
      %8859 = vrot.lane.b32.xlu0 %v8208, 64
      %v8860 = vpop.permute.xlu0 %8859
      %8861 = vrot.lane.b32.xlu0 %v8209, 64
      %v8862 = vpop.permute.xlu0 %8861
      %8863 = vrot.lane.b32.xlu0 %v8210, 64
      %v8864 = vpop.permute.xlu0 %8863
      %8865 = vrot.lane.b32.xlu0 %v8211, 64
      %v8866 = vpop.permute.xlu0 %8865
      %8867 = vrot.lane.b32.xlu0 %v8212, 64
      %v8868 = vpop.permute.xlu0 %8867
      %8869 = vrot.lane.b32.xlu0 %v8213, 64
      %v8870 = vpop.permute.xlu0 %8869
      %8871 = vrot.lane.b32.xlu0 %v8214, 64
      %v8872 = vpop.permute.xlu0 %8871
      %8873 = vrot.lane.b32.xlu0 %v8215, 64
      %v8874 = vpop.permute.xlu0 %8873
      %8875 = vrot.lane.b32.xlu0 %v8216, 64
      %v8876 = vpop.permute.xlu0 %8875
      %8877 = vrot.lane.b32.xlu0 %v8217, 64
      %v8878 = vpop.permute.xlu0 %8877
      %8879 = vrot.lane.b32.xlu0 %v8218, 64
      %v8880 = vpop.permute.xlu0 %8879
      %8881 = vrot.lane.b32.xlu0 %v8219, 64
      %v8882 = vpop.permute.xlu0 %8881
      %8883 = vrot.lane.b32.xlu0 %v8220, 64
      %v8884 = vpop.permute.xlu0 %8883
      %8885 = vrot.lane.b32.xlu0 %v8221, 64
      %v8886 = vpop.permute.xlu0 %8885
      %8887 = vrot.lane.b32.xlu0 %v8222, 64
      %v8888 = vpop.permute.xlu0 %8887
      %8889 = vrot.lane.b32.xlu0 %v8223, 64
      %v8890 = vpop.permute.xlu0 %8889
      %8891 = vrot.lane.b32.xlu0 %v8224, 64
      %v8892 = vpop.permute.xlu0 %8891
      %8893 = vrot.lane.b32.xlu0 %v8225, 64
      %v8894 = vpop.permute.xlu0 %8893
      %8895 = vrot.lane.b32.xlu0 %v8226, 64
      %v8896 = vpop.permute.xlu0 %8895
      %8897 = vrot.lane.b32.xlu0 %v8227, 64
      %v8898 = vpop.permute.xlu0 %8897
      %8899 = vrot.lane.b32.xlu0 %v8228, 64
      %v8900 = vpop.permute.xlu0 %8899
      %8965 = vrot.lane.b32.xlu0 %v8229, 96
      %v8966 = vpop.permute.xlu0 %8965
      %8967 = vrot.lane.b32.xlu0 %v8230, 96
      %v8968 = vpop.permute.xlu0 %8967
      %8969 = vrot.lane.b32.xlu0 %v8231, 96
      %v8970 = vpop.permute.xlu0 %8969
      %8971 = vrot.lane.b32.xlu0 %v8232, 96
      %v8972 = vpop.permute.xlu0 %8971
      %8973 = vrot.lane.b32.xlu0 %v8233, 96
      %v8974 = vpop.permute.xlu0 %8973
      %8975 = vrot.lane.b32.xlu0 %v8234, 96
      %v8976 = vpop.permute.xlu0 %8975
      %8977 = vrot.lane.b32.xlu0 %v8235, 96
      %v8978 = vpop.permute.xlu0 %8977
      %8979 = vrot.lane.b32.xlu0 %v8236, 96
      %v8980 = vpop.permute.xlu0 %8979
      %8981 = vrot.lane.b32.xlu0 %v8237, 96
      %v8982 = vpop.permute.xlu0 %8981
      %8983 = vrot.lane.b32.xlu0 %v8238, 96
      %v8984 = vpop.permute.xlu0 %8983
      %8985 = vrot.lane.b32.xlu0 %v8239, 96
      %v8986 = vpop.permute.xlu0 %8985
      %8987 = vrot.lane.b32.xlu0 %v8240, 96
      %v8988 = vpop.permute.xlu0 %8987
      %8989 = vrot.lane.b32.xlu0 %v8241, 96
      %v8990 = vpop.permute.xlu0 %8989
      %8991 = vrot.lane.b32.xlu0 %v8242, 96
      %v8992 = vpop.permute.xlu0 %8991
      %8993 = vrot.lane.b32.xlu0 %v8243, 96
      %v8994 = vpop.permute.xlu0 %8993
      %8995 = vrot.lane.b32.xlu0 %v8244, 96
      %v8996 = vpop.permute.xlu0 %8995
      %8997 = vrot.lane.b32.xlu0 %v8245, 96
      %v8998 = vpop.permute.xlu0 %8997
      %8999 = vrot.lane.b32.xlu0 %v8246, 96
      %v9000 = vpop.permute.xlu0 %8999
      %9001 = vrot.lane.b32.xlu0 %v8247, 96
      %v9002 = vpop.permute.xlu0 %9001
      %9003 = vrot.lane.b32.xlu0 %v8248, 96
      %v9004 = vpop.permute.xlu0 %9003
      %9005 = vrot.lane.b32.xlu0 %v8249, 96
      %v9006 = vpop.permute.xlu0 %9005
      %9007 = vrot.lane.b32.xlu0 %v8250, 96
      %v9008 = vpop.permute.xlu0 %9007
      %9009 = vrot.lane.b32.xlu0 %v8251, 96
      %v9010 = vpop.permute.xlu0 %9009
      %9011 = vrot.lane.b32.xlu0 %v8252, 96
      %v9012 = vpop.permute.xlu0 %9011
      %9013 = vrot.lane.b32.xlu0 %v8253, 96
      %v9014 = vpop.permute.xlu0 %9013
      %9015 = vrot.lane.b32.xlu0 %v8254, 96
      %v9016 = vpop.permute.xlu0 %9015
      %9017 = vrot.lane.b32.xlu0 %v8255, 96
      %v9018 = vpop.permute.xlu0 %9017
      %9019 = vrot.lane.b32.xlu0 %v8256, 96
      %v9020 = vpop.permute.xlu0 %9019
      %9021 = vrot.lane.b32.xlu0 %v8257, 96
      %v9022 = vpop.permute.xlu0 %9021
      %9023 = vrot.lane.b32.xlu0 %v8258, 96
      %v9024 = vpop.permute.xlu0 %9023
      %9025 = vrot.lane.b32.xlu0 %v8259, 96
      %v9026 = vpop.permute.xlu0 %9025
      %9027 = vrot.lane.b32.xlu0 %v8260, 96
      %v9028 = vpop.permute.xlu0 %9027
      %v9061 = vsel %vm309, %v8005, %v8326
      %v9062 = vsel %vm309, %v8006, %v8328
      %v9063 = vsel %vm309, %v8007, %v8330
      %v9064 = vsel %vm309, %v8008, %v8332
      %v9065 = vsel %vm309, %v8009, %v8334
      %v9066 = vsel %vm309, %v8010, %v8336
      %v9067 = vsel %vm309, %v8011, %v8338
      %v9068 = vsel %vm309, %v8012, %v8340
      %v9069 = vsel %vm309, %v8013, %v8342
      %v9070 = vsel %vm309, %v8014, %v8344
      %v9071 = vsel %vm309, %v8015, %v8346
      %v9072 = vsel %vm309, %v8016, %v8348
      %v9073 = vsel %vm309, %v8017, %v8350
      %v9074 = vsel %vm309, %v8018, %v8352
      %v9075 = vsel %vm309, %v8019, %v8354
      %v9076 = vsel %vm309, %v8020, %v8356
      %v9077 = vsel %vm309, %v8021, %v8358
      %v9078 = vsel %vm309, %v8022, %v8360
      %v9079 = vsel %vm309, %v8023, %v8362
      %v9080 = vsel %vm309, %v8024, %v8364
      %v9081 = vsel %vm309, %v8025, %v8366
      %v9082 = vsel %vm309, %v8026, %v8368
      %v9083 = vsel %vm309, %v8027, %v8370
      %v9084 = vsel %vm309, %v8028, %v8372
      %v9085 = vsel %vm309, %v8029, %v8374
      %v9086 = vsel %vm309, %v8030, %v8376
      %v9087 = vsel %vm309, %v8031, %v8378
      %v9088 = vsel %vm309, %v8032, %v8380
      %v9089 = vsel %vm309, %v8033, %v8382
      %v9090 = vsel %vm309, %v8034, %v8384
      %v9091 = vsel %vm309, %v8035, %v8386
      %v9092 = vsel %vm309, %v8036, %v8388
      %v9093 = vsel %vm3451, %v9061, %v8454
      %v9094 = vsel %vm3451, %v9062, %v8456
      %v9095 = vsel %vm3451, %v9063, %v8458
      %v9096 = vsel %vm3451, %v9064, %v8460
      %v9097 = vsel %vm3451, %v9065, %v8462
      %v9098 = vsel %vm3451, %v9066, %v8464
      %v9099 = vsel %vm3451, %v9067, %v8466
      %v9100 = vsel %vm3451, %v9068, %v8468
      %v9101 = vsel %vm3451, %v9069, %v8470
      %v9102 = vsel %vm3451, %v9070, %v8472
      %v9103 = vsel %vm3451, %v9071, %v8474
      %v9104 = vsel %vm3451, %v9072, %v8476
      %v9105 = vsel %vm3451, %v9073, %v8478
      %v9106 = vsel %vm3451, %v9074, %v8480
      %v9107 = vsel %vm3451, %v9075, %v8482
      %v9108 = vsel %vm3451, %v9076, %v8484
      %v9109 = vsel %vm3451, %v9077, %v8486
      %v9110 = vsel %vm3451, %v9078, %v8488
      %v9111 = vsel %vm3451, %v9079, %v8490
      %v9112 = vsel %vm3451, %v9080, %v8492
      %v9113 = vsel %vm3451, %v9081, %v8494
      %v9114 = vsel %vm3451, %v9082, %v8496
      %v9115 = vsel %vm3451, %v9083, %v8498
      %v9116 = vsel %vm3451, %v9084, %v8500
      %v9117 = vsel %vm3451, %v9085, %v8502
      %v9118 = vsel %vm3451, %v9086, %v8504
      %v9119 = vsel %vm3451, %v9087, %v8506
      %v9120 = vsel %vm3451, %v9088, %v8508
      %v9121 = vsel %vm3451, %v9089, %v8510
      %v9122 = vsel %vm3451, %v9090, %v8512
      %v9123 = vsel %vm3451, %v9091, %v8514
      %v9124 = vsel %vm3451, %v9092, %v8516
      %v9125 = vsel %vm3484, %v9093, %v8582
      %v9126 = vsel %vm3484, %v9094, %v8584
      %v9127 = vsel %vm3484, %v9095, %v8586
      %v9128 = vsel %vm3484, %v9096, %v8588
      %v9129 = vsel %vm3484, %v9097, %v8590
      %v9130 = vsel %vm3484, %v9098, %v8592
      %v9131 = vsel %vm3484, %v9099, %v8594
      %v9132 = vsel %vm3484, %v9100, %v8596
      %v9133 = vsel %vm3484, %v9101, %v8598
      %v9134 = vsel %vm3484, %v9102, %v8600
      %v9135 = vsel %vm3484, %v9103, %v8602
      %v9136 = vsel %vm3484, %v9104, %v8604
      %v9137 = vsel %vm3484, %v9105, %v8606
      %v9138 = vsel %vm3484, %v9106, %v8608
      %v9139 = vsel %vm3484, %v9107, %v8610
      %v9140 = vsel %vm3484, %v9108, %v8612
      %v9141 = vsel %vm3484, %v9109, %v8614
      %v9142 = vsel %vm3484, %v9110, %v8616
      %v9143 = vsel %vm3484, %v9111, %v8618
      %v9144 = vsel %vm3484, %v9112, %v8620
      %v9145 = vsel %vm3484, %v9113, %v8622
      %v9146 = vsel %vm3484, %v9114, %v8624
      %v9147 = vsel %vm3484, %v9115, %v8626
      %v9148 = vsel %vm3484, %v9116, %v8628
      %v9149 = vsel %vm3484, %v9117, %v8630
      %v9150 = vsel %vm3484, %v9118, %v8632
      %v9151 = vsel %vm3484, %v9119, %v8634
      %v9152 = vsel %vm3484, %v9120, %v8636
      %v9153 = vsel %vm3484, %v9121, %v8638
      %v9154 = vsel %vm3484, %v9122, %v8640
      %v9155 = vsel %vm3484, %v9123, %v8642
      %v9156 = vsel %vm3484, %v9124, %v8644
      %v9157 = vsel %vm309, %v8133, %v8710
      %v9158 = vsel %vm309, %v8134, %v8712
      %v9159 = vsel %vm309, %v8135, %v8714
      %v9160 = vsel %vm309, %v8136, %v8716
      %v9161 = vsel %vm309, %v8137, %v8718
      %v9162 = vsel %vm309, %v8138, %v8720
      %v9163 = vsel %vm309, %v8139, %v8722
      %v9164 = vsel %vm309, %v8140, %v8724
      %v9165 = vsel %vm309, %v8141, %v8726
      %v9166 = vsel %vm309, %v8142, %v8728
      %v9167 = vsel %vm309, %v8143, %v8730
      %v9168 = vsel %vm309, %v8144, %v8732
      %v9169 = vsel %vm309, %v8145, %v8734
      %v9170 = vsel %vm309, %v8146, %v8736
      %v9171 = vsel %vm309, %v8147, %v8738
      %v9172 = vsel %vm309, %v8148, %v8740
      %v9173 = vsel %vm309, %v8149, %v8742
      %v9174 = vsel %vm309, %v8150, %v8744
      %v9175 = vsel %vm309, %v8151, %v8746
      %v9176 = vsel %vm309, %v8152, %v8748
      %v9177 = vsel %vm309, %v8153, %v8750
      %v9178 = vsel %vm309, %v8154, %v8752
      %v9179 = vsel %vm309, %v8155, %v8754
      %v9180 = vsel %vm309, %v8156, %v8756
      %v9181 = vsel %vm309, %v8157, %v8758
      %v9182 = vsel %vm309, %v8158, %v8760
      %v9183 = vsel %vm309, %v8159, %v8762
      %v9184 = vsel %vm309, %v8160, %v8764
      %v9185 = vsel %vm309, %v8161, %v8766
      %v9186 = vsel %vm309, %v8162, %v8768
      %v9187 = vsel %vm309, %v8163, %v8770
      %v9188 = vsel %vm309, %v8164, %v8772
      %v9189 = vsel %vm3451, %v9157, %v8838
      %v9190 = vsel %vm3451, %v9158, %v8840
      %v9191 = vsel %vm3451, %v9159, %v8842
      %v9192 = vsel %vm3451, %v9160, %v8844
      %v9193 = vsel %vm3451, %v9161, %v8846
      %v9194 = vsel %vm3451, %v9162, %v8848
      %v9195 = vsel %vm3451, %v9163, %v8850
      %v9196 = vsel %vm3451, %v9164, %v8852
      %v9197 = vsel %vm3451, %v9165, %v8854
      %v9198 = vsel %vm3451, %v9166, %v8856
      %v9199 = vsel %vm3451, %v9167, %v8858
      %v9200 = vsel %vm3451, %v9168, %v8860
      %v9201 = vsel %vm3451, %v9169, %v8862
      %v9202 = vsel %vm3451, %v9170, %v8864
      %v9203 = vsel %vm3451, %v9171, %v8866
      %v9204 = vsel %vm3451, %v9172, %v8868
      %v9205 = vsel %vm3451, %v9173, %v8870
      %v9206 = vsel %vm3451, %v9174, %v8872
      %v9207 = vsel %vm3451, %v9175, %v8874
      %v9208 = vsel %vm3451, %v9176, %v8876
      %v9209 = vsel %vm3451, %v9177, %v8878
      %v9210 = vsel %vm3451, %v9178, %v8880
      %v9211 = vsel %vm3451, %v9179, %v8882
      %v9212 = vsel %vm3451, %v9180, %v8884
      %v9213 = vsel %vm3451, %v9181, %v8886
      %v9214 = vsel %vm3451, %v9182, %v8888
      %v9215 = vsel %vm3451, %v9183, %v8890
      %v9216 = vsel %vm3451, %v9184, %v8892
      %v9217 = vsel %vm3451, %v9185, %v8894
      %v9218 = vsel %vm3451, %v9186, %v8896
      %v9219 = vsel %vm3451, %v9187, %v8898
      %v9220 = vsel %vm3451, %v9188, %v8900
      %v9221 = vsel %vm3484, %v9189, %v8966
      %v9222 = vsel %vm3484, %v9190, %v8968
      %v9223 = vsel %vm3484, %v9191, %v8970
      %v9224 = vsel %vm3484, %v9192, %v8972
      %v9225 = vsel %vm3484, %v9193, %v8974
      %v9226 = vsel %vm3484, %v9194, %v8976
      %v9227 = vsel %vm3484, %v9195, %v8978
      %v9228 = vsel %vm3484, %v9196, %v8980
      %v9229 = vsel %vm3484, %v9197, %v8982
      %v9230 = vsel %vm3484, %v9198, %v8984
      %v9231 = vsel %vm3484, %v9199, %v8986
      %v9232 = vsel %vm3484, %v9200, %v8988
      %v9233 = vsel %vm3484, %v9201, %v8990
      %v9234 = vsel %vm3484, %v9202, %v8992
      %v9235 = vsel %vm3484, %v9203, %v8994
      %v9236 = vsel %vm3484, %v9204, %v8996
      %v9237 = vsel %vm3484, %v9205, %v8998
      %v9238 = vsel %vm3484, %v9206, %v9000
      %v9239 = vsel %vm3484, %v9207, %v9002
      %v9240 = vsel %vm3484, %v9208, %v9004
      %v9241 = vsel %vm3484, %v9209, %v9006
      %v9242 = vsel %vm3484, %v9210, %v9008
      %v9243 = vsel %vm3484, %v9211, %v9010
      %v9244 = vsel %vm3484, %v9212, %v9012
      %v9245 = vsel %vm3484, %v9213, %v9014
      %v9246 = vsel %vm3484, %v9214, %v9016
      %v9247 = vsel %vm3484, %v9215, %v9018
      %v9248 = vsel %vm3484, %v9216, %v9020
      %v9249 = vsel %vm3484, %v9217, %v9022
      %v9250 = vsel %vm3484, %v9218, %v9024
      %v9251 = vsel %vm3484, %v9219, %v9026
      %v9252 = vsel %vm3484, %v9220, %v9028
      %v9253 = vpack.c.bf16 %v9126, %v9125
      %v9254 = vpack.c.bf16 %v9222, %v9221
      %v9255 = vpack.c.bf16 %v8262, %v8261
      %v9256 = vpack.c.bf16 %v9128, %v9127
      %v9257 = vpack.c.bf16 %v9224, %v9223
      %v9258 = vpack.c.bf16 %v8264, %v8263
      %v9259 = vpack.c.bf16 %v9130, %v9129
      %v9260 = vpack.c.bf16 %v9226, %v9225
      %v9261 = vpack.c.bf16 %v8266, %v8265
      %v9262 = vpack.c.bf16 %v9132, %v9131
      %v9263 = vpack.c.bf16 %v9228, %v9227
      %v9264 = vpack.c.bf16 %v8268, %v8267
      %v9265 = vpack.c.bf16 %v9134, %v9133
      %v9266 = vpack.c.bf16 %v9230, %v9229
      %v9267 = vpack.c.bf16 %v8270, %v8269
      %v9268 = vpack.c.bf16 %v9136, %v9135
      %v9269 = vpack.c.bf16 %v9232, %v9231
      %v9270 = vpack.c.bf16 %v8272, %v8271
      %v9271 = vpack.c.bf16 %v9138, %v9137
      %v9272 = vpack.c.bf16 %v9234, %v9233
      %v9273 = vpack.c.bf16 %v8274, %v8273
      %v9274 = vpack.c.bf16 %v9140, %v9139
      %v9275 = vpack.c.bf16 %v9236, %v9235
      %v9276 = vpack.c.bf16 %v8276, %v8275
      %v9277 = vpack.c.bf16 %v9142, %v9141
      %v9278 = vpack.c.bf16 %v9238, %v9237
      %v9279 = vpack.c.bf16 %v8278, %v8277
      %v9280 = vpack.c.bf16 %v9144, %v9143
      %v9281 = vpack.c.bf16 %v9240, %v9239
      %v9282 = vpack.c.bf16 %v8280, %v8279
      %v9283 = vpack.c.bf16 %v9146, %v9145
      %v9284 = vpack.c.bf16 %v9242, %v9241
      %v9285 = vpack.c.bf16 %v8282, %v8281
      %v9286 = vpack.c.bf16 %v9148, %v9147
      %v9287 = vpack.c.bf16 %v9244, %v9243
      %v9288 = vpack.c.bf16 %v8284, %v8283
      %v9289 = vpack.c.bf16 %v9150, %v9149
      %v9290 = vpack.c.bf16 %v9246, %v9245
      %v9291 = vpack.c.bf16 %v8286, %v8285
      %v9292 = vpack.c.bf16 %v9152, %v9151
      %v9293 = vpack.c.bf16 %v9248, %v9247
      %v9294 = vpack.c.bf16 %v8288, %v8287
      %v9295 = vpack.c.bf16 %v9154, %v9153
      %v9296 = vpack.c.bf16 %v9250, %v9249
      %v9297 = vpack.c.bf16 %v8290, %v8289
      %v9298 = vpack.c.bf16 %v9156, %v9155
      %v9299 = vpack.c.bf16 %v9252, %v9251
      %v9300 = vpack.c.bf16 %v8292, %v8291
      %v9301 = vlaneseq
      %v9302 = vshrl.u32 %v9301, 7
      %v9303 = vsub.s32 0, %v9302
      %v9304 = vrot.slane %v8004, %v9303
      %v9341 = vunpack.c.l.b16 %v7968
      %v9342 = vunpack.c.l.b16 %v7969
      %v9343 = vunpack.c.l.b16 %v7970
      %v9344 = vunpack.c.l.b16 %v7971
      %v9345 = vunpack.c.l.b16 %v7972
      %v9346 = vunpack.c.l.b16 %v7973
      %v9347 = vunpack.c.l.b16 %v7974
      %v9348 = vunpack.c.l.b16 %v7975
      %v9349 = vunpack.c.l.b16 %v7976
      %v9350 = vunpack.c.l.b16 %v7977
      %v9351 = vunpack.c.l.b16 %v7978
      %v9352 = vunpack.c.l.b16 %v7979
      %v9353 = vunpack.c.l.b16 %v7980
      %v9354 = vunpack.c.l.b16 %v7981
      %v9355 = vunpack.c.l.b16 %v7982
      %v9356 = vunpack.c.l.b16 %v7983
      %v9357 = vunpack.c.l.b16 %v7984
      %v9358 = vunpack.c.l.b16 %v7985
      %v9359 = vunpack.c.l.b16 %v7986
      %v9360 = vunpack.c.l.b16 %v7987
      %v9361 = vunpack.c.l.b16 %v7988
      %v9362 = vunpack.c.l.b16 %v7989
      %v9363 = vunpack.c.l.b16 %v7990
      %v9364 = vunpack.c.l.b16 %v7991
      %v9365 = vunpack.c.l.b16 %v7992
      %v9366 = vunpack.c.l.b16 %v7993
      %v9367 = vunpack.c.l.b16 %v7994
      %v9368 = vunpack.c.l.b16 %v7995
      %v9369 = vunpack.c.l.b16 %v7996
      %v9370 = vunpack.c.l.b16 %v7997
      %v9371 = vunpack.c.l.b16 %v7998
      %v9372 = vunpack.c.l.b16 %v7999
      %v9373 = vunpack.c.l.b16 %v8000
      %v9374 = vunpack.c.l.b16 %v8001
      %v9375 = vunpack.c.l.b16 %v8002
      %v9376 = vunpack.c.l.b16 %v8003
      %v9377 = vpack.c.b16 %v9342, %v9341
      %v9378 = vpack.c.b16 %v9344, %v9343
      %v9379 = vpack.c.b16 %v9346, %v9345
      %v9380 = vpack.c.b16 %v9348, %v9347
      %v9381 = vpack.c.b16 %v9350, %v9349
      %v9382 = vpack.c.b16 %v9352, %v9351
      %v9383 = vpack.c.b16 %v9354, %v9353
      %v9384 = vpack.c.b16 %v9356, %v9355
      %v9385 = vpack.c.b16 %v9358, %v9357
      %v9386 = vpack.c.b16 %v9360, %v9359
      %v9387 = vpack.c.b16 %v9362, %v9361
      %v9388 = vpack.c.b16 %v9364, %v9363
      %v9389 = vpack.c.b16 %v9366, %v9365
      %v9390 = vpack.c.b16 %v9368, %v9367
      %v9391 = vpack.c.b16 %v9370, %v9369
      %v9392 = vpack.c.b16 %v9372, %v9371
      %v9393 = vpack.c.b16 %v9374, %v9373
      %v9394 = vpack.c.b16 %v9376, %v9375
      %v9414 = vsel %vm309, %v9255, 0
      %v9417 = vsel %vm309, %v9258, 0
      %v9420 = vsel %vm309, %v9261, 0
      %v9423 = vsel %vm309, %v9264, 0
      %v9426 = vsel %vm309, %v9267, 0
      %v9429 = vsel %vm309, %v9270, 0
      %v9432 = vsel %vm309, %v9273, 0
      %v9435 = vsel %vm309, %v9276, 0
      %v9438 = vsel %vm309, %v9279, 0
      %v9441 = vsel %vm309, %v9282, 0
      %v9444 = vsel %vm309, %v9285, 0
      %v9447 = vsel %vm309, %v9288, 0
      %v9450 = vsel %vm309, %v9291, 0
      %v9453 = vsel %vm309, %v9294, 0
      %v9456 = vsel %vm309, %v9297, 0
      %v9459 = vsel %vm309, %v9300, 0
      %9461 = vmatprep.subr.bf16.mxu0 0
      %9462 = vmatpush1.bf16.msra.mxu0 %v9384
      %9463 = vmatprep.subr.bf16.mxu0 0
      %9464 = vmatpush1.bf16.msra.mxu0 %v9383
      %9465 = vmatprep.subr.bf16.mxu0 0
      %9466 = vmatpush1.bf16.msra.mxu0 %v9382
      %9467 = vmatprep.subr.bf16.mxu0 0
      %9468 = vmatpush1.bf16.msra.mxu0 %v9381
      %9469 = vmatprep.subr.bf16.mxu0 0
      %9470 = vmatpush1.bf16.msra.mxu0 %v9380
      %9471 = vmatprep.subr.bf16.mxu0 0
      %9472 = vmatpush1.bf16.msra.mxu0 %v9379
      %9473 = vmatprep.subr.bf16.mxu0 0
      %9474 = vmatpush1.bf16.msra.mxu0 %v9378
      %9475 = vmatprep.subr.bf16.mxu0 0
      %9476 = vmatpush1.bf16.msra.mxu0 %v9377
      %9477 = vmatprep.subr.bf16.mxu0 0
      %9478 = vmatpush2.bf16.msra.mxu0 %v9392
      %9479 = vmatprep.subr.bf16.mxu0 0
      %9480 = vmatpush2.bf16.msra.mxu0 %v9391
      %9481 = vmatprep.subr.bf16.mxu0 0
      %9482 = vmatpush2.bf16.msra.mxu0 %v9390
      %9483 = vmatprep.subr.bf16.mxu0 0
      %9484 = vmatpush2.bf16.msra.mxu0 %v9389
      %9485 = vmatprep.subr.bf16.mxu0 0
      %9486 = vmatpush2.bf16.msra.mxu0 %v9388
      %9487 = vmatprep.subr.bf16.mxu0 0
      %9488 = vmatpush2.bf16.msra.mxu0 %v9387
      %9489 = vmatprep.subr.bf16.mxu0 0
      %9490 = vmatpush2.bf16.msra.mxu0 %v9386
      %9491 = vmatprep.subr.bf16.mxu0 0
      %9492 = vmatpush2.bf16.msra.mxu0 %v9385
      %9493 = vmatprep.mubr.bf16.mxu0 %v9254
      %9494 = vmatmul.mubr.bf16.gmra.mxu0 %v9253
      %v9495 = vpop.f32.mrf.mxu0
      %v9496 = vadd.f32 %v9304, %v9495
      %v9497 = vpop.f32.mrf.mxu0
      %v9498 = vpop.f32.mrf.mxu0
      %v9499 = vadd.f32 %v9304, %v9498
      %v9500 = vpop.f32.mrf.mxu0
      %9501 = vmatprep.mubr.bf16.mxu0 %v9257
      %9502 = vmatmul.mubr.bf16.gmra.mxu0 %v9256
      %v9503 = vpop.f32.mrf.mxu0
      %v9504 = vadd.f32 %v9304, %v9503
      %v9505 = vpop.f32.mrf.mxu0
      %v9506 = vpop.f32.mrf.mxu0
      %v9507 = vadd.f32 %v9304, %v9506
      %v9508 = vpop.f32.mrf.mxu0
      %9509 = vmatprep.mubr.bf16.mxu0 %v9260
      %9510 = vmatmul.mubr.bf16.gmra.mxu0 %v9259
      %v9511 = vpop.f32.mrf.mxu0
      %v9512 = vadd.f32 %v9304, %v9511
      %v9513 = vpop.f32.mrf.mxu0
      %v9514 = vpop.f32.mrf.mxu0
      %v9515 = vadd.f32 %v9304, %v9514
      %v9516 = vpop.f32.mrf.mxu0
      %9517 = vmatprep.mubr.bf16.mxu0 %v9263
      %9518 = vmatmul.mubr.bf16.gmra.mxu0 %v9262
      %v9519 = vpop.f32.mrf.mxu0
      %v9520 = vadd.f32 %v9304, %v9519
      %v9521 = vpop.f32.mrf.mxu0
      %v9522 = vpop.f32.mrf.mxu0
      %v9523 = vadd.f32 %v9304, %v9522
      %v9524 = vpop.f32.mrf.mxu0
      %9525 = vmatprep.mubr.bf16.mxu0 %v9266
      %9526 = vmatmul.mubr.bf16.gmra.mxu0 %v9265
      %v9527 = vpop.f32.mrf.mxu0
      %v9528 = vadd.f32 %v9304, %v9527
      %v9529 = vpop.f32.mrf.mxu0
      %v9530 = vpop.f32.mrf.mxu0
      %v9531 = vadd.f32 %v9304, %v9530
      %v9532 = vpop.f32.mrf.mxu0
      %9533 = vmatprep.mubr.bf16.mxu0 %v9269
      %9534 = vmatmul.mubr.bf16.gmra.mxu0 %v9268
      %v9535 = vpop.f32.mrf.mxu0
      %v9536 = vadd.f32 %v9304, %v9535
      %v9537 = vpop.f32.mrf.mxu0
      %v9538 = vpop.f32.mrf.mxu0
      %v9539 = vadd.f32 %v9304, %v9538
      %v9540 = vpop.f32.mrf.mxu0
      %9541 = vmatprep.mubr.bf16.mxu0 %v9272
      %9542 = vmatmul.mubr.bf16.gmra.mxu0 %v9271
      %v9543 = vpop.f32.mrf.mxu0
      %v9544 = vadd.f32 %v9304, %v9543
      %v9545 = vpop.f32.mrf.mxu0
      %v9546 = vpop.f32.mrf.mxu0
      %v9547 = vadd.f32 %v9304, %v9546
      %v9548 = vpop.f32.mrf.mxu0
      %9549 = vmatprep.mubr.bf16.mxu0 %v9275
      %9550 = vmatmul.mubr.bf16.gmra.mxu0 %v9274
      %v9551 = vpop.f32.mrf.mxu0
      %v9552 = vadd.f32 %v9304, %v9551
      %v9553 = vpop.f32.mrf.mxu0
      %v9554 = vpop.f32.mrf.mxu0
      %v9555 = vadd.f32 %v9304, %v9554
      %v9556 = vpop.f32.mrf.mxu0
      %9557 = vmatprep.mubr.bf16.mxu0 %v9278
      %9558 = vmatmul.mubr.bf16.gmra.mxu0 %v9277
      %v9559 = vpop.f32.mrf.mxu0
      %v9560 = vadd.f32 %v9304, %v9559
      %v9561 = vpop.f32.mrf.mxu0
      %v9562 = vpop.f32.mrf.mxu0
      %v9563 = vadd.f32 %v9304, %v9562
      %v9564 = vpop.f32.mrf.mxu0
      %9565 = vmatprep.mubr.bf16.mxu0 %v9281
      %9566 = vmatmul.mubr.bf16.gmra.mxu0 %v9280
      %v9567 = vpop.f32.mrf.mxu0
      %v9568 = vadd.f32 %v9304, %v9567
      %v9569 = vpop.f32.mrf.mxu0
      %v9570 = vpop.f32.mrf.mxu0
      %v9571 = vadd.f32 %v9304, %v9570
      %v9572 = vpop.f32.mrf.mxu0
      %9573 = vmatprep.mubr.bf16.mxu0 %v9284
      %9574 = vmatmul.mubr.bf16.gmra.mxu0 %v9283
      %v9575 = vpop.f32.mrf.mxu0
      %v9576 = vadd.f32 %v9304, %v9575
      %v9577 = vpop.f32.mrf.mxu0
      %v9578 = vpop.f32.mrf.mxu0
      %v9579 = vadd.f32 %v9304, %v9578
      %v9580 = vpop.f32.mrf.mxu0
      %9581 = vmatprep.mubr.bf16.mxu0 %v9287
      %9582 = vmatmul.mubr.bf16.gmra.mxu0 %v9286
      %v9583 = vpop.f32.mrf.mxu0
      %v9584 = vadd.f32 %v9304, %v9583
      %v9585 = vpop.f32.mrf.mxu0
      %v9586 = vpop.f32.mrf.mxu0
      %v9587 = vadd.f32 %v9304, %v9586
      %v9588 = vpop.f32.mrf.mxu0
      %9589 = vmatprep.mubr.bf16.mxu0 %v9290
      %9590 = vmatmul.mubr.bf16.gmra.mxu0 %v9289
      %v9591 = vpop.f32.mrf.mxu0
      %v9592 = vadd.f32 %v9304, %v9591
      %v9593 = vpop.f32.mrf.mxu0
      %v9594 = vpop.f32.mrf.mxu0
      %v9595 = vadd.f32 %v9304, %v9594
      %v9596 = vpop.f32.mrf.mxu0
      %9597 = vmatprep.mubr.bf16.mxu0 %v9293
      %9598 = vmatmul.mubr.bf16.gmra.mxu0 %v9292
      %v9599 = vpop.f32.mrf.mxu0
      %v9600 = vadd.f32 %v9304, %v9599
      %v9601 = vpop.f32.mrf.mxu0
      %v9602 = vpop.f32.mrf.mxu0
      %v9603 = vadd.f32 %v9304, %v9602
      %v9604 = vpop.f32.mrf.mxu0
      %9605 = vmatprep.mubr.bf16.mxu0 %v9296
      %9606 = vmatmul.mubr.bf16.gmra.mxu0 %v9295
      %v9607 = vpop.f32.mrf.mxu0
      %v9608 = vadd.f32 %v9304, %v9607
      %v9609 = vpop.f32.mrf.mxu0
      %v9610 = vpop.f32.mrf.mxu0
      %v9611 = vadd.f32 %v9304, %v9610
      %v9612 = vpop.f32.mrf.mxu0
      %9613 = vmatprep.mubr.bf16.mxu0 %v9299
      %9614 = vmatmul.mubr.bf16.gmra.mxu0 %v9298
      %v9615 = vpop.f32.mrf.mxu0
      %v9616 = vadd.f32 %v9304, %v9615
      %v9617 = vpop.f32.mrf.mxu0
      %v9618 = vpop.f32.mrf.mxu0
      %v9619 = vadd.f32 %v9304, %v9618
      %v9620 = vpop.f32.mrf.mxu0
      %9621 = vdwg.mxu0
      %9622 = vmatprep.subr.bf16.mxu0 0
      %9623 = vmatpush1.bf16.msra.mxu0 0
      %9624 = vmatprep.subr.bf16.mxu0 0
      %9625 = vmatpush1.bf16.msra.mxu0 0
      %9626 = vmatprep.subr.bf16.mxu0 0
      %9627 = vmatpush1.bf16.msra.mxu0 0
      %9628 = vmatprep.subr.bf16.mxu0 0
      %9629 = vmatpush1.bf16.msra.mxu0 0
      %9630 = vmatprep.subr.bf16.mxu0 0
      %9631 = vmatpush1.bf16.msra.mxu0 0
      %9632 = vmatprep.subr.bf16.mxu0 0
      %9633 = vmatpush1.bf16.msra.mxu0 0
      %9634 = vmatprep.subr.bf16.mxu0 0
      %9635 = vmatpush1.bf16.msra.mxu0 %v9394
      %9636 = vmatprep.subr.bf16.mxu0 0
      %9637 = vmatpush1.bf16.msra.mxu0 %v9393
      %9638 = vmatprep.subr.bf16.mxu0 0
      %9639 = vmatpush2.bf16.msra.mxu0 0
      %9640 = vmatprep.subr.bf16.mxu0 0
      %9641 = vmatpush2.bf16.msra.mxu0 0
      %9642 = vmatprep.subr.bf16.mxu0 0
      %9643 = vmatpush2.bf16.msra.mxu0 0
      %9644 = vmatprep.subr.bf16.mxu0 0
      %9645 = vmatpush2.bf16.msra.mxu0 0
      %9646 = vmatprep.subr.bf16.mxu0 0
      %9647 = vmatpush2.bf16.msra.mxu0 0
      %9648 = vmatprep.subr.bf16.mxu0 0
      %9649 = vmatpush2.bf16.msra.mxu0 0
      %9650 = vmatprep.subr.bf16.mxu0 0
      %9651 = vmatpush2.bf16.msra.mxu0 0
      %9652 = vmatprep.subr.bf16.mxu0 0
      %9653 = vmatpush2.bf16.msra.mxu0 0
      %9654 = vmatprep.mubr.bf16.mxu0 0
      %9655 = vmatmul.mubr.bf16.gmra.mxu0 %v9414
      %v9656 = vpop.f32.mrf.mxu0
      %v9657 = vadd.f32 %v9496, %v9656
      %v9658 = vpop.f32.mrf.mxu0
      %v9659 = vpop.f32.mrf.mxu0
      %v9660 = vadd.f32 %v9499, %v9659
      %v9661 = vpop.f32.mrf.mxu0
      %9662 = vmatprep.mubr.bf16.mxu0 0
      %9663 = vmatmul.mubr.bf16.gmra.mxu0 %v9417
      %v9664 = vpop.f32.mrf.mxu0
      %v9665 = vadd.f32 %v9504, %v9664
      %v9666 = vpop.f32.mrf.mxu0
      %v9667 = vpop.f32.mrf.mxu0
      %v9668 = vadd.f32 %v9507, %v9667
      %v9669 = vpop.f32.mrf.mxu0
      %9670 = vmatprep.mubr.bf16.mxu0 0
      %9671 = vmatmul.mubr.bf16.gmra.mxu0 %v9420
      %v9672 = vpop.f32.mrf.mxu0
      %v9673 = vadd.f32 %v9512, %v9672
      %v9674 = vpop.f32.mrf.mxu0
      %v9675 = vpop.f32.mrf.mxu0
      %v9676 = vadd.f32 %v9515, %v9675
      %v9677 = vpop.f32.mrf.mxu0
      %9678 = vmatprep.mubr.bf16.mxu0 0
      %9679 = vmatmul.mubr.bf16.gmra.mxu0 %v9423
      %v9680 = vpop.f32.mrf.mxu0
      %v9681 = vadd.f32 %v9520, %v9680
      %v9682 = vpop.f32.mrf.mxu0
      %v9683 = vpop.f32.mrf.mxu0
      %v9684 = vadd.f32 %v9523, %v9683
      %v9685 = vpop.f32.mrf.mxu0
      %9686 = vmatprep.mubr.bf16.mxu0 0
      %9687 = vmatmul.mubr.bf16.gmra.mxu0 %v9426
      %v9688 = vpop.f32.mrf.mxu0
      %v9689 = vadd.f32 %v9528, %v9688
      %v9690 = vpop.f32.mrf.mxu0
      %v9691 = vpop.f32.mrf.mxu0
      %v9692 = vadd.f32 %v9531, %v9691
      %v9693 = vpop.f32.mrf.mxu0
      %9694 = vmatprep.mubr.bf16.mxu0 0
      %9695 = vmatmul.mubr.bf16.gmra.mxu0 %v9429
      %v9696 = vpop.f32.mrf.mxu0
      %v9697 = vadd.f32 %v9536, %v9696
      %v9698 = vpop.f32.mrf.mxu0
      %v9699 = vpop.f32.mrf.mxu0
      %v9700 = vadd.f32 %v9539, %v9699
      %v9701 = vpop.f32.mrf.mxu0
      %9702 = vmatprep.mubr.bf16.mxu0 0
      %9703 = vmatmul.mubr.bf16.gmra.mxu0 %v9432
      %v9704 = vpop.f32.mrf.mxu0
      %v9705 = vadd.f32 %v9544, %v9704
      %v9706 = vpop.f32.mrf.mxu0
      %v9707 = vpop.f32.mrf.mxu0
      %v9708 = vadd.f32 %v9547, %v9707
      %v9709 = vpop.f32.mrf.mxu0
      %9710 = vmatprep.mubr.bf16.mxu0 0
      %9711 = vmatmul.mubr.bf16.gmra.mxu0 %v9435
      %v9712 = vpop.f32.mrf.mxu0
      %v9713 = vadd.f32 %v9552, %v9712
      %v9714 = vpop.f32.mrf.mxu0
      %v9715 = vpop.f32.mrf.mxu0
      %v9716 = vadd.f32 %v9555, %v9715
      %v9717 = vpop.f32.mrf.mxu0
      %9718 = vmatprep.mubr.bf16.mxu0 0
      %9719 = vmatmul.mubr.bf16.gmra.mxu0 %v9438
      %v9720 = vpop.f32.mrf.mxu0
      %v9721 = vadd.f32 %v9560, %v9720
      %v9722 = vpop.f32.mrf.mxu0
      %v9723 = vpop.f32.mrf.mxu0
      %v9724 = vadd.f32 %v9563, %v9723
      %v9725 = vpop.f32.mrf.mxu0
      %9726 = vmatprep.mubr.bf16.mxu0 0
      %9727 = vmatmul.mubr.bf16.gmra.mxu0 %v9441
      %v9728 = vpop.f32.mrf.mxu0
      %v9729 = vadd.f32 %v9568, %v9728
      %v9730 = vpop.f32.mrf.mxu0
      %v9731 = vpop.f32.mrf.mxu0
      %v9732 = vadd.f32 %v9571, %v9731
      %v9733 = vpop.f32.mrf.mxu0
      %9734 = vmatprep.mubr.bf16.mxu0 0
      %9735 = vmatmul.mubr.bf16.gmra.mxu0 %v9444
      %v9736 = vpop.f32.mrf.mxu0
      %v9737 = vadd.f32 %v9576, %v9736
      %v9738 = vpop.f32.mrf.mxu0
      %v9739 = vpop.f32.mrf.mxu0
      %v9740 = vadd.f32 %v9579, %v9739
      %v9741 = vpop.f32.mrf.mxu0
      %9742 = vmatprep.mubr.bf16.mxu0 0
      %9743 = vmatmul.mubr.bf16.gmra.mxu0 %v9447
      %v9744 = vpop.f32.mrf.mxu0
      %v9745 = vadd.f32 %v9584, %v9744
      %v9746 = vpop.f32.mrf.mxu0
      %v9747 = vpop.f32.mrf.mxu0
      %v9748 = vadd.f32 %v9587, %v9747
      %v9749 = vpop.f32.mrf.mxu0
      %9750 = vmatprep.mubr.bf16.mxu0 0
      %9751 = vmatmul.mubr.bf16.gmra.mxu0 %v9450
      %v9752 = vpop.f32.mrf.mxu0
      %v9753 = vadd.f32 %v9592, %v9752
      %v9754 = vpop.f32.mrf.mxu0
      %v9755 = vpop.f32.mrf.mxu0
      %v9756 = vadd.f32 %v9595, %v9755
      %v9757 = vpop.f32.mrf.mxu0
      %9758 = vmatprep.mubr.bf16.mxu0 0
      %9759 = vmatmul.mubr.bf16.gmra.mxu0 %v9453
      %v9760 = vpop.f32.mrf.mxu0
      %v9761 = vadd.f32 %v9600, %v9760
      %v9762 = vpop.f32.mrf.mxu0
      %v9763 = vpop.f32.mrf.mxu0
      %v9764 = vadd.f32 %v9603, %v9763
      %v9765 = vpop.f32.mrf.mxu0
      %9766 = vmatprep.mubr.bf16.mxu0 0
      %9767 = vmatmul.mubr.bf16.gmra.mxu0 %v9456
      %v9768 = vpop.f32.mrf.mxu0
      %v9769 = vadd.f32 %v9608, %v9768
      %v9770 = vpop.f32.mrf.mxu0
      %v9771 = vpop.f32.mrf.mxu0
      %v9772 = vadd.f32 %v9611, %v9771
      %v9773 = vpop.f32.mrf.mxu0
      %9774 = vmatprep.mubr.bf16.mxu0 0
      %9775 = vmatmul.mubr.bf16.gmra.mxu0 %v9459
      %v9776 = vpop.f32.mrf.mxu0
      %v9777 = vadd.f32 %v9616, %v9776
      %v9778 = vpop.f32.mrf.mxu0
      %v9779 = vpop.f32.mrf.mxu0
      %v9780 = vadd.f32 %v9619, %v9779
      %v9781 = vpop.f32.mrf.mxu0
      %9782 = vdwg.mxu0
      %v9783 = vmax.f32 %v9657, 0.0
      %v9784 = vmax.f32 %v9660, 0.0
      %v9785 = vmax.f32 %v9665, 0.0
      %v9786 = vmax.f32 %v9668, 0.0
      %v9787 = vmax.f32 %v9673, 0.0
      %v9788 = vmax.f32 %v9676, 0.0
      %v9789 = vmax.f32 %v9681, 0.0
      %v9790 = vmax.f32 %v9684, 0.0
      %v9791 = vmax.f32 %v9689, 0.0
      %v9792 = vmax.f32 %v9692, 0.0
      %v9793 = vmax.f32 %v9697, 0.0
      %v9794 = vmax.f32 %v9700, 0.0
      %v9795 = vmax.f32 %v9705, 0.0
      %v9796 = vmax.f32 %v9708, 0.0
      %v9797 = vmax.f32 %v9713, 0.0
      %v9798 = vmax.f32 %v9716, 0.0
      %v9799 = vmax.f32 %v9721, 0.0
      %v9800 = vmax.f32 %v9724, 0.0
      %v9801 = vmax.f32 %v9729, 0.0
      %v9802 = vmax.f32 %v9732, 0.0
      %v9803 = vmax.f32 %v9737, 0.0
      %v9804 = vmax.f32 %v9740, 0.0
      %v9805 = vmax.f32 %v9745, 0.0
      %v9806 = vmax.f32 %v9748, 0.0
      %v9807 = vmax.f32 %v9753, 0.0
      %v9808 = vmax.f32 %v9756, 0.0
      %v9809 = vmax.f32 %v9761, 0.0
      %v9810 = vmax.f32 %v9764, 0.0
      %v9811 = vmax.f32 %v9769, 0.0
      %v9812 = vmax.f32 %v9772, 0.0
      %v9813 = vmax.f32 %v9777, 0.0
      %v9814 = vmax.f32 %v9780, 0.0
      %v9815 = vpack.c.bf16 %v9784, %v9783
      %v9816 = vpack.c.bf16 %v9786, %v9785
      %v9817 = vpack.c.bf16 %v9788, %v9787
      %v9818 = vpack.c.bf16 %v9790, %v9789
      %v9819 = vpack.c.bf16 %v9792, %v9791
      %v9820 = vpack.c.bf16 %v9794, %v9793
      %v9821 = vpack.c.bf16 %v9796, %v9795
      %v9822 = vpack.c.bf16 %v9798, %v9797
      %v9823 = vpack.c.bf16 %v9800, %v9799
      %v9824 = vpack.c.bf16 %v9802, %v9801
      %v9825 = vpack.c.bf16 %v9804, %v9803
      %v9826 = vpack.c.bf16 %v9806, %v9805
      %v9827 = vpack.c.bf16 %v9808, %v9807
      %v9828 = vpack.c.bf16 %v9810, %v9809
      %v9829 = vpack.c.bf16 %v9812, %v9811
      %v9830 = vpack.c.bf16 %v9814, %v9813
      %v9831 = vld [vmem:[%s4] sm:$0xf]
      %v9832 = vld [vmem:[%s4 + $0x4] sm:$0xf]
      %v9833 = vld [vmem:[%s4 + $0x8] sm:$0xf]
      %v9834 = vld [vmem:[%s4 + $0xc] sm:$0xf]
      %v9835 = vld [vmem:[%s5] sm:$0x1]
      %v9837 = vlaneseq
      %v9838 = vshrl.u32 %v9837, 7
      %v9839 = vsub.s32 0, %v9838
      %v9840 = vrot.slane %v9835, %v9839
      %v9846 = vunpack.c.l.b16 %v9831
      %v9847 = vunpack.c.l.b16 %v9832
      %v9848 = vunpack.c.l.b16 %v9833
      %v9849 = vunpack.c.l.b16 %v9834
      %v9850 = vpack.c.b16 %v9847, %v9846
      %v9851 = vpack.c.b16 %v9849, %v9848
      %v9855 = vsel %vm309, %v9815, 0
      %v9858 = vsel %vm309, %v9816, 0
      %v9861 = vsel %vm309, %v9817, 0
      %v9864 = vsel %vm309, %v9818, 0
      %v9867 = vsel %vm309, %v9819, 0
      %v9870 = vsel %vm309, %v9820, 0
      %v9873 = vsel %vm309, %v9821, 0
      %v9876 = vsel %vm309, %v9822, 0
      %v9879 = vsel %vm309, %v9823, 0
      %v9882 = vsel %vm309, %v9824, 0
      %v9885 = vsel %vm309, %v9825, 0
      %v9888 = vsel %vm309, %v9826, 0
      %v9891 = vsel %vm309, %v9827, 0
      %v9894 = vsel %vm309, %v9828, 0
      %v9897 = vsel %vm309, %v9829, 0
      %v9900 = vsel %vm309, %v9830, 0
      %9902 = vmatprep.subr.bf16.mxu0 0
      %9903 = vmatpush1.bf16.msra.mxu0 0
      %9904 = vmatprep.subr.bf16.mxu0 0
      %9905 = vmatpush1.bf16.msra.mxu0 0
      %9906 = vmatprep.subr.bf16.mxu0 0
      %9907 = vmatpush1.bf16.msra.mxu0 0
      %9908 = vmatprep.subr.bf16.mxu0 0
      %9909 = vmatpush1.bf16.msra.mxu0 0
      %9910 = vmatprep.subr.bf16.mxu0 0
      %9911 = vmatpush1.bf16.msra.mxu0 0
      %9912 = vmatprep.subr.bf16.mxu0 0
      %9913 = vmatpush1.bf16.msra.mxu0 0
      %9914 = vmatprep.subr.bf16.mxu0 0
      %9915 = vmatpush1.bf16.msra.mxu0 %v9851
      %9916 = vmatprep.subr.bf16.mxu0 0
      %9917 = vmatpush1.bf16.msra.mxu0 %v9850
      %9918 = vmatprep.subr.bf16.mxu0 0
      %9919 = vmatpush2.bf16.msra.mxu0 0
      %9920 = vmatprep.subr.bf16.mxu0 0
      %9921 = vmatpush2.bf16.msra.mxu0 0
      %9922 = vmatprep.subr.bf16.mxu0 0
      %9923 = vmatpush2.bf16.msra.mxu0 0
      %9924 = vmatprep.subr.bf16.mxu0 0
      %9925 = vmatpush2.bf16.msra.mxu0 0
      %9926 = vmatprep.subr.bf16.mxu0 0
      %9927 = vmatpush2.bf16.msra.mxu0 0
      %9928 = vmatprep.subr.bf16.mxu0 0
      %9929 = vmatpush2.bf16.msra.mxu0 0
      %9930 = vmatprep.subr.bf16.mxu0 0
      %9931 = vmatpush2.bf16.msra.mxu0 0
      %9932 = vmatprep.subr.bf16.mxu0 0
      %9933 = vmatpush2.bf16.msra.mxu0 0
      %9934 = vmatprep.mubr.bf16.mxu0 0
      %9935 = vmatmul.mubr.bf16.gmra.mxu0 %v9855
      %v9936 = vpop.f32.mrf.mxu0
      %v9937 = vadd.f32 %v9840, %v9936
      %v9938 = vpop.f32.mrf.mxu0
      %v9939 = vpop.f32.mrf.mxu0
      %v9940 = vadd.f32 %v9840, %v9939
      %v9941 = vpop.f32.mrf.mxu0
      %9942 = vmatprep.mubr.bf16.mxu0 0
      %9943 = vmatmul.mubr.bf16.gmra.mxu0 %v9858
      %v9944 = vpop.f32.mrf.mxu0
      %v9945 = vadd.f32 %v9840, %v9944
      %v9946 = vpop.f32.mrf.mxu0
      %v9947 = vpop.f32.mrf.mxu0
      %v9948 = vadd.f32 %v9840, %v9947
      %v9949 = vpop.f32.mrf.mxu0
      %9950 = vmatprep.mubr.bf16.mxu0 0
      %9951 = vmatmul.mubr.bf16.gmra.mxu0 %v9861
      %v9952 = vpop.f32.mrf.mxu0
      %v9953 = vadd.f32 %v9840, %v9952
      %v9954 = vpop.f32.mrf.mxu0
      %v9955 = vpop.f32.mrf.mxu0
      %v9956 = vadd.f32 %v9840, %v9955
      %v9957 = vpop.f32.mrf.mxu0
      %9958 = vmatprep.mubr.bf16.mxu0 0
      %9959 = vmatmul.mubr.bf16.gmra.mxu0 %v9864
      %v9960 = vpop.f32.mrf.mxu0
      %v9961 = vadd.f32 %v9840, %v9960
      %v9962 = vpop.f32.mrf.mxu0
      %v9963 = vpop.f32.mrf.mxu0
      %v9964 = vadd.f32 %v9840, %v9963
      %v9965 = vpop.f32.mrf.mxu0
      %9966 = vmatprep.mubr.bf16.mxu0 0
      %9967 = vmatmul.mubr.bf16.gmra.mxu0 %v9867
      %v9968 = vpop.f32.mrf.mxu0
      %v9969 = vadd.f32 %v9840, %v9968
      %v9970 = vpop.f32.mrf.mxu0
      %v9971 = vpop.f32.mrf.mxu0
      %v9972 = vadd.f32 %v9840, %v9971
      %v9973 = vpop.f32.mrf.mxu0
      %9974 = vmatprep.mubr.bf16.mxu0 0
      %9975 = vmatmul.mubr.bf16.gmra.mxu0 %v9870
      %v9976 = vpop.f32.mrf.mxu0
      %v9977 = vadd.f32 %v9840, %v9976
      %v9978 = vpop.f32.mrf.mxu0
      %v9979 = vpop.f32.mrf.mxu0
      %v9980 = vadd.f32 %v9840, %v9979
      %v9981 = vpop.f32.mrf.mxu0
      %9982 = vmatprep.mubr.bf16.mxu0 0
      %9983 = vmatmul.mubr.bf16.gmra.mxu0 %v9873
      %v9984 = vpop.f32.mrf.mxu0
      %v9985 = vadd.f32 %v9840, %v9984
      %v9986 = vpop.f32.mrf.mxu0
      %v9987 = vpop.f32.mrf.mxu0
      %v9988 = vadd.f32 %v9840, %v9987
      %v9989 = vpop.f32.mrf.mxu0
      %9990 = vmatprep.mubr.bf16.mxu0 0
      %9991 = vmatmul.mubr.bf16.gmra.mxu0 %v9876
      %v9992 = vpop.f32.mrf.mxu0
      %v9993 = vadd.f32 %v9840, %v9992
      %v9994 = vpop.f32.mrf.mxu0
      %v9995 = vpop.f32.mrf.mxu0
      %v9996 = vadd.f32 %v9840, %v9995
      %v9997 = vpop.f32.mrf.mxu0
      %9998 = vmatprep.mubr.bf16.mxu0 0
      %9999 = vmatmul.mubr.bf16.gmra.mxu0 %v9879
      %v10000 = vpop.f32.mrf.mxu0
      %v10001 = vadd.f32 %v9840, %v10000
      %v10002 = vpop.f32.mrf.mxu0
      %v10003 = vpop.f32.mrf.mxu0
      %v10004 = vadd.f32 %v9840, %v10003
      %v10005 = vpop.f32.mrf.mxu0
      %10006 = vmatprep.mubr.bf16.mxu0 0
      %10007 = vmatmul.mubr.bf16.gmra.mxu0 %v9882
      %v10008 = vpop.f32.mrf.mxu0
      %v10009 = vadd.f32 %v9840, %v10008
      %v10010 = vpop.f32.mrf.mxu0
      %v10011 = vpop.f32.mrf.mxu0
      %v10012 = vadd.f32 %v9840, %v10011
      %v10013 = vpop.f32.mrf.mxu0
      %10014 = vmatprep.mubr.bf16.mxu0 0
      %10015 = vmatmul.mubr.bf16.gmra.mxu0 %v9885
      %v10016 = vpop.f32.mrf.mxu0
      %v10017 = vadd.f32 %v9840, %v10016
      %v10018 = vpop.f32.mrf.mxu0
      %v10019 = vpop.f32.mrf.mxu0
      %v10020 = vadd.f32 %v9840, %v10019
      %v10021 = vpop.f32.mrf.mxu0
      %10022 = vmatprep.mubr.bf16.mxu0 0
      %10023 = vmatmul.mubr.bf16.gmra.mxu0 %v9888
      %v10024 = vpop.f32.mrf.mxu0
      %v10025 = vadd.f32 %v9840, %v10024
      %v10026 = vpop.f32.mrf.mxu0
      %v10027 = vpop.f32.mrf.mxu0
      %v10028 = vadd.f32 %v9840, %v10027
      %v10029 = vpop.f32.mrf.mxu0
      %10030 = vmatprep.mubr.bf16.mxu0 0
      %10031 = vmatmul.mubr.bf16.gmra.mxu0 %v9891
      %v10032 = vpop.f32.mrf.mxu0
      %v10033 = vadd.f32 %v9840, %v10032
      %v10034 = vpop.f32.mrf.mxu0
      %v10035 = vpop.f32.mrf.mxu0
      %v10036 = vadd.f32 %v9840, %v10035
      %v10037 = vpop.f32.mrf.mxu0
      %10038 = vmatprep.mubr.bf16.mxu0 0
      %10039 = vmatmul.mubr.bf16.gmra.mxu0 %v9894
      %v10040 = vpop.f32.mrf.mxu0
      %v10041 = vadd.f32 %v9840, %v10040
      %v10042 = vpop.f32.mrf.mxu0
      %v10043 = vpop.f32.mrf.mxu0
      %v10044 = vadd.f32 %v9840, %v10043
      %v10045 = vpop.f32.mrf.mxu0
      %10046 = vmatprep.mubr.bf16.mxu0 0
      %10047 = vmatmul.mubr.bf16.gmra.mxu0 %v9897
      %v10048 = vpop.f32.mrf.mxu0
      %v10049 = vadd.f32 %v9840, %v10048
      %v10050 = vpop.f32.mrf.mxu0
      %v10051 = vpop.f32.mrf.mxu0
      %v10052 = vadd.f32 %v9840, %v10051
      %v10053 = vpop.f32.mrf.mxu0
      %10054 = vmatprep.mubr.bf16.mxu0 0
      %10055 = vmatmul.mubr.bf16.gmra.mxu0 %v9900
      %v10056 = vpop.f32.mrf.mxu0
      %v10057 = vadd.f32 %v9840, %v10056
      %v10058 = vpop.f32.mrf.mxu0
      %v10059 = vpop.f32.mrf.mxu0
      %v10060 = vadd.f32 %v9840, %v10059
      %v10061 = vpop.f32.mrf.mxu0
      %10062 = vdwg.mxu0
      %10063 = vxpose.xlu0.b32.start [1/16] %v9937, 128
      %10064 = vxpose.xlu0.b32.cont [2/16] %v9940, 128
      %10065 = vxpose.xlu0.b32.cont [3/16] %v9945, 128
      %10066 = vxpose.xlu0.b32.cont [4/16] %v9948, 128
      %10067 = vxpose.xlu0.b32.cont [5/16] %v9953, 128
      %10068 = vxpose.xlu0.b32.cont [6/16] %v9956, 128
      %10069 = vxpose.xlu0.b32.cont [7/16] %v9961, 128
      %10070 = vxpose.xlu0.b32.cont [8/16] %v9964, 128
      %10071 = vxpose.xlu0.b32.cont [9/16] %v9969, 128
      %10072 = vxpose.xlu0.b32.cont [10/16] %v9972, 128
      %10073 = vxpose.xlu0.b32.cont [11/16] %v9977, 128
      %10074 = vxpose.xlu0.b32.cont [12/16] %v9980, 128
      %10075 = vxpose.xlu0.b32.cont [13/16] %v9985, 128
      %10076 = vxpose.xlu0.b32.cont [14/16] %v9988, 128
      %10077 = vxpose.xlu0.b32.cont [15/16] %v9993, 128
      %10078 = vxpose.xlu0.b32.end [16/16] %v9996, 128
      %v10079 = vpop.trf.xlu0
      %v10080 = vpop.trf.xlu0
      %v10081 = vpop.trf.xlu0
      %v10082 = vpop.trf.xlu0
      %v10083 = vpop.trf.xlu0
      %v10084 = vpop.trf.xlu0
      %v10085 = vpop.trf.xlu0
      %v10086 = vpop.trf.xlu0
      %v10087 = vpop.trf.xlu0
      %v10088 = vpop.trf.xlu0
      %v10089 = vpop.trf.xlu0
      %v10090 = vpop.trf.xlu0
      %v10091 = vpop.trf.xlu0
      %v10092 = vpop.trf.xlu0
      %v10093 = vpop.trf.xlu0
      %v10094 = vpop.trf.xlu0
      %10095 = vxpose.xlu0.b32.start [1/16] %v10001, 128
      %10096 = vxpose.xlu0.b32.cont [2/16] %v10004, 128
      %10097 = vxpose.xlu0.b32.cont [3/16] %v10009, 128
      %10098 = vxpose.xlu0.b32.cont [4/16] %v10012, 128
      %10099 = vxpose.xlu0.b32.cont [5/16] %v10017, 128
      %10100 = vxpose.xlu0.b32.cont [6/16] %v10020, 128
      %10101 = vxpose.xlu0.b32.cont [7/16] %v10025, 128
      %10102 = vxpose.xlu0.b32.cont [8/16] %v10028, 128
      %10103 = vxpose.xlu0.b32.cont [9/16] %v10033, 128
      %10104 = vxpose.xlu0.b32.cont [10/16] %v10036, 128
      %10105 = vxpose.xlu0.b32.cont [11/16] %v10041, 128
      %10106 = vxpose.xlu0.b32.cont [12/16] %v10044, 128
      %10107 = vxpose.xlu0.b32.cont [13/16] %v10049, 128
      %10108 = vxpose.xlu0.b32.cont [14/16] %v10052, 128
      %10109 = vxpose.xlu0.b32.cont [15/16] %v10057, 128
      %10110 = vxpose.xlu0.b32.end [16/16] %v10060, 128
      %v10111 = vpop.trf.xlu0
      %v10112 = vpop.trf.xlu0
      %v10113 = vpop.trf.xlu0
      %v10114 = vpop.trf.xlu0
      %v10115 = vpop.trf.xlu0
      %v10116 = vpop.trf.xlu0
      %v10117 = vpop.trf.xlu0
      %v10118 = vpop.trf.xlu0
      %v10119 = vpop.trf.xlu0
      %v10120 = vpop.trf.xlu0
      %v10121 = vpop.trf.xlu0
      %v10122 = vpop.trf.xlu0
      %v10123 = vpop.trf.xlu0
      %v10124 = vpop.trf.xlu0
      %v10125 = vpop.trf.xlu0
      %v10126 = vpop.trf.xlu0
      %10127 = vst [vmem:[%s251] sm:$0xff] %v10079
      %10128 = vst [vmem:[%s251 + $0x8] sm:$0xff] %v10111
      %p10129 = scmp.lt.s32.totalorder %s17, 1
      %s10130 = scalar_select %p10129, %s17, 1
      %s10131 = smul.addr %s10130, 2
      %s10132 = smul.addr %s10131, 8
      %s10133 = scalar_lea.vmem %s6, %s10132
      // Predicated region
      $region45: #{fcn_forward_pallas.1} parent=43 // pred_check
        %p10134 = pneg %p166
      $region46: #{fcn_forward_pallas.1} parent=43 // pred_check_branch
        %10136 = sbr.rel (%p10134) target = $region48
      $region47: #{fcn_forward_pallas.1} parent=43 // pred_region
        _
      $region48: #{fcn_forward_pallas.1} parent=43 // pred_fallthru
        _
    $region44: #{fcn_forward_pallas.1} parent=5 // pred_fallthru
      _
    %p10137 = scmp.le.s32.totalorder 2, %s12
    // Predicated region
    $region49: #{fcn_forward_pallas.1} parent=5 // pred_check
      %p10138 = pneg %p10137
    $region50: #{fcn_forward_pallas.1} parent=5 // pred_check_branch
      %10140 = sbr.rel (%p10138) target = $region52
    $region51: #{fcn_forward_pallas.1} parent=5 // pred_region
      %s10141 = ssub.s32 %s12, 2
      // Predicated region
      $region53: #{fcn_forward_pallas.1} parent=51 // pred_check
        %p10142 = pneg %p172
      $region54: #{fcn_forward_pallas.1} parent=51 // pred_check_branch
        %10144 = sbr.rel (%p10142) target = $region56
      $region55: #{fcn_forward_pallas.1} parent=51 // pred_region
        %p10145 = scmp.lt.s32.totalorder %s18, 1
        %s10146 = scalar_select %p10145, %s18, 1
        %s10147 = smul.addr %s10146, 2
        %s10148 = smul.addr %s10147, 8
        %s10149 = scalar_lea.vmem %s6, %s10148
      $region56: #{fcn_forward_pallas.1} parent=51 // pred_fallthru
        _
    $region52: #{fcn_forward_pallas.1} parent=5 // pred_fallthru
      _
  $region6: #{fcn_forward_pallas.1} parent=0 // loop_footer
    %s16 = sadd.s32 1, %s12
  $region7: #{fcn_forward_pallas.1} parent=0 // loop_footer_branch
    %11 = sbr.rel target = $region3
  $region8: #{fcn_forward_pallas.1} parent=0 // loop_exit
    _

</llo_original>
